<compile_context>
chip_gen: v6e
topology: v6e:2x2x1
jax: 0.10.0
libtpu: 0.0.40
codegen_flags: <defaults>
</compile_context>

<pallas_src>
import jax
import jax.numpy as jnp
from jax.experimental import pallas as pl
from jax.experimental.pallas import tpu as pltpu

EPS = 1e-5
LANE = 128
MXU_DTYPE = jnp.bfloat16            # conv matmul input dtype (f32 accumulation)
VMEM_LIMIT = 48 * 1024 * 1024       # safe across v5e / v6e / v7x


# ---------------------------------------------------------------------------
# Kernels
# ---------------------------------------------------------------------------
def _make_conv_stats_kernel(H, W):
    """3x3x3 conv as 27 accumulated MXU matmuls + bias + per-channel sum/sumsq."""
    HW = H * W

    def kernel(x0_ref, x1_ref, x2_ref, w_ref, b_ref, y_ref, s_ref, ss_ref):
        cp = w_ref.shape[-1]
        planes = (x0_ref, x1_ref, x2_ref)
        acc = jnp.zeros((HW, cp), jnp.float32)
        for kd in range(3):                                   # static unroll: 27 taps
            for kh in range(3):
                for kw in range(3):
                    patch = planes[kd][0, 0, kh:kh + H, kw:kw + W, :].reshape(HW, cp)
                    acc = acc + jnp.dot(patch, w_ref[kd, kh, kw],
                                        preferred_element_type=jnp.float32)
        y = acc + b_ref[...]                                  # (HW, Cp) + (1, Cp)
        y_ref[0, 0] = y

        # single-pass sum / sum-of-squares, accumulated across the whole grid
        first = jnp.logical_and(pl.program_id(0) == 0, pl.program_id(1) == 0)

        @pl.when(first)
        def _():
            s_ref[...] = jnp.zeros_like(s_ref)
            ss_ref[...] = jnp.zeros_like(ss_ref)

        s_ref[...] += jnp.sum(y, axis=0, keepdims=True)
        ss_ref[...] += jnp.sum(y * y, axis=0, keepdims=True)

    return kernel


def _make_bn_prelu_pad_kernel(H, W, D):
    """Apply folded BN1 affine + PReLU and write the spatially padded conv2 input."""
    def kernel(y_ref, sc_ref, sh_ref, a_ref, o_ref):
        dd = pl.program_id(1)
        # Zero the whole padded plane: covers the depth-halo planes (dd == 0,
        # dd == D+1) and the H/W zero border that conv2's padding=1 needs.
        o_ref[...] = jnp.zeros_like(o_ref)
        interior = jnp.logical_and(dd >= 1, dd <= D)

        @pl.when(interior)
        def _():
            y = y_ref[0, 0]                                   # (HW, Cp) f32
            h = y * sc_ref[...] + sh_ref[...]                 # folded BN1 affine
            h = jnp.where(h >= 0.0, h, h * a_ref[...])        # PReLU
            o_ref[0, 0, 1:1 + H, 1:1 + W, :] = h.reshape(H, W, -1).astype(o_ref.dtype)

    return kernel


def _bn_add_kernel(y_ref, x_ref, sc_ref, sh_ref, o_ref):
    """out = x + (y * scale2 + shift2)   (folded BN2 + residual add, f32)."""
    o_ref[0, 0] = x_ref[0, 0] + (y_ref[0, 0] * sc_ref[...] + sh_ref[...])


# ---------------------------------------------------------------------------
# pallas_call wrappers
# ---------------------------------------------------------------------------
def _conv3d_with_stats(xp, w, b, N, D, H, W, Cp):
    Hp, Wp, HW = H + 2, W + 2, H * W
    kernel = _make_conv_stats_kernel(H, W)

    def xspec(kd):
        # Same padded slab passed 3x; tap kd reads depth plane d + kd.
        return pl.BlockSpec((1, 1, Hp, Wp, Cp),
                            lambda n, d, kd=kd: (n, d + kd, 0, 0, 0))

    y, s, ss = pl.pallas_call(
        kernel,
        grid_spec=pltpu.PrefetchScalarGridSpec(
            num_scalar_prefetch=0,
            grid=(N, D),
            in_specs=[
                xspec(0), xspec(1), xspec(2),
                pl.BlockSpec((3, 3, 3, Cp, Cp), lambda n, d: (0, 0, 0, 0, 0)),
                pl.BlockSpec((1, Cp), lambda n, d: (0, 0)),
            ],
            out_specs=[
                pl.BlockSpec((1, 1, HW, Cp), lambda n, d: (n, d, 0, 0)),
                pl.BlockSpec((1, Cp), lambda n, d: (0, 0)),   # sum   (accumulator)
                pl.BlockSpec((1, Cp), lambda n, d: (0, 0)),   # sumsq (accumulator)
            ],
        ),
        out_shape=[
            jax.ShapeDtypeStruct((N, D, HW, Cp), jnp.float32),
            jax.ShapeDtypeStruct((1, Cp), jnp.float32),
            jax.ShapeDtypeStruct((1, Cp), jnp.float32),
        ],
        compiler_params=pltpu.CompilerParams(
            # stats outputs are revisited across BOTH axes -> must be arbitrary
            dimension_semantics=("arbitrary", "arbitrary"),
            vmem_limit_bytes=VMEM_LIMIT,
        ),
    )(xp, xp, xp, w, b)
    return y, s, ss


def _bn_prelu_to_padded(y, scale, shift, alpha_vec, N, D, H, W, Cp):
    Hp, Wp, HW = H + 2, W + 2, H * W
    kernel = _make_bn_prelu_pad_kernel(H, W, D)
    return pl.pallas_call(
        kernel,
        grid_spec=pltpu.PrefetchScalarGridSpec(
            num_scalar_prefetch=0,
            grid=(N, D + 2),
            in_specs=[
                pl.BlockSpec(
                    (1, 1, HW, Cp),
                    lambda n, dd: (n, jnp.maximum(jnp.minimum(dd - 1, D - 1), 0), 0, 0)),
                pl.BlockSpec((1, Cp), lambda n, dd: (0, 0)),
                pl.BlockSpec((1, Cp), lambda n, dd: (0, 0)),
                pl.BlockSpec((1, Cp), lambda n, dd: (0, 0)),
            ],
            out_specs=pl.BlockSpec((1, 1, Hp, Wp, Cp),
                                   lambda n, dd: (n, dd, 0, 0, 0)),
        ),
        out_shape=jax.ShapeDtypeStruct((N, D + 2, Hp, Wp, Cp), MXU_DTYPE),
        compiler_params=pltpu.CompilerParams(
            dimension_semantics=("parallel", "parallel"),
            vmem_limit_bytes=VMEM_LIMIT,
        ),
    )(y, scale, shift, alpha_vec)


def _bn_residual_add(y, x_flat, scale, shift, N, D, HW, Cp):
    return pl.pallas_call(
        _bn_add_kernel,
        grid_spec=pltpu.PrefetchScalarGridSpec(
            num_scalar_prefetch=0,
            grid=(N, D),
            in_specs=[
                pl.BlockSpec((1, 1, HW, Cp), lambda n, d: (n, d, 0, 0)),
                pl.BlockSpec((1, 1, HW, Cp), lambda n, d: (n, d, 0, 0)),
                pl.BlockSpec((1, Cp), lambda n, d: (0, 0)),
                pl.BlockSpec((1, Cp), lambda n, d: (0, 0)),
            ],
            out_specs=pl.BlockSpec((1, 1, HW, Cp), lambda n, d: (n, d, 0, 0)),
        ),
        out_shape=jax.ShapeDtypeStruct((N, D, HW, Cp), jnp.float32),
        compiler_params=pltpu.CompilerParams(
            dimension_semantics=("parallel", "parallel"),
            vmem_limit_bytes=VMEM_LIMIT,
        ),
    )(y, x_flat, scale, shift)


# ---------------------------------------------------------------------------
# JAX glue: layout/padding, weight prep, BN affine folding
# ---------------------------------------------------------------------------
def _round_up(x, m):
    return (x + m - 1) // m * m


def _prep_weight(w, Cp):
    """(C_out, C_in, kD, kH, kW) -> (kD, kH, kW, Cp_in, Cp_out), zero-padded, bf16."""
    c_out, c_in = w.shape[0], w.shape[1]
    w = jnp.transpose(w, (2, 3, 4, 1, 0))                    # (kD, kH, kW, Ci, Co)
    w = jnp.pad(w, ((0, 0), (0, 0), (0, 0), (0, Cp - c_in), (0, Cp - c_out)))
    return w.astype(MXU_DTYPE)


def _pad_vec(v, Cp):
    return jnp.pad(v, (0, Cp - v.shape[0])).reshape(1, Cp).astype(jnp.float32)


def _affine_from_stats(s, ss, gamma, beta, count):
    """Fold training-mode BN (batch stats, biased var, eps) into scale/shift."""
    mean = s / count
    var = jnp.maximum(ss / count - mean * mean, 0.0)
    inv = jax.lax.rsqrt(var + EPS)
    scale = gamma * inv
    shift = beta - mean * scale
    return scale, shift


def init_params(key, channels):
    k1, k2, k3, k4 = jax.random.split(key, 4)
    scale = 0.05
    return {
        "w1": scale * jax.random.normal(k1, (channels, channels, 3, 3, 3), jnp.float32),
        "b1": scale * jax.random.normal(k2, (channels,), jnp.float32),
        "gamma1": jnp.ones((channels,), jnp.float32),
        "beta1": jnp.zeros((channels,), jnp.float32),
        "prelu_a": jnp.full((1,), 0.25, jnp.float32),        # PyTorch PReLU default
        "w2": scale * jax.random.normal(k3, (channels, channels, 3, 3, 3), jnp.float32),
        "b2": scale * jax.random.normal(k4, (channels,), jnp.float32),
        "gamma2": jnp.ones((channels,), jnp.float32),
        "beta2": jnp.zeros((channels,), jnp.float32),
    }


@jax.jit
def residual_block(x_ncdhw, params):
    N, C, D, H, W = x_ncdhw.shape
    Cp = max(LANE, _round_up(C, LANE))                       # lane-dense channels
    HW = H * W
    count = float(N * D * H * W)

    # NCDHW -> NDHWC, zero-pad channels (padded gamma/beta/weights are zero, so
    # padded channels stay exactly zero end-to-end and are sliced off at the end).
    x = jnp.transpose(x_ncdhw, (0, 2, 3, 4, 1))
    x = jnp.pad(x, ((0, 0), (0, 0), (0, 0), (0, 0), (0, Cp - C)))
    x_flat = x.reshape(N, D, HW, Cp)                         # f32 residual copy

    # Spatially padded bf16 slab for conv1 (halo of 1 in D/H/W).
    xp = jnp.pad(x, ((0, 0), (1, 1), (1, 1), (1, 1), (0, 0))).astype(MXU_DTYPE)

    w1 = _prep_weight(params["w1"], Cp)
    w2 = _prep_weight(params["w2"], Cp)
    b1 = _pad_vec(params["b1"], Cp)
    b2 = _pad_vec(params["b2"], Cp)
    g1 = _pad_vec(params["gamma1"], Cp)
    g2 = _pad_vec(params["gamma2"], Cp)
    be1 = _pad_vec(params["beta1"], Cp)
    be2 = _pad_vec(params["beta2"], Cp)
    pa = params["prelu_a"].astype(jnp.float32)
    alpha = (jnp.broadcast_to(pa, (1, Cp)) if pa.shape[0] == 1 else _pad_vec(pa, Cp))

    # conv1 (+bias) and per-channel sum/sumsq  (pass 1 of BN1)
    y1, s1, ss1 = _conv3d_with_stats(xp, w1, b1, N, D, H, W, Cp)
    scale1, shift1 = _affine_from_stats(s1, ss1, g1, be1, count)

    # BN1 + PReLU, written directly as the spatially padded bf16 conv2 input
    h1p = _bn_prelu_to_padded(y1, scale1, shift1, alpha, N, D, H, W, Cp)

    # conv2 (+bias) and stats  (pass 1 of BN2)
    y2, s2, ss2 = _conv3d_with_stats(h1p, w2, b2, N, D, H, W, Cp)
    scale2, shift2 = _affine_from_stats(s2, ss2, g2, be2, count)

    # BN2 + residual add (f32)
    out_flat = _bn_residual_add(y2, x_flat, scale2, shift2, N, D, HW, Cp)

    out = out_flat.reshape(N, D, H, W, Cp)[..., :C]
    return jnp.transpose(out, (0, 4, 1, 2, 3))               # NDHWC -> NCDHW


if __name__ == "__main__":
    key = jax.random.PRNGKey(0)
    k_x, k_p = jax.random.split(key)

    N, C, D, H, W = 2, 4, 8, 8, 8                            # small NCDHW input
    x = jax.random.normal(k_x, (N, C, D, H, W), jnp.float32)
    params = init_params(k_p, C)

    out = residual_block(x, params)
    jax.block_until_ready(out)
    assert out.shape == (N, C, D, H, W)
    print("KERNEL_OK")
</pallas_src>

<mosaic_0001>
module attributes {stable_mosaic.version = 11 : i64} {
  func.func @kernel(%arg0: i32, %arg1: i32, %arg2: memref<1x1x10x10x128xbf16, #tpu.memory_space<vmem>>, %arg3: memref<1x1x10x10x128xbf16, #tpu.memory_space<vmem>>, %arg4: memref<1x1x10x10x128xbf16, #tpu.memory_space<vmem>>, %arg5: memref<3x3x3x128x128xbf16, #tpu.memory_space<vmem>>, %arg6: memref<1x128xf32, #tpu.memory_space<vmem>>, %arg7: memref<1x1x64x128xf32, #tpu.memory_space<vmem>>, %arg8: memref<1x128xf32, #tpu.memory_space<vmem>>, %arg9: memref<1x128xf32, #tpu.memory_space<vmem>>) attributes {dimension_semantics = [#tpu.dimension_semantics<arbitrary>, #tpu.dimension_semantics<arbitrary>], iteration_bounds = array<i64: 2, 8>, scalar_prefetch = 0 : i64, scratch_operands = 0 : i64, tpu.core_type = #tpu.core_type<tc>, window_params = [{transform_indices = @transform_0, window_bounds = array<i64: 1, 1, 10, 10, 128>}, {transform_indices = @transform_1, window_bounds = array<i64: 1, 1, 10, 10, 128>}, {transform_indices = @transform_2, window_bounds = array<i64: 1, 1, 10, 10, 128>}, {pipeline_mode = #tpu.pipeline_mode<synchronous>, transform_indices = @transform_3, window_bounds = array<i64: 3, 3, 3, 128, 128>}, {pipeline_mode = #tpu.pipeline_mode<synchronous>, transform_indices = @transform_4, window_bounds = array<i64: 1, 128>}, {transform_indices = @transform_5, window_bounds = array<i64: 1, 1, 64, 128>}, {pipeline_mode = #tpu.pipeline_mode<synchronous>, transform_indices = @transform_6, window_bounds = array<i64: 1, 128>}, {pipeline_mode = #tpu.pipeline_mode<synchronous>, transform_indices = @transform_7, window_bounds = array<i64: 1, 128>}]} {
    %cst = arith.constant 0.000000e+00 : f32
    %0 = vector.broadcast %cst : f32 to vector<64x128xf32>
    %c0 = arith.constant 0 : index
    %c0_0 = arith.constant 0 : index
    %c0_1 = arith.constant 0 : index
    %c0_2 = arith.constant 0 : index
    %c0_3 = arith.constant 0 : index
    %1 = vector.load %arg2[%c0, %c0_0, %c0_1, %c0_2, %c0_3] : memref<1x1x10x10x128xbf16, #tpu.memory_space<vmem>>, vector<1x1x8x8x128xbf16>
    %2 = vector.shape_cast %1 : vector<1x1x8x8x128xbf16> to vector<8x8x128xbf16>
    %3 = vector.shape_cast %2 : vector<8x8x128xbf16> to vector<64x128xbf16>
    %c0_4 = arith.constant 0 : index
    %c0_5 = arith.constant 0 : index
    %c0_6 = arith.constant 0 : index
    %c0_7 = arith.constant 0 : index
    %c0_8 = arith.constant 0 : index
    %4 = vector.load %arg5[%c0_4, %c0_5, %c0_6, %c0_7, %c0_8] : memref<3x3x3x128x128xbf16, #tpu.memory_space<vmem>>, vector<1x1x1x128x128xbf16>
    %5 = vector.shape_cast %4 : vector<1x1x1x128x128xbf16> to vector<128x128xbf16>
    %cst_9 = arith.constant dense<0.000000e+00> : vector<64x128xf32>
    %6 = tpu.matmul %3, %5, %cst_9 {dimension_numbers = #tpu.dot_dimension_numbers<[1], [0], [0], [1], [0, 0, 1, 1], [], []>} : vector<64x128xbf16>, vector<128x128xbf16>, vector<64x128xf32> -> vector<64x128xf32>
    %7 = arith.addf %0, %6 : vector<64x128xf32>
    %c0_10 = arith.constant 0 : index
    %c0_11 = arith.constant 0 : index
    %c0_12 = arith.constant 0 : index
    %c1 = arith.constant 1 : index
    %c0_13 = arith.constant 0 : index
    %8 = vector.load %arg2[%c0_10, %c0_11, %c0_12, %c1, %c0_13] : memref<1x1x10x10x128xbf16, #tpu.memory_space<vmem>>, vector<1x1x8x8x128xbf16>
    %9 = vector.shape_cast %8 : vector<1x1x8x8x128xbf16> to vector<8x8x128xbf16>
    %10 = vector.shape_cast %9 : vector<8x8x128xbf16> to vector<64x128xbf16>
    %c0_14 = arith.constant 0 : index
    %c0_15 = arith.constant 0 : index
    %c1_16 = arith.constant 1 : index
    %c0_17 = arith.constant 0 : index
    %c0_18 = arith.constant 0 : index
    %11 = vector.load %arg5[%c0_14, %c0_15, %c1_16, %c0_17, %c0_18] : memref<3x3x3x128x128xbf16, #tpu.memory_space<vmem>>, vector<1x1x1x128x128xbf16>
    %12 = vector.shape_cast %11 : vector<1x1x1x128x128xbf16> to vector<128x128xbf16>
    %cst_19 = arith.constant dense<0.000000e+00> : vector<64x128xf32>
    %13 = tpu.matmul %10, %12, %cst_19 {dimension_numbers = #tpu.dot_dimension_numbers<[1], [0], [0], [1], [0, 0, 1, 1], [], []>} : vector<64x128xbf16>, vector<128x128xbf16>, vector<64x128xf32> -> vector<64x128xf32>
    %14 = arith.addf %7, %13 : vector<64x128xf32>
    %c0_20 = arith.constant 0 : index
    %c0_21 = arith.constant 0 : index
    %c0_22 = arith.constant 0 : index
    %c2 = arith.constant 2 : index
    %c0_23 = arith.constant 0 : index
    %15 = vector.load %arg2[%c0_20, %c0_21, %c0_22, %c2, %c0_23] : memref<1x1x10x10x128xbf16, #tpu.memory_space<vmem>>, vector<1x1x8x8x128xbf16>
    %16 = vector.shape_cast %15 : vector<1x1x8x8x128xbf16> to vector<8x8x128xbf16>
    %17 = vector.shape_cast %16 : vector<8x8x128xbf16> to vector<64x128xbf16>
    %c0_24 = arith.constant 0 : index
    %c0_25 = arith.constant 0 : index
    %c2_26 = arith.constant 2 : index
    %c0_27 = arith.constant 0 : index
    %c0_28 = arith.constant 0 : index
    %18 = vector.load %arg5[%c0_24, %c0_25, %c2_26, %c0_27, %c0_28] : memref<3x3x3x128x128xbf16, #tpu.memory_space<vmem>>, vector<1x1x1x128x128xbf16>
    %19 = vector.shape_cast %18 : vector<1x1x1x128x128xbf16> to vector<128x128xbf16>
    %cst_29 = arith.constant dense<0.000000e+00> : vector<64x128xf32>
    %20 = tpu.matmul %17, %19, %cst_29 {dimension_numbers = #tpu.dot_dimension_numbers<[1], [0], [0], [1], [0, 0, 1, 1], [], []>} : vector<64x128xbf16>, vector<128x128xbf16>, vector<64x128xf32> -> vector<64x128xf32>
    %21 = arith.addf %14, %20 : vector<64x128xf32>
    %c0_30 = arith.constant 0 : index
    %c0_31 = arith.constant 0 : index
    %c1_32 = arith.constant 1 : index
    %c0_33 = arith.constant 0 : index
    %c0_34 = arith.constant 0 : index
    %22 = vector.load %arg2[%c0_30, %c0_31, %c1_32, %c0_33, %c0_34] : memref<1x1x10x10x128xbf16, #tpu.memory_space<vmem>>, vector<1x1x8x8x128xbf16>
    %23 = vector.shape_cast %22 : vector<1x1x8x8x128xbf16> to vector<8x8x128xbf16>
    %24 = vector.shape_cast %23 : vector<8x8x128xbf16> to vector<64x128xbf16>
    %c0_35 = arith.constant 0 : index
    %c1_36 = arith.constant 1 : index
    %c0_37 = arith.constant 0 : index
    %c0_38 = arith.constant 0 : index
    %c0_39 = arith.constant 0 : index
    %25 = vector.load %arg5[%c0_35, %c1_36, %c0_37, %c0_38, %c0_39] : memref<3x3x3x128x128xbf16, #tpu.memory_space<vmem>>, vector<1x1x1x128x128xbf16>
    %26 = vector.shape_cast %25 : vector<1x1x1x128x128xbf16> to vector<128x128xbf16>
    %cst_40 = arith.constant dense<0.000000e+00> : vector<64x128xf32>
    %27 = tpu.matmul %24, %26, %cst_40 {dimension_numbers = #tpu.dot_dimension_numbers<[1], [0], [0], [1], [0, 0, 1, 1], [], []>} : vector<64x128xbf16>, vector<128x128xbf16>, vector<64x128xf32> -> vector<64x128xf32>
    %28 = arith.addf %21, %27 : vector<64x128xf32>
    %c0_41 = arith.constant 0 : index
    %c0_42 = arith.constant 0 : index
    %c1_43 = arith.constant 1 : index
    %c1_44 = arith.constant 1 : index
    %c0_45 = arith.constant 0 : index
    %29 = vector.load %arg2[%c0_41, %c0_42, %c1_43, %c1_44, %c0_45] : memref<1x1x10x10x128xbf16, #tpu.memory_space<vmem>>, vector<1x1x8x8x128xbf16>
    %30 = vector.shape_cast %29 : vector<1x1x8x8x128xbf16> to vector<8x8x128xbf16>
    %31 = vector.shape_cast %30 : vector<8x8x128xbf16> to vector<64x128xbf16>
    %c0_46 = arith.constant 0 : index
    %c1_47 = arith.constant 1 : index
    %c1_48 = arith.constant 1 : index
    %c0_49 = arith.constant 0 : index
    %c0_50 = arith.constant 0 : index
    %32 = vector.load %arg5[%c0_46, %c1_47, %c1_48, %c0_49, %c0_50] : memref<3x3x3x128x128xbf16, #tpu.memory_space<vmem>>, vector<1x1x1x128x128xbf16>
    %33 = vector.shape_cast %32 : vector<1x1x1x128x128xbf16> to vector<128x128xbf16>
    %cst_51 = arith.constant dense<0.000000e+00> : vector<64x128xf32>
    %34 = tpu.matmul %31, %33, %cst_51 {dimension_numbers = #tpu.dot_dimension_numbers<[1], [0], [0], [1], [0, 0, 1, 1], [], []>} : vector<64x128xbf16>, vector<128x128xbf16>, vector<64x128xf32> -> vector<64x128xf32>
    %35 = arith.addf %28, %34 : vector<64x128xf32>
    %c0_52 = arith.constant 0 : index
    %c0_53 = arith.constant 0 : index
    %c1_54 = arith.constant 1 : index
    %c2_55 = arith.constant 2 : index
    %c0_56 = arith.constant 0 : index
    %36 = vector.load %arg2[%c0_52, %c0_53, %c1_54, %c2_55, %c0_56] : memref<1x1x10x10x128xbf16, #tpu.memory_space<vmem>>, vector<1x1x8x8x128xbf16>
    %37 = vector.shape_cast %36 : vector<1x1x8x8x128xbf16> to vector<8x8x128xbf16>
    %38 = vector.shape_cast %37 : vector<8x8x128xbf16> to vector<64x128xbf16>
    %c0_57 = arith.constant 0 : index
    %c1_58 = arith.constant 1 : index
    %c2_59 = arith.constant 2 : index
    %c0_60 = arith.constant 0 : index
    %c0_61 = arith.constant 0 : index
    %39 = vector.load %arg5[%c0_57, %c1_58, %c2_59, %c0_60, %c0_61] : memref<3x3x3x128x128xbf16, #tpu.memory_space<vmem>>, vector<1x1x1x128x128xbf16>
    %40 = vector.shape_cast %39 : vector<1x1x1x128x128xbf16> to vector<128x128xbf16>
    %cst_62 = arith.constant dense<0.000000e+00> : vector<64x128xf32>
    %41 = tpu.matmul %38, %40, %cst_62 {dimension_numbers = #tpu.dot_dimension_numbers<[1], [0], [0], [1], [0, 0, 1, 1], [], []>} : vector<64x128xbf16>, vector<128x128xbf16>, vector<64x128xf32> -> vector<64x128xf32>
    %42 = arith.addf %35, %41 : vector<64x128xf32>
    %c0_63 = arith.constant 0 : index
    %c0_64 = arith.constant 0 : index
    %c2_65 = arith.constant 2 : index
    %c0_66 = arith.constant 0 : index
    %c0_67 = arith.constant 0 : index
    %43 = vector.load %arg2[%c0_63, %c0_64, %c2_65, %c0_66, %c0_67] : memref<1x1x10x10x128xbf16, #tpu.memory_space<vmem>>, vector<1x1x8x8x128xbf16>
    %44 = vector.shape_cast %43 : vector<1x1x8x8x128xbf16> to vector<8x8x128xbf16>
    %45 = vector.shape_cast %44 : vector<8x8x128xbf16> to vector<64x128xbf16>
    %c0_68 = arith.constant 0 : index
    %c2_69 = arith.constant 2 : index
    %c0_70 = arith.constant 0 : index
    %c0_71 = arith.constant 0 : index
    %c0_72 = arith.constant 0 : index
    %46 = vector.load %arg5[%c0_68, %c2_69, %c0_70, %c0_71, %c0_72] : memref<3x3x3x128x128xbf16, #tpu.memory_space<vmem>>, vector<1x1x1x128x128xbf16>
    %47 = vector.shape_cast %46 : vector<1x1x1x128x128xbf16> to vector<128x128xbf16>
    %cst_73 = arith.constant dense<0.000000e+00> : vector<64x128xf32>
    %48 = tpu.matmul %45, %47, %cst_73 {dimension_numbers = #tpu.dot_dimension_numbers<[1], [0], [0], [1], [0, 0, 1, 1], [], []>} : vector<64x128xbf16>, vector<128x128xbf16>, vector<64x128xf32> -> vector<64x128xf32>
    %49 = arith.addf %42, %48 : vector<64x128xf32>
    %c0_74 = arith.constant 0 : index
    %c0_75 = arith.constant 0 : index
    %c2_76 = arith.constant 2 : index
    %c1_77 = arith.constant 1 : index
    %c0_78 = arith.constant 0 : index
    %50 = vector.load %arg2[%c0_74, %c0_75, %c2_76, %c1_77, %c0_78] : memref<1x1x10x10x128xbf16, #tpu.memory_space<vmem>>, vector<1x1x8x8x128xbf16>
    %51 = vector.shape_cast %50 : vector<1x1x8x8x128xbf16> to vector<8x8x128xbf16>
    %52 = vector.shape_cast %51 : vector<8x8x128xbf16> to vector<64x128xbf16>
    %c0_79 = arith.constant 0 : index
    %c2_80 = arith.constant 2 : index
    %c1_81 = arith.constant 1 : index
    %c0_82 = arith.constant 0 : index
    %c0_83 = arith.constant 0 : index
    %53 = vector.load %arg5[%c0_79, %c2_80, %c1_81, %c0_82, %c0_83] : memref<3x3x3x128x128xbf16, #tpu.memory_space<vmem>>, vector<1x1x1x128x128xbf16>
    %54 = vector.shape_cast %53 : vector<1x1x1x128x128xbf16> to vector<128x128xbf16>
    %cst_84 = arith.constant dense<0.000000e+00> : vector<64x128xf32>
    %55 = tpu.matmul %52, %54, %cst_84 {dimension_numbers = #tpu.dot_dimension_numbers<[1], [0], [0], [1], [0, 0, 1, 1], [], []>} : vector<64x128xbf16>, vector<128x128xbf16>, vector<64x128xf32> -> vector<64x128xf32>
    %56 = arith.addf %49, %55 : vector<64x128xf32>
    %c0_85 = arith.constant 0 : index
    %c0_86 = arith.constant 0 : index
    %c2_87 = arith.constant 2 : index
    %c2_88 = arith.constant 2 : index
    %c0_89 = arith.constant 0 : index
    %57 = vector.load %arg2[%c0_85, %c0_86, %c2_87, %c2_88, %c0_89] : memref<1x1x10x10x128xbf16, #tpu.memory_space<vmem>>, vector<1x1x8x8x128xbf16>
    %58 = vector.shape_cast %57 : vector<1x1x8x8x128xbf16> to vector<8x8x128xbf16>
    %59 = vector.shape_cast %58 : vector<8x8x128xbf16> to vector<64x128xbf16>
    %c0_90 = arith.constant 0 : index
    %c2_91 = arith.constant 2 : index
    %c2_92 = arith.constant 2 : index
    %c0_93 = arith.constant 0 : index
    %c0_94 = arith.constant 0 : index
    %60 = vector.load %arg5[%c0_90, %c2_91, %c2_92, %c0_93, %c0_94] : memref<3x3x3x128x128xbf16, #tpu.memory_space<vmem>>, vector<1x1x1x128x128xbf16>
    %61 = vector.shape_cast %60 : vector<1x1x1x128x128xbf16> to vector<128x128xbf16>
    %cst_95 = arith.constant dense<0.000000e+00> : vector<64x128xf32>
    %62 = tpu.matmul %59, %61, %cst_95 {dimension_numbers = #tpu.dot_dimension_numbers<[1], [0], [0], [1], [0, 0, 1, 1], [], []>} : vector<64x128xbf16>, vector<128x128xbf16>, vector<64x128xf32> -> vector<64x128xf32>
    %63 = arith.addf %56, %62 : vector<64x128xf32>
    %c0_96 = arith.constant 0 : index
    %c0_97 = arith.constant 0 : index
    %c0_98 = arith.constant 0 : index
    %c0_99 = arith.constant 0 : index
    %c0_100 = arith.constant 0 : index
    %64 = vector.load %arg3[%c0_96, %c0_97, %c0_98, %c0_99, %c0_100] : memref<1x1x10x10x128xbf16, #tpu.memory_space<vmem>>, vector<1x1x8x8x128xbf16>
    %65 = vector.shape_cast %64 : vector<1x1x8x8x128xbf16> to vector<8x8x128xbf16>
    %66 = vector.shape_cast %65 : vector<8x8x128xbf16> to vector<64x128xbf16>
    %c1_101 = arith.constant 1 : index
    %c0_102 = arith.constant 0 : index
    %c0_103 = arith.constant 0 : index
    %c0_104 = arith.constant 0 : index
    %c0_105 = arith.constant 0 : index
    %67 = vector.load %arg5[%c1_101, %c0_102, %c0_103, %c0_104, %c0_105] : memref<3x3x3x128x128xbf16, #tpu.memory_space<vmem>>, vector<1x1x1x128x128xbf16>
    %68 = vector.shape_cast %67 : vector<1x1x1x128x128xbf16> to vector<128x128xbf16>
    %cst_106 = arith.constant dense<0.000000e+00> : vector<64x128xf32>
    %69 = tpu.matmul %66, %68, %cst_106 {dimension_numbers = #tpu.dot_dimension_numbers<[1], [0], [0], [1], [0, 0, 1, 1], [], []>} : vector<64x128xbf16>, vector<128x128xbf16>, vector<64x128xf32> -> vector<64x128xf32>
    %70 = arith.addf %63, %69 : vector<64x128xf32>
    %c0_107 = arith.constant 0 : index
    %c0_108 = arith.constant 0 : index
    %c0_109 = arith.constant 0 : index
    %c1_110 = arith.constant 1 : index
    %c0_111 = arith.constant 0 : index
    %71 = vector.load %arg3[%c0_107, %c0_108, %c0_109, %c1_110, %c0_111] : memref<1x1x10x10x128xbf16, #tpu.memory_space<vmem>>, vector<1x1x8x8x128xbf16>
    %72 = vector.shape_cast %71 : vector<1x1x8x8x128xbf16> to vector<8x8x128xbf16>
    %73 = vector.shape_cast %72 : vector<8x8x128xbf16> to vector<64x128xbf16>
    %c1_112 = arith.constant 1 : index
    %c0_113 = arith.constant 0 : index
    %c1_114 = arith.constant 1 : index
    %c0_115 = arith.constant 0 : index
    %c0_116 = arith.constant 0 : index
    %74 = vector.load %arg5[%c1_112, %c0_113, %c1_114, %c0_115, %c0_116] : memref<3x3x3x128x128xbf16, #tpu.memory_space<vmem>>, vector<1x1x1x128x128xbf16>
    %75 = vector.shape_cast %74 : vector<1x1x1x128x128xbf16> to vector<128x128xbf16>
    %cst_117 = arith.constant dense<0.000000e+00> : vector<64x128xf32>
    %76 = tpu.matmul %73, %75, %cst_117 {dimension_numbers = #tpu.dot_dimension_numbers<[1], [0], [0], [1], [0, 0, 1, 1], [], []>} : vector<64x128xbf16>, vector<128x128xbf16>, vector<64x128xf32> -> vector<64x128xf32>
    %77 = arith.addf %70, %76 : vector<64x128xf32>
    %c0_118 = arith.constant 0 : index
    %c0_119 = arith.constant 0 : index
    %c0_120 = arith.constant 0 : index
    %c2_121 = arith.constant 2 : index
    %c0_122 = arith.constant 0 : index
    %78 = vector.load %arg3[%c0_118, %c0_119, %c0_120, %c2_121, %c0_122] : memref<1x1x10x10x128xbf16, #tpu.memory_space<vmem>>, vector<1x1x8x8x128xbf16>
    %79 = vector.shape_cast %78 : vector<1x1x8x8x128xbf16> to vector<8x8x128xbf16>
    %80 = vector.shape_cast %79 : vector<8x8x128xbf16> to vector<64x128xbf16>
    %c1_123 = arith.constant 1 : index
    %c0_124 = arith.constant 0 : index
    %c2_125 = arith.constant 2 : index
    %c0_126 = arith.constant 0 : index
    %c0_127 = arith.constant 0 : index
    %81 = vector.load %arg5[%c1_123, %c0_124, %c2_125, %c0_126, %c0_127] : memref<3x3x3x128x128xbf16, #tpu.memory_space<vmem>>, vector<1x1x1x128x128xbf16>
    %82 = vector.shape_cast %81 : vector<1x1x1x128x128xbf16> to vector<128x128xbf16>
    %cst_128 = arith.constant dense<0.000000e+00> : vector<64x128xf32>
    %83 = tpu.matmul %80, %82, %cst_128 {dimension_numbers = #tpu.dot_dimension_numbers<[1], [0], [0], [1], [0, 0, 1, 1], [], []>} : vector<64x128xbf16>, vector<128x128xbf16>, vector<64x128xf32> -> vector<64x128xf32>
    %84 = arith.addf %77, %83 : vector<64x128xf32>
    %c0_129 = arith.constant 0 : index
    %c0_130 = arith.constant 0 : index
    %c1_131 = arith.constant 1 : index
    %c0_132 = arith.constant 0 : index
    %c0_133 = arith.constant 0 : index
    %85 = vector.load %arg3[%c0_129, %c0_130, %c1_131, %c0_132, %c0_133] : memref<1x1x10x10x128xbf16, #tpu.memory_space<vmem>>, vector<1x1x8x8x128xbf16>
    %86 = vector.shape_cast %85 : vector<1x1x8x8x128xbf16> to vector<8x8x128xbf16>
    %87 = vector.shape_cast %86 : vector<8x8x128xbf16> to vector<64x128xbf16>
    %c1_134 = arith.constant 1 : index
    %c1_135 = arith.constant 1 : index
    %c0_136 = arith.constant 0 : index
    %c0_137 = arith.constant 0 : index
    %c0_138 = arith.constant 0 : index
    %88 = vector.load %arg5[%c1_134, %c1_135, %c0_136, %c0_137, %c0_138] : memref<3x3x3x128x128xbf16, #tpu.memory_space<vmem>>, vector<1x1x1x128x128xbf16>
    %89 = vector.shape_cast %88 : vector<1x1x1x128x128xbf16> to vector<128x128xbf16>
    %cst_139 = arith.constant dense<0.000000e+00> : vector<64x128xf32>
    %90 = tpu.matmul %87, %89, %cst_139 {dimension_numbers = #tpu.dot_dimension_numbers<[1], [0], [0], [1], [0, 0, 1, 1], [], []>} : vector<64x128xbf16>, vector<128x128xbf16>, vector<64x128xf32> -> vector<64x128xf32>
    %91 = arith.addf %84, %90 : vector<64x128xf32>
    %c0_140 = arith.constant 0 : index
    %c0_141 = arith.constant 0 : index
    %c1_142 = arith.constant 1 : index
    %c1_143 = arith.constant 1 : index
    %c0_144 = arith.constant 0 : index
    %92 = vector.load %arg3[%c0_140, %c0_141, %c1_142, %c1_143, %c0_144] : memref<1x1x10x10x128xbf16, #tpu.memory_space<vmem>>, vector<1x1x8x8x128xbf16>
    %93 = vector.shape_cast %92 : vector<1x1x8x8x128xbf16> to vector<8x8x128xbf16>
    %94 = vector.shape_cast %93 : vector<8x8x128xbf16> to vector<64x128xbf16>
    %c1_145 = arith.constant 1 : index
    %c1_146 = arith.constant 1 : index
    %c1_147 = arith.constant 1 : index
    %c0_148 = arith.constant 0 : index
    %c0_149 = arith.constant 0 : index
    %95 = vector.load %arg5[%c1_145, %c1_146, %c1_147, %c0_148, %c0_149] : memref<3x3x3x128x128xbf16, #tpu.memory_space<vmem>>, vector<1x1x1x128x128xbf16>
    %96 = vector.shape_cast %95 : vector<1x1x1x128x128xbf16> to vector<128x128xbf16>
    %cst_150 = arith.constant dense<0.000000e+00> : vector<64x128xf32>
    %97 = tpu.matmul %94, %96, %cst_150 {dimension_numbers = #tpu.dot_dimension_numbers<[1], [0], [0], [1], [0, 0, 1, 1], [], []>} : vector<64x128xbf16>, vector<128x128xbf16>, vector<64x128xf32> -> vector<64x128xf32>
    %98 = arith.addf %91, %97 : vector<64x128xf32>
    %c0_151 = arith.constant 0 : index
    %c0_152 = arith.constant 0 : index
    %c1_153 = arith.constant 1 : index
    %c2_154 = arith.constant 2 : index
    %c0_155 = arith.constant 0 : index
    %99 = vector.load %arg3[%c0_151, %c0_152, %c1_153, %c2_154, %c0_155] : memref<1x1x10x10x128xbf16, #tpu.memory_space<vmem>>, vector<1x1x8x8x128xbf16>
    %100 = vector.shape_cast %99 : vector<1x1x8x8x128xbf16> to vector<8x8x128xbf16>
    %101 = vector.shape_cast %100 : vector<8x8x128xbf16> to vector<64x128xbf16>
    %c1_156 = arith.constant 1 : index
    %c1_157 = arith.constant 1 : index
    %c2_158 = arith.constant 2 : index
    %c0_159 = arith.constant 0 : index
    %c0_160 = arith.constant 0 : index
    %102 = vector.load %arg5[%c1_156, %c1_157, %c2_158, %c0_159, %c0_160] : memref<3x3x3x128x128xbf16, #tpu.memory_space<vmem>>, vector<1x1x1x128x128xbf16>
    %103 = vector.shape_cast %102 : vector<1x1x1x128x128xbf16> to vector<128x128xbf16>
    %cst_161 = arith.constant dense<0.000000e+00> : vector<64x128xf32>
    %104 = tpu.matmul %101, %103, %cst_161 {dimension_numbers = #tpu.dot_dimension_numbers<[1], [0], [0], [1], [0, 0, 1, 1], [], []>} : vector<64x128xbf16>, vector<128x128xbf16>, vector<64x128xf32> -> vector<64x128xf32>
    %105 = arith.addf %98, %104 : vector<64x128xf32>
    %c0_162 = arith.constant 0 : index
    %c0_163 = arith.constant 0 : index
    %c2_164 = arith.constant 2 : index
    %c0_165 = arith.constant 0 : index
    %c0_166 = arith.constant 0 : index
    %106 = vector.load %arg3[%c0_162, %c0_163, %c2_164, %c0_165, %c0_166] : memref<1x1x10x10x128xbf16, #tpu.memory_space<vmem>>, vector<1x1x8x8x128xbf16>
    %107 = vector.shape_cast %106 : vector<1x1x8x8x128xbf16> to vector<8x8x128xbf16>
    %108 = vector.shape_cast %107 : vector<8x8x128xbf16> to vector<64x128xbf16>
    %c1_167 = arith.constant 1 : index
    %c2_168 = arith.constant 2 : index
    %c0_169 = arith.constant 0 : index
    %c0_170 = arith.constant 0 : index
    %c0_171 = arith.constant 0 : index
    %109 = vector.load %arg5[%c1_167, %c2_168, %c0_169, %c0_170, %c0_171] : memref<3x3x3x128x128xbf16, #tpu.memory_space<vmem>>, vector<1x1x1x128x128xbf16>
    %110 = vector.shape_cast %109 : vector<1x1x1x128x128xbf16> to vector<128x128xbf16>
    %cst_172 = arith.constant dense<0.000000e+00> : vector<64x128xf32>
    %111 = tpu.matmul %108, %110, %cst_172 {dimension_numbers = #tpu.dot_dimension_numbers<[1], [0], [0], [1], [0, 0, 1, 1], [], []>} : vector<64x128xbf16>, vector<128x128xbf16>, vector<64x128xf32> -> vector<64x128xf32>
    %112 = arith.addf %105, %111 : vector<64x128xf32>
    %c0_173 = arith.constant 0 : index
    %c0_174 = arith.constant 0 : index
    %c2_175 = arith.constant 2 : index
    %c1_176 = arith.constant 1 : index
    %c0_177 = arith.constant 0 : index
    %113 = vector.load %arg3[%c0_173, %c0_174, %c2_175, %c1_176, %c0_177] : memref<1x1x10x10x128xbf16, #tpu.memory_space<vmem>>, vector<1x1x8x8x128xbf16>
    %114 = vector.shape_cast %113 : vector<1x1x8x8x128xbf16> to vector<8x8x128xbf16>
    %115 = vector.shape_cast %114 : vector<8x8x128xbf16> to vector<64x128xbf16>
    %c1_178 = arith.constant 1 : index
    %c2_179 = arith.constant 2 : index
    %c1_180 = arith.constant 1 : index
    %c0_181 = arith.constant 0 : index
    %c0_182 = arith.constant 0 : index
    %116 = vector.load %arg5[%c1_178, %c2_179, %c1_180, %c0_181, %c0_182] : memref<3x3x3x128x128xbf16, #tpu.memory_space<vmem>>, vector<1x1x1x128x128xbf16>
    %117 = vector.shape_cast %116 : vector<1x1x1x128x128xbf16> to vector<128x128xbf16>
    %cst_183 = arith.constant dense<0.000000e+00> : vector<64x128xf32>
    %118 = tpu.matmul %115, %117, %cst_183 {dimension_numbers = #tpu.dot_dimension_numbers<[1], [0], [0], [1], [0, 0, 1, 1], [], []>} : vector<64x128xbf16>, vector<128x128xbf16>, vector<64x128xf32> -> vector<64x128xf32>
    %119 = arith.addf %112, %118 : vector<64x128xf32>
    %c0_184 = arith.constant 0 : index
    %c0_185 = arith.constant 0 : index
    %c2_186 = arith.constant 2 : index
    %c2_187 = arith.constant 2 : index
    %c0_188 = arith.constant 0 : index
    %120 = vector.load %arg3[%c0_184, %c0_185, %c2_186, %c2_187, %c0_188] : memref<1x1x10x10x128xbf16, #tpu.memory_space<vmem>>, vector<1x1x8x8x128xbf16>
    %121 = vector.shape_cast %120 : vector<1x1x8x8x128xbf16> to vector<8x8x128xbf16>
    %122 = vector.shape_cast %121 : vector<8x8x128xbf16> to vector<64x128xbf16>
    %c1_189 = arith.constant 1 : index
    %c2_190 = arith.constant 2 : index
    %c2_191 = arith.constant 2 : index
    %c0_192 = arith.constant 0 : index
    %c0_193 = arith.constant 0 : index
    %123 = vector.load %arg5[%c1_189, %c2_190, %c2_191, %c0_192, %c0_193] : memref<3x3x3x128x128xbf16, #tpu.memory_space<vmem>>, vector<1x1x1x128x128xbf16>
    %124 = vector.shape_cast %123 : vector<1x1x1x128x128xbf16> to vector<128x128xbf16>
    %cst_194 = arith.constant dense<0.000000e+00> : vector<64x128xf32>
    %125 = tpu.matmul %122, %124, %cst_194 {dimension_numbers = #tpu.dot_dimension_numbers<[1], [0], [0], [1], [0, 0, 1, 1], [], []>} : vector<64x128xbf16>, vector<128x128xbf16>, vector<64x128xf32> -> vector<64x128xf32>
    %126 = arith.addf %119, %125 : vector<64x128xf32>
    %c0_195 = arith.constant 0 : index
    %c0_196 = arith.constant 0 : index
    %c0_197 = arith.constant 0 : index
    %c0_198 = arith.constant 0 : index
    %c0_199 = arith.constant 0 : index
    %127 = vector.load %arg4[%c0_195, %c0_196, %c0_197, %c0_198, %c0_199] : memref<1x1x10x10x128xbf16, #tpu.memory_space<vmem>>, vector<1x1x8x8x128xbf16>
    %128 = vector.shape_cast %127 : vector<1x1x8x8x128xbf16> to vector<8x8x128xbf16>
    %129 = vector.shape_cast %128 : vector<8x8x128xbf16> to vector<64x128xbf16>
    %c2_200 = arith.constant 2 : index
    %c0_201 = arith.constant 0 : index
    %c0_202 = arith.constant 0 : index
    %c0_203 = arith.constant 0 : index
    %c0_204 = arith.constant 0 : index
    %130 = vector.load %arg5[%c2_200, %c0_201, %c0_202, %c0_203, %c0_204] : memref<3x3x3x128x128xbf16, #tpu.memory_space<vmem>>, vector<1x1x1x128x128xbf16>
    %131 = vector.shape_cast %130 : vector<1x1x1x128x128xbf16> to vector<128x128xbf16>
    %cst_205 = arith.constant dense<0.000000e+00> : vector<64x128xf32>
    %132 = tpu.matmul %129, %131, %cst_205 {dimension_numbers = #tpu.dot_dimension_numbers<[1], [0], [0], [1], [0, 0, 1, 1], [], []>} : vector<64x128xbf16>, vector<128x128xbf16>, vector<64x128xf32> -> vector<64x128xf32>
    %133 = arith.addf %126, %132 : vector<64x128xf32>
    %c0_206 = arith.constant 0 : index
    %c0_207 = arith.constant 0 : index
    %c0_208 = arith.constant 0 : index
    %c1_209 = arith.constant 1 : index
    %c0_210 = arith.constant 0 : index
    %134 = vector.load %arg4[%c0_206, %c0_207, %c0_208, %c1_209, %c0_210] : memref<1x1x10x10x128xbf16, #tpu.memory_space<vmem>>, vector<1x1x8x8x128xbf16>
    %135 = vector.shape_cast %134 : vector<1x1x8x8x128xbf16> to vector<8x8x128xbf16>
    %136 = vector.shape_cast %135 : vector<8x8x128xbf16> to vector<64x128xbf16>
    %c2_211 = arith.constant 2 : index
    %c0_212 = arith.constant 0 : index
    %c1_213 = arith.constant 1 : index
    %c0_214 = arith.constant 0 : index
    %c0_215 = arith.constant 0 : index
    %137 = vector.load %arg5[%c2_211, %c0_212, %c1_213, %c0_214, %c0_215] : memref<3x3x3x128x128xbf16, #tpu.memory_space<vmem>>, vector<1x1x1x128x128xbf16>
    %138 = vector.shape_cast %137 : vector<1x1x1x128x128xbf16> to vector<128x128xbf16>
    %cst_216 = arith.constant dense<0.000000e+00> : vector<64x128xf32>
    %139 = tpu.matmul %136, %138, %cst_216 {dimension_numbers = #tpu.dot_dimension_numbers<[1], [0], [0], [1], [0, 0, 1, 1], [], []>} : vector<64x128xbf16>, vector<128x128xbf16>, vector<64x128xf32> -> vector<64x128xf32>
    %140 = arith.addf %133, %139 : vector<64x128xf32>
    %c0_217 = arith.constant 0 : index
    %c0_218 = arith.constant 0 : index
    %c0_219 = arith.constant 0 : index
    %c2_220 = arith.constant 2 : index
    %c0_221 = arith.constant 0 : index
    %141 = vector.load %arg4[%c0_217, %c0_218, %c0_219, %c2_220, %c0_221] : memref<1x1x10x10x128xbf16, #tpu.memory_space<vmem>>, vector<1x1x8x8x128xbf16>
    %142 = vector.shape_cast %141 : vector<1x1x8x8x128xbf16> to vector<8x8x128xbf16>
    %143 = vector.shape_cast %142 : vector<8x8x128xbf16> to vector<64x128xbf16>
    %c2_222 = arith.constant 2 : index
    %c0_223 = arith.constant 0 : index
    %c2_224 = arith.constant 2 : index
    %c0_225 = arith.constant 0 : index
    %c0_226 = arith.constant 0 : index
    %144 = vector.load %arg5[%c2_222, %c0_223, %c2_224, %c0_225, %c0_226] : memref<3x3x3x128x128xbf16, #tpu.memory_space<vmem>>, vector<1x1x1x128x128xbf16>
    %145 = vector.shape_cast %144 : vector<1x1x1x128x128xbf16> to vector<128x128xbf16>
    %cst_227 = arith.constant dense<0.000000e+00> : vector<64x128xf32>
    %146 = tpu.matmul %143, %145, %cst_227 {dimension_numbers = #tpu.dot_dimension_numbers<[1], [0], [0], [1], [0, 0, 1, 1], [], []>} : vector<64x128xbf16>, vector<128x128xbf16>, vector<64x128xf32> -> vector<64x128xf32>
    %147 = arith.addf %140, %146 : vector<64x128xf32>
    %c0_228 = arith.constant 0 : index
    %c0_229 = arith.constant 0 : index
    %c1_230 = arith.constant 1 : index
    %c0_231 = arith.constant 0 : index
    %c0_232 = arith.constant 0 : index
    %148 = vector.load %arg4[%c0_228, %c0_229, %c1_230, %c0_231, %c0_232] : memref<1x1x10x10x128xbf16, #tpu.memory_space<vmem>>, vector<1x1x8x8x128xbf16>
    %149 = vector.shape_cast %148 : vector<1x1x8x8x128xbf16> to vector<8x8x128xbf16>
    %150 = vector.shape_cast %149 : vector<8x8x128xbf16> to vector<64x128xbf16>
    %c2_233 = arith.constant 2 : index
    %c1_234 = arith.constant 1 : index
    %c0_235 = arith.constant 0 : index
    %c0_236 = arith.constant 0 : index
    %c0_237 = arith.constant 0 : index
    %151 = vector.load %arg5[%c2_233, %c1_234, %c0_235, %c0_236, %c0_237] : memref<3x3x3x128x128xbf16, #tpu.memory_space<vmem>>, vector<1x1x1x128x128xbf16>
    %152 = vector.shape_cast %151 : vector<1x1x1x128x128xbf16> to vector<128x128xbf16>
    %cst_238 = arith.constant dense<0.000000e+00> : vector<64x128xf32>
    %153 = tpu.matmul %150, %152, %cst_238 {dimension_numbers = #tpu.dot_dimension_numbers<[1], [0], [0], [1], [0, 0, 1, 1], [], []>} : vector<64x128xbf16>, vector<128x128xbf16>, vector<64x128xf32> -> vector<64x128xf32>
    %154 = arith.addf %147, %153 : vector<64x128xf32>
    %c0_239 = arith.constant 0 : index
    %c0_240 = arith.constant 0 : index
    %c1_241 = arith.constant 1 : index
    %c1_242 = arith.constant 1 : index
    %c0_243 = arith.constant 0 : index
    %155 = vector.load %arg4[%c0_239, %c0_240, %c1_241, %c1_242, %c0_243] : memref<1x1x10x10x128xbf16, #tpu.memory_space<vmem>>, vector<1x1x8x8x128xbf16>
    %156 = vector.shape_cast %155 : vector<1x1x8x8x128xbf16> to vector<8x8x128xbf16>
    %157 = vector.shape_cast %156 : vector<8x8x128xbf16> to vector<64x128xbf16>
    %c2_244 = arith.constant 2 : index
    %c1_245 = arith.constant 1 : index
    %c1_246 = arith.constant 1 : index
    %c0_247 = arith.constant 0 : index
    %c0_248 = arith.constant 0 : index
    %158 = vector.load %arg5[%c2_244, %c1_245, %c1_246, %c0_247, %c0_248] : memref<3x3x3x128x128xbf16, #tpu.memory_space<vmem>>, vector<1x1x1x128x128xbf16>
    %159 = vector.shape_cast %158 : vector<1x1x1x128x128xbf16> to vector<128x128xbf16>
    %cst_249 = arith.constant dense<0.000000e+00> : vector<64x128xf32>
    %160 = tpu.matmul %157, %159, %cst_249 {dimension_numbers = #tpu.dot_dimension_numbers<[1], [0], [0], [1], [0, 0, 1, 1], [], []>} : vector<64x128xbf16>, vector<128x128xbf16>, vector<64x128xf32> -> vector<64x128xf32>
    %161 = arith.addf %154, %160 : vector<64x128xf32>
    %c0_250 = arith.constant 0 : index
    %c0_251 = arith.constant 0 : index
    %c1_252 = arith.constant 1 : index
    %c2_253 = arith.constant 2 : index
    %c0_254 = arith.constant 0 : index
    %162 = vector.load %arg4[%c0_250, %c0_251, %c1_252, %c2_253, %c0_254] : memref<1x1x10x10x128xbf16, #tpu.memory_space<vmem>>, vector<1x1x8x8x128xbf16>
    %163 = vector.shape_cast %162 : vector<1x1x8x8x128xbf16> to vector<8x8x128xbf16>
    %164 = vector.shape_cast %163 : vector<8x8x128xbf16> to vector<64x128xbf16>
    %c2_255 = arith.constant 2 : index
    %c1_256 = arith.constant 1 : index
    %c2_257 = arith.constant 2 : index
    %c0_258 = arith.constant 0 : index
    %c0_259 = arith.constant 0 : index
    %165 = vector.load %arg5[%c2_255, %c1_256, %c2_257, %c0_258, %c0_259] : memref<3x3x3x128x128xbf16, #tpu.memory_space<vmem>>, vector<1x1x1x128x128xbf16>
    %166 = vector.shape_cast %165 : vector<1x1x1x128x128xbf16> to vector<128x128xbf16>
    %cst_260 = arith.constant dense<0.000000e+00> : vector<64x128xf32>
    %167 = tpu.matmul %164, %166, %cst_260 {dimension_numbers = #tpu.dot_dimension_numbers<[1], [0], [0], [1], [0, 0, 1, 1], [], []>} : vector<64x128xbf16>, vector<128x128xbf16>, vector<64x128xf32> -> vector<64x128xf32>
    %168 = arith.addf %161, %167 : vector<64x128xf32>
    %c0_261 = arith.constant 0 : index
    %c0_262 = arith.constant 0 : index
    %c2_263 = arith.constant 2 : index
    %c0_264 = arith.constant 0 : index
    %c0_265 = arith.constant 0 : index
    %169 = vector.load %arg4[%c0_261, %c0_262, %c2_263, %c0_264, %c0_265] : memref<1x1x10x10x128xbf16, #tpu.memory_space<vmem>>, vector<1x1x8x8x128xbf16>
    %170 = vector.shape_cast %169 : vector<1x1x8x8x128xbf16> to vector<8x8x128xbf16>
    %171 = vector.shape_cast %170 : vector<8x8x128xbf16> to vector<64x128xbf16>
    %c2_266 = arith.constant 2 : index
    %c2_267 = arith.constant 2 : index
    %c0_268 = arith.constant 0 : index
    %c0_269 = arith.constant 0 : index
    %c0_270 = arith.constant 0 : index
    %172 = vector.load %arg5[%c2_266, %c2_267, %c0_268, %c0_269, %c0_270] : memref<3x3x3x128x128xbf16, #tpu.memory_space<vmem>>, vector<1x1x1x128x128xbf16>
    %173 = vector.shape_cast %172 : vector<1x1x1x128x128xbf16> to vector<128x128xbf16>
    %cst_271 = arith.constant dense<0.000000e+00> : vector<64x128xf32>
    %174 = tpu.matmul %171, %173, %cst_271 {dimension_numbers = #tpu.dot_dimension_numbers<[1], [0], [0], [1], [0, 0, 1, 1], [], []>} : vector<64x128xbf16>, vector<128x128xbf16>, vector<64x128xf32> -> vector<64x128xf32>
    %175 = arith.addf %168, %174 : vector<64x128xf32>
    %c0_272 = arith.constant 0 : index
    %c0_273 = arith.constant 0 : index
    %c2_274 = arith.constant 2 : index
    %c1_275 = arith.constant 1 : index
    %c0_276 = arith.constant 0 : index
    %176 = vector.load %arg4[%c0_272, %c0_273, %c2_274, %c1_275, %c0_276] : memref<1x1x10x10x128xbf16, #tpu.memory_space<vmem>>, vector<1x1x8x8x128xbf16>
    %177 = vector.shape_cast %176 : vector<1x1x8x8x128xbf16> to vector<8x8x128xbf16>
    %178 = vector.shape_cast %177 : vector<8x8x128xbf16> to vector<64x128xbf16>
    %c2_277 = arith.constant 2 : index
    %c2_278 = arith.constant 2 : index
    %c1_279 = arith.constant 1 : index
    %c0_280 = arith.constant 0 : index
    %c0_281 = arith.constant 0 : index
    %179 = vector.load %arg5[%c2_277, %c2_278, %c1_279, %c0_280, %c0_281] : memref<3x3x3x128x128xbf16, #tpu.memory_space<vmem>>, vector<1x1x1x128x128xbf16>
    %180 = vector.shape_cast %179 : vector<1x1x1x128x128xbf16> to vector<128x128xbf16>
    %cst_282 = arith.constant dense<0.000000e+00> : vector<64x128xf32>
    %181 = tpu.matmul %178, %180, %cst_282 {dimension_numbers = #tpu.dot_dimension_numbers<[1], [0], [0], [1], [0, 0, 1, 1], [], []>} : vector<64x128xbf16>, vector<128x128xbf16>, vector<64x128xf32> -> vector<64x128xf32>
    %182 = arith.addf %175, %181 : vector<64x128xf32>
    %c0_283 = arith.constant 0 : index
    %c0_284 = arith.constant 0 : index
    %c2_285 = arith.constant 2 : index
    %c2_286 = arith.constant 2 : index
    %c0_287 = arith.constant 0 : index
    %183 = vector.load %arg4[%c0_283, %c0_284, %c2_285, %c2_286, %c0_287] : memref<1x1x10x10x128xbf16, #tpu.memory_space<vmem>>, vector<1x1x8x8x128xbf16>
    %184 = vector.shape_cast %183 : vector<1x1x8x8x128xbf16> to vector<8x8x128xbf16>
    %185 = vector.shape_cast %184 : vector<8x8x128xbf16> to vector<64x128xbf16>
    %c2_288 = arith.constant 2 : index
    %c2_289 = arith.constant 2 : index
    %c2_290 = arith.constant 2 : index
    %c0_291 = arith.constant 0 : index
    %c0_292 = arith.constant 0 : index
    %186 = vector.load %arg5[%c2_288, %c2_289, %c2_290, %c0_291, %c0_292] : memref<3x3x3x128x128xbf16, #tpu.memory_space<vmem>>, vector<1x1x1x128x128xbf16>
    %187 = vector.shape_cast %186 : vector<1x1x1x128x128xbf16> to vector<128x128xbf16>
    %cst_293 = arith.constant dense<0.000000e+00> : vector<64x128xf32>
    %188 = tpu.matmul %185, %187, %cst_293 {dimension_numbers = #tpu.dot_dimension_numbers<[1], [0], [0], [1], [0, 0, 1, 1], [], []>} : vector<64x128xbf16>, vector<128x128xbf16>, vector<64x128xf32> -> vector<64x128xf32>
    %189 = arith.addf %182, %188 : vector<64x128xf32>
    %c0_294 = arith.constant 0 : index
    %c0_295 = arith.constant 0 : index
    %190 = vector.load %arg6[%c0_294, %c0_295] : memref<1x128xf32, #tpu.memory_space<vmem>>, vector<1x128xf32>
    %191 = vector.broadcast %190 : vector<1x128xf32> to vector<64x128xf32>
    %192 = arith.addf %189, %191 : vector<64x128xf32>
    %c0_296 = arith.constant 0 : index
    %c0_297 = arith.constant 0 : index
    %c0_298 = arith.constant 0 : index
    %c0_299 = arith.constant 0 : index
    %193 = vector.load %arg7[%c0_296, %c0_297, %c0_298, %c0_299] : memref<1x1x64x128xf32, #tpu.memory_space<vmem>>, vector<1x1x64x128xf32>
    %194 = vector.shape_cast %193 : vector<1x1x64x128xf32> to vector<64x128xf32>
    %195 = vector.shape_cast %192 : vector<64x128xf32> to vector<1x1x64x128xf32>
    tpu.vector_store %arg7[%c0_296, %c0_297, %c0_298, %c0_299], %195 {strides = array<i32>} : memref<1x1x64x128xf32, #tpu.memory_space<vmem>>, vector<1x1x64x128xf32>,
    %c0_i32 = arith.constant 0 : i32
    %196 = arith.cmpi eq, %arg0, %c0_i32 : i32
    %c0_i32_300 = arith.constant 0 : i32
    %197 = arith.cmpi eq, %arg1, %c0_i32_300 : i32
    %198 = arith.andi %196, %197 : i1
    %199 = arith.extui %198 : i1 to i32
    %c0_i32_301 = arith.constant 0 : i32
    %200 = arith.cmpi ne, %199, %c0_i32_301 : i32
    scf.if %200 {
      %cst_312 = arith.constant 0.000000e+00 : f32
      %212 = vector.broadcast %cst_312 : f32 to vector<1x128xf32>
      %c0_313 = arith.constant 0 : index
      %c0_314 = arith.constant 0 : index
      %213 = vector.load %arg8[%c0_313, %c0_314] : memref<1x128xf32, #tpu.memory_space<vmem>>, vector<1x128xf32>
      tpu.vector_store %arg8[%c0_313, %c0_314], %212 {strides = array<i32>} : memref<1x128xf32, #tpu.memory_space<vmem>>, vector<1x128xf32>,
      %cst_315 = arith.constant 0.000000e+00 : f32
      %214 = vector.broadcast %cst_315 : f32 to vector<1x128xf32>
      %c0_316 = arith.constant 0 : index
      %c0_317 = arith.constant 0 : index
      %215 = vector.load %arg9[%c0_316, %c0_317] : memref<1x128xf32, #tpu.memory_space<vmem>>, vector<1x128xf32>
      tpu.vector_store %arg9[%c0_316, %c0_317], %214 {strides = array<i32>} : memref<1x128xf32, #tpu.memory_space<vmem>>, vector<1x128xf32>,
    } else {
    }
    %c0_302 = arith.constant 0 : index
    %c0_303 = arith.constant 0 : index
    %201 = vector.load %arg8[%c0_302, %c0_303] : memref<1x128xf32, #tpu.memory_space<vmem>>, vector<1x128xf32>
    %cst_304 = arith.constant dense<0.000000e+00> : vector<128xf32>
    %202 = vector.multi_reduction <add>, %192, %cst_304 [0] : vector<64x128xf32> to vector<128xf32>
    %203 = vector.shape_cast %202 : vector<128xf32> to vector<1x128xf32>
    %204 = arith.addf %201, %203 : vector<1x128xf32>
    %c0_305 = arith.constant 0 : index
    %c0_306 = arith.constant 0 : index
    %205 = vector.load %arg8[%c0_305, %c0_306] : memref<1x128xf32, #tpu.memory_space<vmem>>, vector<1x128xf32>
    tpu.vector_store %arg8[%c0_305, %c0_306], %204 {strides = array<i32>} : memref<1x128xf32, #tpu.memory_space<vmem>>, vector<1x128xf32>,
    %c0_307 = arith.constant 0 : index
    %c0_308 = arith.constant 0 : index
    %206 = vector.load %arg9[%c0_307, %c0_308] : memref<1x128xf32, #tpu.memory_space<vmem>>, vector<1x128xf32>
    %207 = arith.mulf %192, %192 : vector<64x128xf32>
    %cst_309 = arith.constant dense<0.000000e+00> : vector<128xf32>
    %208 = vector.multi_reduction <add>, %207, %cst_309 [0] : vector<64x128xf32> to vector<128xf32>
    %209 = vector.shape_cast %208 : vector<128xf32> to vector<1x128xf32>
    %210 = arith.addf %206, %209 : vector<1x128xf32>
    %c0_310 = arith.constant 0 : index
    %c0_311 = arith.constant 0 : index
    %211 = vector.load %arg9[%c0_310, %c0_311] : memref<1x128xf32, #tpu.memory_space<vmem>>, vector<1x128xf32>
    tpu.vector_store %arg9[%c0_310, %c0_311], %210 {strides = array<i32>} : memref<1x128xf32, #tpu.memory_space<vmem>>, vector<1x128xf32>,
    return
  }
  func.func @transform_0(%arg0: i32, %arg1: i32) -> (i32, i32, i32, i32, i32) {
    %c0_i32 = arith.constant 0 : i32
    %0 = arith.addi %arg1, %c0_i32 : i32
    %c0_i32_0 = arith.constant 0 : i32
    %c0_i32_1 = arith.constant 0 : i32
    %c0_i32_2 = arith.constant 0 : i32
    %c0_i32_3 = arith.constant 0 : i32
    return %arg0, %0, %c0_i32_0, %c0_i32_1, %c0_i32_2 : i32, i32, i32, i32, i32
  }
  func.func @transform_1(%arg0: i32, %arg1: i32) -> (i32, i32, i32, i32, i32) {
    %c1_i32 = arith.constant 1 : i32
    %0 = arith.addi %arg1, %c1_i32 : i32
    %c0_i32 = arith.constant 0 : i32
    %c0_i32_0 = arith.constant 0 : i32
    %c0_i32_1 = arith.constant 0 : i32
    %c0_i32_2 = arith.constant 0 : i32
    return %arg0, %0, %c0_i32, %c0_i32_0, %c0_i32_1 : i32, i32, i32, i32, i32
  }
  func.func @transform_2(%arg0: i32, %arg1: i32) -> (i32, i32, i32, i32, i32) {
    %c2_i32 = arith.constant 2 : i32
    %0 = arith.addi %arg1, %c2_i32 : i32
    %c0_i32 = arith.constant 0 : i32
    %c0_i32_0 = arith.constant 0 : i32
    %c0_i32_1 = arith.constant 0 : i32
    %c0_i32_2 = arith.constant 0 : i32
    return %arg0, %0, %c0_i32, %c0_i32_0, %c0_i32_1 : i32, i32, i32, i32, i32
  }
  func.func @transform_3(%arg0: i32, %arg1: i32) -> (i32, i32, i32, i32, i32) {
    %c0_i32 = arith.constant 0 : i32
    %c0_i32_0 = arith.constant 0 : i32
    %c0_i32_1 = arith.constant 0 : i32
    %c0_i32_2 = arith.constant 0 : i32
    %c0_i32_3 = arith.constant 0 : i32
    %c0_i32_4 = arith.constant 0 : i32
    return %c0_i32, %c0_i32_0, %c0_i32_1, %c0_i32_2, %c0_i32_3 : i32, i32, i32, i32, i32
  }
  func.func @transform_4(%arg0: i32, %arg1: i32) -> (i32, i32) {
    %c0_i32 = arith.constant 0 : i32
    %c0_i32_0 = arith.constant 0 : i32
    %c0_i32_1 = arith.constant 0 : i32
    return %c0_i32, %c0_i32_0 : i32, i32
  }
  func.func @transform_5(%arg0: i32, %arg1: i32) -> (i32, i32, i32, i32) {
    %c0_i32 = arith.constant 0 : i32
    %c0_i32_0 = arith.constant 0 : i32
    %c0_i32_1 = arith.constant 0 : i32
    return %arg0, %arg1, %c0_i32, %c0_i32_0 : i32, i32, i32, i32
  }
  func.func @transform_6(%arg0: i32, %arg1: i32) -> (i32, i32) {
    %c0_i32 = arith.constant 0 : i32
    %c0_i32_0 = arith.constant 0 : i32
    %c0_i32_1 = arith.constant 0 : i32
    return %c0_i32, %c0_i32_0 : i32, i32
  }
  func.func @transform_7(%arg0: i32, %arg1: i32) -> (i32, i32) {
    %c0_i32 = arith.constant 0 : i32
    %c0_i32_0 = arith.constant 0 : i32
    %c0_i32_1 = arith.constant 0 : i32
    return %c0_i32, %c0_i32_0 : i32, i32
  }
}

module attributes {stable_mosaic.version = 11 : i64} {
  func.func @kernel(%arg0: i32, %arg1: i32, %arg2: memref<1x1x64x128xf32, #tpu.memory_space<vmem>>, %arg3: memref<1x128xf32, #tpu.memory_space<vmem>>, %arg4: memref<1x128xf32, #tpu.memory_space<vmem>>, %arg5: memref<1x128xf32, #tpu.memory_space<vmem>>, %arg6: memref<1x1x10x10x128xbf16, #tpu.memory_space<vmem>>) attributes {dimension_semantics = [#tpu.dimension_semantics<parallel>, #tpu.dimension_semantics<parallel>], iteration_bounds = array<i64: 2, 10>, scalar_prefetch = 0 : i64, scratch_operands = 0 : i64, tpu.core_type = #tpu.core_type<tc>, window_params = [{transform_indices = @transform_0, window_bounds = array<i64: 1, 1, 64, 128>}, {pipeline_mode = #tpu.pipeline_mode<synchronous>, transform_indices = @transform_1, window_bounds = array<i64: 1, 128>}, {pipeline_mode = #tpu.pipeline_mode<synchronous>, transform_indices = @transform_2, window_bounds = array<i64: 1, 128>}, {pipeline_mode = #tpu.pipeline_mode<synchronous>, transform_indices = @transform_3, window_bounds = array<i64: 1, 128>}, {transform_indices = @transform_4, window_bounds = array<i64: 1, 1, 10, 10, 128>}]} {
    %cst = arith.constant 0.000000e+00 : bf16
    %0 = vector.broadcast %cst : bf16 to vector<1x1x10x10x128xbf16>
    %c0 = arith.constant 0 : index
    %c0_0 = arith.constant 0 : index
    %c0_1 = arith.constant 0 : index
    %c0_2 = arith.constant 0 : index
    %c0_3 = arith.constant 0 : index
    %1 = vector.load %arg6[%c0, %c0_0, %c0_1, %c0_2, %c0_3] : memref<1x1x10x10x128xbf16, #tpu.memory_space<vmem>>, vector<1x1x10x10x128xbf16>
    tpu.vector_store %arg6[%c0, %c0_0, %c0_1, %c0_2, %c0_3], %0 {strides = array<i32>} : memref<1x1x10x10x128xbf16, #tpu.memory_space<vmem>>, vector<1x1x10x10x128xbf16>,
    %c1_i32 = arith.constant 1 : i32
    %2 = arith.cmpi sge, %arg1, %c1_i32 : i32
    %c8_i32 = arith.constant 8 : i32
    %3 = arith.cmpi sle, %arg1, %c8_i32 : i32
    %4 = arith.andi %2, %3 : i1
    %5 = arith.extui %4 : i1 to i32
    %c0_i32 = arith.constant 0 : i32
    %6 = arith.cmpi ne, %5, %c0_i32 : i32
    scf.if %6 {
      %c0_4 = arith.constant 0 : index
      %c0_5 = arith.constant 0 : index
      %c0_6 = arith.constant 0 : index
      %c0_7 = arith.constant 0 : index
      %7 = vector.load %arg2[%c0_4, %c0_5, %c0_6, %c0_7] : memref<1x1x64x128xf32, #tpu.memory_space<vmem>>, vector<1x1x64x128xf32>
      %8 = vector.shape_cast %7 : vector<1x1x64x128xf32> to vector<64x128xf32>
      %c0_8 = arith.constant 0 : index
      %c0_9 = arith.constant 0 : index
      %9 = vector.load %arg3[%c0_8, %c0_9] : memref<1x128xf32, #tpu.memory_space<vmem>>, vector<1x128xf32>
      %10 = vector.broadcast %9 : vector<1x128xf32> to vector<64x128xf32>
      %11 = arith.mulf %8, %10 : vector<64x128xf32>
      %c0_10 = arith.constant 0 : index
      %c0_11 = arith.constant 0 : index
      %12 = vector.load %arg4[%c0_10, %c0_11] : memref<1x128xf32, #tpu.memory_space<vmem>>, vector<1x128xf32>
      %13 = vector.broadcast %12 : vector<1x128xf32> to vector<64x128xf32>
      %14 = arith.addf %11, %13 : vector<64x128xf32>
      %cst_12 = arith.constant 0.000000e+00 : f32
      %15 = vector.broadcast %cst_12 : f32 to vector<64x128xf32>
      %16 = arith.cmpf oge, %14, %15 : vector<64x128xf32>
      %c0_13 = arith.constant 0 : index
      %c0_14 = arith.constant 0 : index
      %17 = vector.load %arg5[%c0_13, %c0_14] : memref<1x128xf32, #tpu.memory_space<vmem>>, vector<1x128xf32>
      %18 = vector.broadcast %17 : vector<1x128xf32> to vector<64x128xf32>
      %19 = arith.mulf %14, %18 : vector<64x128xf32>
      %20 = arith.select %16, %14, %19 : vector<64x128xi1>, vector<64x128xf32>
      %21 = vector.shape_cast %20 : vector<64x128xf32> to vector<8x8x128xf32>
      %22 = arith.truncf %21 : vector<8x8x128xf32> to vector<8x8x128xbf16>
      %c0_15 = arith.constant 0 : index
      %c0_16 = arith.constant 0 : index
      %c1 = arith.constant 1 : index
      %c1_17 = arith.constant 1 : index
      %c0_18 = arith.constant 0 : index
      %23 = vector.load %arg6[%c0_15, %c0_16, %c1, %c1_17, %c0_18] : memref<1x1x10x10x128xbf16, #tpu.memory_space<vmem>>, vector<1x1x8x8x128xbf16>
      %24 = vector.shape_cast %23 : vector<1x1x8x8x128xbf16> to vector<8x8x128xbf16>
      %25 = vector.shape_cast %22 : vector<8x8x128xbf16> to vector<1x1x8x8x128xbf16>
      tpu.vector_store %arg6[%c0_15, %c0_16, %c1, %c1_17, %c0_18], %25 {strides = array<i32>} : memref<1x1x10x10x128xbf16, #tpu.memory_space<vmem>>, vector<1x1x8x8x128xbf16>,
    } else {
    }
    return
  }
  func.func @transform_0(%arg0: i32, %arg1: i32) -> (i32, i32, i32, i32) {
    %c1_i32 = arith.constant 1 : i32
    %0 = arith.subi %arg1, %c1_i32 : i32
    %c7_i32 = arith.constant 7 : i32
    %1 = arith.minsi %0, %c7_i32 : i32
    %c0_i32 = arith.constant 0 : i32
    %2 = arith.maxsi %1, %c0_i32 : i32
    %c0_i32_0 = arith.constant 0 : i32
    %c0_i32_1 = arith.constant 0 : i32
    %c0_i32_2 = arith.constant 0 : i32
    return %arg0, %2, %c0_i32_0, %c0_i32_1 : i32, i32, i32, i32
  }
  func.func @transform_1(%arg0: i32, %arg1: i32) -> (i32, i32) {
    %c0_i32 = arith.constant 0 : i32
    %c0_i32_0 = arith.constant 0 : i32
    %c0_i32_1 = arith.constant 0 : i32
    return %c0_i32, %c0_i32_0 : i32, i32
  }
  func.func @transform_2(%arg0: i32, %arg1: i32) -> (i32, i32) {
    %c0_i32 = arith.constant 0 : i32
    %c0_i32_0 = arith.constant 0 : i32
    %c0_i32_1 = arith.constant 0 : i32
    return %c0_i32, %c0_i32_0 : i32, i32
  }
  func.func @transform_3(%arg0: i32, %arg1: i32) -> (i32, i32) {
    %c0_i32 = arith.constant 0 : i32
    %c0_i32_0 = arith.constant 0 : i32
    %c0_i32_1 = arith.constant 0 : i32
    return %c0_i32, %c0_i32_0 : i32, i32
  }
  func.func @transform_4(%arg0: i32, %arg1: i32) -> (i32, i32, i32, i32, i32) {
    %c0_i32 = arith.constant 0 : i32
    %c0_i32_0 = arith.constant 0 : i32
    %c0_i32_1 = arith.constant 0 : i32
    %c0_i32_2 = arith.constant 0 : i32
    return %arg0, %arg1, %c0_i32, %c0_i32_0, %c0_i32_1 : i32, i32, i32, i32, i32
  }
}

module attributes {stable_mosaic.version = 11 : i64} {
  func.func @_bn_add_kernel(%arg0: i32, %arg1: i32, %arg2: memref<1x1x64x128xf32, #tpu.memory_space<vmem>>, %arg3: memref<1x1x64x128xf32, #tpu.memory_space<vmem>>, %arg4: memref<1x128xf32, #tpu.memory_space<vmem>>, %arg5: memref<1x128xf32, #tpu.memory_space<vmem>>, %arg6: memref<1x1x64x128xf32, #tpu.memory_space<vmem>>) attributes {dimension_semantics = [#tpu.dimension_semantics<parallel>, #tpu.dimension_semantics<parallel>], iteration_bounds = array<i64: 2, 8>, scalar_prefetch = 0 : i64, scratch_operands = 0 : i64, tpu.core_type = #tpu.core_type<tc>, window_params = [{transform_indices = @transform_0, window_bounds = array<i64: 1, 1, 64, 128>}, {transform_indices = @transform_1, window_bounds = array<i64: 1, 1, 64, 128>}, {pipeline_mode = #tpu.pipeline_mode<synchronous>, transform_indices = @transform_2, window_bounds = array<i64: 1, 128>}, {pipeline_mode = #tpu.pipeline_mode<synchronous>, transform_indices = @transform_3, window_bounds = array<i64: 1, 128>}, {transform_indices = @transform_4, window_bounds = array<i64: 1, 1, 64, 128>}]} {
    %c0 = arith.constant 0 : index
    %c0_0 = arith.constant 0 : index
    %c0_1 = arith.constant 0 : index
    %c0_2 = arith.constant 0 : index
    %0 = vector.load %arg3[%c0, %c0_0, %c0_1, %c0_2] : memref<1x1x64x128xf32, #tpu.memory_space<vmem>>, vector<1x1x64x128xf32>
    %1 = vector.shape_cast %0 : vector<1x1x64x128xf32> to vector<64x128xf32>
    %c0_3 = arith.constant 0 : index
    %c0_4 = arith.constant 0 : index
    %c0_5 = arith.constant 0 : index
    %c0_6 = arith.constant 0 : index
    %2 = vector.load %arg2[%c0_3, %c0_4, %c0_5, %c0_6] : memref<1x1x64x128xf32, #tpu.memory_space<vmem>>, vector<1x1x64x128xf32>
    %3 = vector.shape_cast %2 : vector<1x1x64x128xf32> to vector<64x128xf32>
    %c0_7 = arith.constant 0 : index
    %c0_8 = arith.constant 0 : index
    %4 = vector.load %arg4[%c0_7, %c0_8] : memref<1x128xf32, #tpu.memory_space<vmem>>, vector<1x128xf32>
    %5 = vector.broadcast %4 : vector<1x128xf32> to vector<64x128xf32>
    %6 = arith.mulf %3, %5 : vector<64x128xf32>
    %c0_9 = arith.constant 0 : index
    %c0_10 = arith.constant 0 : index
    %7 = vector.load %arg5[%c0_9, %c0_10] : memref<1x128xf32, #tpu.memory_space<vmem>>, vector<1x128xf32>
    %8 = vector.broadcast %7 : vector<1x128xf32> to vector<64x128xf32>
    %9 = arith.addf %6, %8 : vector<64x128xf32>
    %10 = arith.addf %1, %9 : vector<64x128xf32>
    %c0_11 = arith.constant 0 : index
    %c0_12 = arith.constant 0 : index
    %c0_13 = arith.constant 0 : index
    %c0_14 = arith.constant 0 : index
    %11 = vector.load %arg6[%c0_11, %c0_12, %c0_13, %c0_14] : memref<1x1x64x128xf32, #tpu.memory_space<vmem>>, vector<1x1x64x128xf32>
    %12 = vector.shape_cast %11 : vector<1x1x64x128xf32> to vector<64x128xf32>
    %13 = vector.shape_cast %10 : vector<64x128xf32> to vector<1x1x64x128xf32>
    tpu.vector_store %arg6[%c0_11, %c0_12, %c0_13, %c0_14], %13 {strides = array<i32>} : memref<1x1x64x128xf32, #tpu.memory_space<vmem>>, vector<1x1x64x128xf32>,
    return
  }
  func.func @transform_0(%arg0: i32, %arg1: i32) -> (i32, i32, i32, i32) {
    %c0_i32 = arith.constant 0 : i32
    %c0_i32_0 = arith.constant 0 : i32
    %c0_i32_1 = arith.constant 0 : i32
    return %arg0, %arg1, %c0_i32, %c0_i32_0 : i32, i32, i32, i32
  }
  func.func @transform_1(%arg0: i32, %arg1: i32) -> (i32, i32, i32, i32) {
    %c0_i32 = arith.constant 0 : i32
    %c0_i32_0 = arith.constant 0 : i32
    %c0_i32_1 = arith.constant 0 : i32
    return %arg0, %arg1, %c0_i32, %c0_i32_0 : i32, i32, i32, i32
  }
  func.func @transform_2(%arg0: i32, %arg1: i32) -> (i32, i32) {
    %c0_i32 = arith.constant 0 : i32
    %c0_i32_0 = arith.constant 0 : i32
    %c0_i32_1 = arith.constant 0 : i32
    return %c0_i32, %c0_i32_0 : i32, i32
  }
  func.func @transform_3(%arg0: i32, %arg1: i32) -> (i32, i32) {
    %c0_i32 = arith.constant 0 : i32
    %c0_i32_0 = arith.constant 0 : i32
    %c0_i32_1 = arith.constant 0 : i32
    return %c0_i32, %c0_i32_0 : i32, i32
  }
  func.func @transform_4(%arg0: i32, %arg1: i32) -> (i32, i32, i32, i32) {
    %c0_i32 = arith.constant 0 : i32
    %c0_i32_0 = arith.constant 0 : i32
    %c0_i32_1 = arith.constant 0 : i32
    return %arg0, %arg1, %c0_i32, %c0_i32_0 : i32, i32, i32, i32
  }
}

</mosaic_0001>

<llo_original>
// kernel: residual_block.5
$region0: #{residual_block.5}
  #allocation0 [shape = 'u32[]', space=smem, size = 0x4, offset = 0x4, fixed_abs, tag = 'smem constant byte address 0x4 - core index']
  #allocation1 [shape = 'u32[144,128]{1,0:T(1,128)}', space=vmem, size = 0x12000, scoped, tag = 'internal scratch']
  %s0 = inlined_call_operand.vmem [shape: f32[2,8,64,128], index: 0, kind: input, shape index: {}]
  %s1 = inlined_call_operand.vmem [shape: f32[1,128], index: 1, kind: input, shape index: {}]
  %s2 = inlined_call_operand.vmem [shape: f32[1,128], index: 2, kind: input, shape index: {}]
  %s3 = inlined_call_operand.vmem [shape: f32[1,128], index: 3, kind: input, shape index: {}]
  %s4 = inlined_call_operand.vmem [shape: bf16[2,10,10,10,128], index: 4, kind: output, shape index: {}]
  %s5 = sld [smem:[#allocation0]]
  $region53: #{residual_block.5} parent=0
    _
  %s7 = ssub.s32 1, %s5
  %s8 = scalar_select 0, %s7, %s5
  loop: start=0, step=1, limit=22
  $region2: #{residual_block.5} parent=0 // loop_pre_header
    _
  $region3: #{residual_block.5} parent=0 // loop_header
    %s10 = sphi 0, %s14
    %p11 = scmp.ge.s32.totalorder %s10, 22
    %s17 = sphi 0, %s29
    %s18 = sphi 0, %s25
    %s19 = sphi 0, %s17
    %s20 = sphi 0, %s18
    %s21 = sphi 0, %s19
    %s22 = sphi 0, %s20
    %s44 = sphi 0, %s46
    %s47 = sphi 0, %s44
    %s48 = sphi 0, %s47
    %s64 = sphi 0, %s48
    %s68 = sphi 0, %s68
    %s70 = sphi 0, %s68
    %s71 = sphi 0, %s70
    %s85 = sphi 0, %s71
    %s89 = sphi 0, %s89
    %s91 = sphi 0, %s89
    %s92 = sphi 0, %s91
    %s106 = sphi 0, %s92
    %s110 = sphi 0, %s110
    %s112 = sphi 0, %s110
    %s113 = sphi 0, %s112
    %s127 = sphi 0, %s113
    %s135 = sphi 0, %s137
    %s138 = sphi 0, %s135
    %s139 = sphi 0, %s138
    %s155 = sphi 0, %s139
  $region4: #{residual_block.5} parent=0 // loop_header_branch
    %13 = sbr.rel (%p11) target = $region8
  $region5: #{residual_block.5} parent=0 // loop_body
    %s15 = ssub.s32 %s10, 1
    %s16 = ssub.s32 %s10, 2
    %s23 = sadd.s32 1, %s18
    %p24 = scmp.ge.s32.totalorder %s23, 10
    %s25 = scalar_select %p24, 0, %s23
    %s26 = sadd.s32 1, %s17
    %s27 = scalar_select %p24, %s26, %s17
    %p28 = scmp.ge.s32.totalorder %s27, 2
    %s29 = scalar_select %p28, 0, %s27
    %s30 = ssub.s32 %s18, 1
    %p31 = scmp.lt.s32.totalorder %s30, 7
    %s32 = scalar_select %p31, %s30, 7
    %p33 = scmp.gt.s32.totalorder %s32, 0
    %s34 = scalar_select %p33, %s32, 0
    %s35 = ssub.s32 %s25, 1
    %p36 = scmp.lt.s32.totalorder %s35, 7
    %s37 = scalar_select %p36, %s35, 7
    %p38 = scmp.gt.s32.totalorder %s37, 0
    %s39 = scalar_select %p38, %s37, 0
    %s40 = ssub.s32 %s17, %s29
    %s41 = ssub.s32 %s34, %s39
    %s42 = sor.u32 %s40, %s41
    %p43 = scmp.eq.s32.totalorder %s42, 0
    %s45 = sadd.s32 %s44, 1
    %s46 = scalar_select %p43, %s44, %s45
    %p49 = pneg %p43
    %p50 = scmp.eq.s32.totalorder %s10, 19
    %p51 = por %p49, %p50
    %p52 = scmp.ne.s32.totalorder %s44, %s47
    %p53 = scmp.eq.s32.totalorder %s10, 0
    %p54 = por %p52, %p53
    %p55 = scmp.ne.s32.totalorder %s44, %s47
    %p56 = scmp.eq.s32.totalorder %s15, 19
    %p57 = por %p55, %p56
    %p58 = scmp.ne.s32.totalorder %s47, %s48
    %p59 = scmp.eq.s32.totalorder %s15, 0
    %p60 = por %p58, %p59
    %p61 = scmp.ne.s32.totalorder %s47, %s48
    %p62 = scmp.eq.s32.totalorder %s16, 19
    %p63 = por %p61, %p62
    %p65 = scmp.ne.s32.totalorder %s48, %s64
    %p66 = scmp.eq.s32.totalorder %s16, 0
    %p67 = por %p65, %p66
    %s69 = sadd.s32 %s68, 1
    %p72 = scmp.eq.s32.totalorder %s10, 19
    %p73 = scmp.ne.s32.totalorder %s68, %s70
    %p74 = scmp.eq.s32.totalorder %s10, 0
    %p75 = por %p73, %p74
    %p76 = scmp.ne.s32.totalorder %s68, %s70
    %p77 = scmp.eq.s32.totalorder %s15, 19
    %p78 = por %p76, %p77
    %p79 = scmp.ne.s32.totalorder %s70, %s71
    %p80 = scmp.eq.s32.totalorder %s15, 0
    %p81 = por %p79, %p80
    %p82 = scmp.ne.s32.totalorder %s70, %s71
    %p83 = scmp.eq.s32.totalorder %s16, 19
    %p84 = por %p82, %p83
    %p86 = scmp.ne.s32.totalorder %s71, %s85
    %p87 = scmp.eq.s32.totalorder %s16, 0
    %p88 = por %p86, %p87
    %s90 = sadd.s32 %s89, 1
    %p93 = scmp.eq.s32.totalorder %s10, 19
    %p94 = scmp.ne.s32.totalorder %s89, %s91
    %p95 = scmp.eq.s32.totalorder %s10, 0
    %p96 = por %p94, %p95
    %p97 = scmp.ne.s32.totalorder %s89, %s91
    %p98 = scmp.eq.s32.totalorder %s15, 19
    %p99 = por %p97, %p98
    %p100 = scmp.ne.s32.totalorder %s91, %s92
    %p101 = scmp.eq.s32.totalorder %s15, 0
    %p102 = por %p100, %p101
    %p103 = scmp.ne.s32.totalorder %s91, %s92
    %p104 = scmp.eq.s32.totalorder %s16, 19
    %p105 = por %p103, %p104
    %p107 = scmp.ne.s32.totalorder %s92, %s106
    %p108 = scmp.eq.s32.totalorder %s16, 0
    %p109 = por %p107, %p108
    %s111 = sadd.s32 %s110, 1
    %p114 = scmp.eq.s32.totalorder %s10, 19
    %p115 = scmp.ne.s32.totalorder %s110, %s112
    %p116 = scmp.eq.s32.totalorder %s10, 0
    %p117 = por %p115, %p116
    %p118 = scmp.ne.s32.totalorder %s110, %s112
    %p119 = scmp.eq.s32.totalorder %s15, 19
    %p120 = por %p118, %p119
    %p121 = scmp.ne.s32.totalorder %s112, %s113
    %p122 = scmp.eq.s32.totalorder %s15, 0
    %p123 = por %p121, %p122
    %p124 = scmp.ne.s32.totalorder %s112, %s113
    %p125 = scmp.eq.s32.totalorder %s16, 19
    %p126 = por %p124, %p125
    %p128 = scmp.ne.s32.totalorder %s113, %s127
    %p129 = scmp.eq.s32.totalorder %s16, 0
    %p130 = por %p128, %p129
    %s131 = ssub.s32 %s17, %s29
    %s132 = ssub.s32 %s18, %s25
    %s133 = sor.u32 %s131, %s132
    %p134 = scmp.eq.s32.totalorder %s133, 0
    %s136 = sadd.s32 %s135, 1
    %s137 = scalar_select %p134, %s135, %s136
    %p140 = pneg %p134
    %p141 = scmp.eq.s32.totalorder %s10, 19
    %p142 = por %p140, %p141
    %p143 = scmp.ne.s32.totalorder %s135, %s138
    %p144 = scmp.eq.s32.totalorder %s10, 0
    %p145 = por %p143, %p144
    %p146 = scmp.ne.s32.totalorder %s135, %s138
    %p147 = scmp.eq.s32.totalorder %s15, 19
    %p148 = por %p146, %p147
    %p149 = scmp.ne.s32.totalorder %s138, %s139
    %p150 = scmp.eq.s32.totalorder %s15, 0
    %p151 = por %p149, %p150
    %p152 = scmp.ne.s32.totalorder %s138, %s139
    %p153 = scmp.eq.s32.totalorder %s16, 19
    %p154 = por %p152, %p153
    %p156 = scmp.ne.s32.totalorder %s139, %s155
    %p157 = scmp.eq.s32.totalorder %s16, 0
    %p158 = por %p156, %p157
    %p159 = scmp.le.s32.totalorder 1, %s10
    %p160 = scmp.lt.s32.totalorder %s10, 21
    %p161 = pnand %p159, %p160
    %p162 = pneg %p161
    // Predicated region
    $region9: #{residual_block.5} parent=5 // pred_check
      _
    $region10: #{residual_block.5} parent=5 // pred_check_branch
      %164 = sbr.rel (%p161) target = $region12
    $region11: #{residual_block.5} parent=5 // pred_region
      %s165 = ssub.s32 %s10, 1
      // Predicated region
      $region13: #{residual_block.5} parent=11 // pred_check
        %p166 = pneg %p81
      $region14: #{residual_block.5} parent=11 // pred_check_branch
        %168 = sbr.rel (%p166) target = $region16
      $region15: #{residual_block.5} parent=11 // pred_region
        _
      $region16: #{residual_block.5} parent=11 // pred_fallthru
        _
      // Predicated region
      $region17: #{residual_block.5} parent=11 // pred_check
        %p169 = pneg %p102
      $region18: #{residual_block.5} parent=11 // pred_check_branch
        %171 = sbr.rel (%p169) target = $region20
      $region19: #{residual_block.5} parent=11 // pred_region
        _
      $region20: #{residual_block.5} parent=11 // pred_fallthru
        _
      // Predicated region
      $region21: #{residual_block.5} parent=11 // pred_check
        %p172 = pneg %p123
      $region22: #{residual_block.5} parent=11 // pred_check_branch
        %174 = sbr.rel (%p172) target = $region24
      $region23: #{residual_block.5} parent=11 // pred_region
        _
      $region24: #{residual_block.5} parent=11 // pred_fallthru
        _
    $region12: #{residual_block.5} parent=5 // pred_fallthru
      _
    %p175 = scmp.lt.s32.totalorder %s10, 20
    // Predicated region
    $region25: #{residual_block.5} parent=5 // pred_check
      %p176 = pneg %p175
    $region26: #{residual_block.5} parent=5 // pred_check_branch
      %178 = sbr.rel (%p176) target = $region28
    $region27: #{residual_block.5} parent=5 // pred_region
      // Predicated region
      $region29: #{residual_block.5} parent=27 // pred_check
        %p179 = pneg %p54
      $region30: #{residual_block.5} parent=27 // pred_check_branch
        %181 = sbr.rel (%p179) target = $region32
      $region31: #{residual_block.5} parent=27 // pred_region
        %s182 = ssub.s32 %s18, 1
        %p183 = scmp.lt.s32.totalorder %s182, 7
        %s184 = scalar_select %p183, %s182, 7
        %p185 = scmp.gt.s32.totalorder %s184, 0
        %s186 = scalar_select %p185, %s184, 0
        %p187 = scmp.lt.s32.totalorder %s17, 1
        %s188 = scalar_select %p187, %s17, 1
        %p189 = scmp.lt.s32.totalorder %s186, 7
        %s190 = scalar_select %p189, %s186, 7
        %s191 = smul.addr %s190, 8
        %s192 = smul.addr %s188, 64
        %s193 = sadd.s32 %s191, %s192
        %s194 = smul.addr %s193, 8
        %s195 = scalar_lea.vmem %s0, %s194
        %s196 = ssub.s32 %s18, 1
        %p197 = scmp.lt.s32.totalorder %s196, 7
        %s198 = scalar_select %p197, %s196, 7
        %p199 = scmp.gt.s32.totalorder %s198, 0
        %s200 = scalar_select %p199, %s198, 0
      $region32: #{residual_block.5} parent=27 // pred_fallthru
        _
    $region28: #{residual_block.5} parent=5 // pred_fallthru
      _
    %p201 = scmp.le.s32.totalorder 1, %s10
    %p202 = scmp.lt.s32.totalorder %s10, 21
    %p203 = pnand %p201, %p202
    %p204 = pneg %p203
    // Predicated region
    $region33: #{residual_block.5} parent=5 // pred_check
      _
    $region34: #{residual_block.5} parent=5 // pred_check_branch
      %206 = sbr.rel (%p203) target = $region36
    $region35: #{residual_block.5} parent=5 // pred_region
      %s207 = ssub.s32 %s10, 1
      %s208 = ssub.s32 %s20, 1
      %p209 = scmp.lt.s32.totalorder %s208, 7
      %s210 = scalar_select %p209, %s208, 7
      %p211 = scmp.gt.s32.totalorder %s210, 0
      %s212 = scalar_select %p211, %s210, 0
      %p213 = scmp.lt.s32.totalorder %s19, 1
      %s214 = scalar_select %p213, %s19, 1
      %p215 = scmp.lt.s32.totalorder %s212, 7
      %s216 = scalar_select %p215, %s212, 7
      %s217 = smul.addr %s216, 8
      %s218 = smul.addr %s214, 64
      %s219 = sadd.s32 %s217, %s218
      %s220 = smul.addr %s219, 8
      %s221 = scalar_lea.vmem %s0, %s220
      %p222 = pneg %p60
      %p223 = pneg %p57
      %p224 = pneg %p81
      %p225 = pneg %p78
      %p226 = pneg %p102
      %p227 = pneg %p99
      %p228 = pneg %p123
      %p229 = pneg %p120
      %p230 = pneg %p151
      %p231 = pneg %p148
      %p232 = scmp.lt.s32.totalorder %s19, 1
      %s233 = scalar_select %p232, %s19, 1
      %p234 = scmp.lt.s32.totalorder %s20, 9
      %s235 = scalar_select %p234, %s20, 9
      %s236 = smul.addr %s235, 20
      %s237 = smul.addr %s233, 200
      %s238 = sadd.s32 %s236, %s237
      %s239 = smul.addr %s238, 4
      %s240 = scalar_lea.vmem %s4, %s239
      %s241 = ssub.s32 %s20, 1
      %p242 = scmp.lt.s32.totalorder %s241, 7
      %s243 = scalar_select %p242, %s241, 7
      %p244 = scmp.gt.s32.totalorder %s243, 0
      %s245 = scalar_select %p244, %s243, 0
      %p246 = scmp.lt.s32.totalorder %s19, 1
      %s247 = scalar_select %p246, %s19, 1
      %p248 = scmp.lt.s32.totalorder %s245, 7
      %s249 = scalar_select %p248, %s245, 7
      %s250 = smul.addr %s249, 8
      %s251 = smul.addr %s247, 64
      %s252 = sadd.s32 %s250, %s251
      %s253 = smul.addr %s252, 8
      %s254 = scalar_lea.vmem %s0, %s253
      %s255 = ssub.s32 %s20, 1
      %p256 = scmp.lt.s32.totalorder %s255, 7
      %s257 = scalar_select %p256, %s255, 7
      %p258 = scmp.gt.s32.totalorder %s257, 0
      %s259 = scalar_select %p258, %s257, 0
      %p260 = scmp.lt.s32.totalorder %s19, 1
      %s261 = scalar_select %p260, %s19, 1
      %p262 = scmp.lt.s32.totalorder %s20, 9
      %s263 = scalar_select %p262, %s20, 9
      %s264 = smul.addr %s263, 20
      %s265 = smul.addr %s261, 200
      %s266 = sadd.s32 %s264, %s265
      %s267 = smul.addr %s266, 4
      %s268 = scalar_lea.vmem %s4, %s267
      %270 = vst [vmem:[%s268] sm:$0xf] 0
      %271 = vst [vmem:[%s268 + $0x4] sm:$0x1] 0
      %272 = vst [vmem:[%s268 + $0x8] sm:$0xf] 0
      %273 = vst [vmem:[%s268 + $0xc] sm:$0x1] 0
      %274 = vst [vmem:[%s268 + $0x10] sm:$0xf] 0
      %275 = vst [vmem:[%s268 + $0x14] sm:$0x1] 0
      %276 = vst [vmem:[%s268 + $0x18] sm:$0xf] 0
      %277 = vst [vmem:[%s268 + $0x1c] sm:$0x1] 0
      %278 = vst [vmem:[%s268 + $0x20] sm:$0xf] 0
      %279 = vst [vmem:[%s268 + $0x24] sm:$0x1] 0
      %280 = vst [vmem:[%s268 + $0x28] sm:$0xf] 0
      %281 = vst [vmem:[%s268 + $0x2c] sm:$0x1] 0
      %282 = vst [vmem:[%s268 + $0x30] sm:$0xf] 0
      %283 = vst [vmem:[%s268 + $0x34] sm:$0x1] 0
      %284 = vst [vmem:[%s268 + $0x38] sm:$0xf] 0
      %285 = vst [vmem:[%s268 + $0x3c] sm:$0x1] 0
      %286 = vst [vmem:[%s268 + $0x40] sm:$0xf] 0
      %287 = vst [vmem:[%s268 + $0x44] sm:$0x1] 0
      %288 = vst [vmem:[%s268 + $0x48] sm:$0xf] 0
      %289 = vst [vmem:[%s268 + $0x4c] sm:$0x1] 0
      %p290 = scmp.ge.s32.totalorder %s20, 1
      %p291 = scmp.le.s32.totalorder %s20, 8
      %p292 = pnand %p290, %p291
      %p293 = pneg %p292
      // Predicated region
      $region37: #{residual_block.5} parent=35 // pred_check
        _
      $region38: #{residual_block.5} parent=35 // pred_check_branch
        %295 = sbr.rel (%p292) target = $region40
      $region39: #{residual_block.5} parent=35 // pred_region
        %v296 = vld [vmem:[%s254] sm:$0xff]
        %v297 = vld [vmem:[%s254 + $0x8] sm:$0xff]
        %v298 = vld [vmem:[%s254 + $0x10] sm:$0xff]
        %v299 = vld [vmem:[%s254 + $0x18] sm:$0xff]
        %v300 = vld [vmem:[%s254 + $0x20] sm:$0xff]
        %v301 = vld [vmem:[%s254 + $0x28] sm:$0xff]
        %v302 = vld [vmem:[%s254 + $0x30] sm:$0xff]
        %v303 = vld [vmem:[%s254 + $0x38] sm:$0xff]
        %v304 = vld [vmem:[%s1] sm:$0x1]
        %v306 = vlaneseq
        %v307 = vshrl.u32 %v306, 7
        %v308 = vsub.s32 0, %v307
        %v309 = vrot.slane %v304, %v308
        %v311 = vmul.f32 %v296, %v309
        %v312 = vmul.f32 %v297, %v309
        %v313 = vmul.f32 %v298, %v309
        %v314 = vmul.f32 %v299, %v309
        %v315 = vmul.f32 %v300, %v309
        %v316 = vmul.f32 %v301, %v309
        %v317 = vmul.f32 %v302, %v309
        %v318 = vmul.f32 %v303, %v309
        %v319 = vld [vmem:[%s2] sm:$0x1]
        %v321 = vlaneseq
        %v322 = vshrl.u32 %v321, 7
        %v323 = vsub.s32 0, %v322
        %v324 = vrot.slane %v319, %v323
        %v326 = vadd.f32 %v311, %v324
        %v327 = vadd.f32 %v312, %v324
        %v328 = vadd.f32 %v313, %v324
        %v329 = vadd.f32 %v314, %v324
        %v330 = vadd.f32 %v315, %v324
        %v331 = vadd.f32 %v316, %v324
        %v332 = vadd.f32 %v317, %v324
        %v333 = vadd.f32 %v318, %v324
        %vm334 = vcmp.ge.f32.partialorder %v326, 0.0
        %vm335 = vcmp.ge.f32.partialorder %v327, 0.0
        %vm336 = vcmp.ge.f32.partialorder %v328, 0.0
        %vm337 = vcmp.ge.f32.partialorder %v329, 0.0
        %vm338 = vcmp.ge.f32.partialorder %v330, 0.0
        %vm339 = vcmp.ge.f32.partialorder %v331, 0.0
        %vm340 = vcmp.ge.f32.partialorder %v332, 0.0
        %vm341 = vcmp.ge.f32.partialorder %v333, 0.0
        %v342 = vld [vmem:[%s3] sm:$0x1]
        %v344 = vlaneseq
        %v345 = vshrl.u32 %v344, 7
        %v346 = vsub.s32 0, %v345
        %v347 = vrot.slane %v342, %v346
        %v349 = vmul.f32 %v326, %v347
        %v350 = vmul.f32 %v327, %v347
        %v351 = vmul.f32 %v328, %v347
        %v352 = vmul.f32 %v329, %v347
        %v353 = vmul.f32 %v330, %v347
        %v354 = vmul.f32 %v331, %v347
        %v355 = vmul.f32 %v332, %v347
        %v356 = vmul.f32 %v333, %v347
        %v357 = vsel %vm334, %v326, %v349
        %v358 = vsel %vm335, %v327, %v350
        %v359 = vsel %vm336, %v328, %v351
        %v360 = vsel %vm337, %v329, %v352
        %v361 = vsel %vm338, %v330, %v353
        %v362 = vsel %vm339, %v331, %v354
        %v363 = vsel %vm340, %v332, %v355
        %v364 = vsel %vm341, %v333, %v356
        %v365 = vpack.c.bf16 %v357, %v357
        %v366 = vpack.c.bf16 %v358, %v358
        %v367 = vpack.c.bf16 %v359, %v359
        %v368 = vpack.c.bf16 %v360, %v360
        %v369 = vpack.c.bf16 %v361, %v361
        %v370 = vpack.c.bf16 %v362, %v362
        %v371 = vpack.c.bf16 %v363, %v363
        %v372 = vpack.c.bf16 %v364, %v364
        %v381 = vunpack.c.l.b16 %v365
        %v382 = vunpack.c.l.b16 %v366
        %v383 = vunpack.c.l.b16 %v367
        %v384 = vunpack.c.l.b16 %v368
        %v385 = vunpack.c.l.b16 %v369
        %v386 = vunpack.c.l.b16 %v370
        %v387 = vunpack.c.l.b16 %v371
        %v388 = vunpack.c.l.b16 %v372
        %v389 = vpack.c.b16 %v381, %v381
        %v390 = vpack.c.b16 %v382, %v382
        %v391 = vpack.c.b16 %v383, %v383
        %v392 = vpack.c.b16 %v384, %v384
        %v393 = vpack.c.b16 %v385, %v385
        %v394 = vpack.c.b16 %v386, %v386
        %v395 = vpack.c.b16 %v387, %v387
        %v396 = vpack.c.b16 %v388, %v388
        %v398 = vshrl.u32 %v389, 16
        %v400 = vrot.slane %v398, 7
        %v401 = vshll.u32 %v389, 16
        %v403 = vor.u32 %v400, %v401
        %v404 = vrot.slane %v400, 4
        %v406 = vshrl.u32 %v390, 16
        %v408 = vrot.slane %v406, 7
        %v409 = vshll.u32 %v390, 16
        %v411 = vor.u32 %v408, %v409
        %v412 = vrot.slane %v408, 4
        %v414 = vshrl.u32 %v391, 16
        %v416 = vrot.slane %v414, 7
        %v417 = vshll.u32 %v391, 16
        %v419 = vor.u32 %v416, %v417
        %v420 = vrot.slane %v416, 4
        %v422 = vshrl.u32 %v392, 16
        %v424 = vrot.slane %v422, 7
        %v425 = vshll.u32 %v392, 16
        %v427 = vor.u32 %v424, %v425
        %v428 = vrot.slane %v424, 4
        %v430 = vshrl.u32 %v393, 16
        %v432 = vrot.slane %v430, 7
        %v433 = vshll.u32 %v393, 16
        %v435 = vor.u32 %v432, %v433
        %v436 = vrot.slane %v432, 4
        %v438 = vshrl.u32 %v394, 16
        %v440 = vrot.slane %v438, 7
        %v441 = vshll.u32 %v394, 16
        %v443 = vor.u32 %v440, %v441
        %v444 = vrot.slane %v440, 4
        %v446 = vshrl.u32 %v395, 16
        %v448 = vrot.slane %v446, 7
        %v449 = vshll.u32 %v395, 16
        %v451 = vor.u32 %v448, %v449
        %v452 = vrot.slane %v448, 4
        %v454 = vshrl.u32 %v396, 16
        %v456 = vrot.slane %v454, 7
        %v457 = vshll.u32 %v396, 16
        %v459 = vor.u32 %v456, %v457
        %v460 = vrot.slane %v456, 4
        %s477 = scalar_lea.vmem %s268, 8
        %vm478 = vcmask 1043456
        %vm479 = vsmask.f32 7938
        %vm480 = vmand %vm478, %vm479
        %v481 = vld [vmem:[%s477] sm:$0xf]
        %v482 = vsel %vm480, %v403, %v481
        %483 = vst [vmem:[%s477] sm:$0xf] %v482
        %vm484 = vcmask 1040384
        %vm485 = vsmask.f32 256
        %vm486 = vmand %vm484, %vm485
        %v487 = vld [vmem:[%s477 + $0x4] sm:$0x1]
        %v488 = vsel %vm486, %v404, %v487
        %489 = vst [vmem:[%s477 + $0x4] sm:$0x1] %v488
        %v490 = vld [vmem:[%s477 + $0x8] sm:$0xf]
        %v491 = vsel %vm480, %v411, %v490
        %492 = vst [vmem:[%s477 + $0x8] sm:$0xf] %v491
        %v493 = vld [vmem:[%s477 + $0xc] sm:$0x1]
        %v494 = vsel %vm486, %v412, %v493
        %495 = vst [vmem:[%s477 + $0xc] sm:$0x1] %v494
        %v496 = vld [vmem:[%s477 + $0x10] sm:$0xf]
        %v497 = vsel %vm480, %v419, %v496
        %498 = vst [vmem:[%s477 + $0x10] sm:$0xf] %v497
        %v499 = vld [vmem:[%s477 + $0x14] sm:$0x1]
        %v500 = vsel %vm486, %v420, %v499
        %501 = vst [vmem:[%s477 + $0x14] sm:$0x1] %v500
        %v502 = vld [vmem:[%s477 + $0x18] sm:$0xf]
        %v503 = vsel %vm480, %v427, %v502
        %504 = vst [vmem:[%s477 + $0x18] sm:$0xf] %v503
        %v505 = vld [vmem:[%s477 + $0x1c] sm:$0x1]
        %v506 = vsel %vm486, %v428, %v505
        %507 = vst [vmem:[%s477 + $0x1c] sm:$0x1] %v506
        %v508 = vld [vmem:[%s477 + $0x20] sm:$0xf]
        %v509 = vsel %vm480, %v435, %v508
        %510 = vst [vmem:[%s477 + $0x20] sm:$0xf] %v509
        %v511 = vld [vmem:[%s477 + $0x24] sm:$0x1]
        %v512 = vsel %vm486, %v436, %v511
        %513 = vst [vmem:[%s477 + $0x24] sm:$0x1] %v512
        %v514 = vld [vmem:[%s477 + $0x28] sm:$0xf]
        %v515 = vsel %vm480, %v443, %v514
        %516 = vst [vmem:[%s477 + $0x28] sm:$0xf] %v515
        %v517 = vld [vmem:[%s477 + $0x2c] sm:$0x1]
        %v518 = vsel %vm486, %v444, %v517
        %519 = vst [vmem:[%s477 + $0x2c] sm:$0x1] %v518
        %v520 = vld [vmem:[%s477 + $0x30] sm:$0xf]
        %v521 = vsel %vm480, %v451, %v520
        %522 = vst [vmem:[%s477 + $0x30] sm:$0xf] %v521
        %v523 = vld [vmem:[%s477 + $0x34] sm:$0x1]
        %v524 = vsel %vm486, %v452, %v523
        %525 = vst [vmem:[%s477 + $0x34] sm:$0x1] %v524
        %v526 = vld [vmem:[%s477 + $0x38] sm:$0xf]
        %v527 = vsel %vm480, %v459, %v526
        %528 = vst [vmem:[%s477 + $0x38] sm:$0xf] %v527
        %v529 = vld [vmem:[%s477 + $0x3c] sm:$0x1]
        %v530 = vsel %vm486, %v460, %v529
        %531 = vst [vmem:[%s477 + $0x3c] sm:$0x1] %v530
      $region40: #{residual_block.5} parent=35 // pred_fallthru
        _
      %p532 = scmp.lt.s32.totalorder %s19, 1
      %s533 = scalar_select %p532, %s19, 1
      %p534 = scmp.lt.s32.totalorder %s20, 9
      %s535 = scalar_select %p534, %s20, 9
      %s536 = smul.addr %s535, 20
      %s537 = smul.addr %s533, 200
      %s538 = sadd.s32 %s536, %s537
      %s539 = smul.addr %s538, 4
      %s540 = scalar_lea.vmem %s4, %s539
      // Predicated region
      $region41: #{residual_block.5} parent=35 // pred_check
        %p541 = pneg %p148
      $region42: #{residual_block.5} parent=35 // pred_check_branch
        %543 = sbr.rel (%p541) target = $region44
      $region43: #{residual_block.5} parent=35 // pred_region
        _
      $region44: #{residual_block.5} parent=35 // pred_fallthru
        _
    $region36: #{residual_block.5} parent=5 // pred_fallthru
      _
    %p544 = scmp.le.s32.totalorder 2, %s10
    // Predicated region
    $region45: #{residual_block.5} parent=5 // pred_check
      %p545 = pneg %p544
    $region46: #{residual_block.5} parent=5 // pred_check_branch
      %547 = sbr.rel (%p545) target = $region48
    $region47: #{residual_block.5} parent=5 // pred_region
      %s548 = ssub.s32 %s10, 2
      // Predicated region
      $region49: #{residual_block.5} parent=47 // pred_check
        %p549 = pneg %p154
      $region50: #{residual_block.5} parent=47 // pred_check_branch
        %551 = sbr.rel (%p549) target = $region52
      $region51: #{residual_block.5} parent=47 // pred_region
        %p552 = scmp.lt.s32.totalorder %s21, 1
        %s553 = scalar_select %p552, %s21, 1
        %p554 = scmp.lt.s32.totalorder %s22, 9
        %s555 = scalar_select %p554, %s22, 9
        %s556 = smul.addr %s555, 20
        %s557 = smul.addr %s553, 200
        %s558 = sadd.s32 %s556, %s557
        %s559 = smul.addr %s558, 4
        %s560 = scalar_lea.vmem %s4, %s559
      $region52: #{residual_block.5} parent=47 // pred_fallthru
        _
    $region48: #{residual_block.5} parent=5 // pred_fallthru
      _
  $region6: #{residual_block.5} parent=0 // loop_footer
    %s14 = sadd.s32 1, %s10
  $region7: #{residual_block.5} parent=0 // loop_footer_branch
    %9 = sbr.rel target = $region3
  $region8: #{residual_block.5} parent=0 // loop_exit
    _

// kernel: residual_block.7
$region0: #{residual_block.7}
  #allocation0 [shape = 'u32[]', space=smem, size = 0x4, offset = 0x4, fixed_abs, tag = 'smem constant byte address 0x4 - core index']
  #allocation1 [shape = 'u32[144,128]{1,0:T(1,128)}', space=vmem, size = 0x12000, scoped, tag = 'internal scratch']
  %s0 = inlined_call_operand.vmem [shape: f32[2,8,64,128], index: 0, kind: input, shape index: {}]
  %s1 = inlined_call_operand.vmem [shape: f32[2,8,64,128], index: 1, kind: input, shape index: {}]
  %s2 = inlined_call_operand.vmem [shape: f32[1,128], index: 2, kind: input, shape index: {}]
  %s3 = inlined_call_operand.vmem [shape: f32[1,128], index: 3, kind: input, shape index: {}]
  %s4 = inlined_call_operand.vmem [shape: f32[2,8,64,128], index: 4, kind: output, shape index: {}]
  %s5 = sld [smem:[#allocation0]]
  $region49: #{residual_block.7} parent=0
    _
  %s7 = ssub.s32 1, %s5
  %s8 = scalar_select 0, %s7, %s5
  loop: start=0, step=1, limit=18
  $region2: #{residual_block.7} parent=0 // loop_pre_header
    _
  $region3: #{residual_block.7} parent=0 // loop_header
    %s10 = sphi 0, %s14
    %p11 = scmp.ge.s32.totalorder %s10, 18
    %s17 = sphi 0, %s29
    %s18 = sphi 0, %s25
    %s19 = sphi 0, %s17
    %s20 = sphi 0, %s18
    %s21 = sphi 0, %s19
    %s22 = sphi 0, %s20
    %s34 = sphi 0, %s36
    %s37 = sphi 0, %s34
    %s38 = sphi 0, %s37
    %s54 = sphi 0, %s38
    %s62 = sphi 0, %s64
    %s65 = sphi 0, %s62
    %s66 = sphi 0, %s65
    %s82 = sphi 0, %s66
    %s86 = sphi 0, %s86
    %s88 = sphi 0, %s86
    %s89 = sphi 0, %s88
    %s103 = sphi 0, %s89
    %s107 = sphi 0, %s107
    %s109 = sphi 0, %s107
    %s110 = sphi 0, %s109
    %s124 = sphi 0, %s110
    %s132 = sphi 0, %s134
    %s135 = sphi 0, %s132
    %s136 = sphi 0, %s135
    %s152 = sphi 0, %s136
  $region4: #{residual_block.7} parent=0 // loop_header_branch
    %13 = sbr.rel (%p11) target = $region8
  $region5: #{residual_block.7} parent=0 // loop_body
    %s15 = ssub.s32 %s10, 1
    %s16 = ssub.s32 %s10, 2
    %s23 = sadd.s32 1, %s18
    %p24 = scmp.ge.s32.totalorder %s23, 8
    %s25 = scalar_select %p24, 0, %s23
    %s26 = sadd.s32 1, %s17
    %s27 = scalar_select %p24, %s26, %s17
    %p28 = scmp.ge.s32.totalorder %s27, 2
    %s29 = scalar_select %p28, 0, %s27
    %s30 = ssub.s32 %s17, %s29
    %s31 = ssub.s32 %s18, %s25
    %s32 = sor.u32 %s30, %s31
    %p33 = scmp.eq.s32.totalorder %s32, 0
    %s35 = sadd.s32 %s34, 1
    %s36 = scalar_select %p33, %s34, %s35
    %p39 = pneg %p33
    %p40 = scmp.eq.s32.totalorder %s10, 15
    %p41 = por %p39, %p40
    %p42 = scmp.ne.s32.totalorder %s34, %s37
    %p43 = scmp.eq.s32.totalorder %s10, 0
    %p44 = por %p42, %p43
    %p45 = scmp.ne.s32.totalorder %s34, %s37
    %p46 = scmp.eq.s32.totalorder %s15, 15
    %p47 = por %p45, %p46
    %p48 = scmp.ne.s32.totalorder %s37, %s38
    %p49 = scmp.eq.s32.totalorder %s15, 0
    %p50 = por %p48, %p49
    %p51 = scmp.ne.s32.totalorder %s37, %s38
    %p52 = scmp.eq.s32.totalorder %s16, 15
    %p53 = por %p51, %p52
    %p55 = scmp.ne.s32.totalorder %s38, %s54
    %p56 = scmp.eq.s32.totalorder %s16, 0
    %p57 = por %p55, %p56
    %s58 = ssub.s32 %s17, %s29
    %s59 = ssub.s32 %s18, %s25
    %s60 = sor.u32 %s58, %s59
    %p61 = scmp.eq.s32.totalorder %s60, 0
    %s63 = sadd.s32 %s62, 1
    %s64 = scalar_select %p61, %s62, %s63
    %p67 = pneg %p61
    %p68 = scmp.eq.s32.totalorder %s10, 15
    %p69 = por %p67, %p68
    %p70 = scmp.ne.s32.totalorder %s62, %s65
    %p71 = scmp.eq.s32.totalorder %s10, 0
    %p72 = por %p70, %p71
    %p73 = scmp.ne.s32.totalorder %s62, %s65
    %p74 = scmp.eq.s32.totalorder %s15, 15
    %p75 = por %p73, %p74
    %p76 = scmp.ne.s32.totalorder %s65, %s66
    %p77 = scmp.eq.s32.totalorder %s15, 0
    %p78 = por %p76, %p77
    %p79 = scmp.ne.s32.totalorder %s65, %s66
    %p80 = scmp.eq.s32.totalorder %s16, 15
    %p81 = por %p79, %p80
    %p83 = scmp.ne.s32.totalorder %s66, %s82
    %p84 = scmp.eq.s32.totalorder %s16, 0
    %p85 = por %p83, %p84
    %s87 = sadd.s32 %s86, 1
    %p90 = scmp.eq.s32.totalorder %s10, 15
    %p91 = scmp.ne.s32.totalorder %s86, %s88
    %p92 = scmp.eq.s32.totalorder %s10, 0
    %p93 = por %p91, %p92
    %p94 = scmp.ne.s32.totalorder %s86, %s88
    %p95 = scmp.eq.s32.totalorder %s15, 15
    %p96 = por %p94, %p95
    %p97 = scmp.ne.s32.totalorder %s88, %s89
    %p98 = scmp.eq.s32.totalorder %s15, 0
    %p99 = por %p97, %p98
    %p100 = scmp.ne.s32.totalorder %s88, %s89
    %p101 = scmp.eq.s32.totalorder %s16, 15
    %p102 = por %p100, %p101
    %p104 = scmp.ne.s32.totalorder %s89, %s103
    %p105 = scmp.eq.s32.totalorder %s16, 0
    %p106 = por %p104, %p105
    %s108 = sadd.s32 %s107, 1
    %p111 = scmp.eq.s32.totalorder %s10, 15
    %p112 = scmp.ne.s32.totalorder %s107, %s109
    %p113 = scmp.eq.s32.totalorder %s10, 0
    %p114 = por %p112, %p113
    %p115 = scmp.ne.s32.totalorder %s107, %s109
    %p116 = scmp.eq.s32.totalorder %s15, 15
    %p117 = por %p115, %p116
    %p118 = scmp.ne.s32.totalorder %s109, %s110
    %p119 = scmp.eq.s32.totalorder %s15, 0
    %p120 = por %p118, %p119
    %p121 = scmp.ne.s32.totalorder %s109, %s110
    %p122 = scmp.eq.s32.totalorder %s16, 15
    %p123 = por %p121, %p122
    %p125 = scmp.ne.s32.totalorder %s110, %s124
    %p126 = scmp.eq.s32.totalorder %s16, 0
    %p127 = por %p125, %p126
    %s128 = ssub.s32 %s17, %s29
    %s129 = ssub.s32 %s18, %s25
    %s130 = sor.u32 %s128, %s129
    %p131 = scmp.eq.s32.totalorder %s130, 0
    %s133 = sadd.s32 %s132, 1
    %s134 = scalar_select %p131, %s132, %s133
    %p137 = pneg %p131
    %p138 = scmp.eq.s32.totalorder %s10, 15
    %p139 = por %p137, %p138
    %p140 = scmp.ne.s32.totalorder %s132, %s135
    %p141 = scmp.eq.s32.totalorder %s10, 0
    %p142 = por %p140, %p141
    %p143 = scmp.ne.s32.totalorder %s132, %s135
    %p144 = scmp.eq.s32.totalorder %s15, 15
    %p145 = por %p143, %p144
    %p146 = scmp.ne.s32.totalorder %s135, %s136
    %p147 = scmp.eq.s32.totalorder %s15, 0
    %p148 = por %p146, %p147
    %p149 = scmp.ne.s32.totalorder %s135, %s136
    %p150 = scmp.eq.s32.totalorder %s16, 15
    %p151 = por %p149, %p150
    %p153 = scmp.ne.s32.totalorder %s136, %s152
    %p154 = scmp.eq.s32.totalorder %s16, 0
    %p155 = por %p153, %p154
    %p156 = scmp.le.s32.totalorder 1, %s10
    %p157 = scmp.lt.s32.totalorder %s10, 17
    %p158 = pnand %p156, %p157
    %p159 = pneg %p158
    // Predicated region
    $region9: #{residual_block.7} parent=5 // pred_check
      _
    $region10: #{residual_block.7} parent=5 // pred_check_branch
      %161 = sbr.rel (%p158) target = $region12
    $region11: #{residual_block.7} parent=5 // pred_region
      %s162 = ssub.s32 %s10, 1
      // Predicated region
      $region13: #{residual_block.7} parent=11 // pred_check
        %p163 = pneg %p99
      $region14: #{residual_block.7} parent=11 // pred_check_branch
        %165 = sbr.rel (%p163) target = $region16
      $region15: #{residual_block.7} parent=11 // pred_region
        _
      $region16: #{residual_block.7} parent=11 // pred_fallthru
        _
      // Predicated region
      $region17: #{residual_block.7} parent=11 // pred_check
        %p166 = pneg %p120
      $region18: #{residual_block.7} parent=11 // pred_check_branch
        %168 = sbr.rel (%p166) target = $region20
      $region19: #{residual_block.7} parent=11 // pred_region
        _
      $region20: #{residual_block.7} parent=11 // pred_fallthru
        _
    $region12: #{residual_block.7} parent=5 // pred_fallthru
      _
    %p169 = scmp.lt.s32.totalorder %s10, 16
    // Predicated region
    $region21: #{residual_block.7} parent=5 // pred_check
      %p170 = pneg %p169
    $region22: #{residual_block.7} parent=5 // pred_check_branch
      %172 = sbr.rel (%p170) target = $region24
    $region23: #{residual_block.7} parent=5 // pred_region
      // Predicated region
      $region25: #{residual_block.7} parent=23 // pred_check
        %p173 = pneg %p44
      $region26: #{residual_block.7} parent=23 // pred_check_branch
        %175 = sbr.rel (%p173) target = $region28
      $region27: #{residual_block.7} parent=23 // pred_region
        %p176 = scmp.lt.s32.totalorder %s17, 1
        %s177 = scalar_select %p176, %s17, 1
        %p178 = scmp.lt.s32.totalorder %s18, 7
        %s179 = scalar_select %p178, %s18, 7
        %s180 = smul.addr %s179, 8
        %s181 = smul.addr %s177, 64
        %s182 = sadd.s32 %s180, %s181
        %s183 = smul.addr %s182, 8
        %s184 = scalar_lea.vmem %s0, %s183
      $region28: #{residual_block.7} parent=23 // pred_fallthru
        _
      // Predicated region
      $region29: #{residual_block.7} parent=23 // pred_check
        %p185 = pneg %p72
      $region30: #{residual_block.7} parent=23 // pred_check_branch
        %187 = sbr.rel (%p185) target = $region32
      $region31: #{residual_block.7} parent=23 // pred_region
        %p188 = scmp.lt.s32.totalorder %s17, 1
        %s189 = scalar_select %p188, %s17, 1
        %p190 = scmp.lt.s32.totalorder %s18, 7
        %s191 = scalar_select %p190, %s18, 7
        %s192 = smul.addr %s191, 8
        %s193 = smul.addr %s189, 64
        %s194 = sadd.s32 %s192, %s193
        %s195 = smul.addr %s194, 8
        %s196 = scalar_lea.vmem %s1, %s195
      $region32: #{residual_block.7} parent=23 // pred_fallthru
        _
    $region24: #{residual_block.7} parent=5 // pred_fallthru
      _
    %p197 = scmp.le.s32.totalorder 1, %s10
    %p198 = scmp.lt.s32.totalorder %s10, 17
    %p199 = pnand %p197, %p198
    %p200 = pneg %p199
    // Predicated region
    $region33: #{residual_block.7} parent=5 // pred_check
      _
    $region34: #{residual_block.7} parent=5 // pred_check_branch
      %202 = sbr.rel (%p199) target = $region36
    $region35: #{residual_block.7} parent=5 // pred_region
      %s203 = ssub.s32 %s10, 1
      %p204 = scmp.lt.s32.totalorder %s19, 1
      %s205 = scalar_select %p204, %s19, 1
      %p206 = scmp.lt.s32.totalorder %s20, 7
      %s207 = scalar_select %p206, %s20, 7
      %s208 = smul.addr %s207, 8
      %s209 = smul.addr %s205, 64
      %s210 = sadd.s32 %s208, %s209
      %s211 = smul.addr %s210, 8
      %s212 = scalar_lea.vmem %s0, %s211
      %p213 = pneg %p50
      %p214 = pneg %p47
      %p215 = scmp.lt.s32.totalorder %s19, 1
      %s216 = scalar_select %p215, %s19, 1
      %p217 = scmp.lt.s32.totalorder %s20, 7
      %s218 = scalar_select %p217, %s20, 7
      %s219 = smul.addr %s218, 8
      %s220 = smul.addr %s216, 64
      %s221 = sadd.s32 %s219, %s220
      %s222 = smul.addr %s221, 8
      %s223 = scalar_lea.vmem %s1, %s222
      %p224 = pneg %p78
      %p225 = pneg %p75
      %p226 = pneg %p99
      %p227 = pneg %p96
      %p228 = pneg %p120
      %p229 = pneg %p117
      %p230 = pneg %p148
      %p231 = pneg %p145
      %p232 = scmp.lt.s32.totalorder %s19, 1
      %s233 = scalar_select %p232, %s19, 1
      %p234 = scmp.lt.s32.totalorder %s20, 7
      %s235 = scalar_select %p234, %s20, 7
      %s236 = smul.addr %s235, 8
      %s237 = smul.addr %s233, 64
      %s238 = sadd.s32 %s236, %s237
      %s239 = smul.addr %s238, 8
      %s240 = scalar_lea.vmem %s4, %s239
      %p241 = scmp.lt.s32.totalorder %s19, 1
      %s242 = scalar_select %p241, %s19, 1
      %p243 = scmp.lt.s32.totalorder %s20, 7
      %s244 = scalar_select %p243, %s20, 7
      %s245 = smul.addr %s244, 8
      %s246 = smul.addr %s242, 64
      %s247 = sadd.s32 %s245, %s246
      %s248 = smul.addr %s247, 8
      %s249 = scalar_lea.vmem %s0, %s248
      %p250 = scmp.lt.s32.totalorder %s19, 1
      %s251 = scalar_select %p250, %s19, 1
      %p252 = scmp.lt.s32.totalorder %s20, 7
      %s253 = scalar_select %p252, %s20, 7
      %s254 = smul.addr %s253, 8
      %s255 = smul.addr %s251, 64
      %s256 = sadd.s32 %s254, %s255
      %s257 = smul.addr %s256, 8
      %s258 = scalar_lea.vmem %s1, %s257
      %p259 = scmp.lt.s32.totalorder %s19, 1
      %s260 = scalar_select %p259, %s19, 1
      %p261 = scmp.lt.s32.totalorder %s20, 7
      %s262 = scalar_select %p261, %s20, 7
      %s263 = smul.addr %s262, 8
      %s264 = smul.addr %s260, 64
      %s265 = sadd.s32 %s263, %s264
      %s266 = smul.addr %s265, 8
      %s267 = scalar_lea.vmem %s4, %s266
      %v268 = vld [vmem:[%s258] sm:$0xff]
      %v269 = vld [vmem:[%s258 + $0x8] sm:$0xff]
      %v270 = vld [vmem:[%s258 + $0x10] sm:$0xff]
      %v271 = vld [vmem:[%s258 + $0x18] sm:$0xff]
      %v272 = vld [vmem:[%s258 + $0x20] sm:$0xff]
      %v273 = vld [vmem:[%s258 + $0x28] sm:$0xff]
      %v274 = vld [vmem:[%s258 + $0x30] sm:$0xff]
      %v275 = vld [vmem:[%s258 + $0x38] sm:$0xff]
      %v276 = vld [vmem:[%s249] sm:$0xff]
      %v277 = vld [vmem:[%s249 + $0x8] sm:$0xff]
      %v278 = vld [vmem:[%s249 + $0x10] sm:$0xff]
      %v279 = vld [vmem:[%s249 + $0x18] sm:$0xff]
      %v280 = vld [vmem:[%s249 + $0x20] sm:$0xff]
      %v281 = vld [vmem:[%s249 + $0x28] sm:$0xff]
      %v282 = vld [vmem:[%s249 + $0x30] sm:$0xff]
      %v283 = vld [vmem:[%s249 + $0x38] sm:$0xff]
      %v284 = vld [vmem:[%s2] sm:$0x1]
      %v286 = vlaneseq
      %v287 = vshrl.u32 %v286, 7
      %v288 = vsub.s32 0, %v287
      %v289 = vrot.slane %v284, %v288
      %v291 = vmul.f32 %v276, %v289
      %v292 = vmul.f32 %v277, %v289
      %v293 = vmul.f32 %v278, %v289
      %v294 = vmul.f32 %v279, %v289
      %v295 = vmul.f32 %v280, %v289
      %v296 = vmul.f32 %v281, %v289
      %v297 = vmul.f32 %v282, %v289
      %v298 = vmul.f32 %v283, %v289
      %v299 = vld [vmem:[%s3] sm:$0x1]
      %v301 = vlaneseq
      %v302 = vshrl.u32 %v301, 7
      %v303 = vsub.s32 0, %v302
      %v304 = vrot.slane %v299, %v303
      %v306 = vadd.f32 %v291, %v304
      %v307 = vadd.f32 %v292, %v304
      %v308 = vadd.f32 %v293, %v304
      %v309 = vadd.f32 %v294, %v304
      %v310 = vadd.f32 %v295, %v304
      %v311 = vadd.f32 %v296, %v304
      %v312 = vadd.f32 %v297, %v304
      %v313 = vadd.f32 %v298, %v304
      %v314 = vadd.f32 %v268, %v306
      %v315 = vadd.f32 %v269, %v307
      %v316 = vadd.f32 %v270, %v308
      %v317 = vadd.f32 %v271, %v309
      %v318 = vadd.f32 %v272, %v310
      %v319 = vadd.f32 %v273, %v311
      %v320 = vadd.f32 %v274, %v312
      %v321 = vadd.f32 %v275, %v313
      %322 = vst [vmem:[%s267] sm:$0xff] %v314
      %323 = vst [vmem:[%s267 + $0x8] sm:$0xff] %v315
      %324 = vst [vmem:[%s267 + $0x10] sm:$0xff] %v316
      %325 = vst [vmem:[%s267 + $0x18] sm:$0xff] %v317
      %326 = vst [vmem:[%s267 + $0x20] sm:$0xff] %v318
      %327 = vst [vmem:[%s267 + $0x28] sm:$0xff] %v319
      %328 = vst [vmem:[%s267 + $0x30] sm:$0xff] %v320
      %329 = vst [vmem:[%s267 + $0x38] sm:$0xff] %v321
      %p330 = scmp.lt.s32.totalorder %s19, 1
      %s331 = scalar_select %p330, %s19, 1
      %p332 = scmp.lt.s32.totalorder %s20, 7
      %s333 = scalar_select %p332, %s20, 7
      %s334 = smul.addr %s333, 8
      %s335 = smul.addr %s331, 64
      %s336 = sadd.s32 %s334, %s335
      %s337 = smul.addr %s336, 8
      %s338 = scalar_lea.vmem %s4, %s337
      // Predicated region
      $region37: #{residual_block.7} parent=35 // pred_check
        %p339 = pneg %p145
      $region38: #{residual_block.7} parent=35 // pred_check_branch
        %341 = sbr.rel (%p339) target = $region40
      $region39: #{residual_block.7} parent=35 // pred_region
        _
      $region40: #{residual_block.7} parent=35 // pred_fallthru
        _
    $region36: #{residual_block.7} parent=5 // pred_fallthru
      _
    %p342 = scmp.le.s32.totalorder 2, %s10
    // Predicated region
    $region41: #{residual_block.7} parent=5 // pred_check
      %p343 = pneg %p342
    $region42: #{residual_block.7} parent=5 // pred_check_branch
      %345 = sbr.rel (%p343) target = $region44
    $region43: #{residual_block.7} parent=5 // pred_region
      %s346 = ssub.s32 %s10, 2
      // Predicated region
      $region45: #{residual_block.7} parent=43 // pred_check
        %p347 = pneg %p151
      $region46: #{residual_block.7} parent=43 // pred_check_branch
        %349 = sbr.rel (%p347) target = $region48
      $region47: #{residual_block.7} parent=43 // pred_region
        %p350 = scmp.lt.s32.totalorder %s21, 1
        %s351 = scalar_select %p350, %s21, 1
        %p352 = scmp.lt.s32.totalorder %s22, 7
        %s353 = scalar_select %p352, %s22, 7
        %s354 = smul.addr %s353, 8
        %s355 = smul.addr %s351, 64
        %s356 = sadd.s32 %s354, %s355
        %s357 = smul.addr %s356, 8
        %s358 = scalar_lea.vmem %s4, %s357
      $region48: #{residual_block.7} parent=43 // pred_fallthru
        _
    $region44: #{residual_block.7} parent=5 // pred_fallthru
      _
  $region6: #{residual_block.7} parent=0 // loop_footer
    %s14 = sadd.s32 1, %s10
  $region7: #{residual_block.7} parent=0 // loop_footer_branch
    %9 = sbr.rel target = $region3
  $region8: #{residual_block.7} parent=0 // loop_exit
    _

// kernel: residual_block.4
$region0: #{residual_block.4}
  #allocation0 [shape = 'u32[]', space=smem, size = 0x4, offset = 0x4, fixed_abs, tag = 'smem constant byte address 0x4 - core index']
  #allocation1 [shape = 'u32[144,128]{1,0:T(1,128)}', space=vmem, size = 0x12000, scoped, tag = 'internal scratch']
  %s0 = inlined_call_operand.vmem [shape: bf16[2,10,10,10,128], index: 0, kind: input, shape index: {}, may-alias: {0,1,2}]
  %s1 = inlined_call_operand.vmem [shape: bf16[2,10,10,10,128], index: 1, kind: input, shape index: {}, may-alias: {0,1,2}]
  %s2 = inlined_call_operand.vmem [shape: bf16[2,10,10,10,128], index: 2, kind: input, shape index: {}, may-alias: {0,1,2}]
  %s3 = inlined_call_operand.vmem [shape: bf16[3,3,3,128,128], index: 3, kind: input, shape index: {}]
  %s4 = inlined_call_operand.vmem [shape: f32[1,128], index: 4, kind: input, shape index: {}]
  %s5 = inlined_call_operand.vmem [shape: f32[2,8,64,128], index: 5, kind: output, shape index: {0}]
  %s6 = inlined_call_operand.vmem [shape: f32[1,128], index: 6, kind: output, shape index: {1}]
  %s7 = inlined_call_operand.vmem [shape: f32[1,128], index: 7, kind: output, shape index: {2}]
  %8 = xla_tuple %s5, %s6, %s7
  %s9 = sld [smem:[#allocation0]]
  $region73: #{residual_block.4} parent=0
    _
  %s11 = ssub.s32 1, %s9
  %s12 = scalar_select 0, %s11, %s9
  loop: start=0, step=1, limit=18
  $region2: #{residual_block.4} parent=0 // loop_pre_header
    _
  $region3: #{residual_block.4} parent=0 // loop_header
    %s14 = sphi 0, %s18
    %p15 = scmp.ge.s32.totalorder %s14, 18
    %s21 = sphi 0, %s33
    %s22 = sphi 0, %s29
    %s23 = sphi 0, %s21
    %s24 = sphi 0, %s22
    %s25 = sphi 0, %s23
    %s26 = sphi 0, %s24
    %s38 = sphi 0, %s40
    %s41 = sphi 0, %s38
    %s42 = sphi 0, %s41
    %s58 = sphi 0, %s42
    %s68 = sphi 0, %s70
    %s71 = sphi 0, %s68
    %s72 = sphi 0, %s71
    %s88 = sphi 0, %s72
    %s98 = sphi 0, %s100
    %s101 = sphi 0, %s98
    %s102 = sphi 0, %s101
    %s118 = sphi 0, %s102
    %s122 = sphi 0, %s122
    %s124 = sphi 0, %s122
    %s125 = sphi 0, %s124
    %s139 = sphi 0, %s125
    %s143 = sphi 0, %s143
    %s145 = sphi 0, %s143
    %s146 = sphi 0, %s145
    %s160 = sphi 0, %s146
    %s168 = sphi 0, %s170
    %s171 = sphi 0, %s168
    %s172 = sphi 0, %s171
    %s188 = sphi 0, %s172
    %s192 = sphi 0, %s192
    %s194 = sphi 0, %s192
    %s195 = sphi 0, %s194
    %s209 = sphi 0, %s195
    %s213 = sphi 0, %s213
    %s215 = sphi 0, %s213
    %s216 = sphi 0, %s215
    %s230 = sphi 0, %s216
  $region4: #{residual_block.4} parent=0 // loop_header_branch
    %17 = sbr.rel (%p15) target = $region8
  $region5: #{residual_block.4} parent=0 // loop_body
    %s19 = ssub.s32 %s14, 1
    %s20 = ssub.s32 %s14, 2
    %s27 = sadd.s32 1, %s22
    %p28 = scmp.ge.s32.totalorder %s27, 8
    %s29 = scalar_select %p28, 0, %s27
    %s30 = sadd.s32 1, %s21
    %s31 = scalar_select %p28, %s30, %s21
    %p32 = scmp.ge.s32.totalorder %s31, 2
    %s33 = scalar_select %p32, 0, %s31
    %s34 = ssub.s32 %s21, %s33
    %s35 = ssub.s32 %s22, %s29
    %s36 = sor.u32 %s34, %s35
    %p37 = scmp.eq.s32.totalorder %s36, 0
    %s39 = sadd.s32 %s38, 1
    %s40 = scalar_select %p37, %s38, %s39
    %p43 = pneg %p37
    %p44 = scmp.eq.s32.totalorder %s14, 15
    %p45 = por %p43, %p44
    %p46 = scmp.ne.s32.totalorder %s38, %s41
    %p47 = scmp.eq.s32.totalorder %s14, 0
    %p48 = por %p46, %p47
    %p49 = scmp.ne.s32.totalorder %s38, %s41
    %p50 = scmp.eq.s32.totalorder %s19, 15
    %p51 = por %p49, %p50
    %p52 = scmp.ne.s32.totalorder %s41, %s42
    %p53 = scmp.eq.s32.totalorder %s19, 0
    %p54 = por %p52, %p53
    %p55 = scmp.ne.s32.totalorder %s41, %s42
    %p56 = scmp.eq.s32.totalorder %s20, 15
    %p57 = por %p55, %p56
    %p59 = scmp.ne.s32.totalorder %s42, %s58
    %p60 = scmp.eq.s32.totalorder %s20, 0
    %p61 = por %p59, %p60
    %s62 = sadd.s32 %s22, 1
    %s63 = sadd.s32 %s29, 1
    %s64 = ssub.s32 %s21, %s33
    %s65 = ssub.s32 %s62, %s63
    %s66 = sor.u32 %s64, %s65
    %p67 = scmp.eq.s32.totalorder %s66, 0
    %s69 = sadd.s32 %s68, 1
    %s70 = scalar_select %p67, %s68, %s69
    %p73 = pneg %p67
    %p74 = scmp.eq.s32.totalorder %s14, 15
    %p75 = por %p73, %p74
    %p76 = scmp.ne.s32.totalorder %s68, %s71
    %p77 = scmp.eq.s32.totalorder %s14, 0
    %p78 = por %p76, %p77
    %p79 = scmp.ne.s32.totalorder %s68, %s71
    %p80 = scmp.eq.s32.totalorder %s19, 15
    %p81 = por %p79, %p80
    %p82 = scmp.ne.s32.totalorder %s71, %s72
    %p83 = scmp.eq.s32.totalorder %s19, 0
    %p84 = por %p82, %p83
    %p85 = scmp.ne.s32.totalorder %s71, %s72
    %p86 = scmp.eq.s32.totalorder %s20, 15
    %p87 = por %p85, %p86
    %p89 = scmp.ne.s32.totalorder %s72, %s88
    %p90 = scmp.eq.s32.totalorder %s20, 0
    %p91 = por %p89, %p90
    %s92 = sadd.s32 %s22, 2
    %s93 = sadd.s32 %s29, 2
    %s94 = ssub.s32 %s21, %s33
    %s95 = ssub.s32 %s92, %s93
    %s96 = sor.u32 %s94, %s95
    %p97 = scmp.eq.s32.totalorder %s96, 0
    %s99 = sadd.s32 %s98, 1
    %s100 = scalar_select %p97, %s98, %s99
    %p103 = pneg %p97
    %p104 = scmp.eq.s32.totalorder %s14, 15
    %p105 = por %p103, %p104
    %p106 = scmp.ne.s32.totalorder %s98, %s101
    %p107 = scmp.eq.s32.totalorder %s14, 0
    %p108 = por %p106, %p107
    %p109 = scmp.ne.s32.totalorder %s98, %s101
    %p110 = scmp.eq.s32.totalorder %s19, 15
    %p111 = por %p109, %p110
    %p112 = scmp.ne.s32.totalorder %s101, %s102
    %p113 = scmp.eq.s32.totalorder %s19, 0
    %p114 = por %p112, %p113
    %p115 = scmp.ne.s32.totalorder %s101, %s102
    %p116 = scmp.eq.s32.totalorder %s20, 15
    %p117 = por %p115, %p116
    %p119 = scmp.ne.s32.totalorder %s102, %s118
    %p120 = scmp.eq.s32.totalorder %s20, 0
    %p121 = por %p119, %p120
    %s123 = sadd.s32 %s122, 1
    %p126 = scmp.eq.s32.totalorder %s14, 15
    %p127 = scmp.ne.s32.totalorder %s122, %s124
    %p128 = scmp.eq.s32.totalorder %s14, 0
    %p129 = por %p127, %p128
    %p130 = scmp.ne.s32.totalorder %s122, %s124
    %p131 = scmp.eq.s32.totalorder %s19, 15
    %p132 = por %p130, %p131
    %p133 = scmp.ne.s32.totalorder %s124, %s125
    %p134 = scmp.eq.s32.totalorder %s19, 0
    %p135 = por %p133, %p134
    %p136 = scmp.ne.s32.totalorder %s124, %s125
    %p137 = scmp.eq.s32.totalorder %s20, 15
    %p138 = por %p136, %p137
    %p140 = scmp.ne.s32.totalorder %s125, %s139
    %p141 = scmp.eq.s32.totalorder %s20, 0
    %p142 = por %p140, %p141
    %s144 = sadd.s32 %s143, 1
    %p147 = scmp.eq.s32.totalorder %s14, 15
    %p148 = scmp.ne.s32.totalorder %s143, %s145
    %p149 = scmp.eq.s32.totalorder %s14, 0
    %p150 = por %p148, %p149
    %p151 = scmp.ne.s32.totalorder %s143, %s145
    %p152 = scmp.eq.s32.totalorder %s19, 15
    %p153 = por %p151, %p152
    %p154 = scmp.ne.s32.totalorder %s145, %s146
    %p155 = scmp.eq.s32.totalorder %s19, 0
    %p156 = por %p154, %p155
    %p157 = scmp.ne.s32.totalorder %s145, %s146
    %p158 = scmp.eq.s32.totalorder %s20, 15
    %p159 = por %p157, %p158
    %p161 = scmp.ne.s32.totalorder %s146, %s160
    %p162 = scmp.eq.s32.totalorder %s20, 0
    %p163 = por %p161, %p162
    %s164 = ssub.s32 %s21, %s33
    %s165 = ssub.s32 %s22, %s29
    %s166 = sor.u32 %s164, %s165
    %p167 = scmp.eq.s32.totalorder %s166, 0
    %s169 = sadd.s32 %s168, 1
    %s170 = scalar_select %p167, %s168, %s169
    %p173 = pneg %p167
    %p174 = scmp.eq.s32.totalorder %s14, 15
    %p175 = por %p173, %p174
    %p176 = scmp.ne.s32.totalorder %s168, %s171
    %p177 = scmp.eq.s32.totalorder %s14, 0
    %p178 = por %p176, %p177
    %p179 = scmp.ne.s32.totalorder %s168, %s171
    %p180 = scmp.eq.s32.totalorder %s19, 15
    %p181 = por %p179, %p180
    %p182 = scmp.ne.s32.totalorder %s171, %s172
    %p183 = scmp.eq.s32.totalorder %s19, 0
    %p184 = por %p182, %p183
    %p185 = scmp.ne.s32.totalorder %s171, %s172
    %p186 = scmp.eq.s32.totalorder %s20, 15
    %p187 = por %p185, %p186
    %p189 = scmp.ne.s32.totalorder %s172, %s188
    %p190 = scmp.eq.s32.totalorder %s20, 0
    %p191 = por %p189, %p190
    %s193 = sadd.s32 %s192, 1
    %p196 = scmp.eq.s32.totalorder %s14, 15
    %p197 = scmp.ne.s32.totalorder %s192, %s194
    %p198 = scmp.eq.s32.totalorder %s14, 0
    %p199 = por %p197, %p198
    %p200 = scmp.ne.s32.totalorder %s192, %s194
    %p201 = scmp.eq.s32.totalorder %s19, 15
    %p202 = por %p200, %p201
    %p203 = scmp.ne.s32.totalorder %s194, %s195
    %p204 = scmp.eq.s32.totalorder %s19, 0
    %p205 = por %p203, %p204
    %p206 = scmp.ne.s32.totalorder %s194, %s195
    %p207 = scmp.eq.s32.totalorder %s20, 15
    %p208 = por %p206, %p207
    %p210 = scmp.ne.s32.totalorder %s195, %s209
    %p211 = scmp.eq.s32.totalorder %s20, 0
    %p212 = por %p210, %p211
    %s214 = sadd.s32 %s213, 1
    %p217 = scmp.eq.s32.totalorder %s14, 15
    %p218 = scmp.ne.s32.totalorder %s213, %s215
    %p219 = scmp.eq.s32.totalorder %s14, 0
    %p220 = por %p218, %p219
    %p221 = scmp.ne.s32.totalorder %s213, %s215
    %p222 = scmp.eq.s32.totalorder %s19, 15
    %p223 = por %p221, %p222
    %p224 = scmp.ne.s32.totalorder %s215, %s216
    %p225 = scmp.eq.s32.totalorder %s19, 0
    %p226 = por %p224, %p225
    %p227 = scmp.ne.s32.totalorder %s215, %s216
    %p228 = scmp.eq.s32.totalorder %s20, 15
    %p229 = por %p227, %p228
    %p231 = scmp.ne.s32.totalorder %s216, %s230
    %p232 = scmp.eq.s32.totalorder %s20, 0
    %p233 = por %p231, %p232
    %p234 = scmp.le.s32.totalorder 1, %s14
    %p235 = scmp.lt.s32.totalorder %s14, 17
    %p236 = pnand %p234, %p235
    %p237 = pneg %p236
    // Predicated region
    $region9: #{residual_block.4} parent=5 // pred_check
      _
    $region10: #{residual_block.4} parent=5 // pred_check_branch
      %239 = sbr.rel (%p236) target = $region12
    $region11: #{residual_block.4} parent=5 // pred_region
      %s240 = ssub.s32 %s14, 1
      // Predicated region
      $region13: #{residual_block.4} parent=11 // pred_check
        %p241 = pneg %p135
      $region14: #{residual_block.4} parent=11 // pred_check_branch
        %243 = sbr.rel (%p241) target = $region16
      $region15: #{residual_block.4} parent=11 // pred_region
        _
      $region16: #{residual_block.4} parent=11 // pred_fallthru
        _
      // Predicated region
      $region17: #{residual_block.4} parent=11 // pred_check
        %p244 = pneg %p156
      $region18: #{residual_block.4} parent=11 // pred_check_branch
        %246 = sbr.rel (%p244) target = $region20
      $region19: #{residual_block.4} parent=11 // pred_region
        _
      $region20: #{residual_block.4} parent=11 // pred_fallthru
        _
    $region12: #{residual_block.4} parent=5 // pred_fallthru
      _
    %p247 = scmp.lt.s32.totalorder %s14, 16
    // Predicated region
    $region21: #{residual_block.4} parent=5 // pred_check
      %p248 = pneg %p247
    $region22: #{residual_block.4} parent=5 // pred_check_branch
      %250 = sbr.rel (%p248) target = $region24
    $region23: #{residual_block.4} parent=5 // pred_region
      // Predicated region
      $region25: #{residual_block.4} parent=23 // pred_check
        %p251 = pneg %p48
      $region26: #{residual_block.4} parent=23 // pred_check_branch
        %253 = sbr.rel (%p251) target = $region28
      $region27: #{residual_block.4} parent=23 // pred_region
        %p254 = scmp.lt.s32.totalorder %s21, 1
        %s255 = scalar_select %p254, %s21, 1
        %p256 = scmp.lt.s32.totalorder %s22, 9
        %s257 = scalar_select %p256, %s22, 9
        %s258 = smul.addr %s257, 20
        %s259 = smul.addr %s255, 200
        %s260 = sadd.s32 %s258, %s259
        %s261 = smul.addr %s260, 4
        %s262 = scalar_lea.vmem %s0, %s261
      $region28: #{residual_block.4} parent=23 // pred_fallthru
        _
      // Predicated region
      $region29: #{residual_block.4} parent=23 // pred_check
        %p263 = pneg %p78
      $region30: #{residual_block.4} parent=23 // pred_check_branch
        %265 = sbr.rel (%p263) target = $region32
      $region31: #{residual_block.4} parent=23 // pred_region
        %s266 = sadd.s32 %s22, 1
        %p267 = scmp.lt.s32.totalorder %s21, 1
        %s268 = scalar_select %p267, %s21, 1
        %p269 = scmp.lt.s32.totalorder %s266, 9
        %s270 = scalar_select %p269, %s266, 9
        %s271 = smul.addr %s270, 20
        %s272 = smul.addr %s268, 200
        %s273 = sadd.s32 %s271, %s272
        %s274 = smul.addr %s273, 4
        %s275 = scalar_lea.vmem %s1, %s274
        %s276 = sadd.s32 %s22, 1
      $region32: #{residual_block.4} parent=23 // pred_fallthru
        _
      // Predicated region
      $region33: #{residual_block.4} parent=23 // pred_check
        %p277 = pneg %p108
      $region34: #{residual_block.4} parent=23 // pred_check_branch
        %279 = sbr.rel (%p277) target = $region36
      $region35: #{residual_block.4} parent=23 // pred_region
        %s280 = sadd.s32 %s22, 2
        %p281 = scmp.lt.s32.totalorder %s21, 1
        %s282 = scalar_select %p281, %s21, 1
        %p283 = scmp.lt.s32.totalorder %s280, 9
        %s284 = scalar_select %p283, %s280, 9
        %s285 = smul.addr %s284, 20
        %s286 = smul.addr %s282, 200
        %s287 = sadd.s32 %s285, %s286
        %s288 = smul.addr %s287, 4
        %s289 = scalar_lea.vmem %s2, %s288
        %s290 = sadd.s32 %s22, 2
      $region36: #{residual_block.4} parent=23 // pred_fallthru
        _
    $region24: #{residual_block.4} parent=5 // pred_fallthru
      _
    %p291 = scmp.le.s32.totalorder 1, %s14
    %p292 = scmp.lt.s32.totalorder %s14, 17
    %p293 = pnand %p291, %p292
    %p294 = pneg %p293
    // Predicated region
    $region37: #{residual_block.4} parent=5 // pred_check
      _
    $region38: #{residual_block.4} parent=5 // pred_check_branch
      %296 = sbr.rel (%p293) target = $region40
    $region39: #{residual_block.4} parent=5 // pred_region
      %s297 = ssub.s32 %s14, 1
      %p298 = scmp.lt.s32.totalorder %s23, 1
      %s299 = scalar_select %p298, %s23, 1
      %p300 = scmp.lt.s32.totalorder %s24, 9
      %s301 = scalar_select %p300, %s24, 9
      %s302 = smul.addr %s301, 20
      %s303 = smul.addr %s299, 200
      %s304 = sadd.s32 %s302, %s303
      %s305 = smul.addr %s304, 4
      %s306 = scalar_lea.vmem %s0, %s305
      %p307 = pneg %p54
      %p308 = pneg %p51
      %s309 = sadd.s32 %s24, 1
      %p310 = scmp.lt.s32.totalorder %s23, 1
      %s311 = scalar_select %p310, %s23, 1
      %p312 = scmp.lt.s32.totalorder %s309, 9
      %s313 = scalar_select %p312, %s309, 9
      %s314 = smul.addr %s313, 20
      %s315 = smul.addr %s311, 200
      %s316 = sadd.s32 %s314, %s315
      %s317 = smul.addr %s316, 4
      %s318 = scalar_lea.vmem %s1, %s317
      %p319 = pneg %p84
      %p320 = pneg %p81
      %s321 = sadd.s32 %s24, 2
      %p322 = scmp.lt.s32.totalorder %s23, 1
      %s323 = scalar_select %p322, %s23, 1
      %p324 = scmp.lt.s32.totalorder %s321, 9
      %s325 = scalar_select %p324, %s321, 9
      %s326 = smul.addr %s325, 20
      %s327 = smul.addr %s323, 200
      %s328 = sadd.s32 %s326, %s327
      %s329 = smul.addr %s328, 4
      %s330 = scalar_lea.vmem %s2, %s329
      %p331 = pneg %p114
      %p332 = pneg %p111
      %p333 = pneg %p135
      %p334 = pneg %p132
      %p335 = pneg %p156
      %p336 = pneg %p153
      %p337 = pneg %p184
      %p338 = pneg %p181
      %p339 = scmp.lt.s32.totalorder %s23, 1
      %s340 = scalar_select %p339, %s23, 1
      %p341 = scmp.lt.s32.totalorder %s24, 7
      %s342 = scalar_select %p341, %s24, 7
      %s343 = smul.addr %s342, 8
      %s344 = smul.addr %s340, 64
      %s345 = sadd.s32 %s343, %s344
      %s346 = smul.addr %s345, 8
      %s347 = scalar_lea.vmem %s5, %s346
      %p348 = pneg %p205
      %p349 = pneg %p202
      %p350 = pneg %p226
      %p351 = pneg %p223
      %p352 = scmp.lt.s32.totalorder %s23, 1
      %s353 = scalar_select %p352, %s23, 1
      %p354 = scmp.lt.s32.totalorder %s24, 9
      %s355 = scalar_select %p354, %s24, 9
      %s356 = smul.addr %s355, 20
      %s357 = smul.addr %s353, 200
      %s358 = sadd.s32 %s356, %s357
      %s359 = smul.addr %s358, 4
      %s360 = scalar_lea.vmem %s0, %s359
      %s361 = sadd.s32 %s24, 1
      %p362 = scmp.lt.s32.totalorder %s23, 1
      %s363 = scalar_select %p362, %s23, 1
      %p364 = scmp.lt.s32.totalorder %s361, 9
      %s365 = scalar_select %p364, %s361, 9
      %s366 = smul.addr %s365, 20
      %s367 = smul.addr %s363, 200
      %s368 = sadd.s32 %s366, %s367
      %s369 = smul.addr %s368, 4
      %s370 = scalar_lea.vmem %s1, %s369
      %s371 = sadd.s32 %s24, 1
      %s372 = sadd.s32 %s24, 2
      %p373 = scmp.lt.s32.totalorder %s23, 1
      %s374 = scalar_select %p373, %s23, 1
      %p375 = scmp.lt.s32.totalorder %s372, 9
      %s376 = scalar_select %p375, %s372, 9
      %s377 = smul.addr %s376, 20
      %s378 = smul.addr %s374, 200
      %s379 = sadd.s32 %s377, %s378
      %s380 = smul.addr %s379, 4
      %s381 = scalar_lea.vmem %s2, %s380
      %s382 = sadd.s32 %s24, 2
      %p383 = scmp.lt.s32.totalorder %s23, 1
      %s384 = scalar_select %p383, %s23, 1
      %p385 = scmp.lt.s32.totalorder %s24, 7
      %s386 = scalar_select %p385, %s24, 7
      %s387 = smul.addr %s386, 8
      %s388 = smul.addr %s384, 64
      %s389 = sadd.s32 %s387, %s388
      %s390 = smul.addr %s389, 8
      %s391 = scalar_lea.vmem %s5, %s390
      %v393 = vld [vmem:[%s360] sm:$0xf]
      %v394 = vld [vmem:[%s360 + $0x8] sm:$0xf]
      %v395 = vld [vmem:[%s360 + $0x10] sm:$0xf]
      %v396 = vld [vmem:[%s360 + $0x18] sm:$0xf]
      %v397 = vld [vmem:[%s360 + $0x20] sm:$0xf]
      %v398 = vld [vmem:[%s360 + $0x28] sm:$0xf]
      %v399 = vld [vmem:[%s360 + $0x30] sm:$0xf]
      %v400 = vld [vmem:[%s360 + $0x38] sm:$0xf]
      %v401 = vld [vmem:[%s3] sm:$0xf]
      %v402 = vld [vmem:[%s3 + $0x4] sm:$0xf]
      %v403 = vld [vmem:[%s3 + $0x8] sm:$0xf]
      %v404 = vld [vmem:[%s3 + $0xc] sm:$0xf]
      %v405 = vld [vmem:[%s3 + $0x10] sm:$0xf]
      %v406 = vld [vmem:[%s3 + $0x14] sm:$0xf]
      %v407 = vld [vmem:[%s3 + $0x18] sm:$0xf]
      %v408 = vld [vmem:[%s3 + $0x1c] sm:$0xf]
      %v409 = vld [vmem:[%s3 + $0x20] sm:$0xf]
      %v410 = vld [vmem:[%s3 + $0x24] sm:$0xf]
      %v411 = vld [vmem:[%s3 + $0x28] sm:$0xf]
      %v412 = vld [vmem:[%s3 + $0x2c] sm:$0xf]
      %v413 = vld [vmem:[%s3 + $0x30] sm:$0xf]
      %v414 = vld [vmem:[%s3 + $0x34] sm:$0xf]
      %v415 = vld [vmem:[%s3 + $0x38] sm:$0xf]
      %v416 = vld [vmem:[%s3 + $0x3c] sm:$0xf]
      %v417 = vld [vmem:[%s360 + $0x4] sm:$0x1]
      %v418 = vld [vmem:[%s360 + $0xc] sm:$0x1]
      %v419 = vld [vmem:[%s360 + $0x14] sm:$0x1]
      %v420 = vld [vmem:[%s360 + $0x1c] sm:$0x1]
      %v421 = vld [vmem:[%s360 + $0x24] sm:$0x1]
      %v422 = vld [vmem:[%s360 + $0x2c] sm:$0x1]
      %v423 = vld [vmem:[%s360 + $0x34] sm:$0x1]
      %v424 = vld [vmem:[%s360 + $0x3c] sm:$0x1]
      %vm425 = vsmask.f32 3328
      %vm426 = vsmask.f32 7440
      %vm427 = vmor %vm425, %vm426
      %v429 = vshrl.u32 %v393, 16
      %v431 = vrot.slane %v429, 4
      %v432 = vshll.u32 %v393, 16
      %v434 = vrot.slane %v432, 5
      %v435 = vor.u32 %v431, %v434
      %v436 = vrot.slane %v435, 4
      %v438 = vshll.u32 %v417, 16
      %v440 = vrot.slane %v438, 5
      %v441 = vsel %vm427, %v436, %v440
      %v443 = vshrl.u32 %v394, 16
      %v445 = vrot.slane %v443, 4
      %v446 = vshll.u32 %v394, 16
      %v448 = vrot.slane %v446, 5
      %v449 = vor.u32 %v445, %v448
      %v450 = vrot.slane %v449, 4
      %v452 = vshll.u32 %v418, 16
      %v454 = vrot.slane %v452, 5
      %v455 = vsel %vm427, %v450, %v454
      %v457 = vshrl.u32 %v395, 16
      %v459 = vrot.slane %v457, 4
      %v460 = vshll.u32 %v395, 16
      %v462 = vrot.slane %v460, 5
      %v463 = vor.u32 %v459, %v462
      %v464 = vrot.slane %v463, 4
      %v466 = vshll.u32 %v419, 16
      %v468 = vrot.slane %v466, 5
      %v469 = vsel %vm427, %v464, %v468
      %v471 = vshrl.u32 %v396, 16
      %v473 = vrot.slane %v471, 4
      %v474 = vshll.u32 %v396, 16
      %v476 = vrot.slane %v474, 5
      %v477 = vor.u32 %v473, %v476
      %v478 = vrot.slane %v477, 4
      %v480 = vshll.u32 %v420, 16
      %v482 = vrot.slane %v480, 5
      %v483 = vsel %vm427, %v478, %v482
      %v485 = vshrl.u32 %v397, 16
      %v487 = vrot.slane %v485, 4
      %v488 = vshll.u32 %v397, 16
      %v490 = vrot.slane %v488, 5
      %v491 = vor.u32 %v487, %v490
      %v492 = vrot.slane %v491, 4
      %v494 = vshll.u32 %v421, 16
      %v496 = vrot.slane %v494, 5
      %v497 = vsel %vm427, %v492, %v496
      %v499 = vshrl.u32 %v398, 16
      %v501 = vrot.slane %v499, 4
      %v502 = vshll.u32 %v398, 16
      %v504 = vrot.slane %v502, 5
      %v505 = vor.u32 %v501, %v504
      %v506 = vrot.slane %v505, 4
      %v508 = vshll.u32 %v422, 16
      %v510 = vrot.slane %v508, 5
      %v511 = vsel %vm427, %v506, %v510
      %v513 = vshrl.u32 %v399, 16
      %v515 = vrot.slane %v513, 4
      %v516 = vshll.u32 %v399, 16
      %v518 = vrot.slane %v516, 5
      %v519 = vor.u32 %v515, %v518
      %v520 = vrot.slane %v519, 4
      %v522 = vshll.u32 %v423, 16
      %v524 = vrot.slane %v522, 5
      %v525 = vsel %vm427, %v520, %v524
      %v527 = vshrl.u32 %v400, 16
      %v529 = vrot.slane %v527, 4
      %v530 = vshll.u32 %v400, 16
      %v532 = vrot.slane %v530, 5
      %v533 = vor.u32 %v529, %v532
      %v534 = vrot.slane %v533, 4
      %v536 = vshll.u32 %v424, 16
      %v538 = vrot.slane %v536, 5
      %v539 = vsel %vm427, %v534, %v538
      %s540 = scalar_lea.vmem %s3, 64
      %v541 = vld [vmem:[%s540] sm:$0xf]
      %v542 = vld [vmem:[%s540 + $0x4] sm:$0xf]
      %v543 = vld [vmem:[%s540 + $0x8] sm:$0xf]
      %v544 = vld [vmem:[%s540 + $0xc] sm:$0xf]
      %v545 = vld [vmem:[%s540 + $0x10] sm:$0xf]
      %v546 = vld [vmem:[%s540 + $0x14] sm:$0xf]
      %v547 = vld [vmem:[%s540 + $0x18] sm:$0xf]
      %v548 = vld [vmem:[%s540 + $0x1c] sm:$0xf]
      %v549 = vld [vmem:[%s540 + $0x20] sm:$0xf]
      %v550 = vld [vmem:[%s540 + $0x24] sm:$0xf]
      %v551 = vld [vmem:[%s540 + $0x28] sm:$0xf]
      %v552 = vld [vmem:[%s540 + $0x2c] sm:$0xf]
      %v553 = vld [vmem:[%s540 + $0x30] sm:$0xf]
      %v554 = vld [vmem:[%s540 + $0x34] sm:$0xf]
      %v555 = vld [vmem:[%s540 + $0x38] sm:$0xf]
      %v556 = vld [vmem:[%s540 + $0x3c] sm:$0xf]
      %v557 = vunpack.c.l.b16 %v441
      %v558 = vunpack.c.l.b16 %v455
      %v559 = vunpack.c.l.b16 %v469
      %v560 = vunpack.c.l.b16 %v483
      %v561 = vunpack.c.l.b16 %v497
      %v562 = vunpack.c.l.b16 %v511
      %v563 = vunpack.c.l.b16 %v525
      %v564 = vunpack.c.l.b16 %v539
      %v565 = vpack.c.b16 %v558, %v557
      %v566 = vpack.c.b16 %v560, %v559
      %v567 = vpack.c.b16 %v562, %v561
      %v568 = vpack.c.b16 %v564, %v563
      %v589 = vunpack.c.l.b16 %v541
      %v590 = vunpack.c.l.b16 %v542
      %v591 = vunpack.c.l.b16 %v543
      %v592 = vunpack.c.l.b16 %v544
      %v593 = vunpack.c.l.b16 %v545
      %v594 = vunpack.c.l.b16 %v546
      %v595 = vunpack.c.l.b16 %v547
      %v596 = vunpack.c.l.b16 %v548
      %v597 = vunpack.c.l.b16 %v549
      %v598 = vunpack.c.l.b16 %v550
      %v599 = vunpack.c.l.b16 %v551
      %v600 = vunpack.c.l.b16 %v552
      %v601 = vunpack.c.l.b16 %v553
      %v602 = vunpack.c.l.b16 %v554
      %v603 = vunpack.c.l.b16 %v555
      %v604 = vunpack.c.l.b16 %v556
      %v605 = vpack.c.b16 %v590, %v589
      %v606 = vpack.c.b16 %v592, %v591
      %v607 = vpack.c.b16 %v594, %v593
      %v608 = vpack.c.b16 %v596, %v595
      %v609 = vpack.c.b16 %v598, %v597
      %v610 = vpack.c.b16 %v600, %v599
      %v611 = vpack.c.b16 %v602, %v601
      %v612 = vpack.c.b16 %v604, %v603
      %621 = vmatprep.subr.bf16.mxu0 0
      %622 = vmatpush1.bf16.msra.mxu0 %v612
      %623 = vmatprep.subr.bf16.mxu0 0
      %624 = vmatpush1.bf16.msra.mxu0 %v611
      %625 = vmatprep.subr.bf16.mxu0 0
      %626 = vmatpush1.bf16.msra.mxu0 %v610
      %627 = vmatprep.subr.bf16.mxu0 0
      %628 = vmatpush1.bf16.msra.mxu0 %v609
      %629 = vmatprep.subr.bf16.mxu0 0
      %630 = vmatpush1.bf16.msra.mxu0 %v608
      %631 = vmatprep.subr.bf16.mxu0 0
      %632 = vmatpush1.bf16.msra.mxu0 %v607
      %633 = vmatprep.subr.bf16.mxu0 0
      %634 = vmatpush1.bf16.msra.mxu0 %v606
      %635 = vmatprep.subr.bf16.mxu0 0
      %636 = vmatpush1.bf16.msra.mxu0 %v605
      %637 = vmatprep.subr.bf16.mxu0 0
      %638 = vmatpush2.bf16.msra.mxu0 0
      %639 = vmatprep.subr.bf16.mxu0 0
      %640 = vmatpush2.bf16.msra.mxu0 0
      %641 = vmatprep.subr.bf16.mxu0 0
      %642 = vmatpush2.bf16.msra.mxu0 0
      %643 = vmatprep.subr.bf16.mxu0 0
      %644 = vmatpush2.bf16.msra.mxu0 0
      %645 = vmatprep.subr.bf16.mxu0 0
      %646 = vmatpush2.bf16.msra.mxu0 0
      %647 = vmatprep.subr.bf16.mxu0 0
      %648 = vmatpush2.bf16.msra.mxu0 0
      %649 = vmatprep.subr.bf16.mxu0 0
      %650 = vmatpush2.bf16.msra.mxu0 0
      %651 = vmatprep.subr.bf16.mxu0 0
      %652 = vmatpush2.bf16.msra.mxu0 0
      %653 = vmatprep.mubr.bf16.mxu0 0
      %654 = vmatmul.mubr.bf16.gmra.mxu0 %v565
      %v655 = vpop.f32.mrf.mxu0
      %v656 = vadd.f32 0.0, %v655
      %v657 = vpop.f32.mrf.mxu0
      %v658 = vpop.f32.mrf.mxu0
      %v659 = vadd.f32 0.0, %v658
      %v660 = vpop.f32.mrf.mxu0
      %661 = vmatprep.mubr.bf16.mxu0 0
      %662 = vmatmul.mubr.bf16.gmra.mxu0 %v566
      %v663 = vpop.f32.mrf.mxu0
      %v664 = vadd.f32 0.0, %v663
      %v665 = vpop.f32.mrf.mxu0
      %v666 = vpop.f32.mrf.mxu0
      %v667 = vadd.f32 0.0, %v666
      %v668 = vpop.f32.mrf.mxu0
      %669 = vmatprep.mubr.bf16.mxu0 0
      %670 = vmatmul.mubr.bf16.gmra.mxu0 %v567
      %v671 = vpop.f32.mrf.mxu0
      %v672 = vadd.f32 0.0, %v671
      %v673 = vpop.f32.mrf.mxu0
      %v674 = vpop.f32.mrf.mxu0
      %v675 = vadd.f32 0.0, %v674
      %v676 = vpop.f32.mrf.mxu0
      %677 = vmatprep.mubr.bf16.mxu0 0
      %678 = vmatmul.mubr.bf16.gmra.mxu0 %v568
      %v679 = vpop.f32.mrf.mxu0
      %v680 = vadd.f32 0.0, %v679
      %v681 = vpop.f32.mrf.mxu0
      %v682 = vpop.f32.mrf.mxu0
      %v683 = vadd.f32 0.0, %v682
      %v684 = vpop.f32.mrf.mxu0
      %685 = vdwg.mxu0
      %v694 = vunpack.c.l.b16 %v393
      %v695 = vunpack.c.l.b16 %v394
      %v696 = vunpack.c.l.b16 %v395
      %v697 = vunpack.c.l.b16 %v396
      %v698 = vunpack.c.l.b16 %v397
      %v699 = vunpack.c.l.b16 %v398
      %v700 = vunpack.c.l.b16 %v399
      %v701 = vunpack.c.l.b16 %v400
      %v702 = vpack.c.b16 %v695, %v694
      %v703 = vpack.c.b16 %v697, %v696
      %v704 = vpack.c.b16 %v699, %v698
      %v705 = vpack.c.b16 %v701, %v700
      %v726 = vunpack.c.l.b16 %v401
      %v727 = vunpack.c.l.b16 %v402
      %v728 = vunpack.c.l.b16 %v403
      %v729 = vunpack.c.l.b16 %v404
      %v730 = vunpack.c.l.b16 %v405
      %v731 = vunpack.c.l.b16 %v406
      %v732 = vunpack.c.l.b16 %v407
      %v733 = vunpack.c.l.b16 %v408
      %v734 = vunpack.c.l.b16 %v409
      %v735 = vunpack.c.l.b16 %v410
      %v736 = vunpack.c.l.b16 %v411
      %v737 = vunpack.c.l.b16 %v412
      %v738 = vunpack.c.l.b16 %v413
      %v739 = vunpack.c.l.b16 %v414
      %v740 = vunpack.c.l.b16 %v415
      %v741 = vunpack.c.l.b16 %v416
      %v742 = vpack.c.b16 %v727, %v726
      %v743 = vpack.c.b16 %v729, %v728
      %v744 = vpack.c.b16 %v731, %v730
      %v745 = vpack.c.b16 %v733, %v732
      %v746 = vpack.c.b16 %v735, %v734
      %v747 = vpack.c.b16 %v737, %v736
      %v748 = vpack.c.b16 %v739, %v738
      %v749 = vpack.c.b16 %v741, %v740
      %758 = vmatprep.subr.bf16.mxu0 0
      %759 = vmatpush1.bf16.msra.mxu0 %v749
      %760 = vmatprep.subr.bf16.mxu0 0
      %761 = vmatpush1.bf16.msra.mxu0 %v748
      %762 = vmatprep.subr.bf16.mxu0 0
      %763 = vmatpush1.bf16.msra.mxu0 %v747
      %764 = vmatprep.subr.bf16.mxu0 0
      %765 = vmatpush1.bf16.msra.mxu0 %v746
      %766 = vmatprep.subr.bf16.mxu0 0
      %767 = vmatpush1.bf16.msra.mxu0 %v745
      %768 = vmatprep.subr.bf16.mxu0 0
      %769 = vmatpush1.bf16.msra.mxu0 %v744
      %770 = vmatprep.subr.bf16.mxu0 0
      %771 = vmatpush1.bf16.msra.mxu0 %v743
      %772 = vmatprep.subr.bf16.mxu0 0
      %773 = vmatpush1.bf16.msra.mxu0 %v742
      %774 = vmatprep.subr.bf16.mxu0 0
      %775 = vmatpush2.bf16.msra.mxu0 0
      %776 = vmatprep.subr.bf16.mxu0 0
      %777 = vmatpush2.bf16.msra.mxu0 0
      %778 = vmatprep.subr.bf16.mxu0 0
      %779 = vmatpush2.bf16.msra.mxu0 0
      %780 = vmatprep.subr.bf16.mxu0 0
      %781 = vmatpush2.bf16.msra.mxu0 0
      %782 = vmatprep.subr.bf16.mxu0 0
      %783 = vmatpush2.bf16.msra.mxu0 0
      %784 = vmatprep.subr.bf16.mxu0 0
      %785 = vmatpush2.bf16.msra.mxu0 0
      %786 = vmatprep.subr.bf16.mxu0 0
      %787 = vmatpush2.bf16.msra.mxu0 0
      %788 = vmatprep.subr.bf16.mxu0 0
      %789 = vmatpush2.bf16.msra.mxu0 0
      %790 = vmatprep.mubr.bf16.mxu0 0
      %791 = vmatmul.mubr.bf16.gmra.mxu0 %v702
      %v792 = vpop.f32.mrf.mxu0
      %v793 = vadd.f32 %v656, %v792
      %v794 = vpop.f32.mrf.mxu0
      %v795 = vpop.f32.mrf.mxu0
      %v796 = vadd.f32 %v659, %v795
      %v797 = vpop.f32.mrf.mxu0
      %798 = vmatprep.mubr.bf16.mxu0 0
      %799 = vmatmul.mubr.bf16.gmra.mxu0 %v703
      %v800 = vpop.f32.mrf.mxu0
      %v801 = vadd.f32 %v664, %v800
      %v802 = vpop.f32.mrf.mxu0
      %v803 = vpop.f32.mrf.mxu0
      %v804 = vadd.f32 %v667, %v803
      %v805 = vpop.f32.mrf.mxu0
      %806 = vmatprep.mubr.bf16.mxu0 0
      %807 = vmatmul.mubr.bf16.gmra.mxu0 %v704
      %v808 = vpop.f32.mrf.mxu0
      %v809 = vadd.f32 %v672, %v808
      %v810 = vpop.f32.mrf.mxu0
      %v811 = vpop.f32.mrf.mxu0
      %v812 = vadd.f32 %v675, %v811
      %v813 = vpop.f32.mrf.mxu0
      %814 = vmatprep.mubr.bf16.mxu0 0
      %815 = vmatmul.mubr.bf16.gmra.mxu0 %v705
      %v816 = vpop.f32.mrf.mxu0
      %v817 = vadd.f32 %v680, %v816
      %v818 = vpop.f32.mrf.mxu0
      %v819 = vpop.f32.mrf.mxu0
      %v820 = vadd.f32 %v683, %v819
      %v821 = vpop.f32.mrf.mxu0
      %822 = vdwg.mxu0
      %v823 = vld [vmem:[%s360] sm:$0xe]
      %v824 = vld [vmem:[%s360 + $0x8] sm:$0xe]
      %v825 = vld [vmem:[%s360 + $0x10] sm:$0xe]
      %v826 = vld [vmem:[%s360 + $0x18] sm:$0xe]
      %v827 = vld [vmem:[%s360 + $0x20] sm:$0xe]
      %v828 = vld [vmem:[%s360 + $0x28] sm:$0xe]
      %v829 = vld [vmem:[%s360 + $0x30] sm:$0xe]
      %v830 = vld [vmem:[%s360 + $0x38] sm:$0xe]
      %vm847 = vcmask 1042432
      %vm848 = vcmask 1046532
      %vm849 = vmor %vm847, %vm848
      %v850 = vrot.slane %v823, 5
      %v851 = vrot.slane %v850, 4
      %v852 = vrot.slane %v417, 5
      %v853 = vsel %vm849, %v851, %v852
      %v854 = vrot.slane %v824, 5
      %v855 = vrot.slane %v854, 4
      %v856 = vrot.slane %v418, 5
      %v857 = vsel %vm849, %v855, %v856
      %v858 = vrot.slane %v825, 5
      %v859 = vrot.slane %v858, 4
      %v860 = vrot.slane %v419, 5
      %v861 = vsel %vm849, %v859, %v860
      %v862 = vrot.slane %v826, 5
      %v863 = vrot.slane %v862, 4
      %v864 = vrot.slane %v420, 5
      %v865 = vsel %vm849, %v863, %v864
      %v866 = vrot.slane %v827, 5
      %v867 = vrot.slane %v866, 4
      %v868 = vrot.slane %v421, 5
      %v869 = vsel %vm849, %v867, %v868
      %v870 = vrot.slane %v828, 5
      %v871 = vrot.slane %v870, 4
      %v872 = vrot.slane %v422, 5
      %v873 = vsel %vm849, %v871, %v872
      %v874 = vrot.slane %v829, 5
      %v875 = vrot.slane %v874, 4
      %v876 = vrot.slane %v423, 5
      %v877 = vsel %vm849, %v875, %v876
      %v878 = vrot.slane %v830, 5
      %v879 = vrot.slane %v878, 4
      %v880 = vrot.slane %v424, 5
      %v881 = vsel %vm849, %v879, %v880
      %s882 = scalar_lea.vmem %s3, 128
      %v883 = vld [vmem:[%s882] sm:$0xf]
      %v884 = vld [vmem:[%s882 + $0x4] sm:$0xf]
      %v885 = vld [vmem:[%s882 + $0x8] sm:$0xf]
      %v886 = vld [vmem:[%s882 + $0xc] sm:$0xf]
      %v887 = vld [vmem:[%s882 + $0x10] sm:$0xf]
      %v888 = vld [vmem:[%s882 + $0x14] sm:$0xf]
      %v889 = vld [vmem:[%s882 + $0x18] sm:$0xf]
      %v890 = vld [vmem:[%s882 + $0x1c] sm:$0xf]
      %v891 = vld [vmem:[%s882 + $0x20] sm:$0xf]
      %v892 = vld [vmem:[%s882 + $0x24] sm:$0xf]
      %v893 = vld [vmem:[%s882 + $0x28] sm:$0xf]
      %v894 = vld [vmem:[%s882 + $0x2c] sm:$0xf]
      %v895 = vld [vmem:[%s882 + $0x30] sm:$0xf]
      %v896 = vld [vmem:[%s882 + $0x34] sm:$0xf]
      %v897 = vld [vmem:[%s882 + $0x38] sm:$0xf]
      %v898 = vld [vmem:[%s882 + $0x3c] sm:$0xf]
      %v899 = vunpack.c.l.b16 %v853
      %v900 = vunpack.c.l.b16 %v857
      %v901 = vunpack.c.l.b16 %v861
      %v902 = vunpack.c.l.b16 %v865
      %v903 = vunpack.c.l.b16 %v869
      %v904 = vunpack.c.l.b16 %v873
      %v905 = vunpack.c.l.b16 %v877
      %v906 = vunpack.c.l.b16 %v881
      %v907 = vpack.c.b16 %v900, %v899
      %v908 = vpack.c.b16 %v902, %v901
      %v909 = vpack.c.b16 %v904, %v903
      %v910 = vpack.c.b16 %v906, %v905
      %v931 = vunpack.c.l.b16 %v883
      %v932 = vunpack.c.l.b16 %v884
      %v933 = vunpack.c.l.b16 %v885
      %v934 = vunpack.c.l.b16 %v886
      %v935 = vunpack.c.l.b16 %v887
      %v936 = vunpack.c.l.b16 %v888
      %v937 = vunpack.c.l.b16 %v889
      %v938 = vunpack.c.l.b16 %v890
      %v939 = vunpack.c.l.b16 %v891
      %v940 = vunpack.c.l.b16 %v892
      %v941 = vunpack.c.l.b16 %v893
      %v942 = vunpack.c.l.b16 %v894
      %v943 = vunpack.c.l.b16 %v895
      %v944 = vunpack.c.l.b16 %v896
      %v945 = vunpack.c.l.b16 %v897
      %v946 = vunpack.c.l.b16 %v898
      %v947 = vpack.c.b16 %v932, %v931
      %v948 = vpack.c.b16 %v934, %v933
      %v949 = vpack.c.b16 %v936, %v935
      %v950 = vpack.c.b16 %v938, %v937
      %v951 = vpack.c.b16 %v940, %v939
      %v952 = vpack.c.b16 %v942, %v941
      %v953 = vpack.c.b16 %v944, %v943
      %v954 = vpack.c.b16 %v946, %v945
      %963 = vmatprep.subr.bf16.mxu0 0
      %964 = vmatpush1.bf16.msra.mxu0 %v954
      %965 = vmatprep.subr.bf16.mxu0 0
      %966 = vmatpush1.bf16.msra.mxu0 %v953
      %967 = vmatprep.subr.bf16.mxu0 0
      %968 = vmatpush1.bf16.msra.mxu0 %v952
      %969 = vmatprep.subr.bf16.mxu0 0
      %970 = vmatpush1.bf16.msra.mxu0 %v951
      %971 = vmatprep.subr.bf16.mxu0 0
      %972 = vmatpush1.bf16.msra.mxu0 %v950
      %973 = vmatprep.subr.bf16.mxu0 0
      %974 = vmatpush1.bf16.msra.mxu0 %v949
      %975 = vmatprep.subr.bf16.mxu0 0
      %976 = vmatpush1.bf16.msra.mxu0 %v948
      %977 = vmatprep.subr.bf16.mxu0 0
      %978 = vmatpush1.bf16.msra.mxu0 %v947
      %979 = vmatprep.subr.bf16.mxu0 0
      %980 = vmatpush2.bf16.msra.mxu0 0
      %981 = vmatprep.subr.bf16.mxu0 0
      %982 = vmatpush2.bf16.msra.mxu0 0
      %983 = vmatprep.subr.bf16.mxu0 0
      %984 = vmatpush2.bf16.msra.mxu0 0
      %985 = vmatprep.subr.bf16.mxu0 0
      %986 = vmatpush2.bf16.msra.mxu0 0
      %987 = vmatprep.subr.bf16.mxu0 0
      %988 = vmatpush2.bf16.msra.mxu0 0
      %989 = vmatprep.subr.bf16.mxu0 0
      %990 = vmatpush2.bf16.msra.mxu0 0
      %991 = vmatprep.subr.bf16.mxu0 0
      %992 = vmatpush2.bf16.msra.mxu0 0
      %993 = vmatprep.subr.bf16.mxu0 0
      %994 = vmatpush2.bf16.msra.mxu0 0
      %995 = vmatprep.mubr.bf16.mxu0 0
      %996 = vmatmul.mubr.bf16.gmra.mxu0 %v907
      %v997 = vpop.f32.mrf.mxu0
      %v998 = vadd.f32 0.0, %v997
      %v999 = vpop.f32.mrf.mxu0
      %v1000 = vpop.f32.mrf.mxu0
      %v1001 = vadd.f32 0.0, %v1000
      %v1002 = vpop.f32.mrf.mxu0
      %1003 = vmatprep.mubr.bf16.mxu0 0
      %1004 = vmatmul.mubr.bf16.gmra.mxu0 %v908
      %v1005 = vpop.f32.mrf.mxu0
      %v1006 = vadd.f32 0.0, %v1005
      %v1007 = vpop.f32.mrf.mxu0
      %v1008 = vpop.f32.mrf.mxu0
      %v1009 = vadd.f32 0.0, %v1008
      %v1010 = vpop.f32.mrf.mxu0
      %1011 = vmatprep.mubr.bf16.mxu0 0
      %1012 = vmatmul.mubr.bf16.gmra.mxu0 %v909
      %v1013 = vpop.f32.mrf.mxu0
      %v1014 = vadd.f32 0.0, %v1013
      %v1015 = vpop.f32.mrf.mxu0
      %v1016 = vpop.f32.mrf.mxu0
      %v1017 = vadd.f32 0.0, %v1016
      %v1018 = vpop.f32.mrf.mxu0
      %1019 = vmatprep.mubr.bf16.mxu0 0
      %1020 = vmatmul.mubr.bf16.gmra.mxu0 %v910
      %v1021 = vpop.f32.mrf.mxu0
      %v1022 = vadd.f32 0.0, %v1021
      %v1023 = vpop.f32.mrf.mxu0
      %v1024 = vpop.f32.mrf.mxu0
      %v1025 = vadd.f32 0.0, %v1024
      %v1026 = vpop.f32.mrf.mxu0
      %1027 = vdwg.mxu0
      %v1028 = vadd.f32 %v793, %v998
      %v1029 = vadd.f32 %v796, %v1001
      %v1030 = vadd.f32 %v801, %v1006
      %v1031 = vadd.f32 %v804, %v1009
      %v1032 = vadd.f32 %v809, %v1014
      %v1033 = vadd.f32 %v812, %v1017
      %v1034 = vadd.f32 %v817, %v1022
      %v1035 = vadd.f32 %v820, %v1025
      %s1036 = scalar_lea.vmem %s360, 8
      %v1037 = vld [vmem:[%s1036] sm:$0xf]
      %v1038 = vld [vmem:[%s1036 + $0x8] sm:$0xf]
      %v1039 = vld [vmem:[%s1036 + $0x10] sm:$0xf]
      %v1040 = vld [vmem:[%s1036 + $0x18] sm:$0xf]
      %v1041 = vld [vmem:[%s1036 + $0x20] sm:$0xf]
      %v1042 = vld [vmem:[%s1036 + $0x28] sm:$0xf]
      %v1043 = vld [vmem:[%s1036 + $0x30] sm:$0xf]
      %v1044 = vld [vmem:[%s1036 + $0x38] sm:$0xf]
      %s1045 = scalar_lea.vmem %s3, 192
      %v1046 = vld [vmem:[%s1045] sm:$0xf]
      %v1047 = vld [vmem:[%s1045 + $0x4] sm:$0xf]
      %v1048 = vld [vmem:[%s1045 + $0x8] sm:$0xf]
      %v1049 = vld [vmem:[%s1045 + $0xc] sm:$0xf]
      %v1050 = vld [vmem:[%s1045 + $0x10] sm:$0xf]
      %v1051 = vld [vmem:[%s1045 + $0x14] sm:$0xf]
      %v1052 = vld [vmem:[%s1045 + $0x18] sm:$0xf]
      %v1053 = vld [vmem:[%s1045 + $0x1c] sm:$0xf]
      %v1054 = vld [vmem:[%s1045 + $0x20] sm:$0xf]
      %v1055 = vld [vmem:[%s1045 + $0x24] sm:$0xf]
      %v1056 = vld [vmem:[%s1045 + $0x28] sm:$0xf]
      %v1057 = vld [vmem:[%s1045 + $0x2c] sm:$0xf]
      %v1058 = vld [vmem:[%s1045 + $0x30] sm:$0xf]
      %v1059 = vld [vmem:[%s1045 + $0x34] sm:$0xf]
      %v1060 = vld [vmem:[%s1045 + $0x38] sm:$0xf]
      %v1061 = vld [vmem:[%s1045 + $0x3c] sm:$0xf]
      %v1070 = vunpack.c.l.b16 %v1037
      %v1071 = vunpack.c.l.b16 %v1038
      %v1072 = vunpack.c.l.b16 %v1039
      %v1073 = vunpack.c.l.b16 %v1040
      %v1074 = vunpack.c.l.b16 %v1041
      %v1075 = vunpack.c.l.b16 %v1042
      %v1076 = vunpack.c.l.b16 %v1043
      %v1077 = vunpack.c.l.b16 %v1044
      %v1078 = vpack.c.b16 %v1071, %v1070
      %v1079 = vpack.c.b16 %v1073, %v1072
      %v1080 = vpack.c.b16 %v1075, %v1074
      %v1081 = vpack.c.b16 %v1077, %v1076
      %v1102 = vunpack.c.l.b16 %v1046
      %v1103 = vunpack.c.l.b16 %v1047
      %v1104 = vunpack.c.l.b16 %v1048
      %v1105 = vunpack.c.l.b16 %v1049
      %v1106 = vunpack.c.l.b16 %v1050
      %v1107 = vunpack.c.l.b16 %v1051
      %v1108 = vunpack.c.l.b16 %v1052
      %v1109 = vunpack.c.l.b16 %v1053
      %v1110 = vunpack.c.l.b16 %v1054
      %v1111 = vunpack.c.l.b16 %v1055
      %v1112 = vunpack.c.l.b16 %v1056
      %v1113 = vunpack.c.l.b16 %v1057
      %v1114 = vunpack.c.l.b16 %v1058
      %v1115 = vunpack.c.l.b16 %v1059
      %v1116 = vunpack.c.l.b16 %v1060
      %v1117 = vunpack.c.l.b16 %v1061
      %v1118 = vpack.c.b16 %v1103, %v1102
      %v1119 = vpack.c.b16 %v1105, %v1104
      %v1120 = vpack.c.b16 %v1107, %v1106
      %v1121 = vpack.c.b16 %v1109, %v1108
      %v1122 = vpack.c.b16 %v1111, %v1110
      %v1123 = vpack.c.b16 %v1113, %v1112
      %v1124 = vpack.c.b16 %v1115, %v1114
      %v1125 = vpack.c.b16 %v1117, %v1116
      %1134 = vmatprep.subr.bf16.mxu0 0
      %1135 = vmatpush1.bf16.msra.mxu0 %v1125
      %1136 = vmatprep.subr.bf16.mxu0 0
      %1137 = vmatpush1.bf16.msra.mxu0 %v1124
      %1138 = vmatprep.subr.bf16.mxu0 0
      %1139 = vmatpush1.bf16.msra.mxu0 %v1123
      %1140 = vmatprep.subr.bf16.mxu0 0
      %1141 = vmatpush1.bf16.msra.mxu0 %v1122
      %1142 = vmatprep.subr.bf16.mxu0 0
      %1143 = vmatpush1.bf16.msra.mxu0 %v1121
      %1144 = vmatprep.subr.bf16.mxu0 0
      %1145 = vmatpush1.bf16.msra.mxu0 %v1120
      %1146 = vmatprep.subr.bf16.mxu0 0
      %1147 = vmatpush1.bf16.msra.mxu0 %v1119
      %1148 = vmatprep.subr.bf16.mxu0 0
      %1149 = vmatpush1.bf16.msra.mxu0 %v1118
      %1150 = vmatprep.subr.bf16.mxu0 0
      %1151 = vmatpush2.bf16.msra.mxu0 0
      %1152 = vmatprep.subr.bf16.mxu0 0
      %1153 = vmatpush2.bf16.msra.mxu0 0
      %1154 = vmatprep.subr.bf16.mxu0 0
      %1155 = vmatpush2.bf16.msra.mxu0 0
      %1156 = vmatprep.subr.bf16.mxu0 0
      %1157 = vmatpush2.bf16.msra.mxu0 0
      %1158 = vmatprep.subr.bf16.mxu0 0
      %1159 = vmatpush2.bf16.msra.mxu0 0
      %1160 = vmatprep.subr.bf16.mxu0 0
      %1161 = vmatpush2.bf16.msra.mxu0 0
      %1162 = vmatprep.subr.bf16.mxu0 0
      %1163 = vmatpush2.bf16.msra.mxu0 0
      %1164 = vmatprep.subr.bf16.mxu0 0
      %1165 = vmatpush2.bf16.msra.mxu0 0
      %1166 = vmatprep.mubr.bf16.mxu0 0
      %1167 = vmatmul.mubr.bf16.gmra.mxu0 %v1078
      %v1168 = vpop.f32.mrf.mxu0
      %v1169 = vadd.f32 0.0, %v1168
      %v1170 = vpop.f32.mrf.mxu0
      %v1171 = vpop.f32.mrf.mxu0
      %v1172 = vadd.f32 0.0, %v1171
      %v1173 = vpop.f32.mrf.mxu0
      %1174 = vmatprep.mubr.bf16.mxu0 0
      %1175 = vmatmul.mubr.bf16.gmra.mxu0 %v1079
      %v1176 = vpop.f32.mrf.mxu0
      %v1177 = vadd.f32 0.0, %v1176
      %v1178 = vpop.f32.mrf.mxu0
      %v1179 = vpop.f32.mrf.mxu0
      %v1180 = vadd.f32 0.0, %v1179
      %v1181 = vpop.f32.mrf.mxu0
      %1182 = vmatprep.mubr.bf16.mxu0 0
      %1183 = vmatmul.mubr.bf16.gmra.mxu0 %v1080
      %v1184 = vpop.f32.mrf.mxu0
      %v1185 = vadd.f32 0.0, %v1184
      %v1186 = vpop.f32.mrf.mxu0
      %v1187 = vpop.f32.mrf.mxu0
      %v1188 = vadd.f32 0.0, %v1187
      %v1189 = vpop.f32.mrf.mxu0
      %1190 = vmatprep.mubr.bf16.mxu0 0
      %1191 = vmatmul.mubr.bf16.gmra.mxu0 %v1081
      %v1192 = vpop.f32.mrf.mxu0
      %v1193 = vadd.f32 0.0, %v1192
      %v1194 = vpop.f32.mrf.mxu0
      %v1195 = vpop.f32.mrf.mxu0
      %v1196 = vadd.f32 0.0, %v1195
      %v1197 = vpop.f32.mrf.mxu0
      %1198 = vdwg.mxu0
      %v1199 = vadd.f32 %v1028, %v1169
      %v1200 = vadd.f32 %v1029, %v1172
      %v1201 = vadd.f32 %v1030, %v1177
      %v1202 = vadd.f32 %v1031, %v1180
      %v1203 = vadd.f32 %v1032, %v1185
      %v1204 = vadd.f32 %v1033, %v1188
      %v1205 = vadd.f32 %v1034, %v1193
      %v1206 = vadd.f32 %v1035, %v1196
      %v1207 = vld [vmem:[%s1036] sm:$0xf]
      %v1208 = vld [vmem:[%s1036 + $0x4] sm:$0x1]
      %v1209 = vld [vmem:[%s1036 + $0x8] sm:$0xf]
      %v1210 = vld [vmem:[%s1036 + $0xc] sm:$0x1]
      %v1211 = vld [vmem:[%s1036 + $0x10] sm:$0xf]
      %v1212 = vld [vmem:[%s1036 + $0x14] sm:$0x1]
      %v1213 = vld [vmem:[%s1036 + $0x18] sm:$0xf]
      %v1214 = vld [vmem:[%s1036 + $0x1c] sm:$0x1]
      %v1215 = vld [vmem:[%s1036 + $0x20] sm:$0xf]
      %v1216 = vld [vmem:[%s1036 + $0x24] sm:$0x1]
      %v1217 = vld [vmem:[%s1036 + $0x28] sm:$0xf]
      %v1218 = vld [vmem:[%s1036 + $0x2c] sm:$0x1]
      %v1219 = vld [vmem:[%s1036 + $0x30] sm:$0xf]
      %v1220 = vld [vmem:[%s1036 + $0x34] sm:$0x1]
      %v1221 = vld [vmem:[%s1036 + $0x38] sm:$0xf]
      %v1222 = vld [vmem:[%s1036 + $0x3c] sm:$0x1]
      %v1224 = vshrl.u32 %v1207, 16
      %v1226 = vrot.slane %v1224, 4
      %v1227 = vshll.u32 %v1207, 16
      %v1229 = vrot.slane %v1227, 5
      %v1230 = vor.u32 %v1226, %v1229
      %v1231 = vrot.slane %v1230, 4
      %v1233 = vshll.u32 %v1208, 16
      %v1235 = vrot.slane %v1233, 5
      %v1236 = vsel %vm427, %v1231, %v1235
      %v1238 = vshrl.u32 %v1209, 16
      %v1240 = vrot.slane %v1238, 4
      %v1241 = vshll.u32 %v1209, 16
      %v1243 = vrot.slane %v1241, 5
      %v1244 = vor.u32 %v1240, %v1243
      %v1245 = vrot.slane %v1244, 4
      %v1247 = vshll.u32 %v1210, 16
      %v1249 = vrot.slane %v1247, 5
      %v1250 = vsel %vm427, %v1245, %v1249
      %v1252 = vshrl.u32 %v1211, 16
      %v1254 = vrot.slane %v1252, 4
      %v1255 = vshll.u32 %v1211, 16
      %v1257 = vrot.slane %v1255, 5
      %v1258 = vor.u32 %v1254, %v1257
      %v1259 = vrot.slane %v1258, 4
      %v1261 = vshll.u32 %v1212, 16
      %v1263 = vrot.slane %v1261, 5
      %v1264 = vsel %vm427, %v1259, %v1263
      %v1266 = vshrl.u32 %v1213, 16
      %v1268 = vrot.slane %v1266, 4
      %v1269 = vshll.u32 %v1213, 16
      %v1271 = vrot.slane %v1269, 5
      %v1272 = vor.u32 %v1268, %v1271
      %v1273 = vrot.slane %v1272, 4
      %v1275 = vshll.u32 %v1214, 16
      %v1277 = vrot.slane %v1275, 5
      %v1278 = vsel %vm427, %v1273, %v1277
      %v1280 = vshrl.u32 %v1215, 16
      %v1282 = vrot.slane %v1280, 4
      %v1283 = vshll.u32 %v1215, 16
      %v1285 = vrot.slane %v1283, 5
      %v1286 = vor.u32 %v1282, %v1285
      %v1287 = vrot.slane %v1286, 4
      %v1289 = vshll.u32 %v1216, 16
      %v1291 = vrot.slane %v1289, 5
      %v1292 = vsel %vm427, %v1287, %v1291
      %v1294 = vshrl.u32 %v1217, 16
      %v1296 = vrot.slane %v1294, 4
      %v1297 = vshll.u32 %v1217, 16
      %v1299 = vrot.slane %v1297, 5
      %v1300 = vor.u32 %v1296, %v1299
      %v1301 = vrot.slane %v1300, 4
      %v1303 = vshll.u32 %v1218, 16
      %v1305 = vrot.slane %v1303, 5
      %v1306 = vsel %vm427, %v1301, %v1305
      %v1308 = vshrl.u32 %v1219, 16
      %v1310 = vrot.slane %v1308, 4
      %v1311 = vshll.u32 %v1219, 16
      %v1313 = vrot.slane %v1311, 5
      %v1314 = vor.u32 %v1310, %v1313
      %v1315 = vrot.slane %v1314, 4
      %v1317 = vshll.u32 %v1220, 16
      %v1319 = vrot.slane %v1317, 5
      %v1320 = vsel %vm427, %v1315, %v1319
      %v1322 = vshrl.u32 %v1221, 16
      %v1324 = vrot.slane %v1322, 4
      %v1325 = vshll.u32 %v1221, 16
      %v1327 = vrot.slane %v1325, 5
      %v1328 = vor.u32 %v1324, %v1327
      %v1329 = vrot.slane %v1328, 4
      %v1331 = vshll.u32 %v1222, 16
      %v1333 = vrot.slane %v1331, 5
      %v1334 = vsel %vm427, %v1329, %v1333
      %s1335 = scalar_lea.vmem %s3, 256
      %v1336 = vld [vmem:[%s1335] sm:$0xf]
      %v1337 = vld [vmem:[%s1335 + $0x4] sm:$0xf]
      %v1338 = vld [vmem:[%s1335 + $0x8] sm:$0xf]
      %v1339 = vld [vmem:[%s1335 + $0xc] sm:$0xf]
      %v1340 = vld [vmem:[%s1335 + $0x10] sm:$0xf]
      %v1341 = vld [vmem:[%s1335 + $0x14] sm:$0xf]
      %v1342 = vld [vmem:[%s1335 + $0x18] sm:$0xf]
      %v1343 = vld [vmem:[%s1335 + $0x1c] sm:$0xf]
      %v1344 = vld [vmem:[%s1335 + $0x20] sm:$0xf]
      %v1345 = vld [vmem:[%s1335 + $0x24] sm:$0xf]
      %v1346 = vld [vmem:[%s1335 + $0x28] sm:$0xf]
      %v1347 = vld [vmem:[%s1335 + $0x2c] sm:$0xf]
      %v1348 = vld [vmem:[%s1335 + $0x30] sm:$0xf]
      %v1349 = vld [vmem:[%s1335 + $0x34] sm:$0xf]
      %v1350 = vld [vmem:[%s1335 + $0x38] sm:$0xf]
      %v1351 = vld [vmem:[%s1335 + $0x3c] sm:$0xf]
      %v1352 = vunpack.c.l.b16 %v1236
      %v1353 = vunpack.c.l.b16 %v1250
      %v1354 = vunpack.c.l.b16 %v1264
      %v1355 = vunpack.c.l.b16 %v1278
      %v1356 = vunpack.c.l.b16 %v1292
      %v1357 = vunpack.c.l.b16 %v1306
      %v1358 = vunpack.c.l.b16 %v1320
      %v1359 = vunpack.c.l.b16 %v1334
      %v1360 = vpack.c.b16 %v1353, %v1352
      %v1361 = vpack.c.b16 %v1355, %v1354
      %v1362 = vpack.c.b16 %v1357, %v1356
      %v1363 = vpack.c.b16 %v1359, %v1358
      %v1384 = vunpack.c.l.b16 %v1336
      %v1385 = vunpack.c.l.b16 %v1337
      %v1386 = vunpack.c.l.b16 %v1338
      %v1387 = vunpack.c.l.b16 %v1339
      %v1388 = vunpack.c.l.b16 %v1340
      %v1389 = vunpack.c.l.b16 %v1341
      %v1390 = vunpack.c.l.b16 %v1342
      %v1391 = vunpack.c.l.b16 %v1343
      %v1392 = vunpack.c.l.b16 %v1344
      %v1393 = vunpack.c.l.b16 %v1345
      %v1394 = vunpack.c.l.b16 %v1346
      %v1395 = vunpack.c.l.b16 %v1347
      %v1396 = vunpack.c.l.b16 %v1348
      %v1397 = vunpack.c.l.b16 %v1349
      %v1398 = vunpack.c.l.b16 %v1350
      %v1399 = vunpack.c.l.b16 %v1351
      %v1400 = vpack.c.b16 %v1385, %v1384
      %v1401 = vpack.c.b16 %v1387, %v1386
      %v1402 = vpack.c.b16 %v1389, %v1388
      %v1403 = vpack.c.b16 %v1391, %v1390
      %v1404 = vpack.c.b16 %v1393, %v1392
      %v1405 = vpack.c.b16 %v1395, %v1394
      %v1406 = vpack.c.b16 %v1397, %v1396
      %v1407 = vpack.c.b16 %v1399, %v1398
      %1416 = vmatprep.subr.bf16.mxu0 0
      %1417 = vmatpush1.bf16.msra.mxu0 %v1407
      %1418 = vmatprep.subr.bf16.mxu0 0
      %1419 = vmatpush1.bf16.msra.mxu0 %v1406
      %1420 = vmatprep.subr.bf16.mxu0 0
      %1421 = vmatpush1.bf16.msra.mxu0 %v1405
      %1422 = vmatprep.subr.bf16.mxu0 0
      %1423 = vmatpush1.bf16.msra.mxu0 %v1404
      %1424 = vmatprep.subr.bf16.mxu0 0
      %1425 = vmatpush1.bf16.msra.mxu0 %v1403
      %1426 = vmatprep.subr.bf16.mxu0 0
      %1427 = vmatpush1.bf16.msra.mxu0 %v1402
      %1428 = vmatprep.subr.bf16.mxu0 0
      %1429 = vmatpush1.bf16.msra.mxu0 %v1401
      %1430 = vmatprep.subr.bf16.mxu0 0
      %1431 = vmatpush1.bf16.msra.mxu0 %v1400
      %1432 = vmatprep.subr.bf16.mxu0 0
      %1433 = vmatpush2.bf16.msra.mxu0 0
      %1434 = vmatprep.subr.bf16.mxu0 0
      %1435 = vmatpush2.bf16.msra.mxu0 0
      %1436 = vmatprep.subr.bf16.mxu0 0
      %1437 = vmatpush2.bf16.msra.mxu0 0
      %1438 = vmatprep.subr.bf16.mxu0 0
      %1439 = vmatpush2.bf16.msra.mxu0 0
      %1440 = vmatprep.subr.bf16.mxu0 0
      %1441 = vmatpush2.bf16.msra.mxu0 0
      %1442 = vmatprep.subr.bf16.mxu0 0
      %1443 = vmatpush2.bf16.msra.mxu0 0
      %1444 = vmatprep.subr.bf16.mxu0 0
      %1445 = vmatpush2.bf16.msra.mxu0 0
      %1446 = vmatprep.subr.bf16.mxu0 0
      %1447 = vmatpush2.bf16.msra.mxu0 0
      %1448 = vmatprep.mubr.bf16.mxu0 0
      %1449 = vmatmul.mubr.bf16.gmra.mxu0 %v1360
      %v1450 = vpop.f32.mrf.mxu0
      %v1451 = vadd.f32 0.0, %v1450
      %v1452 = vpop.f32.mrf.mxu0
      %v1453 = vpop.f32.mrf.mxu0
      %v1454 = vadd.f32 0.0, %v1453
      %v1455 = vpop.f32.mrf.mxu0
      %1456 = vmatprep.mubr.bf16.mxu0 0
      %1457 = vmatmul.mubr.bf16.gmra.mxu0 %v1361
      %v1458 = vpop.f32.mrf.mxu0
      %v1459 = vadd.f32 0.0, %v1458
      %v1460 = vpop.f32.mrf.mxu0
      %v1461 = vpop.f32.mrf.mxu0
      %v1462 = vadd.f32 0.0, %v1461
      %v1463 = vpop.f32.mrf.mxu0
      %1464 = vmatprep.mubr.bf16.mxu0 0
      %1465 = vmatmul.mubr.bf16.gmra.mxu0 %v1362
      %v1466 = vpop.f32.mrf.mxu0
      %v1467 = vadd.f32 0.0, %v1466
      %v1468 = vpop.f32.mrf.mxu0
      %v1469 = vpop.f32.mrf.mxu0
      %v1470 = vadd.f32 0.0, %v1469
      %v1471 = vpop.f32.mrf.mxu0
      %1472 = vmatprep.mubr.bf16.mxu0 0
      %1473 = vmatmul.mubr.bf16.gmra.mxu0 %v1363
      %v1474 = vpop.f32.mrf.mxu0
      %v1475 = vadd.f32 0.0, %v1474
      %v1476 = vpop.f32.mrf.mxu0
      %v1477 = vpop.f32.mrf.mxu0
      %v1478 = vadd.f32 0.0, %v1477
      %v1479 = vpop.f32.mrf.mxu0
      %1480 = vdwg.mxu0
      %v1481 = vadd.f32 %v1199, %v1451
      %v1482 = vadd.f32 %v1200, %v1454
      %v1483 = vadd.f32 %v1201, %v1459
      %v1484 = vadd.f32 %v1202, %v1462
      %v1485 = vadd.f32 %v1203, %v1467
      %v1486 = vadd.f32 %v1204, %v1470
      %v1487 = vadd.f32 %v1205, %v1475
      %v1488 = vadd.f32 %v1206, %v1478
      %v1489 = vld [vmem:[%s1036] sm:$0xe]
      %v1490 = vld [vmem:[%s1036 + $0x8] sm:$0xe]
      %v1491 = vld [vmem:[%s1036 + $0x10] sm:$0xe]
      %v1492 = vld [vmem:[%s1036 + $0x18] sm:$0xe]
      %v1493 = vld [vmem:[%s1036 + $0x20] sm:$0xe]
      %v1494 = vld [vmem:[%s1036 + $0x28] sm:$0xe]
      %v1495 = vld [vmem:[%s1036 + $0x30] sm:$0xe]
      %v1496 = vld [vmem:[%s1036 + $0x38] sm:$0xe]
      %v1513 = vrot.slane %v1489, 5
      %v1514 = vrot.slane %v1513, 4
      %v1515 = vrot.slane %v1208, 5
      %v1516 = vsel %vm849, %v1514, %v1515
      %v1517 = vrot.slane %v1490, 5
      %v1518 = vrot.slane %v1517, 4
      %v1519 = vrot.slane %v1210, 5
      %v1520 = vsel %vm849, %v1518, %v1519
      %v1521 = vrot.slane %v1491, 5
      %v1522 = vrot.slane %v1521, 4
      %v1523 = vrot.slane %v1212, 5
      %v1524 = vsel %vm849, %v1522, %v1523
      %v1525 = vrot.slane %v1492, 5
      %v1526 = vrot.slane %v1525, 4
      %v1527 = vrot.slane %v1214, 5
      %v1528 = vsel %vm849, %v1526, %v1527
      %v1529 = vrot.slane %v1493, 5
      %v1530 = vrot.slane %v1529, 4
      %v1531 = vrot.slane %v1216, 5
      %v1532 = vsel %vm849, %v1530, %v1531
      %v1533 = vrot.slane %v1494, 5
      %v1534 = vrot.slane %v1533, 4
      %v1535 = vrot.slane %v1218, 5
      %v1536 = vsel %vm849, %v1534, %v1535
      %v1537 = vrot.slane %v1495, 5
      %v1538 = vrot.slane %v1537, 4
      %v1539 = vrot.slane %v1220, 5
      %v1540 = vsel %vm849, %v1538, %v1539
      %v1541 = vrot.slane %v1496, 5
      %v1542 = vrot.slane %v1541, 4
      %v1543 = vrot.slane %v1222, 5
      %v1544 = vsel %vm849, %v1542, %v1543
      %s1545 = scalar_lea.vmem %s3, 320
      %v1546 = vld [vmem:[%s1545] sm:$0xf]
      %v1547 = vld [vmem:[%s1545 + $0x4] sm:$0xf]
      %v1548 = vld [vmem:[%s1545 + $0x8] sm:$0xf]
      %v1549 = vld [vmem:[%s1545 + $0xc] sm:$0xf]
      %v1550 = vld [vmem:[%s1545 + $0x10] sm:$0xf]
      %v1551 = vld [vmem:[%s1545 + $0x14] sm:$0xf]
      %v1552 = vld [vmem:[%s1545 + $0x18] sm:$0xf]
      %v1553 = vld [vmem:[%s1545 + $0x1c] sm:$0xf]
      %v1554 = vld [vmem:[%s1545 + $0x20] sm:$0xf]
      %v1555 = vld [vmem:[%s1545 + $0x24] sm:$0xf]
      %v1556 = vld [vmem:[%s1545 + $0x28] sm:$0xf]
      %v1557 = vld [vmem:[%s1545 + $0x2c] sm:$0xf]
      %v1558 = vld [vmem:[%s1545 + $0x30] sm:$0xf]
      %v1559 = vld [vmem:[%s1545 + $0x34] sm:$0xf]
      %v1560 = vld [vmem:[%s1545 + $0x38] sm:$0xf]
      %v1561 = vld [vmem:[%s1545 + $0x3c] sm:$0xf]
      %v1562 = vunpack.c.l.b16 %v1516
      %v1563 = vunpack.c.l.b16 %v1520
      %v1564 = vunpack.c.l.b16 %v1524
      %v1565 = vunpack.c.l.b16 %v1528
      %v1566 = vunpack.c.l.b16 %v1532
      %v1567 = vunpack.c.l.b16 %v1536
      %v1568 = vunpack.c.l.b16 %v1540
      %v1569 = vunpack.c.l.b16 %v1544
      %v1570 = vpack.c.b16 %v1563, %v1562
      %v1571 = vpack.c.b16 %v1565, %v1564
      %v1572 = vpack.c.b16 %v1567, %v1566
      %v1573 = vpack.c.b16 %v1569, %v1568
      %v1594 = vunpack.c.l.b16 %v1546
      %v1595 = vunpack.c.l.b16 %v1547
      %v1596 = vunpack.c.l.b16 %v1548
      %v1597 = vunpack.c.l.b16 %v1549
      %v1598 = vunpack.c.l.b16 %v1550
      %v1599 = vunpack.c.l.b16 %v1551
      %v1600 = vunpack.c.l.b16 %v1552
      %v1601 = vunpack.c.l.b16 %v1553
      %v1602 = vunpack.c.l.b16 %v1554
      %v1603 = vunpack.c.l.b16 %v1555
      %v1604 = vunpack.c.l.b16 %v1556
      %v1605 = vunpack.c.l.b16 %v1557
      %v1606 = vunpack.c.l.b16 %v1558
      %v1607 = vunpack.c.l.b16 %v1559
      %v1608 = vunpack.c.l.b16 %v1560
      %v1609 = vunpack.c.l.b16 %v1561
      %v1610 = vpack.c.b16 %v1595, %v1594
      %v1611 = vpack.c.b16 %v1597, %v1596
      %v1612 = vpack.c.b16 %v1599, %v1598
      %v1613 = vpack.c.b16 %v1601, %v1600
      %v1614 = vpack.c.b16 %v1603, %v1602
      %v1615 = vpack.c.b16 %v1605, %v1604
      %v1616 = vpack.c.b16 %v1607, %v1606
      %v1617 = vpack.c.b16 %v1609, %v1608
      %1626 = vmatprep.subr.bf16.mxu0 0
      %1627 = vmatpush1.bf16.msra.mxu0 %v1617
      %1628 = vmatprep.subr.bf16.mxu0 0
      %1629 = vmatpush1.bf16.msra.mxu0 %v1616
      %1630 = vmatprep.subr.bf16.mxu0 0
      %1631 = vmatpush1.bf16.msra.mxu0 %v1615
      %1632 = vmatprep.subr.bf16.mxu0 0
      %1633 = vmatpush1.bf16.msra.mxu0 %v1614
      %1634 = vmatprep.subr.bf16.mxu0 0
      %1635 = vmatpush1.bf16.msra.mxu0 %v1613
      %1636 = vmatprep.subr.bf16.mxu0 0
      %1637 = vmatpush1.bf16.msra.mxu0 %v1612
      %1638 = vmatprep.subr.bf16.mxu0 0
      %1639 = vmatpush1.bf16.msra.mxu0 %v1611
      %1640 = vmatprep.subr.bf16.mxu0 0
      %1641 = vmatpush1.bf16.msra.mxu0 %v1610
      %1642 = vmatprep.subr.bf16.mxu0 0
      %1643 = vmatpush2.bf16.msra.mxu0 0
      %1644 = vmatprep.subr.bf16.mxu0 0
      %1645 = vmatpush2.bf16.msra.mxu0 0
      %1646 = vmatprep.subr.bf16.mxu0 0
      %1647 = vmatpush2.bf16.msra.mxu0 0
      %1648 = vmatprep.subr.bf16.mxu0 0
      %1649 = vmatpush2.bf16.msra.mxu0 0
      %1650 = vmatprep.subr.bf16.mxu0 0
      %1651 = vmatpush2.bf16.msra.mxu0 0
      %1652 = vmatprep.subr.bf16.mxu0 0
      %1653 = vmatpush2.bf16.msra.mxu0 0
      %1654 = vmatprep.subr.bf16.mxu0 0
      %1655 = vmatpush2.bf16.msra.mxu0 0
      %1656 = vmatprep.subr.bf16.mxu0 0
      %1657 = vmatpush2.bf16.msra.mxu0 0
      %1658 = vmatprep.mubr.bf16.mxu0 0
      %1659 = vmatmul.mubr.bf16.gmra.mxu0 %v1570
      %v1660 = vpop.f32.mrf.mxu0
      %v1661 = vadd.f32 0.0, %v1660
      %v1662 = vpop.f32.mrf.mxu0
      %v1663 = vpop.f32.mrf.mxu0
      %v1664 = vadd.f32 0.0, %v1663
      %v1665 = vpop.f32.mrf.mxu0
      %1666 = vmatprep.mubr.bf16.mxu0 0
      %1667 = vmatmul.mubr.bf16.gmra.mxu0 %v1571
      %v1668 = vpop.f32.mrf.mxu0
      %v1669 = vadd.f32 0.0, %v1668
      %v1670 = vpop.f32.mrf.mxu0
      %v1671 = vpop.f32.mrf.mxu0
      %v1672 = vadd.f32 0.0, %v1671
      %v1673 = vpop.f32.mrf.mxu0
      %1674 = vmatprep.mubr.bf16.mxu0 0
      %1675 = vmatmul.mubr.bf16.gmra.mxu0 %v1572
      %v1676 = vpop.f32.mrf.mxu0
      %v1677 = vadd.f32 0.0, %v1676
      %v1678 = vpop.f32.mrf.mxu0
      %v1679 = vpop.f32.mrf.mxu0
      %v1680 = vadd.f32 0.0, %v1679
      %v1681 = vpop.f32.mrf.mxu0
      %1682 = vmatprep.mubr.bf16.mxu0 0
      %1683 = vmatmul.mubr.bf16.gmra.mxu0 %v1573
      %v1684 = vpop.f32.mrf.mxu0
      %v1685 = vadd.f32 0.0, %v1684
      %v1686 = vpop.f32.mrf.mxu0
      %v1687 = vpop.f32.mrf.mxu0
      %v1688 = vadd.f32 0.0, %v1687
      %v1689 = vpop.f32.mrf.mxu0
      %1690 = vdwg.mxu0
      %v1691 = vadd.f32 %v1481, %v1661
      %v1692 = vadd.f32 %v1482, %v1664
      %v1693 = vadd.f32 %v1483, %v1669
      %v1694 = vadd.f32 %v1484, %v1672
      %v1695 = vadd.f32 %v1485, %v1677
      %v1696 = vadd.f32 %v1486, %v1680
      %v1697 = vadd.f32 %v1487, %v1685
      %v1698 = vadd.f32 %v1488, %v1688
      %s1699 = scalar_lea.vmem %s360, 16
      %v1700 = vld [vmem:[%s1699] sm:$0xf]
      %v1701 = vld [vmem:[%s1699 + $0x8] sm:$0xf]
      %v1702 = vld [vmem:[%s1699 + $0x10] sm:$0xf]
      %v1703 = vld [vmem:[%s1699 + $0x18] sm:$0xf]
      %v1704 = vld [vmem:[%s1699 + $0x20] sm:$0xf]
      %v1705 = vld [vmem:[%s1699 + $0x28] sm:$0xf]
      %v1706 = vld [vmem:[%s1699 + $0x30] sm:$0xf]
      %v1707 = vld [vmem:[%s1699 + $0x38] sm:$0xf]
      %s1708 = scalar_lea.vmem %s3, 384
      %v1709 = vld [vmem:[%s1708] sm:$0xf]
      %v1710 = vld [vmem:[%s1708 + $0x4] sm:$0xf]
      %v1711 = vld [vmem:[%s1708 + $0x8] sm:$0xf]
      %v1712 = vld [vmem:[%s1708 + $0xc] sm:$0xf]
      %v1713 = vld [vmem:[%s1708 + $0x10] sm:$0xf]
      %v1714 = vld [vmem:[%s1708 + $0x14] sm:$0xf]
      %v1715 = vld [vmem:[%s1708 + $0x18] sm:$0xf]
      %v1716 = vld [vmem:[%s1708 + $0x1c] sm:$0xf]
      %v1717 = vld [vmem:[%s1708 + $0x20] sm:$0xf]
      %v1718 = vld [vmem:[%s1708 + $0x24] sm:$0xf]
      %v1719 = vld [vmem:[%s1708 + $0x28] sm:$0xf]
      %v1720 = vld [vmem:[%s1708 + $0x2c] sm:$0xf]
      %v1721 = vld [vmem:[%s1708 + $0x30] sm:$0xf]
      %v1722 = vld [vmem:[%s1708 + $0x34] sm:$0xf]
      %v1723 = vld [vmem:[%s1708 + $0x38] sm:$0xf]
      %v1724 = vld [vmem:[%s1708 + $0x3c] sm:$0xf]
      %v1733 = vunpack.c.l.b16 %v1700
      %v1734 = vunpack.c.l.b16 %v1701
      %v1735 = vunpack.c.l.b16 %v1702
      %v1736 = vunpack.c.l.b16 %v1703
      %v1737 = vunpack.c.l.b16 %v1704
      %v1738 = vunpack.c.l.b16 %v1705
      %v1739 = vunpack.c.l.b16 %v1706
      %v1740 = vunpack.c.l.b16 %v1707
      %v1741 = vpack.c.b16 %v1734, %v1733
      %v1742 = vpack.c.b16 %v1736, %v1735
      %v1743 = vpack.c.b16 %v1738, %v1737
      %v1744 = vpack.c.b16 %v1740, %v1739
      %v1765 = vunpack.c.l.b16 %v1709
      %v1766 = vunpack.c.l.b16 %v1710
      %v1767 = vunpack.c.l.b16 %v1711
      %v1768 = vunpack.c.l.b16 %v1712
      %v1769 = vunpack.c.l.b16 %v1713
      %v1770 = vunpack.c.l.b16 %v1714
      %v1771 = vunpack.c.l.b16 %v1715
      %v1772 = vunpack.c.l.b16 %v1716
      %v1773 = vunpack.c.l.b16 %v1717
      %v1774 = vunpack.c.l.b16 %v1718
      %v1775 = vunpack.c.l.b16 %v1719
      %v1776 = vunpack.c.l.b16 %v1720
      %v1777 = vunpack.c.l.b16 %v1721
      %v1778 = vunpack.c.l.b16 %v1722
      %v1779 = vunpack.c.l.b16 %v1723
      %v1780 = vunpack.c.l.b16 %v1724
      %v1781 = vpack.c.b16 %v1766, %v1765
      %v1782 = vpack.c.b16 %v1768, %v1767
      %v1783 = vpack.c.b16 %v1770, %v1769
      %v1784 = vpack.c.b16 %v1772, %v1771
      %v1785 = vpack.c.b16 %v1774, %v1773
      %v1786 = vpack.c.b16 %v1776, %v1775
      %v1787 = vpack.c.b16 %v1778, %v1777
      %v1788 = vpack.c.b16 %v1780, %v1779
      %1797 = vmatprep.subr.bf16.mxu0 0
      %1798 = vmatpush1.bf16.msra.mxu0 %v1788
      %1799 = vmatprep.subr.bf16.mxu0 0
      %1800 = vmatpush1.bf16.msra.mxu0 %v1787
      %1801 = vmatprep.subr.bf16.mxu0 0
      %1802 = vmatpush1.bf16.msra.mxu0 %v1786
      %1803 = vmatprep.subr.bf16.mxu0 0
      %1804 = vmatpush1.bf16.msra.mxu0 %v1785
      %1805 = vmatprep.subr.bf16.mxu0 0
      %1806 = vmatpush1.bf16.msra.mxu0 %v1784
      %1807 = vmatprep.subr.bf16.mxu0 0
      %1808 = vmatpush1.bf16.msra.mxu0 %v1783
      %1809 = vmatprep.subr.bf16.mxu0 0
      %1810 = vmatpush1.bf16.msra.mxu0 %v1782
      %1811 = vmatprep.subr.bf16.mxu0 0
      %1812 = vmatpush1.bf16.msra.mxu0 %v1781
      %1813 = vmatprep.subr.bf16.mxu0 0
      %1814 = vmatpush2.bf16.msra.mxu0 0
      %1815 = vmatprep.subr.bf16.mxu0 0
      %1816 = vmatpush2.bf16.msra.mxu0 0
      %1817 = vmatprep.subr.bf16.mxu0 0
      %1818 = vmatpush2.bf16.msra.mxu0 0
      %1819 = vmatprep.subr.bf16.mxu0 0
      %1820 = vmatpush2.bf16.msra.mxu0 0
      %1821 = vmatprep.subr.bf16.mxu0 0
      %1822 = vmatpush2.bf16.msra.mxu0 0
      %1823 = vmatprep.subr.bf16.mxu0 0
      %1824 = vmatpush2.bf16.msra.mxu0 0
      %1825 = vmatprep.subr.bf16.mxu0 0
      %1826 = vmatpush2.bf16.msra.mxu0 0
      %1827 = vmatprep.subr.bf16.mxu0 0
      %1828 = vmatpush2.bf16.msra.mxu0 0
      %1829 = vmatprep.mubr.bf16.mxu0 0
      %1830 = vmatmul.mubr.bf16.gmra.mxu0 %v1741
      %v1831 = vpop.f32.mrf.mxu0
      %v1832 = vadd.f32 0.0, %v1831
      %v1833 = vpop.f32.mrf.mxu0
      %v1834 = vpop.f32.mrf.mxu0
      %v1835 = vadd.f32 0.0, %v1834
      %v1836 = vpop.f32.mrf.mxu0
      %1837 = vmatprep.mubr.bf16.mxu0 0
      %1838 = vmatmul.mubr.bf16.gmra.mxu0 %v1742
      %v1839 = vpop.f32.mrf.mxu0
      %v1840 = vadd.f32 0.0, %v1839
      %v1841 = vpop.f32.mrf.mxu0
      %v1842 = vpop.f32.mrf.mxu0
      %v1843 = vadd.f32 0.0, %v1842
      %v1844 = vpop.f32.mrf.mxu0
      %1845 = vmatprep.mubr.bf16.mxu0 0
      %1846 = vmatmul.mubr.bf16.gmra.mxu0 %v1743
      %v1847 = vpop.f32.mrf.mxu0
      %v1848 = vadd.f32 0.0, %v1847
      %v1849 = vpop.f32.mrf.mxu0
      %v1850 = vpop.f32.mrf.mxu0
      %v1851 = vadd.f32 0.0, %v1850
      %v1852 = vpop.f32.mrf.mxu0
      %1853 = vmatprep.mubr.bf16.mxu0 0
      %1854 = vmatmul.mubr.bf16.gmra.mxu0 %v1744
      %v1855 = vpop.f32.mrf.mxu0
      %v1856 = vadd.f32 0.0, %v1855
      %v1857 = vpop.f32.mrf.mxu0
      %v1858 = vpop.f32.mrf.mxu0
      %v1859 = vadd.f32 0.0, %v1858
      %v1860 = vpop.f32.mrf.mxu0
      %1861 = vdwg.mxu0
      %v1862 = vadd.f32 %v1691, %v1832
      %v1863 = vadd.f32 %v1692, %v1835
      %v1864 = vadd.f32 %v1693, %v1840
      %v1865 = vadd.f32 %v1694, %v1843
      %v1866 = vadd.f32 %v1695, %v1848
      %v1867 = vadd.f32 %v1696, %v1851
      %v1868 = vadd.f32 %v1697, %v1856
      %v1869 = vadd.f32 %v1698, %v1859
      %v1870 = vld [vmem:[%s1699] sm:$0xf]
      %v1871 = vld [vmem:[%s1699 + $0x4] sm:$0x1]
      %v1872 = vld [vmem:[%s1699 + $0x8] sm:$0xf]
      %v1873 = vld [vmem:[%s1699 + $0xc] sm:$0x1]
      %v1874 = vld [vmem:[%s1699 + $0x10] sm:$0xf]
      %v1875 = vld [vmem:[%s1699 + $0x14] sm:$0x1]
      %v1876 = vld [vmem:[%s1699 + $0x18] sm:$0xf]
      %v1877 = vld [vmem:[%s1699 + $0x1c] sm:$0x1]
      %v1878 = vld [vmem:[%s1699 + $0x20] sm:$0xf]
      %v1879 = vld [vmem:[%s1699 + $0x24] sm:$0x1]
      %v1880 = vld [vmem:[%s1699 + $0x28] sm:$0xf]
      %v1881 = vld [vmem:[%s1699 + $0x2c] sm:$0x1]
      %v1882 = vld [vmem:[%s1699 + $0x30] sm:$0xf]
      %v1883 = vld [vmem:[%s1699 + $0x34] sm:$0x1]
      %v1884 = vld [vmem:[%s1699 + $0x38] sm:$0xf]
      %v1885 = vld [vmem:[%s1699 + $0x3c] sm:$0x1]
      %v1887 = vshrl.u32 %v1870, 16
      %v1889 = vrot.slane %v1887, 4
      %v1890 = vshll.u32 %v1870, 16
      %v1892 = vrot.slane %v1890, 5
      %v1893 = vor.u32 %v1889, %v1892
      %v1894 = vrot.slane %v1893, 4
      %v1896 = vshll.u32 %v1871, 16
      %v1898 = vrot.slane %v1896, 5
      %v1899 = vsel %vm427, %v1894, %v1898
      %v1901 = vshrl.u32 %v1872, 16
      %v1903 = vrot.slane %v1901, 4
      %v1904 = vshll.u32 %v1872, 16
      %v1906 = vrot.slane %v1904, 5
      %v1907 = vor.u32 %v1903, %v1906
      %v1908 = vrot.slane %v1907, 4
      %v1910 = vshll.u32 %v1873, 16
      %v1912 = vrot.slane %v1910, 5
      %v1913 = vsel %vm427, %v1908, %v1912
      %v1915 = vshrl.u32 %v1874, 16
      %v1917 = vrot.slane %v1915, 4
      %v1918 = vshll.u32 %v1874, 16
      %v1920 = vrot.slane %v1918, 5
      %v1921 = vor.u32 %v1917, %v1920
      %v1922 = vrot.slane %v1921, 4
      %v1924 = vshll.u32 %v1875, 16
      %v1926 = vrot.slane %v1924, 5
      %v1927 = vsel %vm427, %v1922, %v1926
      %v1929 = vshrl.u32 %v1876, 16
      %v1931 = vrot.slane %v1929, 4
      %v1932 = vshll.u32 %v1876, 16
      %v1934 = vrot.slane %v1932, 5
      %v1935 = vor.u32 %v1931, %v1934
      %v1936 = vrot.slane %v1935, 4
      %v1938 = vshll.u32 %v1877, 16
      %v1940 = vrot.slane %v1938, 5
      %v1941 = vsel %vm427, %v1936, %v1940
      %v1943 = vshrl.u32 %v1878, 16
      %v1945 = vrot.slane %v1943, 4
      %v1946 = vshll.u32 %v1878, 16
      %v1948 = vrot.slane %v1946, 5
      %v1949 = vor.u32 %v1945, %v1948
      %v1950 = vrot.slane %v1949, 4
      %v1952 = vshll.u32 %v1879, 16
      %v1954 = vrot.slane %v1952, 5
      %v1955 = vsel %vm427, %v1950, %v1954
      %v1957 = vshrl.u32 %v1880, 16
      %v1959 = vrot.slane %v1957, 4
      %v1960 = vshll.u32 %v1880, 16
      %v1962 = vrot.slane %v1960, 5
      %v1963 = vor.u32 %v1959, %v1962
      %v1964 = vrot.slane %v1963, 4
      %v1966 = vshll.u32 %v1881, 16
      %v1968 = vrot.slane %v1966, 5
      %v1969 = vsel %vm427, %v1964, %v1968
      %v1971 = vshrl.u32 %v1882, 16
      %v1973 = vrot.slane %v1971, 4
      %v1974 = vshll.u32 %v1882, 16
      %v1976 = vrot.slane %v1974, 5
      %v1977 = vor.u32 %v1973, %v1976
      %v1978 = vrot.slane %v1977, 4
      %v1980 = vshll.u32 %v1883, 16
      %v1982 = vrot.slane %v1980, 5
      %v1983 = vsel %vm427, %v1978, %v1982
      %v1985 = vshrl.u32 %v1884, 16
      %v1987 = vrot.slane %v1985, 4
      %v1988 = vshll.u32 %v1884, 16
      %v1990 = vrot.slane %v1988, 5
      %v1991 = vor.u32 %v1987, %v1990
      %v1992 = vrot.slane %v1991, 4
      %v1994 = vshll.u32 %v1885, 16
      %v1996 = vrot.slane %v1994, 5
      %v1997 = vsel %vm427, %v1992, %v1996
      %s1998 = scalar_lea.vmem %s3, 448
      %v1999 = vld [vmem:[%s1998] sm:$0xf]
      %v2000 = vld [vmem:[%s1998 + $0x4] sm:$0xf]
      %v2001 = vld [vmem:[%s1998 + $0x8] sm:$0xf]
      %v2002 = vld [vmem:[%s1998 + $0xc] sm:$0xf]
      %v2003 = vld [vmem:[%s1998 + $0x10] sm:$0xf]
      %v2004 = vld [vmem:[%s1998 + $0x14] sm:$0xf]
      %v2005 = vld [vmem:[%s1998 + $0x18] sm:$0xf]
      %v2006 = vld [vmem:[%s1998 + $0x1c] sm:$0xf]
      %v2007 = vld [vmem:[%s1998 + $0x20] sm:$0xf]
      %v2008 = vld [vmem:[%s1998 + $0x24] sm:$0xf]
      %v2009 = vld [vmem:[%s1998 + $0x28] sm:$0xf]
      %v2010 = vld [vmem:[%s1998 + $0x2c] sm:$0xf]
      %v2011 = vld [vmem:[%s1998 + $0x30] sm:$0xf]
      %v2012 = vld [vmem:[%s1998 + $0x34] sm:$0xf]
      %v2013 = vld [vmem:[%s1998 + $0x38] sm:$0xf]
      %v2014 = vld [vmem:[%s1998 + $0x3c] sm:$0xf]
      %v2015 = vunpack.c.l.b16 %v1899
      %v2016 = vunpack.c.l.b16 %v1913
      %v2017 = vunpack.c.l.b16 %v1927
      %v2018 = vunpack.c.l.b16 %v1941
      %v2019 = vunpack.c.l.b16 %v1955
      %v2020 = vunpack.c.l.b16 %v1969
      %v2021 = vunpack.c.l.b16 %v1983
      %v2022 = vunpack.c.l.b16 %v1997
      %v2023 = vpack.c.b16 %v2016, %v2015
      %v2024 = vpack.c.b16 %v2018, %v2017
      %v2025 = vpack.c.b16 %v2020, %v2019
      %v2026 = vpack.c.b16 %v2022, %v2021
      %v2047 = vunpack.c.l.b16 %v1999
      %v2048 = vunpack.c.l.b16 %v2000
      %v2049 = vunpack.c.l.b16 %v2001
      %v2050 = vunpack.c.l.b16 %v2002
      %v2051 = vunpack.c.l.b16 %v2003
      %v2052 = vunpack.c.l.b16 %v2004
      %v2053 = vunpack.c.l.b16 %v2005
      %v2054 = vunpack.c.l.b16 %v2006
      %v2055 = vunpack.c.l.b16 %v2007
      %v2056 = vunpack.c.l.b16 %v2008
      %v2057 = vunpack.c.l.b16 %v2009
      %v2058 = vunpack.c.l.b16 %v2010
      %v2059 = vunpack.c.l.b16 %v2011
      %v2060 = vunpack.c.l.b16 %v2012
      %v2061 = vunpack.c.l.b16 %v2013
      %v2062 = vunpack.c.l.b16 %v2014
      %v2063 = vpack.c.b16 %v2048, %v2047
      %v2064 = vpack.c.b16 %v2050, %v2049
      %v2065 = vpack.c.b16 %v2052, %v2051
      %v2066 = vpack.c.b16 %v2054, %v2053
      %v2067 = vpack.c.b16 %v2056, %v2055
      %v2068 = vpack.c.b16 %v2058, %v2057
      %v2069 = vpack.c.b16 %v2060, %v2059
      %v2070 = vpack.c.b16 %v2062, %v2061
      %2079 = vmatprep.subr.bf16.mxu0 0
      %2080 = vmatpush1.bf16.msra.mxu0 %v2070
      %2081 = vmatprep.subr.bf16.mxu0 0
      %2082 = vmatpush1.bf16.msra.mxu0 %v2069
      %2083 = vmatprep.subr.bf16.mxu0 0
      %2084 = vmatpush1.bf16.msra.mxu0 %v2068
      %2085 = vmatprep.subr.bf16.mxu0 0
      %2086 = vmatpush1.bf16.msra.mxu0 %v2067
      %2087 = vmatprep.subr.bf16.mxu0 0
      %2088 = vmatpush1.bf16.msra.mxu0 %v2066
      %2089 = vmatprep.subr.bf16.mxu0 0
      %2090 = vmatpush1.bf16.msra.mxu0 %v2065
      %2091 = vmatprep.subr.bf16.mxu0 0
      %2092 = vmatpush1.bf16.msra.mxu0 %v2064
      %2093 = vmatprep.subr.bf16.mxu0 0
      %2094 = vmatpush1.bf16.msra.mxu0 %v2063
      %2095 = vmatprep.subr.bf16.mxu0 0
      %2096 = vmatpush2.bf16.msra.mxu0 0
      %2097 = vmatprep.subr.bf16.mxu0 0
      %2098 = vmatpush2.bf16.msra.mxu0 0
      %2099 = vmatprep.subr.bf16.mxu0 0
      %2100 = vmatpush2.bf16.msra.mxu0 0
      %2101 = vmatprep.subr.bf16.mxu0 0
      %2102 = vmatpush2.bf16.msra.mxu0 0
      %2103 = vmatprep.subr.bf16.mxu0 0
      %2104 = vmatpush2.bf16.msra.mxu0 0
      %2105 = vmatprep.subr.bf16.mxu0 0
      %2106 = vmatpush2.bf16.msra.mxu0 0
      %2107 = vmatprep.subr.bf16.mxu0 0
      %2108 = vmatpush2.bf16.msra.mxu0 0
      %2109 = vmatprep.subr.bf16.mxu0 0
      %2110 = vmatpush2.bf16.msra.mxu0 0
      %2111 = vmatprep.mubr.bf16.mxu0 0
      %2112 = vmatmul.mubr.bf16.gmra.mxu0 %v2023
      %v2113 = vpop.f32.mrf.mxu0
      %v2114 = vadd.f32 0.0, %v2113
      %v2115 = vpop.f32.mrf.mxu0
      %v2116 = vpop.f32.mrf.mxu0
      %v2117 = vadd.f32 0.0, %v2116
      %v2118 = vpop.f32.mrf.mxu0
      %2119 = vmatprep.mubr.bf16.mxu0 0
      %2120 = vmatmul.mubr.bf16.gmra.mxu0 %v2024
      %v2121 = vpop.f32.mrf.mxu0
      %v2122 = vadd.f32 0.0, %v2121
      %v2123 = vpop.f32.mrf.mxu0
      %v2124 = vpop.f32.mrf.mxu0
      %v2125 = vadd.f32 0.0, %v2124
      %v2126 = vpop.f32.mrf.mxu0
      %2127 = vmatprep.mubr.bf16.mxu0 0
      %2128 = vmatmul.mubr.bf16.gmra.mxu0 %v2025
      %v2129 = vpop.f32.mrf.mxu0
      %v2130 = vadd.f32 0.0, %v2129
      %v2131 = vpop.f32.mrf.mxu0
      %v2132 = vpop.f32.mrf.mxu0
      %v2133 = vadd.f32 0.0, %v2132
      %v2134 = vpop.f32.mrf.mxu0
      %2135 = vmatprep.mubr.bf16.mxu0 0
      %2136 = vmatmul.mubr.bf16.gmra.mxu0 %v2026
      %v2137 = vpop.f32.mrf.mxu0
      %v2138 = vadd.f32 0.0, %v2137
      %v2139 = vpop.f32.mrf.mxu0
      %v2140 = vpop.f32.mrf.mxu0
      %v2141 = vadd.f32 0.0, %v2140
      %v2142 = vpop.f32.mrf.mxu0
      %2143 = vdwg.mxu0
      %v2144 = vadd.f32 %v1862, %v2114
      %v2145 = vadd.f32 %v1863, %v2117
      %v2146 = vadd.f32 %v1864, %v2122
      %v2147 = vadd.f32 %v1865, %v2125
      %v2148 = vadd.f32 %v1866, %v2130
      %v2149 = vadd.f32 %v1867, %v2133
      %v2150 = vadd.f32 %v1868, %v2138
      %v2151 = vadd.f32 %v1869, %v2141
      %v2152 = vld [vmem:[%s1699] sm:$0xe]
      %v2153 = vld [vmem:[%s1699 + $0x8] sm:$0xe]
      %v2154 = vld [vmem:[%s1699 + $0x10] sm:$0xe]
      %v2155 = vld [vmem:[%s1699 + $0x18] sm:$0xe]
      %v2156 = vld [vmem:[%s1699 + $0x20] sm:$0xe]
      %v2157 = vld [vmem:[%s1699 + $0x28] sm:$0xe]
      %v2158 = vld [vmem:[%s1699 + $0x30] sm:$0xe]
      %v2159 = vld [vmem:[%s1699 + $0x38] sm:$0xe]
      %v2176 = vrot.slane %v2152, 5
      %v2177 = vrot.slane %v2176, 4
      %v2178 = vrot.slane %v1871, 5
      %v2179 = vsel %vm849, %v2177, %v2178
      %v2180 = vrot.slane %v2153, 5
      %v2181 = vrot.slane %v2180, 4
      %v2182 = vrot.slane %v1873, 5
      %v2183 = vsel %vm849, %v2181, %v2182
      %v2184 = vrot.slane %v2154, 5
      %v2185 = vrot.slane %v2184, 4
      %v2186 = vrot.slane %v1875, 5
      %v2187 = vsel %vm849, %v2185, %v2186
      %v2188 = vrot.slane %v2155, 5
      %v2189 = vrot.slane %v2188, 4
      %v2190 = vrot.slane %v1877, 5
      %v2191 = vsel %vm849, %v2189, %v2190
      %v2192 = vrot.slane %v2156, 5
      %v2193 = vrot.slane %v2192, 4
      %v2194 = vrot.slane %v1879, 5
      %v2195 = vsel %vm849, %v2193, %v2194
      %v2196 = vrot.slane %v2157, 5
      %v2197 = vrot.slane %v2196, 4
      %v2198 = vrot.slane %v1881, 5
      %v2199 = vsel %vm849, %v2197, %v2198
      %v2200 = vrot.slane %v2158, 5
      %v2201 = vrot.slane %v2200, 4
      %v2202 = vrot.slane %v1883, 5
      %v2203 = vsel %vm849, %v2201, %v2202
      %v2204 = vrot.slane %v2159, 5
      %v2205 = vrot.slane %v2204, 4
      %v2206 = vrot.slane %v1885, 5
      %v2207 = vsel %vm849, %v2205, %v2206
      %s2208 = scalar_lea.vmem %s3, 512
      %v2209 = vld [vmem:[%s2208] sm:$0xf]
      %v2210 = vld [vmem:[%s2208 + $0x4] sm:$0xf]
      %v2211 = vld [vmem:[%s2208 + $0x8] sm:$0xf]
      %v2212 = vld [vmem:[%s2208 + $0xc] sm:$0xf]
      %v2213 = vld [vmem:[%s2208 + $0x10] sm:$0xf]
      %v2214 = vld [vmem:[%s2208 + $0x14] sm:$0xf]
      %v2215 = vld [vmem:[%s2208 + $0x18] sm:$0xf]
      %v2216 = vld [vmem:[%s2208 + $0x1c] sm:$0xf]
      %v2217 = vld [vmem:[%s2208 + $0x20] sm:$0xf]
      %v2218 = vld [vmem:[%s2208 + $0x24] sm:$0xf]
      %v2219 = vld [vmem:[%s2208 + $0x28] sm:$0xf]
      %v2220 = vld [vmem:[%s2208 + $0x2c] sm:$0xf]
      %v2221 = vld [vmem:[%s2208 + $0x30] sm:$0xf]
      %v2222 = vld [vmem:[%s2208 + $0x34] sm:$0xf]
      %v2223 = vld [vmem:[%s2208 + $0x38] sm:$0xf]
      %v2224 = vld [vmem:[%s2208 + $0x3c] sm:$0xf]
      %v2225 = vunpack.c.l.b16 %v2179
      %v2226 = vunpack.c.l.b16 %v2183
      %v2227 = vunpack.c.l.b16 %v2187
      %v2228 = vunpack.c.l.b16 %v2191
      %v2229 = vunpack.c.l.b16 %v2195
      %v2230 = vunpack.c.l.b16 %v2199
      %v2231 = vunpack.c.l.b16 %v2203
      %v2232 = vunpack.c.l.b16 %v2207
      %v2233 = vpack.c.b16 %v2226, %v2225
      %v2234 = vpack.c.b16 %v2228, %v2227
      %v2235 = vpack.c.b16 %v2230, %v2229
      %v2236 = vpack.c.b16 %v2232, %v2231
      %v2257 = vunpack.c.l.b16 %v2209
      %v2258 = vunpack.c.l.b16 %v2210
      %v2259 = vunpack.c.l.b16 %v2211
      %v2260 = vunpack.c.l.b16 %v2212
      %v2261 = vunpack.c.l.b16 %v2213
      %v2262 = vunpack.c.l.b16 %v2214
      %v2263 = vunpack.c.l.b16 %v2215
      %v2264 = vunpack.c.l.b16 %v2216
      %v2265 = vunpack.c.l.b16 %v2217
      %v2266 = vunpack.c.l.b16 %v2218
      %v2267 = vunpack.c.l.b16 %v2219
      %v2268 = vunpack.c.l.b16 %v2220
      %v2269 = vunpack.c.l.b16 %v2221
      %v2270 = vunpack.c.l.b16 %v2222
      %v2271 = vunpack.c.l.b16 %v2223
      %v2272 = vunpack.c.l.b16 %v2224
      %v2273 = vpack.c.b16 %v2258, %v2257
      %v2274 = vpack.c.b16 %v2260, %v2259
      %v2275 = vpack.c.b16 %v2262, %v2261
      %v2276 = vpack.c.b16 %v2264, %v2263
      %v2277 = vpack.c.b16 %v2266, %v2265
      %v2278 = vpack.c.b16 %v2268, %v2267
      %v2279 = vpack.c.b16 %v2270, %v2269
      %v2280 = vpack.c.b16 %v2272, %v2271
      %2289 = vmatprep.subr.bf16.mxu0 0
      %2290 = vmatpush1.bf16.msra.mxu0 %v2280
      %2291 = vmatprep.subr.bf16.mxu0 0
      %2292 = vmatpush1.bf16.msra.mxu0 %v2279
      %2293 = vmatprep.subr.bf16.mxu0 0
      %2294 = vmatpush1.bf16.msra.mxu0 %v2278
      %2295 = vmatprep.subr.bf16.mxu0 0
      %2296 = vmatpush1.bf16.msra.mxu0 %v2277
      %2297 = vmatprep.subr.bf16.mxu0 0
      %2298 = vmatpush1.bf16.msra.mxu0 %v2276
      %2299 = vmatprep.subr.bf16.mxu0 0
      %2300 = vmatpush1.bf16.msra.mxu0 %v2275
      %2301 = vmatprep.subr.bf16.mxu0 0
      %2302 = vmatpush1.bf16.msra.mxu0 %v2274
      %2303 = vmatprep.subr.bf16.mxu0 0
      %2304 = vmatpush1.bf16.msra.mxu0 %v2273
      %2305 = vmatprep.subr.bf16.mxu0 0
      %2306 = vmatpush2.bf16.msra.mxu0 0
      %2307 = vmatprep.subr.bf16.mxu0 0
      %2308 = vmatpush2.bf16.msra.mxu0 0
      %2309 = vmatprep.subr.bf16.mxu0 0
      %2310 = vmatpush2.bf16.msra.mxu0 0
      %2311 = vmatprep.subr.bf16.mxu0 0
      %2312 = vmatpush2.bf16.msra.mxu0 0
      %2313 = vmatprep.subr.bf16.mxu0 0
      %2314 = vmatpush2.bf16.msra.mxu0 0
      %2315 = vmatprep.subr.bf16.mxu0 0
      %2316 = vmatpush2.bf16.msra.mxu0 0
      %2317 = vmatprep.subr.bf16.mxu0 0
      %2318 = vmatpush2.bf16.msra.mxu0 0
      %2319 = vmatprep.subr.bf16.mxu0 0
      %2320 = vmatpush2.bf16.msra.mxu0 0
      %2321 = vmatprep.mubr.bf16.mxu0 0
      %2322 = vmatmul.mubr.bf16.gmra.mxu0 %v2233
      %v2323 = vpop.f32.mrf.mxu0
      %v2324 = vadd.f32 0.0, %v2323
      %v2325 = vpop.f32.mrf.mxu0
      %v2326 = vpop.f32.mrf.mxu0
      %v2327 = vadd.f32 0.0, %v2326
      %v2328 = vpop.f32.mrf.mxu0
      %2329 = vmatprep.mubr.bf16.mxu0 0
      %2330 = vmatmul.mubr.bf16.gmra.mxu0 %v2234
      %v2331 = vpop.f32.mrf.mxu0
      %v2332 = vadd.f32 0.0, %v2331
      %v2333 = vpop.f32.mrf.mxu0
      %v2334 = vpop.f32.mrf.mxu0
      %v2335 = vadd.f32 0.0, %v2334
      %v2336 = vpop.f32.mrf.mxu0
      %2337 = vmatprep.mubr.bf16.mxu0 0
      %2338 = vmatmul.mubr.bf16.gmra.mxu0 %v2235
      %v2339 = vpop.f32.mrf.mxu0
      %v2340 = vadd.f32 0.0, %v2339
      %v2341 = vpop.f32.mrf.mxu0
      %v2342 = vpop.f32.mrf.mxu0
      %v2343 = vadd.f32 0.0, %v2342
      %v2344 = vpop.f32.mrf.mxu0
      %2345 = vmatprep.mubr.bf16.mxu0 0
      %2346 = vmatmul.mubr.bf16.gmra.mxu0 %v2236
      %v2347 = vpop.f32.mrf.mxu0
      %v2348 = vadd.f32 0.0, %v2347
      %v2349 = vpop.f32.mrf.mxu0
      %v2350 = vpop.f32.mrf.mxu0
      %v2351 = vadd.f32 0.0, %v2350
      %v2352 = vpop.f32.mrf.mxu0
      %2353 = vdwg.mxu0
      %v2354 = vadd.f32 %v2144, %v2324
      %v2355 = vadd.f32 %v2145, %v2327
      %v2356 = vadd.f32 %v2146, %v2332
      %v2357 = vadd.f32 %v2147, %v2335
      %v2358 = vadd.f32 %v2148, %v2340
      %v2359 = vadd.f32 %v2149, %v2343
      %v2360 = vadd.f32 %v2150, %v2348
      %v2361 = vadd.f32 %v2151, %v2351
      %v2362 = vld [vmem:[%s370] sm:$0xf]
      %v2363 = vld [vmem:[%s370 + $0x8] sm:$0xf]
      %v2364 = vld [vmem:[%s370 + $0x10] sm:$0xf]
      %v2365 = vld [vmem:[%s370 + $0x18] sm:$0xf]
      %v2366 = vld [vmem:[%s370 + $0x20] sm:$0xf]
      %v2367 = vld [vmem:[%s370 + $0x28] sm:$0xf]
      %v2368 = vld [vmem:[%s370 + $0x30] sm:$0xf]
      %v2369 = vld [vmem:[%s370 + $0x38] sm:$0xf]
      %s2370 = scalar_lea.vmem %s3, 576
      %v2371 = vld [vmem:[%s2370] sm:$0xf]
      %v2372 = vld [vmem:[%s2370 + $0x4] sm:$0xf]
      %v2373 = vld [vmem:[%s2370 + $0x8] sm:$0xf]
      %v2374 = vld [vmem:[%s2370 + $0xc] sm:$0xf]
      %v2375 = vld [vmem:[%s2370 + $0x10] sm:$0xf]
      %v2376 = vld [vmem:[%s2370 + $0x14] sm:$0xf]
      %v2377 = vld [vmem:[%s2370 + $0x18] sm:$0xf]
      %v2378 = vld [vmem:[%s2370 + $0x1c] sm:$0xf]
      %v2379 = vld [vmem:[%s2370 + $0x20] sm:$0xf]
      %v2380 = vld [vmem:[%s2370 + $0x24] sm:$0xf]
      %v2381 = vld [vmem:[%s2370 + $0x28] sm:$0xf]
      %v2382 = vld [vmem:[%s2370 + $0x2c] sm:$0xf]
      %v2383 = vld [vmem:[%s2370 + $0x30] sm:$0xf]
      %v2384 = vld [vmem:[%s2370 + $0x34] sm:$0xf]
      %v2385 = vld [vmem:[%s2370 + $0x38] sm:$0xf]
      %v2386 = vld [vmem:[%s2370 + $0x3c] sm:$0xf]
      %v2395 = vunpack.c.l.b16 %v2362
      %v2396 = vunpack.c.l.b16 %v2363
      %v2397 = vunpack.c.l.b16 %v2364
      %v2398 = vunpack.c.l.b16 %v2365
      %v2399 = vunpack.c.l.b16 %v2366
      %v2400 = vunpack.c.l.b16 %v2367
      %v2401 = vunpack.c.l.b16 %v2368
      %v2402 = vunpack.c.l.b16 %v2369
      %v2403 = vpack.c.b16 %v2396, %v2395
      %v2404 = vpack.c.b16 %v2398, %v2397
      %v2405 = vpack.c.b16 %v2400, %v2399
      %v2406 = vpack.c.b16 %v2402, %v2401
      %v2427 = vunpack.c.l.b16 %v2371
      %v2428 = vunpack.c.l.b16 %v2372
      %v2429 = vunpack.c.l.b16 %v2373
      %v2430 = vunpack.c.l.b16 %v2374
      %v2431 = vunpack.c.l.b16 %v2375
      %v2432 = vunpack.c.l.b16 %v2376
      %v2433 = vunpack.c.l.b16 %v2377
      %v2434 = vunpack.c.l.b16 %v2378
      %v2435 = vunpack.c.l.b16 %v2379
      %v2436 = vunpack.c.l.b16 %v2380
      %v2437 = vunpack.c.l.b16 %v2381
      %v2438 = vunpack.c.l.b16 %v2382
      %v2439 = vunpack.c.l.b16 %v2383
      %v2440 = vunpack.c.l.b16 %v2384
      %v2441 = vunpack.c.l.b16 %v2385
      %v2442 = vunpack.c.l.b16 %v2386
      %v2443 = vpack.c.b16 %v2428, %v2427
      %v2444 = vpack.c.b16 %v2430, %v2429
      %v2445 = vpack.c.b16 %v2432, %v2431
      %v2446 = vpack.c.b16 %v2434, %v2433
      %v2447 = vpack.c.b16 %v2436, %v2435
      %v2448 = vpack.c.b16 %v2438, %v2437
      %v2449 = vpack.c.b16 %v2440, %v2439
      %v2450 = vpack.c.b16 %v2442, %v2441
      %2459 = vmatprep.subr.bf16.mxu0 0
      %2460 = vmatpush1.bf16.msra.mxu0 %v2450
      %2461 = vmatprep.subr.bf16.mxu0 0
      %2462 = vmatpush1.bf16.msra.mxu0 %v2449
      %2463 = vmatprep.subr.bf16.mxu0 0
      %2464 = vmatpush1.bf16.msra.mxu0 %v2448
      %2465 = vmatprep.subr.bf16.mxu0 0
      %2466 = vmatpush1.bf16.msra.mxu0 %v2447
      %2467 = vmatprep.subr.bf16.mxu0 0
      %2468 = vmatpush1.bf16.msra.mxu0 %v2446
      %2469 = vmatprep.subr.bf16.mxu0 0
      %2470 = vmatpush1.bf16.msra.mxu0 %v2445
      %2471 = vmatprep.subr.bf16.mxu0 0
      %2472 = vmatpush1.bf16.msra.mxu0 %v2444
      %2473 = vmatprep.subr.bf16.mxu0 0
      %2474 = vmatpush1.bf16.msra.mxu0 %v2443
      %2475 = vmatprep.subr.bf16.mxu0 0
      %2476 = vmatpush2.bf16.msra.mxu0 0
      %2477 = vmatprep.subr.bf16.mxu0 0
      %2478 = vmatpush2.bf16.msra.mxu0 0
      %2479 = vmatprep.subr.bf16.mxu0 0
      %2480 = vmatpush2.bf16.msra.mxu0 0
      %2481 = vmatprep.subr.bf16.mxu0 0
      %2482 = vmatpush2.bf16.msra.mxu0 0
      %2483 = vmatprep.subr.bf16.mxu0 0
      %2484 = vmatpush2.bf16.msra.mxu0 0
      %2485 = vmatprep.subr.bf16.mxu0 0
      %2486 = vmatpush2.bf16.msra.mxu0 0
      %2487 = vmatprep.subr.bf16.mxu0 0
      %2488 = vmatpush2.bf16.msra.mxu0 0
      %2489 = vmatprep.subr.bf16.mxu0 0
      %2490 = vmatpush2.bf16.msra.mxu0 0
      %2491 = vmatprep.mubr.bf16.mxu0 0
      %2492 = vmatmul.mubr.bf16.gmra.mxu0 %v2403
      %v2493 = vpop.f32.mrf.mxu0
      %v2494 = vadd.f32 0.0, %v2493
      %v2495 = vpop.f32.mrf.mxu0
      %v2496 = vpop.f32.mrf.mxu0
      %v2497 = vadd.f32 0.0, %v2496
      %v2498 = vpop.f32.mrf.mxu0
      %2499 = vmatprep.mubr.bf16.mxu0 0
      %2500 = vmatmul.mubr.bf16.gmra.mxu0 %v2404
      %v2501 = vpop.f32.mrf.mxu0
      %v2502 = vadd.f32 0.0, %v2501
      %v2503 = vpop.f32.mrf.mxu0
      %v2504 = vpop.f32.mrf.mxu0
      %v2505 = vadd.f32 0.0, %v2504
      %v2506 = vpop.f32.mrf.mxu0
      %2507 = vmatprep.mubr.bf16.mxu0 0
      %2508 = vmatmul.mubr.bf16.gmra.mxu0 %v2405
      %v2509 = vpop.f32.mrf.mxu0
      %v2510 = vadd.f32 0.0, %v2509
      %v2511 = vpop.f32.mrf.mxu0
      %v2512 = vpop.f32.mrf.mxu0
      %v2513 = vadd.f32 0.0, %v2512
      %v2514 = vpop.f32.mrf.mxu0
      %2515 = vmatprep.mubr.bf16.mxu0 0
      %2516 = vmatmul.mubr.bf16.gmra.mxu0 %v2406
      %v2517 = vpop.f32.mrf.mxu0
      %v2518 = vadd.f32 0.0, %v2517
      %v2519 = vpop.f32.mrf.mxu0
      %v2520 = vpop.f32.mrf.mxu0
      %v2521 = vadd.f32 0.0, %v2520
      %v2522 = vpop.f32.mrf.mxu0
      %2523 = vdwg.mxu0
      %v2524 = vadd.f32 %v2354, %v2494
      %v2525 = vadd.f32 %v2355, %v2497
      %v2526 = vadd.f32 %v2356, %v2502
      %v2527 = vadd.f32 %v2357, %v2505
      %v2528 = vadd.f32 %v2358, %v2510
      %v2529 = vadd.f32 %v2359, %v2513
      %v2530 = vadd.f32 %v2360, %v2518
      %v2531 = vadd.f32 %v2361, %v2521
      %v2532 = vld [vmem:[%s370] sm:$0xf]
      %v2533 = vld [vmem:[%s370 + $0x4] sm:$0x1]
      %v2534 = vld [vmem:[%s370 + $0x8] sm:$0xf]
      %v2535 = vld [vmem:[%s370 + $0xc] sm:$0x1]
      %v2536 = vld [vmem:[%s370 + $0x10] sm:$0xf]
      %v2537 = vld [vmem:[%s370 + $0x14] sm:$0x1]
      %v2538 = vld [vmem:[%s370 + $0x18] sm:$0xf]
      %v2539 = vld [vmem:[%s370 + $0x1c] sm:$0x1]
      %v2540 = vld [vmem:[%s370 + $0x20] sm:$0xf]
      %v2541 = vld [vmem:[%s370 + $0x24] sm:$0x1]
      %v2542 = vld [vmem:[%s370 + $0x28] sm:$0xf]
      %v2543 = vld [vmem:[%s370 + $0x2c] sm:$0x1]
      %v2544 = vld [vmem:[%s370 + $0x30] sm:$0xf]
      %v2545 = vld [vmem:[%s370 + $0x34] sm:$0x1]
      %v2546 = vld [vmem:[%s370 + $0x38] sm:$0xf]
      %v2547 = vld [vmem:[%s370 + $0x3c] sm:$0x1]
      %v2549 = vshrl.u32 %v2532, 16
      %v2551 = vrot.slane %v2549, 4
      %v2552 = vshll.u32 %v2532, 16
      %v2554 = vrot.slane %v2552, 5
      %v2555 = vor.u32 %v2551, %v2554
      %v2556 = vrot.slane %v2555, 4
      %v2558 = vshll.u32 %v2533, 16
      %v2560 = vrot.slane %v2558, 5
      %v2561 = vsel %vm427, %v2556, %v2560
      %v2563 = vshrl.u32 %v2534, 16
      %v2565 = vrot.slane %v2563, 4
      %v2566 = vshll.u32 %v2534, 16
      %v2568 = vrot.slane %v2566, 5
      %v2569 = vor.u32 %v2565, %v2568
      %v2570 = vrot.slane %v2569, 4
      %v2572 = vshll.u32 %v2535, 16
      %v2574 = vrot.slane %v2572, 5
      %v2575 = vsel %vm427, %v2570, %v2574
      %v2577 = vshrl.u32 %v2536, 16
      %v2579 = vrot.slane %v2577, 4
      %v2580 = vshll.u32 %v2536, 16
      %v2582 = vrot.slane %v2580, 5
      %v2583 = vor.u32 %v2579, %v2582
      %v2584 = vrot.slane %v2583, 4
      %v2586 = vshll.u32 %v2537, 16
      %v2588 = vrot.slane %v2586, 5
      %v2589 = vsel %vm427, %v2584, %v2588
      %v2591 = vshrl.u32 %v2538, 16
      %v2593 = vrot.slane %v2591, 4
      %v2594 = vshll.u32 %v2538, 16
      %v2596 = vrot.slane %v2594, 5
      %v2597 = vor.u32 %v2593, %v2596
      %v2598 = vrot.slane %v2597, 4
      %v2600 = vshll.u32 %v2539, 16
      %v2602 = vrot.slane %v2600, 5
      %v2603 = vsel %vm427, %v2598, %v2602
      %v2605 = vshrl.u32 %v2540, 16
      %v2607 = vrot.slane %v2605, 4
      %v2608 = vshll.u32 %v2540, 16
      %v2610 = vrot.slane %v2608, 5
      %v2611 = vor.u32 %v2607, %v2610
      %v2612 = vrot.slane %v2611, 4
      %v2614 = vshll.u32 %v2541, 16
      %v2616 = vrot.slane %v2614, 5
      %v2617 = vsel %vm427, %v2612, %v2616
      %v2619 = vshrl.u32 %v2542, 16
      %v2621 = vrot.slane %v2619, 4
      %v2622 = vshll.u32 %v2542, 16
      %v2624 = vrot.slane %v2622, 5
      %v2625 = vor.u32 %v2621, %v2624
      %v2626 = vrot.slane %v2625, 4
      %v2628 = vshll.u32 %v2543, 16
      %v2630 = vrot.slane %v2628, 5
      %v2631 = vsel %vm427, %v2626, %v2630
      %v2633 = vshrl.u32 %v2544, 16
      %v2635 = vrot.slane %v2633, 4
      %v2636 = vshll.u32 %v2544, 16
      %v2638 = vrot.slane %v2636, 5
      %v2639 = vor.u32 %v2635, %v2638
      %v2640 = vrot.slane %v2639, 4
      %v2642 = vshll.u32 %v2545, 16
      %v2644 = vrot.slane %v2642, 5
      %v2645 = vsel %vm427, %v2640, %v2644
      %v2647 = vshrl.u32 %v2546, 16
      %v2649 = vrot.slane %v2647, 4
      %v2650 = vshll.u32 %v2546, 16
      %v2652 = vrot.slane %v2650, 5
      %v2653 = vor.u32 %v2649, %v2652
      %v2654 = vrot.slane %v2653, 4
      %v2656 = vshll.u32 %v2547, 16
      %v2658 = vrot.slane %v2656, 5
      %v2659 = vsel %vm427, %v2654, %v2658
      %s2660 = scalar_lea.vmem %s3, 640
      %v2661 = vld [vmem:[%s2660] sm:$0xf]
      %v2662 = vld [vmem:[%s2660 + $0x4] sm:$0xf]
      %v2663 = vld [vmem:[%s2660 + $0x8] sm:$0xf]
      %v2664 = vld [vmem:[%s2660 + $0xc] sm:$0xf]
      %v2665 = vld [vmem:[%s2660 + $0x10] sm:$0xf]
      %v2666 = vld [vmem:[%s2660 + $0x14] sm:$0xf]
      %v2667 = vld [vmem:[%s2660 + $0x18] sm:$0xf]
      %v2668 = vld [vmem:[%s2660 + $0x1c] sm:$0xf]
      %v2669 = vld [vmem:[%s2660 + $0x20] sm:$0xf]
      %v2670 = vld [vmem:[%s2660 + $0x24] sm:$0xf]
      %v2671 = vld [vmem:[%s2660 + $0x28] sm:$0xf]
      %v2672 = vld [vmem:[%s2660 + $0x2c] sm:$0xf]
      %v2673 = vld [vmem:[%s2660 + $0x30] sm:$0xf]
      %v2674 = vld [vmem:[%s2660 + $0x34] sm:$0xf]
      %v2675 = vld [vmem:[%s2660 + $0x38] sm:$0xf]
      %v2676 = vld [vmem:[%s2660 + $0x3c] sm:$0xf]
      %v2677 = vunpack.c.l.b16 %v2561
      %v2678 = vunpack.c.l.b16 %v2575
      %v2679 = vunpack.c.l.b16 %v2589
      %v2680 = vunpack.c.l.b16 %v2603
      %v2681 = vunpack.c.l.b16 %v2617
      %v2682 = vunpack.c.l.b16 %v2631
      %v2683 = vunpack.c.l.b16 %v2645
      %v2684 = vunpack.c.l.b16 %v2659
      %v2685 = vpack.c.b16 %v2678, %v2677
      %v2686 = vpack.c.b16 %v2680, %v2679
      %v2687 = vpack.c.b16 %v2682, %v2681
      %v2688 = vpack.c.b16 %v2684, %v2683
      %v2709 = vunpack.c.l.b16 %v2661
      %v2710 = vunpack.c.l.b16 %v2662
      %v2711 = vunpack.c.l.b16 %v2663
      %v2712 = vunpack.c.l.b16 %v2664
      %v2713 = vunpack.c.l.b16 %v2665
      %v2714 = vunpack.c.l.b16 %v2666
      %v2715 = vunpack.c.l.b16 %v2667
      %v2716 = vunpack.c.l.b16 %v2668
      %v2717 = vunpack.c.l.b16 %v2669
      %v2718 = vunpack.c.l.b16 %v2670
      %v2719 = vunpack.c.l.b16 %v2671
      %v2720 = vunpack.c.l.b16 %v2672
      %v2721 = vunpack.c.l.b16 %v2673
      %v2722 = vunpack.c.l.b16 %v2674
      %v2723 = vunpack.c.l.b16 %v2675
      %v2724 = vunpack.c.l.b16 %v2676
      %v2725 = vpack.c.b16 %v2710, %v2709
      %v2726 = vpack.c.b16 %v2712, %v2711
      %v2727 = vpack.c.b16 %v2714, %v2713
      %v2728 = vpack.c.b16 %v2716, %v2715
      %v2729 = vpack.c.b16 %v2718, %v2717
      %v2730 = vpack.c.b16 %v2720, %v2719
      %v2731 = vpack.c.b16 %v2722, %v2721
      %v2732 = vpack.c.b16 %v2724, %v2723
      %2741 = vmatprep.subr.bf16.mxu0 0
      %2742 = vmatpush1.bf16.msra.mxu0 %v2732
      %2743 = vmatprep.subr.bf16.mxu0 0
      %2744 = vmatpush1.bf16.msra.mxu0 %v2731
      %2745 = vmatprep.subr.bf16.mxu0 0
      %2746 = vmatpush1.bf16.msra.mxu0 %v2730
      %2747 = vmatprep.subr.bf16.mxu0 0
      %2748 = vmatpush1.bf16.msra.mxu0 %v2729
      %2749 = vmatprep.subr.bf16.mxu0 0
      %2750 = vmatpush1.bf16.msra.mxu0 %v2728
      %2751 = vmatprep.subr.bf16.mxu0 0
      %2752 = vmatpush1.bf16.msra.mxu0 %v2727
      %2753 = vmatprep.subr.bf16.mxu0 0
      %2754 = vmatpush1.bf16.msra.mxu0 %v2726
      %2755 = vmatprep.subr.bf16.mxu0 0
      %2756 = vmatpush1.bf16.msra.mxu0 %v2725
      %2757 = vmatprep.subr.bf16.mxu0 0
      %2758 = vmatpush2.bf16.msra.mxu0 0
      %2759 = vmatprep.subr.bf16.mxu0 0
      %2760 = vmatpush2.bf16.msra.mxu0 0
      %2761 = vmatprep.subr.bf16.mxu0 0
      %2762 = vmatpush2.bf16.msra.mxu0 0
      %2763 = vmatprep.subr.bf16.mxu0 0
      %2764 = vmatpush2.bf16.msra.mxu0 0
      %2765 = vmatprep.subr.bf16.mxu0 0
      %2766 = vmatpush2.bf16.msra.mxu0 0
      %2767 = vmatprep.subr.bf16.mxu0 0
      %2768 = vmatpush2.bf16.msra.mxu0 0
      %2769 = vmatprep.subr.bf16.mxu0 0
      %2770 = vmatpush2.bf16.msra.mxu0 0
      %2771 = vmatprep.subr.bf16.mxu0 0
      %2772 = vmatpush2.bf16.msra.mxu0 0
      %2773 = vmatprep.mubr.bf16.mxu0 0
      %2774 = vmatmul.mubr.bf16.gmra.mxu0 %v2685
      %v2775 = vpop.f32.mrf.mxu0
      %v2776 = vadd.f32 0.0, %v2775
      %v2777 = vpop.f32.mrf.mxu0
      %v2778 = vpop.f32.mrf.mxu0
      %v2779 = vadd.f32 0.0, %v2778
      %v2780 = vpop.f32.mrf.mxu0
      %2781 = vmatprep.mubr.bf16.mxu0 0
      %2782 = vmatmul.mubr.bf16.gmra.mxu0 %v2686
      %v2783 = vpop.f32.mrf.mxu0
      %v2784 = vadd.f32 0.0, %v2783
      %v2785 = vpop.f32.mrf.mxu0
      %v2786 = vpop.f32.mrf.mxu0
      %v2787 = vadd.f32 0.0, %v2786
      %v2788 = vpop.f32.mrf.mxu0
      %2789 = vmatprep.mubr.bf16.mxu0 0
      %2790 = vmatmul.mubr.bf16.gmra.mxu0 %v2687
      %v2791 = vpop.f32.mrf.mxu0
      %v2792 = vadd.f32 0.0, %v2791
      %v2793 = vpop.f32.mrf.mxu0
      %v2794 = vpop.f32.mrf.mxu0
      %v2795 = vadd.f32 0.0, %v2794
      %v2796 = vpop.f32.mrf.mxu0
      %2797 = vmatprep.mubr.bf16.mxu0 0
      %2798 = vmatmul.mubr.bf16.gmra.mxu0 %v2688
      %v2799 = vpop.f32.mrf.mxu0
      %v2800 = vadd.f32 0.0, %v2799
      %v2801 = vpop.f32.mrf.mxu0
      %v2802 = vpop.f32.mrf.mxu0
      %v2803 = vadd.f32 0.0, %v2802
      %v2804 = vpop.f32.mrf.mxu0
      %2805 = vdwg.mxu0
      %v2806 = vadd.f32 %v2524, %v2776
      %v2807 = vadd.f32 %v2525, %v2779
      %v2808 = vadd.f32 %v2526, %v2784
      %v2809 = vadd.f32 %v2527, %v2787
      %v2810 = vadd.f32 %v2528, %v2792
      %v2811 = vadd.f32 %v2529, %v2795
      %v2812 = vadd.f32 %v2530, %v2800
      %v2813 = vadd.f32 %v2531, %v2803
      %v2814 = vld [vmem:[%s370] sm:$0xe]
      %v2815 = vld [vmem:[%s370 + $0x8] sm:$0xe]
      %v2816 = vld [vmem:[%s370 + $0x10] sm:$0xe]
      %v2817 = vld [vmem:[%s370 + $0x18] sm:$0xe]
      %v2818 = vld [vmem:[%s370 + $0x20] sm:$0xe]
      %v2819 = vld [vmem:[%s370 + $0x28] sm:$0xe]
      %v2820 = vld [vmem:[%s370 + $0x30] sm:$0xe]
      %v2821 = vld [vmem:[%s370 + $0x38] sm:$0xe]
      %v2838 = vrot.slane %v2814, 5
      %v2839 = vrot.slane %v2838, 4
      %v2840 = vrot.slane %v2533, 5
      %v2841 = vsel %vm849, %v2839, %v2840
      %v2842 = vrot.slane %v2815, 5
      %v2843 = vrot.slane %v2842, 4
      %v2844 = vrot.slane %v2535, 5
      %v2845 = vsel %vm849, %v2843, %v2844
      %v2846 = vrot.slane %v2816, 5
      %v2847 = vrot.slane %v2846, 4
      %v2848 = vrot.slane %v2537, 5
      %v2849 = vsel %vm849, %v2847, %v2848
      %v2850 = vrot.slane %v2817, 5
      %v2851 = vrot.slane %v2850, 4
      %v2852 = vrot.slane %v2539, 5
      %v2853 = vsel %vm849, %v2851, %v2852
      %v2854 = vrot.slane %v2818, 5
      %v2855 = vrot.slane %v2854, 4
      %v2856 = vrot.slane %v2541, 5
      %v2857 = vsel %vm849, %v2855, %v2856
      %v2858 = vrot.slane %v2819, 5
      %v2859 = vrot.slane %v2858, 4
      %v2860 = vrot.slane %v2543, 5
      %v2861 = vsel %vm849, %v2859, %v2860
      %v2862 = vrot.slane %v2820, 5
      %v2863 = vrot.slane %v2862, 4
      %v2864 = vrot.slane %v2545, 5
      %v2865 = vsel %vm849, %v2863, %v2864
      %v2866 = vrot.slane %v2821, 5
      %v2867 = vrot.slane %v2866, 4
      %v2868 = vrot.slane %v2547, 5
      %v2869 = vsel %vm849, %v2867, %v2868
      %s2870 = scalar_lea.vmem %s3, 704
      %v2871 = vld [vmem:[%s2870] sm:$0xf]
      %v2872 = vld [vmem:[%s2870 + $0x4] sm:$0xf]
      %v2873 = vld [vmem:[%s2870 + $0x8] sm:$0xf]
      %v2874 = vld [vmem:[%s2870 + $0xc] sm:$0xf]
      %v2875 = vld [vmem:[%s2870 + $0x10] sm:$0xf]
      %v2876 = vld [vmem:[%s2870 + $0x14] sm:$0xf]
      %v2877 = vld [vmem:[%s2870 + $0x18] sm:$0xf]
      %v2878 = vld [vmem:[%s2870 + $0x1c] sm:$0xf]
      %v2879 = vld [vmem:[%s2870 + $0x20] sm:$0xf]
      %v2880 = vld [vmem:[%s2870 + $0x24] sm:$0xf]
      %v2881 = vld [vmem:[%s2870 + $0x28] sm:$0xf]
      %v2882 = vld [vmem:[%s2870 + $0x2c] sm:$0xf]
      %v2883 = vld [vmem:[%s2870 + $0x30] sm:$0xf]
      %v2884 = vld [vmem:[%s2870 + $0x34] sm:$0xf]
      %v2885 = vld [vmem:[%s2870 + $0x38] sm:$0xf]
      %v2886 = vld [vmem:[%s2870 + $0x3c] sm:$0xf]
      %v2887 = vunpack.c.l.b16 %v2841
      %v2888 = vunpack.c.l.b16 %v2845
      %v2889 = vunpack.c.l.b16 %v2849
      %v2890 = vunpack.c.l.b16 %v2853
      %v2891 = vunpack.c.l.b16 %v2857
      %v2892 = vunpack.c.l.b16 %v2861
      %v2893 = vunpack.c.l.b16 %v2865
      %v2894 = vunpack.c.l.b16 %v2869
      %v2895 = vpack.c.b16 %v2888, %v2887
      %v2896 = vpack.c.b16 %v2890, %v2889
      %v2897 = vpack.c.b16 %v2892, %v2891
      %v2898 = vpack.c.b16 %v2894, %v2893
      %v2919 = vunpack.c.l.b16 %v2871
      %v2920 = vunpack.c.l.b16 %v2872
      %v2921 = vunpack.c.l.b16 %v2873
      %v2922 = vunpack.c.l.b16 %v2874
      %v2923 = vunpack.c.l.b16 %v2875
      %v2924 = vunpack.c.l.b16 %v2876
      %v2925 = vunpack.c.l.b16 %v2877
      %v2926 = vunpack.c.l.b16 %v2878
      %v2927 = vunpack.c.l.b16 %v2879
      %v2928 = vunpack.c.l.b16 %v2880
      %v2929 = vunpack.c.l.b16 %v2881
      %v2930 = vunpack.c.l.b16 %v2882
      %v2931 = vunpack.c.l.b16 %v2883
      %v2932 = vunpack.c.l.b16 %v2884
      %v2933 = vunpack.c.l.b16 %v2885
      %v2934 = vunpack.c.l.b16 %v2886
      %v2935 = vpack.c.b16 %v2920, %v2919
      %v2936 = vpack.c.b16 %v2922, %v2921
      %v2937 = vpack.c.b16 %v2924, %v2923
      %v2938 = vpack.c.b16 %v2926, %v2925
      %v2939 = vpack.c.b16 %v2928, %v2927
      %v2940 = vpack.c.b16 %v2930, %v2929
      %v2941 = vpack.c.b16 %v2932, %v2931
      %v2942 = vpack.c.b16 %v2934, %v2933
      %2951 = vmatprep.subr.bf16.mxu0 0
      %2952 = vmatpush1.bf16.msra.mxu0 %v2942
      %2953 = vmatprep.subr.bf16.mxu0 0
      %2954 = vmatpush1.bf16.msra.mxu0 %v2941
      %2955 = vmatprep.subr.bf16.mxu0 0
      %2956 = vmatpush1.bf16.msra.mxu0 %v2940
      %2957 = vmatprep.subr.bf16.mxu0 0
      %2958 = vmatpush1.bf16.msra.mxu0 %v2939
      %2959 = vmatprep.subr.bf16.mxu0 0
      %2960 = vmatpush1.bf16.msra.mxu0 %v2938
      %2961 = vmatprep.subr.bf16.mxu0 0
      %2962 = vmatpush1.bf16.msra.mxu0 %v2937
      %2963 = vmatprep.subr.bf16.mxu0 0
      %2964 = vmatpush1.bf16.msra.mxu0 %v2936
      %2965 = vmatprep.subr.bf16.mxu0 0
      %2966 = vmatpush1.bf16.msra.mxu0 %v2935
      %2967 = vmatprep.subr.bf16.mxu0 0
      %2968 = vmatpush2.bf16.msra.mxu0 0
      %2969 = vmatprep.subr.bf16.mxu0 0
      %2970 = vmatpush2.bf16.msra.mxu0 0
      %2971 = vmatprep.subr.bf16.mxu0 0
      %2972 = vmatpush2.bf16.msra.mxu0 0
      %2973 = vmatprep.subr.bf16.mxu0 0
      %2974 = vmatpush2.bf16.msra.mxu0 0
      %2975 = vmatprep.subr.bf16.mxu0 0
      %2976 = vmatpush2.bf16.msra.mxu0 0
      %2977 = vmatprep.subr.bf16.mxu0 0
      %2978 = vmatpush2.bf16.msra.mxu0 0
      %2979 = vmatprep.subr.bf16.mxu0 0
      %2980 = vmatpush2.bf16.msra.mxu0 0
      %2981 = vmatprep.subr.bf16.mxu0 0
      %2982 = vmatpush2.bf16.msra.mxu0 0
      %2983 = vmatprep.mubr.bf16.mxu0 0
      %2984 = vmatmul.mubr.bf16.gmra.mxu0 %v2895
      %v2985 = vpop.f32.mrf.mxu0
      %v2986 = vadd.f32 0.0, %v2985
      %v2987 = vpop.f32.mrf.mxu0
      %v2988 = vpop.f32.mrf.mxu0
      %v2989 = vadd.f32 0.0, %v2988
      %v2990 = vpop.f32.mrf.mxu0
      %2991 = vmatprep.mubr.bf16.mxu0 0
      %2992 = vmatmul.mubr.bf16.gmra.mxu0 %v2896
      %v2993 = vpop.f32.mrf.mxu0
      %v2994 = vadd.f32 0.0, %v2993
      %v2995 = vpop.f32.mrf.mxu0
      %v2996 = vpop.f32.mrf.mxu0
      %v2997 = vadd.f32 0.0, %v2996
      %v2998 = vpop.f32.mrf.mxu0
      %2999 = vmatprep.mubr.bf16.mxu0 0
      %3000 = vmatmul.mubr.bf16.gmra.mxu0 %v2897
      %v3001 = vpop.f32.mrf.mxu0
      %v3002 = vadd.f32 0.0, %v3001
      %v3003 = vpop.f32.mrf.mxu0
      %v3004 = vpop.f32.mrf.mxu0
      %v3005 = vadd.f32 0.0, %v3004
      %v3006 = vpop.f32.mrf.mxu0
      %3007 = vmatprep.mubr.bf16.mxu0 0
      %3008 = vmatmul.mubr.bf16.gmra.mxu0 %v2898
      %v3009 = vpop.f32.mrf.mxu0
      %v3010 = vadd.f32 0.0, %v3009
      %v3011 = vpop.f32.mrf.mxu0
      %v3012 = vpop.f32.mrf.mxu0
      %v3013 = vadd.f32 0.0, %v3012
      %v3014 = vpop.f32.mrf.mxu0
      %3015 = vdwg.mxu0
      %v3016 = vadd.f32 %v2806, %v2986
      %v3017 = vadd.f32 %v2807, %v2989
      %v3018 = vadd.f32 %v2808, %v2994
      %v3019 = vadd.f32 %v2809, %v2997
      %v3020 = vadd.f32 %v2810, %v3002
      %v3021 = vadd.f32 %v2811, %v3005
      %v3022 = vadd.f32 %v2812, %v3010
      %v3023 = vadd.f32 %v2813, %v3013
      %s3024 = scalar_lea.vmem %s370, 8
      %v3025 = vld [vmem:[%s3024] sm:$0xf]
      %v3026 = vld [vmem:[%s3024 + $0x8] sm:$0xf]
      %v3027 = vld [vmem:[%s3024 + $0x10] sm:$0xf]
      %v3028 = vld [vmem:[%s3024 + $0x18] sm:$0xf]
      %v3029 = vld [vmem:[%s3024 + $0x20] sm:$0xf]
      %v3030 = vld [vmem:[%s3024 + $0x28] sm:$0xf]
      %v3031 = vld [vmem:[%s3024 + $0x30] sm:$0xf]
      %v3032 = vld [vmem:[%s3024 + $0x38] sm:$0xf]
      %s3033 = scalar_lea.vmem %s3, 768
      %v3034 = vld [vmem:[%s3033] sm:$0xf]
      %v3035 = vld [vmem:[%s3033 + $0x4] sm:$0xf]
      %v3036 = vld [vmem:[%s3033 + $0x8] sm:$0xf]
      %v3037 = vld [vmem:[%s3033 + $0xc] sm:$0xf]
      %v3038 = vld [vmem:[%s3033 + $0x10] sm:$0xf]
      %v3039 = vld [vmem:[%s3033 + $0x14] sm:$0xf]
      %v3040 = vld [vmem:[%s3033 + $0x18] sm:$0xf]
      %v3041 = vld [vmem:[%s3033 + $0x1c] sm:$0xf]
      %v3042 = vld [vmem:[%s3033 + $0x20] sm:$0xf]
      %v3043 = vld [vmem:[%s3033 + $0x24] sm:$0xf]
      %v3044 = vld [vmem:[%s3033 + $0x28] sm:$0xf]
      %v3045 = vld [vmem:[%s3033 + $0x2c] sm:$0xf]
      %v3046 = vld [vmem:[%s3033 + $0x30] sm:$0xf]
      %v3047 = vld [vmem:[%s3033 + $0x34] sm:$0xf]
      %v3048 = vld [vmem:[%s3033 + $0x38] sm:$0xf]
      %v3049 = vld [vmem:[%s3033 + $0x3c] sm:$0xf]
      %v3058 = vunpack.c.l.b16 %v3025
      %v3059 = vunpack.c.l.b16 %v3026
      %v3060 = vunpack.c.l.b16 %v3027
      %v3061 = vunpack.c.l.b16 %v3028
      %v3062 = vunpack.c.l.b16 %v3029
      %v3063 = vunpack.c.l.b16 %v3030
      %v3064 = vunpack.c.l.b16 %v3031
      %v3065 = vunpack.c.l.b16 %v3032
      %v3066 = vpack.c.b16 %v3059, %v3058
      %v3067 = vpack.c.b16 %v3061, %v3060
      %v3068 = vpack.c.b16 %v3063, %v3062
      %v3069 = vpack.c.b16 %v3065, %v3064
      %v3090 = vunpack.c.l.b16 %v3034
      %v3091 = vunpack.c.l.b16 %v3035
      %v3092 = vunpack.c.l.b16 %v3036
      %v3093 = vunpack.c.l.b16 %v3037
      %v3094 = vunpack.c.l.b16 %v3038
      %v3095 = vunpack.c.l.b16 %v3039
      %v3096 = vunpack.c.l.b16 %v3040
      %v3097 = vunpack.c.l.b16 %v3041
      %v3098 = vunpack.c.l.b16 %v3042
      %v3099 = vunpack.c.l.b16 %v3043
      %v3100 = vunpack.c.l.b16 %v3044
      %v3101 = vunpack.c.l.b16 %v3045
      %v3102 = vunpack.c.l.b16 %v3046
      %v3103 = vunpack.c.l.b16 %v3047
      %v3104 = vunpack.c.l.b16 %v3048
      %v3105 = vunpack.c.l.b16 %v3049
      %v3106 = vpack.c.b16 %v3091, %v3090
      %v3107 = vpack.c.b16 %v3093, %v3092
      %v3108 = vpack.c.b16 %v3095, %v3094
      %v3109 = vpack.c.b16 %v3097, %v3096
      %v3110 = vpack.c.b16 %v3099, %v3098
      %v3111 = vpack.c.b16 %v3101, %v3100
      %v3112 = vpack.c.b16 %v3103, %v3102
      %v3113 = vpack.c.b16 %v3105, %v3104
      %3122 = vmatprep.subr.bf16.mxu0 0
      %3123 = vmatpush1.bf16.msra.mxu0 %v3113
      %3124 = vmatprep.subr.bf16.mxu0 0
      %3125 = vmatpush1.bf16.msra.mxu0 %v3112
      %3126 = vmatprep.subr.bf16.mxu0 0
      %3127 = vmatpush1.bf16.msra.mxu0 %v3111
      %3128 = vmatprep.subr.bf16.mxu0 0
      %3129 = vmatpush1.bf16.msra.mxu0 %v3110
      %3130 = vmatprep.subr.bf16.mxu0 0
      %3131 = vmatpush1.bf16.msra.mxu0 %v3109
      %3132 = vmatprep.subr.bf16.mxu0 0
      %3133 = vmatpush1.bf16.msra.mxu0 %v3108
      %3134 = vmatprep.subr.bf16.mxu0 0
      %3135 = vmatpush1.bf16.msra.mxu0 %v3107
      %3136 = vmatprep.subr.bf16.mxu0 0
      %3137 = vmatpush1.bf16.msra.mxu0 %v3106
      %3138 = vmatprep.subr.bf16.mxu0 0
      %3139 = vmatpush2.bf16.msra.mxu0 0
      %3140 = vmatprep.subr.bf16.mxu0 0
      %3141 = vmatpush2.bf16.msra.mxu0 0
      %3142 = vmatprep.subr.bf16.mxu0 0
      %3143 = vmatpush2.bf16.msra.mxu0 0
      %3144 = vmatprep.subr.bf16.mxu0 0
      %3145 = vmatpush2.bf16.msra.mxu0 0
      %3146 = vmatprep.subr.bf16.mxu0 0
      %3147 = vmatpush2.bf16.msra.mxu0 0
      %3148 = vmatprep.subr.bf16.mxu0 0
      %3149 = vmatpush2.bf16.msra.mxu0 0
      %3150 = vmatprep.subr.bf16.mxu0 0
      %3151 = vmatpush2.bf16.msra.mxu0 0
      %3152 = vmatprep.subr.bf16.mxu0 0
      %3153 = vmatpush2.bf16.msra.mxu0 0
      %3154 = vmatprep.mubr.bf16.mxu0 0
      %3155 = vmatmul.mubr.bf16.gmra.mxu0 %v3066
      %v3156 = vpop.f32.mrf.mxu0
      %v3157 = vadd.f32 0.0, %v3156
      %v3158 = vpop.f32.mrf.mxu0
      %v3159 = vpop.f32.mrf.mxu0
      %v3160 = vadd.f32 0.0, %v3159
      %v3161 = vpop.f32.mrf.mxu0
      %3162 = vmatprep.mubr.bf16.mxu0 0
      %3163 = vmatmul.mubr.bf16.gmra.mxu0 %v3067
      %v3164 = vpop.f32.mrf.mxu0
      %v3165 = vadd.f32 0.0, %v3164
      %v3166 = vpop.f32.mrf.mxu0
      %v3167 = vpop.f32.mrf.mxu0
      %v3168 = vadd.f32 0.0, %v3167
      %v3169 = vpop.f32.mrf.mxu0
      %3170 = vmatprep.mubr.bf16.mxu0 0
      %3171 = vmatmul.mubr.bf16.gmra.mxu0 %v3068
      %v3172 = vpop.f32.mrf.mxu0
      %v3173 = vadd.f32 0.0, %v3172
      %v3174 = vpop.f32.mrf.mxu0
      %v3175 = vpop.f32.mrf.mxu0
      %v3176 = vadd.f32 0.0, %v3175
      %v3177 = vpop.f32.mrf.mxu0
      %3178 = vmatprep.mubr.bf16.mxu0 0
      %3179 = vmatmul.mubr.bf16.gmra.mxu0 %v3069
      %v3180 = vpop.f32.mrf.mxu0
      %v3181 = vadd.f32 0.0, %v3180
      %v3182 = vpop.f32.mrf.mxu0
      %v3183 = vpop.f32.mrf.mxu0
      %v3184 = vadd.f32 0.0, %v3183
      %v3185 = vpop.f32.mrf.mxu0
      %3186 = vdwg.mxu0
      %v3187 = vadd.f32 %v3016, %v3157
      %v3188 = vadd.f32 %v3017, %v3160
      %v3189 = vadd.f32 %v3018, %v3165
      %v3190 = vadd.f32 %v3019, %v3168
      %v3191 = vadd.f32 %v3020, %v3173
      %v3192 = vadd.f32 %v3021, %v3176
      %v3193 = vadd.f32 %v3022, %v3181
      %v3194 = vadd.f32 %v3023, %v3184
      %v3195 = vld [vmem:[%s3024] sm:$0xf]
      %v3196 = vld [vmem:[%s3024 + $0x4] sm:$0x1]
      %v3197 = vld [vmem:[%s3024 + $0x8] sm:$0xf]
      %v3198 = vld [vmem:[%s3024 + $0xc] sm:$0x1]
      %v3199 = vld [vmem:[%s3024 + $0x10] sm:$0xf]
      %v3200 = vld [vmem:[%s3024 + $0x14] sm:$0x1]
      %v3201 = vld [vmem:[%s3024 + $0x18] sm:$0xf]
      %v3202 = vld [vmem:[%s3024 + $0x1c] sm:$0x1]
      %v3203 = vld [vmem:[%s3024 + $0x20] sm:$0xf]
      %v3204 = vld [vmem:[%s3024 + $0x24] sm:$0x1]
      %v3205 = vld [vmem:[%s3024 + $0x28] sm:$0xf]
      %v3206 = vld [vmem:[%s3024 + $0x2c] sm:$0x1]
      %v3207 = vld [vmem:[%s3024 + $0x30] sm:$0xf]
      %v3208 = vld [vmem:[%s3024 + $0x34] sm:$0x1]
      %v3209 = vld [vmem:[%s3024 + $0x38] sm:$0xf]
      %v3210 = vld [vmem:[%s3024 + $0x3c] sm:$0x1]
      %v3212 = vshrl.u32 %v3195, 16
      %v3214 = vrot.slane %v3212, 4
      %v3215 = vshll.u32 %v3195, 16
      %v3217 = vrot.slane %v3215, 5
      %v3218 = vor.u32 %v3214, %v3217
      %v3219 = vrot.slane %v3218, 4
      %v3221 = vshll.u32 %v3196, 16
      %v3223 = vrot.slane %v3221, 5
      %v3224 = vsel %vm427, %v3219, %v3223
      %v3226 = vshrl.u32 %v3197, 16
      %v3228 = vrot.slane %v3226, 4
      %v3229 = vshll.u32 %v3197, 16
      %v3231 = vrot.slane %v3229, 5
      %v3232 = vor.u32 %v3228, %v3231
      %v3233 = vrot.slane %v3232, 4
      %v3235 = vshll.u32 %v3198, 16
      %v3237 = vrot.slane %v3235, 5
      %v3238 = vsel %vm427, %v3233, %v3237
      %v3240 = vshrl.u32 %v3199, 16
      %v3242 = vrot.slane %v3240, 4
      %v3243 = vshll.u32 %v3199, 16
      %v3245 = vrot.slane %v3243, 5
      %v3246 = vor.u32 %v3242, %v3245
      %v3247 = vrot.slane %v3246, 4
      %v3249 = vshll.u32 %v3200, 16
      %v3251 = vrot.slane %v3249, 5
      %v3252 = vsel %vm427, %v3247, %v3251
      %v3254 = vshrl.u32 %v3201, 16
      %v3256 = vrot.slane %v3254, 4
      %v3257 = vshll.u32 %v3201, 16
      %v3259 = vrot.slane %v3257, 5
      %v3260 = vor.u32 %v3256, %v3259
      %v3261 = vrot.slane %v3260, 4
      %v3263 = vshll.u32 %v3202, 16
      %v3265 = vrot.slane %v3263, 5
      %v3266 = vsel %vm427, %v3261, %v3265
      %v3268 = vshrl.u32 %v3203, 16
      %v3270 = vrot.slane %v3268, 4
      %v3271 = vshll.u32 %v3203, 16
      %v3273 = vrot.slane %v3271, 5
      %v3274 = vor.u32 %v3270, %v3273
      %v3275 = vrot.slane %v3274, 4
      %v3277 = vshll.u32 %v3204, 16
      %v3279 = vrot.slane %v3277, 5
      %v3280 = vsel %vm427, %v3275, %v3279
      %v3282 = vshrl.u32 %v3205, 16
      %v3284 = vrot.slane %v3282, 4
      %v3285 = vshll.u32 %v3205, 16
      %v3287 = vrot.slane %v3285, 5
      %v3288 = vor.u32 %v3284, %v3287
      %v3289 = vrot.slane %v3288, 4
      %v3291 = vshll.u32 %v3206, 16
      %v3293 = vrot.slane %v3291, 5
      %v3294 = vsel %vm427, %v3289, %v3293
      %v3296 = vshrl.u32 %v3207, 16
      %v3298 = vrot.slane %v3296, 4
      %v3299 = vshll.u32 %v3207, 16
      %v3301 = vrot.slane %v3299, 5
      %v3302 = vor.u32 %v3298, %v3301
      %v3303 = vrot.slane %v3302, 4
      %v3305 = vshll.u32 %v3208, 16
      %v3307 = vrot.slane %v3305, 5
      %v3308 = vsel %vm427, %v3303, %v3307
      %v3310 = vshrl.u32 %v3209, 16
      %v3312 = vrot.slane %v3310, 4
      %v3313 = vshll.u32 %v3209, 16
      %v3315 = vrot.slane %v3313, 5
      %v3316 = vor.u32 %v3312, %v3315
      %v3317 = vrot.slane %v3316, 4
      %v3319 = vshll.u32 %v3210, 16
      %v3321 = vrot.slane %v3319, 5
      %v3322 = vsel %vm427, %v3317, %v3321
      %s3323 = scalar_lea.vmem %s3, 832
      %v3324 = vld [vmem:[%s3323] sm:$0xf]
      %v3325 = vld [vmem:[%s3323 + $0x4] sm:$0xf]
      %v3326 = vld [vmem:[%s3323 + $0x8] sm:$0xf]
      %v3327 = vld [vmem:[%s3323 + $0xc] sm:$0xf]
      %v3328 = vld [vmem:[%s3323 + $0x10] sm:$0xf]
      %v3329 = vld [vmem:[%s3323 + $0x14] sm:$0xf]
      %v3330 = vld [vmem:[%s3323 + $0x18] sm:$0xf]
      %v3331 = vld [vmem:[%s3323 + $0x1c] sm:$0xf]
      %v3332 = vld [vmem:[%s3323 + $0x20] sm:$0xf]
      %v3333 = vld [vmem:[%s3323 + $0x24] sm:$0xf]
      %v3334 = vld [vmem:[%s3323 + $0x28] sm:$0xf]
      %v3335 = vld [vmem:[%s3323 + $0x2c] sm:$0xf]
      %v3336 = vld [vmem:[%s3323 + $0x30] sm:$0xf]
      %v3337 = vld [vmem:[%s3323 + $0x34] sm:$0xf]
      %v3338 = vld [vmem:[%s3323 + $0x38] sm:$0xf]
      %v3339 = vld [vmem:[%s3323 + $0x3c] sm:$0xf]
      %v3340 = vunpack.c.l.b16 %v3224
      %v3341 = vunpack.c.l.b16 %v3238
      %v3342 = vunpack.c.l.b16 %v3252
      %v3343 = vunpack.c.l.b16 %v3266
      %v3344 = vunpack.c.l.b16 %v3280
      %v3345 = vunpack.c.l.b16 %v3294
      %v3346 = vunpack.c.l.b16 %v3308
      %v3347 = vunpack.c.l.b16 %v3322
      %v3348 = vpack.c.b16 %v3341, %v3340
      %v3349 = vpack.c.b16 %v3343, %v3342
      %v3350 = vpack.c.b16 %v3345, %v3344
      %v3351 = vpack.c.b16 %v3347, %v3346
      %v3372 = vunpack.c.l.b16 %v3324
      %v3373 = vunpack.c.l.b16 %v3325
      %v3374 = vunpack.c.l.b16 %v3326
      %v3375 = vunpack.c.l.b16 %v3327
      %v3376 = vunpack.c.l.b16 %v3328
      %v3377 = vunpack.c.l.b16 %v3329
      %v3378 = vunpack.c.l.b16 %v3330
      %v3379 = vunpack.c.l.b16 %v3331
      %v3380 = vunpack.c.l.b16 %v3332
      %v3381 = vunpack.c.l.b16 %v3333
      %v3382 = vunpack.c.l.b16 %v3334
      %v3383 = vunpack.c.l.b16 %v3335
      %v3384 = vunpack.c.l.b16 %v3336
      %v3385 = vunpack.c.l.b16 %v3337
      %v3386 = vunpack.c.l.b16 %v3338
      %v3387 = vunpack.c.l.b16 %v3339
      %v3388 = vpack.c.b16 %v3373, %v3372
      %v3389 = vpack.c.b16 %v3375, %v3374
      %v3390 = vpack.c.b16 %v3377, %v3376
      %v3391 = vpack.c.b16 %v3379, %v3378
      %v3392 = vpack.c.b16 %v3381, %v3380
      %v3393 = vpack.c.b16 %v3383, %v3382
      %v3394 = vpack.c.b16 %v3385, %v3384
      %v3395 = vpack.c.b16 %v3387, %v3386
      %3404 = vmatprep.subr.bf16.mxu0 0
      %3405 = vmatpush1.bf16.msra.mxu0 %v3395
      %3406 = vmatprep.subr.bf16.mxu0 0
      %3407 = vmatpush1.bf16.msra.mxu0 %v3394
      %3408 = vmatprep.subr.bf16.mxu0 0
      %3409 = vmatpush1.bf16.msra.mxu0 %v3393
      %3410 = vmatprep.subr.bf16.mxu0 0
      %3411 = vmatpush1.bf16.msra.mxu0 %v3392
      %3412 = vmatprep.subr.bf16.mxu0 0
      %3413 = vmatpush1.bf16.msra.mxu0 %v3391
      %3414 = vmatprep.subr.bf16.mxu0 0
      %3415 = vmatpush1.bf16.msra.mxu0 %v3390
      %3416 = vmatprep.subr.bf16.mxu0 0
      %3417 = vmatpush1.bf16.msra.mxu0 %v3389
      %3418 = vmatprep.subr.bf16.mxu0 0
      %3419 = vmatpush1.bf16.msra.mxu0 %v3388
      %3420 = vmatprep.subr.bf16.mxu0 0
      %3421 = vmatpush2.bf16.msra.mxu0 0
      %3422 = vmatprep.subr.bf16.mxu0 0
      %3423 = vmatpush2.bf16.msra.mxu0 0
      %3424 = vmatprep.subr.bf16.mxu0 0
      %3425 = vmatpush2.bf16.msra.mxu0 0
      %3426 = vmatprep.subr.bf16.mxu0 0
      %3427 = vmatpush2.bf16.msra.mxu0 0
      %3428 = vmatprep.subr.bf16.mxu0 0
      %3429 = vmatpush2.bf16.msra.mxu0 0
      %3430 = vmatprep.subr.bf16.mxu0 0
      %3431 = vmatpush2.bf16.msra.mxu0 0
      %3432 = vmatprep.subr.bf16.mxu0 0
      %3433 = vmatpush2.bf16.msra.mxu0 0
      %3434 = vmatprep.subr.bf16.mxu0 0
      %3435 = vmatpush2.bf16.msra.mxu0 0
      %3436 = vmatprep.mubr.bf16.mxu0 0
      %3437 = vmatmul.mubr.bf16.gmra.mxu0 %v3348
      %v3438 = vpop.f32.mrf.mxu0
      %v3439 = vadd.f32 0.0, %v3438
      %v3440 = vpop.f32.mrf.mxu0
      %v3441 = vpop.f32.mrf.mxu0
      %v3442 = vadd.f32 0.0, %v3441
      %v3443 = vpop.f32.mrf.mxu0
      %3444 = vmatprep.mubr.bf16.mxu0 0
      %3445 = vmatmul.mubr.bf16.gmra.mxu0 %v3349
      %v3446 = vpop.f32.mrf.mxu0
      %v3447 = vadd.f32 0.0, %v3446
      %v3448 = vpop.f32.mrf.mxu0
      %v3449 = vpop.f32.mrf.mxu0
      %v3450 = vadd.f32 0.0, %v3449
      %v3451 = vpop.f32.mrf.mxu0
      %3452 = vmatprep.mubr.bf16.mxu0 0
      %3453 = vmatmul.mubr.bf16.gmra.mxu0 %v3350
      %v3454 = vpop.f32.mrf.mxu0
      %v3455 = vadd.f32 0.0, %v3454
      %v3456 = vpop.f32.mrf.mxu0
      %v3457 = vpop.f32.mrf.mxu0
      %v3458 = vadd.f32 0.0, %v3457
      %v3459 = vpop.f32.mrf.mxu0
      %3460 = vmatprep.mubr.bf16.mxu0 0
      %3461 = vmatmul.mubr.bf16.gmra.mxu0 %v3351
      %v3462 = vpop.f32.mrf.mxu0
      %v3463 = vadd.f32 0.0, %v3462
      %v3464 = vpop.f32.mrf.mxu0
      %v3465 = vpop.f32.mrf.mxu0
      %v3466 = vadd.f32 0.0, %v3465
      %v3467 = vpop.f32.mrf.mxu0
      %3468 = vdwg.mxu0
      %v3469 = vadd.f32 %v3187, %v3439
      %v3470 = vadd.f32 %v3188, %v3442
      %v3471 = vadd.f32 %v3189, %v3447
      %v3472 = vadd.f32 %v3190, %v3450
      %v3473 = vadd.f32 %v3191, %v3455
      %v3474 = vadd.f32 %v3192, %v3458
      %v3475 = vadd.f32 %v3193, %v3463
      %v3476 = vadd.f32 %v3194, %v3466
      %v3477 = vld [vmem:[%s3024] sm:$0xe]
      %v3478 = vld [vmem:[%s3024 + $0x8] sm:$0xe]
      %v3479 = vld [vmem:[%s3024 + $0x10] sm:$0xe]
      %v3480 = vld [vmem:[%s3024 + $0x18] sm:$0xe]
      %v3481 = vld [vmem:[%s3024 + $0x20] sm:$0xe]
      %v3482 = vld [vmem:[%s3024 + $0x28] sm:$0xe]
      %v3483 = vld [vmem:[%s3024 + $0x30] sm:$0xe]
      %v3484 = vld [vmem:[%s3024 + $0x38] sm:$0xe]
      %v3501 = vrot.slane %v3477, 5
      %v3502 = vrot.slane %v3501, 4
      %v3503 = vrot.slane %v3196, 5
      %v3504 = vsel %vm849, %v3502, %v3503
      %v3505 = vrot.slane %v3478, 5
      %v3506 = vrot.slane %v3505, 4
      %v3507 = vrot.slane %v3198, 5
      %v3508 = vsel %vm849, %v3506, %v3507
      %v3509 = vrot.slane %v3479, 5
      %v3510 = vrot.slane %v3509, 4
      %v3511 = vrot.slane %v3200, 5
      %v3512 = vsel %vm849, %v3510, %v3511
      %v3513 = vrot.slane %v3480, 5
      %v3514 = vrot.slane %v3513, 4
      %v3515 = vrot.slane %v3202, 5
      %v3516 = vsel %vm849, %v3514, %v3515
      %v3517 = vrot.slane %v3481, 5
      %v3518 = vrot.slane %v3517, 4
      %v3519 = vrot.slane %v3204, 5
      %v3520 = vsel %vm849, %v3518, %v3519
      %v3521 = vrot.slane %v3482, 5
      %v3522 = vrot.slane %v3521, 4
      %v3523 = vrot.slane %v3206, 5
      %v3524 = vsel %vm849, %v3522, %v3523
      %v3525 = vrot.slane %v3483, 5
      %v3526 = vrot.slane %v3525, 4
      %v3527 = vrot.slane %v3208, 5
      %v3528 = vsel %vm849, %v3526, %v3527
      %v3529 = vrot.slane %v3484, 5
      %v3530 = vrot.slane %v3529, 4
      %v3531 = vrot.slane %v3210, 5
      %v3532 = vsel %vm849, %v3530, %v3531
      %s3533 = scalar_lea.vmem %s3, 896
      %v3534 = vld [vmem:[%s3533] sm:$0xf]
      %v3535 = vld [vmem:[%s3533 + $0x4] sm:$0xf]
      %v3536 = vld [vmem:[%s3533 + $0x8] sm:$0xf]
      %v3537 = vld [vmem:[%s3533 + $0xc] sm:$0xf]
      %v3538 = vld [vmem:[%s3533 + $0x10] sm:$0xf]
      %v3539 = vld [vmem:[%s3533 + $0x14] sm:$0xf]
      %v3540 = vld [vmem:[%s3533 + $0x18] sm:$0xf]
      %v3541 = vld [vmem:[%s3533 + $0x1c] sm:$0xf]
      %v3542 = vld [vmem:[%s3533 + $0x20] sm:$0xf]
      %v3543 = vld [vmem:[%s3533 + $0x24] sm:$0xf]
      %v3544 = vld [vmem:[%s3533 + $0x28] sm:$0xf]
      %v3545 = vld [vmem:[%s3533 + $0x2c] sm:$0xf]
      %v3546 = vld [vmem:[%s3533 + $0x30] sm:$0xf]
      %v3547 = vld [vmem:[%s3533 + $0x34] sm:$0xf]
      %v3548 = vld [vmem:[%s3533 + $0x38] sm:$0xf]
      %v3549 = vld [vmem:[%s3533 + $0x3c] sm:$0xf]
      %v3550 = vunpack.c.l.b16 %v3504
      %v3551 = vunpack.c.l.b16 %v3508
      %v3552 = vunpack.c.l.b16 %v3512
      %v3553 = vunpack.c.l.b16 %v3516
      %v3554 = vunpack.c.l.b16 %v3520
      %v3555 = vunpack.c.l.b16 %v3524
      %v3556 = vunpack.c.l.b16 %v3528
      %v3557 = vunpack.c.l.b16 %v3532
      %v3558 = vpack.c.b16 %v3551, %v3550
      %v3559 = vpack.c.b16 %v3553, %v3552
      %v3560 = vpack.c.b16 %v3555, %v3554
      %v3561 = vpack.c.b16 %v3557, %v3556
      %v3582 = vunpack.c.l.b16 %v3534
      %v3583 = vunpack.c.l.b16 %v3535
      %v3584 = vunpack.c.l.b16 %v3536
      %v3585 = vunpack.c.l.b16 %v3537
      %v3586 = vunpack.c.l.b16 %v3538
      %v3587 = vunpack.c.l.b16 %v3539
      %v3588 = vunpack.c.l.b16 %v3540
      %v3589 = vunpack.c.l.b16 %v3541
      %v3590 = vunpack.c.l.b16 %v3542
      %v3591 = vunpack.c.l.b16 %v3543
      %v3592 = vunpack.c.l.b16 %v3544
      %v3593 = vunpack.c.l.b16 %v3545
      %v3594 = vunpack.c.l.b16 %v3546
      %v3595 = vunpack.c.l.b16 %v3547
      %v3596 = vunpack.c.l.b16 %v3548
      %v3597 = vunpack.c.l.b16 %v3549
      %v3598 = vpack.c.b16 %v3583, %v3582
      %v3599 = vpack.c.b16 %v3585, %v3584
      %v3600 = vpack.c.b16 %v3587, %v3586
      %v3601 = vpack.c.b16 %v3589, %v3588
      %v3602 = vpack.c.b16 %v3591, %v3590
      %v3603 = vpack.c.b16 %v3593, %v3592
      %v3604 = vpack.c.b16 %v3595, %v3594
      %v3605 = vpack.c.b16 %v3597, %v3596
      %3614 = vmatprep.subr.bf16.mxu0 0
      %3615 = vmatpush1.bf16.msra.mxu0 %v3605
      %3616 = vmatprep.subr.bf16.mxu0 0
      %3617 = vmatpush1.bf16.msra.mxu0 %v3604
      %3618 = vmatprep.subr.bf16.mxu0 0
      %3619 = vmatpush1.bf16.msra.mxu0 %v3603
      %3620 = vmatprep.subr.bf16.mxu0 0
      %3621 = vmatpush1.bf16.msra.mxu0 %v3602
      %3622 = vmatprep.subr.bf16.mxu0 0
      %3623 = vmatpush1.bf16.msra.mxu0 %v3601
      %3624 = vmatprep.subr.bf16.mxu0 0
      %3625 = vmatpush1.bf16.msra.mxu0 %v3600
      %3626 = vmatprep.subr.bf16.mxu0 0
      %3627 = vmatpush1.bf16.msra.mxu0 %v3599
      %3628 = vmatprep.subr.bf16.mxu0 0
      %3629 = vmatpush1.bf16.msra.mxu0 %v3598
      %3630 = vmatprep.subr.bf16.mxu0 0
      %3631 = vmatpush2.bf16.msra.mxu0 0
      %3632 = vmatprep.subr.bf16.mxu0 0
      %3633 = vmatpush2.bf16.msra.mxu0 0
      %3634 = vmatprep.subr.bf16.mxu0 0
      %3635 = vmatpush2.bf16.msra.mxu0 0
      %3636 = vmatprep.subr.bf16.mxu0 0
      %3637 = vmatpush2.bf16.msra.mxu0 0
      %3638 = vmatprep.subr.bf16.mxu0 0
      %3639 = vmatpush2.bf16.msra.mxu0 0
      %3640 = vmatprep.subr.bf16.mxu0 0
      %3641 = vmatpush2.bf16.msra.mxu0 0
      %3642 = vmatprep.subr.bf16.mxu0 0
      %3643 = vmatpush2.bf16.msra.mxu0 0
      %3644 = vmatprep.subr.bf16.mxu0 0
      %3645 = vmatpush2.bf16.msra.mxu0 0
      %3646 = vmatprep.mubr.bf16.mxu0 0
      %3647 = vmatmul.mubr.bf16.gmra.mxu0 %v3558
      %v3648 = vpop.f32.mrf.mxu0
      %v3649 = vadd.f32 0.0, %v3648
      %v3650 = vpop.f32.mrf.mxu0
      %v3651 = vpop.f32.mrf.mxu0
      %v3652 = vadd.f32 0.0, %v3651
      %v3653 = vpop.f32.mrf.mxu0
      %3654 = vmatprep.mubr.bf16.mxu0 0
      %3655 = vmatmul.mubr.bf16.gmra.mxu0 %v3559
      %v3656 = vpop.f32.mrf.mxu0
      %v3657 = vadd.f32 0.0, %v3656
      %v3658 = vpop.f32.mrf.mxu0
      %v3659 = vpop.f32.mrf.mxu0
      %v3660 = vadd.f32 0.0, %v3659
      %v3661 = vpop.f32.mrf.mxu0
      %3662 = vmatprep.mubr.bf16.mxu0 0
      %3663 = vmatmul.mubr.bf16.gmra.mxu0 %v3560
      %v3664 = vpop.f32.mrf.mxu0
      %v3665 = vadd.f32 0.0, %v3664
      %v3666 = vpop.f32.mrf.mxu0
      %v3667 = vpop.f32.mrf.mxu0
      %v3668 = vadd.f32 0.0, %v3667
      %v3669 = vpop.f32.mrf.mxu0
      %3670 = vmatprep.mubr.bf16.mxu0 0
      %3671 = vmatmul.mubr.bf16.gmra.mxu0 %v3561
      %v3672 = vpop.f32.mrf.mxu0
      %v3673 = vadd.f32 0.0, %v3672
      %v3674 = vpop.f32.mrf.mxu0
      %v3675 = vpop.f32.mrf.mxu0
      %v3676 = vadd.f32 0.0, %v3675
      %v3677 = vpop.f32.mrf.mxu0
      %3678 = vdwg.mxu0
      %v3679 = vadd.f32 %v3469, %v3649
      %v3680 = vadd.f32 %v3470, %v3652
      %v3681 = vadd.f32 %v3471, %v3657
      %v3682 = vadd.f32 %v3472, %v3660
      %v3683 = vadd.f32 %v3473, %v3665
      %v3684 = vadd.f32 %v3474, %v3668
      %v3685 = vadd.f32 %v3475, %v3673
      %v3686 = vadd.f32 %v3476, %v3676
      %s3687 = scalar_lea.vmem %s370, 16
      %v3688 = vld [vmem:[%s3687] sm:$0xf]
      %v3689 = vld [vmem:[%s3687 + $0x8] sm:$0xf]
      %v3690 = vld [vmem:[%s3687 + $0x10] sm:$0xf]
      %v3691 = vld [vmem:[%s3687 + $0x18] sm:$0xf]
      %v3692 = vld [vmem:[%s3687 + $0x20] sm:$0xf]
      %v3693 = vld [vmem:[%s3687 + $0x28] sm:$0xf]
      %v3694 = vld [vmem:[%s3687 + $0x30] sm:$0xf]
      %v3695 = vld [vmem:[%s3687 + $0x38] sm:$0xf]
      %s3696 = scalar_lea.vmem %s3, 960
      %v3697 = vld [vmem:[%s3696] sm:$0xf]
      %v3698 = vld [vmem:[%s3696 + $0x4] sm:$0xf]
      %v3699 = vld [vmem:[%s3696 + $0x8] sm:$0xf]
      %v3700 = vld [vmem:[%s3696 + $0xc] sm:$0xf]
      %v3701 = vld [vmem:[%s3696 + $0x10] sm:$0xf]
      %v3702 = vld [vmem:[%s3696 + $0x14] sm:$0xf]
      %v3703 = vld [vmem:[%s3696 + $0x18] sm:$0xf]
      %v3704 = vld [vmem:[%s3696 + $0x1c] sm:$0xf]
      %v3705 = vld [vmem:[%s3696 + $0x20] sm:$0xf]
      %v3706 = vld [vmem:[%s3696 + $0x24] sm:$0xf]
      %v3707 = vld [vmem:[%s3696 + $0x28] sm:$0xf]
      %v3708 = vld [vmem:[%s3696 + $0x2c] sm:$0xf]
      %v3709 = vld [vmem:[%s3696 + $0x30] sm:$0xf]
      %v3710 = vld [vmem:[%s3696 + $0x34] sm:$0xf]
      %v3711 = vld [vmem:[%s3696 + $0x38] sm:$0xf]
      %v3712 = vld [vmem:[%s3696 + $0x3c] sm:$0xf]
      %v3721 = vunpack.c.l.b16 %v3688
      %v3722 = vunpack.c.l.b16 %v3689
      %v3723 = vunpack.c.l.b16 %v3690
      %v3724 = vunpack.c.l.b16 %v3691
      %v3725 = vunpack.c.l.b16 %v3692
      %v3726 = vunpack.c.l.b16 %v3693
      %v3727 = vunpack.c.l.b16 %v3694
      %v3728 = vunpack.c.l.b16 %v3695
      %v3729 = vpack.c.b16 %v3722, %v3721
      %v3730 = vpack.c.b16 %v3724, %v3723
      %v3731 = vpack.c.b16 %v3726, %v3725
      %v3732 = vpack.c.b16 %v3728, %v3727
      %v3753 = vunpack.c.l.b16 %v3697
      %v3754 = vunpack.c.l.b16 %v3698
      %v3755 = vunpack.c.l.b16 %v3699
      %v3756 = vunpack.c.l.b16 %v3700
      %v3757 = vunpack.c.l.b16 %v3701
      %v3758 = vunpack.c.l.b16 %v3702
      %v3759 = vunpack.c.l.b16 %v3703
      %v3760 = vunpack.c.l.b16 %v3704
      %v3761 = vunpack.c.l.b16 %v3705
      %v3762 = vunpack.c.l.b16 %v3706
      %v3763 = vunpack.c.l.b16 %v3707
      %v3764 = vunpack.c.l.b16 %v3708
      %v3765 = vunpack.c.l.b16 %v3709
      %v3766 = vunpack.c.l.b16 %v3710
      %v3767 = vunpack.c.l.b16 %v3711
      %v3768 = vunpack.c.l.b16 %v3712
      %v3769 = vpack.c.b16 %v3754, %v3753
      %v3770 = vpack.c.b16 %v3756, %v3755
      %v3771 = vpack.c.b16 %v3758, %v3757
      %v3772 = vpack.c.b16 %v3760, %v3759
      %v3773 = vpack.c.b16 %v3762, %v3761
      %v3774 = vpack.c.b16 %v3764, %v3763
      %v3775 = vpack.c.b16 %v3766, %v3765
      %v3776 = vpack.c.b16 %v3768, %v3767
      %3785 = vmatprep.subr.bf16.mxu0 0
      %3786 = vmatpush1.bf16.msra.mxu0 %v3776
      %3787 = vmatprep.subr.bf16.mxu0 0
      %3788 = vmatpush1.bf16.msra.mxu0 %v3775
      %3789 = vmatprep.subr.bf16.mxu0 0
      %3790 = vmatpush1.bf16.msra.mxu0 %v3774
      %3791 = vmatprep.subr.bf16.mxu0 0
      %3792 = vmatpush1.bf16.msra.mxu0 %v3773
      %3793 = vmatprep.subr.bf16.mxu0 0
      %3794 = vmatpush1.bf16.msra.mxu0 %v3772
      %3795 = vmatprep.subr.bf16.mxu0 0
      %3796 = vmatpush1.bf16.msra.mxu0 %v3771
      %3797 = vmatprep.subr.bf16.mxu0 0
      %3798 = vmatpush1.bf16.msra.mxu0 %v3770
      %3799 = vmatprep.subr.bf16.mxu0 0
      %3800 = vmatpush1.bf16.msra.mxu0 %v3769
      %3801 = vmatprep.subr.bf16.mxu0 0
      %3802 = vmatpush2.bf16.msra.mxu0 0
      %3803 = vmatprep.subr.bf16.mxu0 0
      %3804 = vmatpush2.bf16.msra.mxu0 0
      %3805 = vmatprep.subr.bf16.mxu0 0
      %3806 = vmatpush2.bf16.msra.mxu0 0
      %3807 = vmatprep.subr.bf16.mxu0 0
      %3808 = vmatpush2.bf16.msra.mxu0 0
      %3809 = vmatprep.subr.bf16.mxu0 0
      %3810 = vmatpush2.bf16.msra.mxu0 0
      %3811 = vmatprep.subr.bf16.mxu0 0
      %3812 = vmatpush2.bf16.msra.mxu0 0
      %3813 = vmatprep.subr.bf16.mxu0 0
      %3814 = vmatpush2.bf16.msra.mxu0 0
      %3815 = vmatprep.subr.bf16.mxu0 0
      %3816 = vmatpush2.bf16.msra.mxu0 0
      %3817 = vmatprep.mubr.bf16.mxu0 0
      %3818 = vmatmul.mubr.bf16.gmra.mxu0 %v3729
      %v3819 = vpop.f32.mrf.mxu0
      %v3820 = vadd.f32 0.0, %v3819
      %v3821 = vpop.f32.mrf.mxu0
      %v3822 = vpop.f32.mrf.mxu0
      %v3823 = vadd.f32 0.0, %v3822
      %v3824 = vpop.f32.mrf.mxu0
      %3825 = vmatprep.mubr.bf16.mxu0 0
      %3826 = vmatmul.mubr.bf16.gmra.mxu0 %v3730
      %v3827 = vpop.f32.mrf.mxu0
      %v3828 = vadd.f32 0.0, %v3827
      %v3829 = vpop.f32.mrf.mxu0
      %v3830 = vpop.f32.mrf.mxu0
      %v3831 = vadd.f32 0.0, %v3830
      %v3832 = vpop.f32.mrf.mxu0
      %3833 = vmatprep.mubr.bf16.mxu0 0
      %3834 = vmatmul.mubr.bf16.gmra.mxu0 %v3731
      %v3835 = vpop.f32.mrf.mxu0
      %v3836 = vadd.f32 0.0, %v3835
      %v3837 = vpop.f32.mrf.mxu0
      %v3838 = vpop.f32.mrf.mxu0
      %v3839 = vadd.f32 0.0, %v3838
      %v3840 = vpop.f32.mrf.mxu0
      %3841 = vmatprep.mubr.bf16.mxu0 0
      %3842 = vmatmul.mubr.bf16.gmra.mxu0 %v3732
      %v3843 = vpop.f32.mrf.mxu0
      %v3844 = vadd.f32 0.0, %v3843
      %v3845 = vpop.f32.mrf.mxu0
      %v3846 = vpop.f32.mrf.mxu0
      %v3847 = vadd.f32 0.0, %v3846
      %v3848 = vpop.f32.mrf.mxu0
      %3849 = vdwg.mxu0
      %v3850 = vadd.f32 %v3679, %v3820
      %v3851 = vadd.f32 %v3680, %v3823
      %v3852 = vadd.f32 %v3681, %v3828
      %v3853 = vadd.f32 %v3682, %v3831
      %v3854 = vadd.f32 %v3683, %v3836
      %v3855 = vadd.f32 %v3684, %v3839
      %v3856 = vadd.f32 %v3685, %v3844
      %v3857 = vadd.f32 %v3686, %v3847
      %v3858 = vld [vmem:[%s3687] sm:$0xf]
      %v3859 = vld [vmem:[%s3687 + $0x4] sm:$0x1]
      %v3860 = vld [vmem:[%s3687 + $0x8] sm:$0xf]
      %v3861 = vld [vmem:[%s3687 + $0xc] sm:$0x1]
      %v3862 = vld [vmem:[%s3687 + $0x10] sm:$0xf]
      %v3863 = vld [vmem:[%s3687 + $0x14] sm:$0x1]
      %v3864 = vld [vmem:[%s3687 + $0x18] sm:$0xf]
      %v3865 = vld [vmem:[%s3687 + $0x1c] sm:$0x1]
      %v3866 = vld [vmem:[%s3687 + $0x20] sm:$0xf]
      %v3867 = vld [vmem:[%s3687 + $0x24] sm:$0x1]
      %v3868 = vld [vmem:[%s3687 + $0x28] sm:$0xf]
      %v3869 = vld [vmem:[%s3687 + $0x2c] sm:$0x1]
      %v3870 = vld [vmem:[%s3687 + $0x30] sm:$0xf]
      %v3871 = vld [vmem:[%s3687 + $0x34] sm:$0x1]
      %v3872 = vld [vmem:[%s3687 + $0x38] sm:$0xf]
      %v3873 = vld [vmem:[%s3687 + $0x3c] sm:$0x1]
      %v3875 = vshrl.u32 %v3858, 16
      %v3877 = vrot.slane %v3875, 4
      %v3878 = vshll.u32 %v3858, 16
      %v3880 = vrot.slane %v3878, 5
      %v3881 = vor.u32 %v3877, %v3880
      %v3882 = vrot.slane %v3881, 4
      %v3884 = vshll.u32 %v3859, 16
      %v3886 = vrot.slane %v3884, 5
      %v3887 = vsel %vm427, %v3882, %v3886
      %v3889 = vshrl.u32 %v3860, 16
      %v3891 = vrot.slane %v3889, 4
      %v3892 = vshll.u32 %v3860, 16
      %v3894 = vrot.slane %v3892, 5
      %v3895 = vor.u32 %v3891, %v3894
      %v3896 = vrot.slane %v3895, 4
      %v3898 = vshll.u32 %v3861, 16
      %v3900 = vrot.slane %v3898, 5
      %v3901 = vsel %vm427, %v3896, %v3900
      %v3903 = vshrl.u32 %v3862, 16
      %v3905 = vrot.slane %v3903, 4
      %v3906 = vshll.u32 %v3862, 16
      %v3908 = vrot.slane %v3906, 5
      %v3909 = vor.u32 %v3905, %v3908
      %v3910 = vrot.slane %v3909, 4
      %v3912 = vshll.u32 %v3863, 16
      %v3914 = vrot.slane %v3912, 5
      %v3915 = vsel %vm427, %v3910, %v3914
      %v3917 = vshrl.u32 %v3864, 16
      %v3919 = vrot.slane %v3917, 4
      %v3920 = vshll.u32 %v3864, 16
      %v3922 = vrot.slane %v3920, 5
      %v3923 = vor.u32 %v3919, %v3922
      %v3924 = vrot.slane %v3923, 4
      %v3926 = vshll.u32 %v3865, 16
      %v3928 = vrot.slane %v3926, 5
      %v3929 = vsel %vm427, %v3924, %v3928
      %v3931 = vshrl.u32 %v3866, 16
      %v3933 = vrot.slane %v3931, 4
      %v3934 = vshll.u32 %v3866, 16
      %v3936 = vrot.slane %v3934, 5
      %v3937 = vor.u32 %v3933, %v3936
      %v3938 = vrot.slane %v3937, 4
      %v3940 = vshll.u32 %v3867, 16
      %v3942 = vrot.slane %v3940, 5
      %v3943 = vsel %vm427, %v3938, %v3942
      %v3945 = vshrl.u32 %v3868, 16
      %v3947 = vrot.slane %v3945, 4
      %v3948 = vshll.u32 %v3868, 16
      %v3950 = vrot.slane %v3948, 5
      %v3951 = vor.u32 %v3947, %v3950
      %v3952 = vrot.slane %v3951, 4
      %v3954 = vshll.u32 %v3869, 16
      %v3956 = vrot.slane %v3954, 5
      %v3957 = vsel %vm427, %v3952, %v3956
      %v3959 = vshrl.u32 %v3870, 16
      %v3961 = vrot.slane %v3959, 4
      %v3962 = vshll.u32 %v3870, 16
      %v3964 = vrot.slane %v3962, 5
      %v3965 = vor.u32 %v3961, %v3964
      %v3966 = vrot.slane %v3965, 4
      %v3968 = vshll.u32 %v3871, 16
      %v3970 = vrot.slane %v3968, 5
      %v3971 = vsel %vm427, %v3966, %v3970
      %v3973 = vshrl.u32 %v3872, 16
      %v3975 = vrot.slane %v3973, 4
      %v3976 = vshll.u32 %v3872, 16
      %v3978 = vrot.slane %v3976, 5
      %v3979 = vor.u32 %v3975, %v3978
      %v3980 = vrot.slane %v3979, 4
      %v3982 = vshll.u32 %v3873, 16
      %v3984 = vrot.slane %v3982, 5
      %v3985 = vsel %vm427, %v3980, %v3984
      %s3986 = scalar_lea.vmem %s3, 1024
      %v3987 = vld [vmem:[%s3986] sm:$0xf]
      %v3988 = vld [vmem:[%s3986 + $0x4] sm:$0xf]
      %v3989 = vld [vmem:[%s3986 + $0x8] sm:$0xf]
      %v3990 = vld [vmem:[%s3986 + $0xc] sm:$0xf]
      %v3991 = vld [vmem:[%s3986 + $0x10] sm:$0xf]
      %v3992 = vld [vmem:[%s3986 + $0x14] sm:$0xf]
      %v3993 = vld [vmem:[%s3986 + $0x18] sm:$0xf]
      %v3994 = vld [vmem:[%s3986 + $0x1c] sm:$0xf]
      %v3995 = vld [vmem:[%s3986 + $0x20] sm:$0xf]
      %v3996 = vld [vmem:[%s3986 + $0x24] sm:$0xf]
      %v3997 = vld [vmem:[%s3986 + $0x28] sm:$0xf]
      %v3998 = vld [vmem:[%s3986 + $0x2c] sm:$0xf]
      %v3999 = vld [vmem:[%s3986 + $0x30] sm:$0xf]
      %v4000 = vld [vmem:[%s3986 + $0x34] sm:$0xf]
      %v4001 = vld [vmem:[%s3986 + $0x38] sm:$0xf]
      %v4002 = vld [vmem:[%s3986 + $0x3c] sm:$0xf]
      %v4003 = vunpack.c.l.b16 %v3887
      %v4004 = vunpack.c.l.b16 %v3901
      %v4005 = vunpack.c.l.b16 %v3915
      %v4006 = vunpack.c.l.b16 %v3929
      %v4007 = vunpack.c.l.b16 %v3943
      %v4008 = vunpack.c.l.b16 %v3957
      %v4009 = vunpack.c.l.b16 %v3971
      %v4010 = vunpack.c.l.b16 %v3985
      %v4011 = vpack.c.b16 %v4004, %v4003
      %v4012 = vpack.c.b16 %v4006, %v4005
      %v4013 = vpack.c.b16 %v4008, %v4007
      %v4014 = vpack.c.b16 %v4010, %v4009
      %v4035 = vunpack.c.l.b16 %v3987
      %v4036 = vunpack.c.l.b16 %v3988
      %v4037 = vunpack.c.l.b16 %v3989
      %v4038 = vunpack.c.l.b16 %v3990
      %v4039 = vunpack.c.l.b16 %v3991
      %v4040 = vunpack.c.l.b16 %v3992
      %v4041 = vunpack.c.l.b16 %v3993
      %v4042 = vunpack.c.l.b16 %v3994
      %v4043 = vunpack.c.l.b16 %v3995
      %v4044 = vunpack.c.l.b16 %v3996
      %v4045 = vunpack.c.l.b16 %v3997
      %v4046 = vunpack.c.l.b16 %v3998
      %v4047 = vunpack.c.l.b16 %v3999
      %v4048 = vunpack.c.l.b16 %v4000
      %v4049 = vunpack.c.l.b16 %v4001
      %v4050 = vunpack.c.l.b16 %v4002
      %v4051 = vpack.c.b16 %v4036, %v4035
      %v4052 = vpack.c.b16 %v4038, %v4037
      %v4053 = vpack.c.b16 %v4040, %v4039
      %v4054 = vpack.c.b16 %v4042, %v4041
      %v4055 = vpack.c.b16 %v4044, %v4043
      %v4056 = vpack.c.b16 %v4046, %v4045
      %v4057 = vpack.c.b16 %v4048, %v4047
      %v4058 = vpack.c.b16 %v4050, %v4049
      %4067 = vmatprep.subr.bf16.mxu0 0
      %4068 = vmatpush1.bf16.msra.mxu0 %v4058
      %4069 = vmatprep.subr.bf16.mxu0 0
      %4070 = vmatpush1.bf16.msra.mxu0 %v4057
      %4071 = vmatprep.subr.bf16.mxu0 0
      %4072 = vmatpush1.bf16.msra.mxu0 %v4056
      %4073 = vmatprep.subr.bf16.mxu0 0
      %4074 = vmatpush1.bf16.msra.mxu0 %v4055
      %4075 = vmatprep.subr.bf16.mxu0 0
      %4076 = vmatpush1.bf16.msra.mxu0 %v4054
      %4077 = vmatprep.subr.bf16.mxu0 0
      %4078 = vmatpush1.bf16.msra.mxu0 %v4053
      %4079 = vmatprep.subr.bf16.mxu0 0
      %4080 = vmatpush1.bf16.msra.mxu0 %v4052
      %4081 = vmatprep.subr.bf16.mxu0 0
      %4082 = vmatpush1.bf16.msra.mxu0 %v4051
      %4083 = vmatprep.subr.bf16.mxu0 0
      %4084 = vmatpush2.bf16.msra.mxu0 0
      %4085 = vmatprep.subr.bf16.mxu0 0
      %4086 = vmatpush2.bf16.msra.mxu0 0
      %4087 = vmatprep.subr.bf16.mxu0 0
      %4088 = vmatpush2.bf16.msra.mxu0 0
      %4089 = vmatprep.subr.bf16.mxu0 0
      %4090 = vmatpush2.bf16.msra.mxu0 0
      %4091 = vmatprep.subr.bf16.mxu0 0
      %4092 = vmatpush2.bf16.msra.mxu0 0
      %4093 = vmatprep.subr.bf16.mxu0 0
      %4094 = vmatpush2.bf16.msra.mxu0 0
      %4095 = vmatprep.subr.bf16.mxu0 0
      %4096 = vmatpush2.bf16.msra.mxu0 0
      %4097 = vmatprep.subr.bf16.mxu0 0
      %4098 = vmatpush2.bf16.msra.mxu0 0
      %4099 = vmatprep.mubr.bf16.mxu0 0
      %4100 = vmatmul.mubr.bf16.gmra.mxu0 %v4011
      %v4101 = vpop.f32.mrf.mxu0
      %v4102 = vadd.f32 0.0, %v4101
      %v4103 = vpop.f32.mrf.mxu0
      %v4104 = vpop.f32.mrf.mxu0
      %v4105 = vadd.f32 0.0, %v4104
      %v4106 = vpop.f32.mrf.mxu0
      %4107 = vmatprep.mubr.bf16.mxu0 0
      %4108 = vmatmul.mubr.bf16.gmra.mxu0 %v4012
      %v4109 = vpop.f32.mrf.mxu0
      %v4110 = vadd.f32 0.0, %v4109
      %v4111 = vpop.f32.mrf.mxu0
      %v4112 = vpop.f32.mrf.mxu0
      %v4113 = vadd.f32 0.0, %v4112
      %v4114 = vpop.f32.mrf.mxu0
      %4115 = vmatprep.mubr.bf16.mxu0 0
      %4116 = vmatmul.mubr.bf16.gmra.mxu0 %v4013
      %v4117 = vpop.f32.mrf.mxu0
      %v4118 = vadd.f32 0.0, %v4117
      %v4119 = vpop.f32.mrf.mxu0
      %v4120 = vpop.f32.mrf.mxu0
      %v4121 = vadd.f32 0.0, %v4120
      %v4122 = vpop.f32.mrf.mxu0
      %4123 = vmatprep.mubr.bf16.mxu0 0
      %4124 = vmatmul.mubr.bf16.gmra.mxu0 %v4014
      %v4125 = vpop.f32.mrf.mxu0
      %v4126 = vadd.f32 0.0, %v4125
      %v4127 = vpop.f32.mrf.mxu0
      %v4128 = vpop.f32.mrf.mxu0
      %v4129 = vadd.f32 0.0, %v4128
      %v4130 = vpop.f32.mrf.mxu0
      %4131 = vdwg.mxu0
      %v4132 = vadd.f32 %v3850, %v4102
      %v4133 = vadd.f32 %v3851, %v4105
      %v4134 = vadd.f32 %v3852, %v4110
      %v4135 = vadd.f32 %v3853, %v4113
      %v4136 = vadd.f32 %v3854, %v4118
      %v4137 = vadd.f32 %v3855, %v4121
      %v4138 = vadd.f32 %v3856, %v4126
      %v4139 = vadd.f32 %v3857, %v4129
      %v4140 = vld [vmem:[%s3687] sm:$0xe]
      %v4141 = vld [vmem:[%s3687 + $0x8] sm:$0xe]
      %v4142 = vld [vmem:[%s3687 + $0x10] sm:$0xe]
      %v4143 = vld [vmem:[%s3687 + $0x18] sm:$0xe]
      %v4144 = vld [vmem:[%s3687 + $0x20] sm:$0xe]
      %v4145 = vld [vmem:[%s3687 + $0x28] sm:$0xe]
      %v4146 = vld [vmem:[%s3687 + $0x30] sm:$0xe]
      %v4147 = vld [vmem:[%s3687 + $0x38] sm:$0xe]
      %v4164 = vrot.slane %v4140, 5
      %v4165 = vrot.slane %v4164, 4
      %v4166 = vrot.slane %v3859, 5
      %v4167 = vsel %vm849, %v4165, %v4166
      %v4168 = vrot.slane %v4141, 5
      %v4169 = vrot.slane %v4168, 4
      %v4170 = vrot.slane %v3861, 5
      %v4171 = vsel %vm849, %v4169, %v4170
      %v4172 = vrot.slane %v4142, 5
      %v4173 = vrot.slane %v4172, 4
      %v4174 = vrot.slane %v3863, 5
      %v4175 = vsel %vm849, %v4173, %v4174
      %v4176 = vrot.slane %v4143, 5
      %v4177 = vrot.slane %v4176, 4
      %v4178 = vrot.slane %v3865, 5
      %v4179 = vsel %vm849, %v4177, %v4178
      %v4180 = vrot.slane %v4144, 5
      %v4181 = vrot.slane %v4180, 4
      %v4182 = vrot.slane %v3867, 5
      %v4183 = vsel %vm849, %v4181, %v4182
      %v4184 = vrot.slane %v4145, 5
      %v4185 = vrot.slane %v4184, 4
      %v4186 = vrot.slane %v3869, 5
      %v4187 = vsel %vm849, %v4185, %v4186
      %v4188 = vrot.slane %v4146, 5
      %v4189 = vrot.slane %v4188, 4
      %v4190 = vrot.slane %v3871, 5
      %v4191 = vsel %vm849, %v4189, %v4190
      %v4192 = vrot.slane %v4147, 5
      %v4193 = vrot.slane %v4192, 4
      %v4194 = vrot.slane %v3873, 5
      %v4195 = vsel %vm849, %v4193, %v4194
      %s4196 = scalar_lea.vmem %s3, 1088
      %v4197 = vld [vmem:[%s4196] sm:$0xf]
      %v4198 = vld [vmem:[%s4196 + $0x4] sm:$0xf]
      %v4199 = vld [vmem:[%s4196 + $0x8] sm:$0xf]
      %v4200 = vld [vmem:[%s4196 + $0xc] sm:$0xf]
      %v4201 = vld [vmem:[%s4196 + $0x10] sm:$0xf]
      %v4202 = vld [vmem:[%s4196 + $0x14] sm:$0xf]
      %v4203 = vld [vmem:[%s4196 + $0x18] sm:$0xf]
      %v4204 = vld [vmem:[%s4196 + $0x1c] sm:$0xf]
      %v4205 = vld [vmem:[%s4196 + $0x20] sm:$0xf]
      %v4206 = vld [vmem:[%s4196 + $0x24] sm:$0xf]
      %v4207 = vld [vmem:[%s4196 + $0x28] sm:$0xf]
      %v4208 = vld [vmem:[%s4196 + $0x2c] sm:$0xf]
      %v4209 = vld [vmem:[%s4196 + $0x30] sm:$0xf]
      %v4210 = vld [vmem:[%s4196 + $0x34] sm:$0xf]
      %v4211 = vld [vmem:[%s4196 + $0x38] sm:$0xf]
      %v4212 = vld [vmem:[%s4196 + $0x3c] sm:$0xf]
      %v4213 = vunpack.c.l.b16 %v4167
      %v4214 = vunpack.c.l.b16 %v4171
      %v4215 = vunpack.c.l.b16 %v4175
      %v4216 = vunpack.c.l.b16 %v4179
      %v4217 = vunpack.c.l.b16 %v4183
      %v4218 = vunpack.c.l.b16 %v4187
      %v4219 = vunpack.c.l.b16 %v4191
      %v4220 = vunpack.c.l.b16 %v4195
      %v4221 = vpack.c.b16 %v4214, %v4213
      %v4222 = vpack.c.b16 %v4216, %v4215
      %v4223 = vpack.c.b16 %v4218, %v4217
      %v4224 = vpack.c.b16 %v4220, %v4219
      %v4245 = vunpack.c.l.b16 %v4197
      %v4246 = vunpack.c.l.b16 %v4198
      %v4247 = vunpack.c.l.b16 %v4199
      %v4248 = vunpack.c.l.b16 %v4200
      %v4249 = vunpack.c.l.b16 %v4201
      %v4250 = vunpack.c.l.b16 %v4202
      %v4251 = vunpack.c.l.b16 %v4203
      %v4252 = vunpack.c.l.b16 %v4204
      %v4253 = vunpack.c.l.b16 %v4205
      %v4254 = vunpack.c.l.b16 %v4206
      %v4255 = vunpack.c.l.b16 %v4207
      %v4256 = vunpack.c.l.b16 %v4208
      %v4257 = vunpack.c.l.b16 %v4209
      %v4258 = vunpack.c.l.b16 %v4210
      %v4259 = vunpack.c.l.b16 %v4211
      %v4260 = vunpack.c.l.b16 %v4212
      %v4261 = vpack.c.b16 %v4246, %v4245
      %v4262 = vpack.c.b16 %v4248, %v4247
      %v4263 = vpack.c.b16 %v4250, %v4249
      %v4264 = vpack.c.b16 %v4252, %v4251
      %v4265 = vpack.c.b16 %v4254, %v4253
      %v4266 = vpack.c.b16 %v4256, %v4255
      %v4267 = vpack.c.b16 %v4258, %v4257
      %v4268 = vpack.c.b16 %v4260, %v4259
      %4277 = vmatprep.subr.bf16.mxu0 0
      %4278 = vmatpush1.bf16.msra.mxu0 %v4268
      %4279 = vmatprep.subr.bf16.mxu0 0
      %4280 = vmatpush1.bf16.msra.mxu0 %v4267
      %4281 = vmatprep.subr.bf16.mxu0 0
      %4282 = vmatpush1.bf16.msra.mxu0 %v4266
      %4283 = vmatprep.subr.bf16.mxu0 0
      %4284 = vmatpush1.bf16.msra.mxu0 %v4265
      %4285 = vmatprep.subr.bf16.mxu0 0
      %4286 = vmatpush1.bf16.msra.mxu0 %v4264
      %4287 = vmatprep.subr.bf16.mxu0 0
      %4288 = vmatpush1.bf16.msra.mxu0 %v4263
      %4289 = vmatprep.subr.bf16.mxu0 0
      %4290 = vmatpush1.bf16.msra.mxu0 %v4262
      %4291 = vmatprep.subr.bf16.mxu0 0
      %4292 = vmatpush1.bf16.msra.mxu0 %v4261
      %4293 = vmatprep.subr.bf16.mxu0 0
      %4294 = vmatpush2.bf16.msra.mxu0 0
      %4295 = vmatprep.subr.bf16.mxu0 0
      %4296 = vmatpush2.bf16.msra.mxu0 0
      %4297 = vmatprep.subr.bf16.mxu0 0
      %4298 = vmatpush2.bf16.msra.mxu0 0
      %4299 = vmatprep.subr.bf16.mxu0 0
      %4300 = vmatpush2.bf16.msra.mxu0 0
      %4301 = vmatprep.subr.bf16.mxu0 0
      %4302 = vmatpush2.bf16.msra.mxu0 0
      %4303 = vmatprep.subr.bf16.mxu0 0
      %4304 = vmatpush2.bf16.msra.mxu0 0
      %4305 = vmatprep.subr.bf16.mxu0 0
      %4306 = vmatpush2.bf16.msra.mxu0 0
      %4307 = vmatprep.subr.bf16.mxu0 0
      %4308 = vmatpush2.bf16.msra.mxu0 0
      %4309 = vmatprep.mubr.bf16.mxu0 0
      %4310 = vmatmul.mubr.bf16.gmra.mxu0 %v4221
      %v4311 = vpop.f32.mrf.mxu0
      %v4312 = vadd.f32 0.0, %v4311
      %v4313 = vpop.f32.mrf.mxu0
      %v4314 = vpop.f32.mrf.mxu0
      %v4315 = vadd.f32 0.0, %v4314
      %v4316 = vpop.f32.mrf.mxu0
      %4317 = vmatprep.mubr.bf16.mxu0 0
      %4318 = vmatmul.mubr.bf16.gmra.mxu0 %v4222
      %v4319 = vpop.f32.mrf.mxu0
      %v4320 = vadd.f32 0.0, %v4319
      %v4321 = vpop.f32.mrf.mxu0
      %v4322 = vpop.f32.mrf.mxu0
      %v4323 = vadd.f32 0.0, %v4322
      %v4324 = vpop.f32.mrf.mxu0
      %4325 = vmatprep.mubr.bf16.mxu0 0
      %4326 = vmatmul.mubr.bf16.gmra.mxu0 %v4223
      %v4327 = vpop.f32.mrf.mxu0
      %v4328 = vadd.f32 0.0, %v4327
      %v4329 = vpop.f32.mrf.mxu0
      %v4330 = vpop.f32.mrf.mxu0
      %v4331 = vadd.f32 0.0, %v4330
      %v4332 = vpop.f32.mrf.mxu0
      %4333 = vmatprep.mubr.bf16.mxu0 0
      %4334 = vmatmul.mubr.bf16.gmra.mxu0 %v4224
      %v4335 = vpop.f32.mrf.mxu0
      %v4336 = vadd.f32 0.0, %v4335
      %v4337 = vpop.f32.mrf.mxu0
      %v4338 = vpop.f32.mrf.mxu0
      %v4339 = vadd.f32 0.0, %v4338
      %v4340 = vpop.f32.mrf.mxu0
      %4341 = vdwg.mxu0
      %v4342 = vadd.f32 %v4132, %v4312
      %v4343 = vadd.f32 %v4133, %v4315
      %v4344 = vadd.f32 %v4134, %v4320
      %v4345 = vadd.f32 %v4135, %v4323
      %v4346 = vadd.f32 %v4136, %v4328
      %v4347 = vadd.f32 %v4137, %v4331
      %v4348 = vadd.f32 %v4138, %v4336
      %v4349 = vadd.f32 %v4139, %v4339
      %v4350 = vld [vmem:[%s381] sm:$0xf]
      %v4351 = vld [vmem:[%s381 + $0x8] sm:$0xf]
      %v4352 = vld [vmem:[%s381 + $0x10] sm:$0xf]
      %v4353 = vld [vmem:[%s381 + $0x18] sm:$0xf]
      %v4354 = vld [vmem:[%s381 + $0x20] sm:$0xf]
      %v4355 = vld [vmem:[%s381 + $0x28] sm:$0xf]
      %v4356 = vld [vmem:[%s381 + $0x30] sm:$0xf]
      %v4357 = vld [vmem:[%s381 + $0x38] sm:$0xf]
      %s4358 = scalar_lea.vmem %s3, 1152
      %v4359 = vld [vmem:[%s4358] sm:$0xf]
      %v4360 = vld [vmem:[%s4358 + $0x4] sm:$0xf]
      %v4361 = vld [vmem:[%s4358 + $0x8] sm:$0xf]
      %v4362 = vld [vmem:[%s4358 + $0xc] sm:$0xf]
      %v4363 = vld [vmem:[%s4358 + $0x10] sm:$0xf]
      %v4364 = vld [vmem:[%s4358 + $0x14] sm:$0xf]
      %v4365 = vld [vmem:[%s4358 + $0x18] sm:$0xf]
      %v4366 = vld [vmem:[%s4358 + $0x1c] sm:$0xf]
      %v4367 = vld [vmem:[%s4358 + $0x20] sm:$0xf]
      %v4368 = vld [vmem:[%s4358 + $0x24] sm:$0xf]
      %v4369 = vld [vmem:[%s4358 + $0x28] sm:$0xf]
      %v4370 = vld [vmem:[%s4358 + $0x2c] sm:$0xf]
      %v4371 = vld [vmem:[%s4358 + $0x30] sm:$0xf]
      %v4372 = vld [vmem:[%s4358 + $0x34] sm:$0xf]
      %v4373 = vld [vmem:[%s4358 + $0x38] sm:$0xf]
      %v4374 = vld [vmem:[%s4358 + $0x3c] sm:$0xf]
      %v4383 = vunpack.c.l.b16 %v4350
      %v4384 = vunpack.c.l.b16 %v4351
      %v4385 = vunpack.c.l.b16 %v4352
      %v4386 = vunpack.c.l.b16 %v4353
      %v4387 = vunpack.c.l.b16 %v4354
      %v4388 = vunpack.c.l.b16 %v4355
      %v4389 = vunpack.c.l.b16 %v4356
      %v4390 = vunpack.c.l.b16 %v4357
      %v4391 = vpack.c.b16 %v4384, %v4383
      %v4392 = vpack.c.b16 %v4386, %v4385
      %v4393 = vpack.c.b16 %v4388, %v4387
      %v4394 = vpack.c.b16 %v4390, %v4389
      %v4415 = vunpack.c.l.b16 %v4359
      %v4416 = vunpack.c.l.b16 %v4360
      %v4417 = vunpack.c.l.b16 %v4361
      %v4418 = vunpack.c.l.b16 %v4362
      %v4419 = vunpack.c.l.b16 %v4363
      %v4420 = vunpack.c.l.b16 %v4364
      %v4421 = vunpack.c.l.b16 %v4365
      %v4422 = vunpack.c.l.b16 %v4366
      %v4423 = vunpack.c.l.b16 %v4367
      %v4424 = vunpack.c.l.b16 %v4368
      %v4425 = vunpack.c.l.b16 %v4369
      %v4426 = vunpack.c.l.b16 %v4370
      %v4427 = vunpack.c.l.b16 %v4371
      %v4428 = vunpack.c.l.b16 %v4372
      %v4429 = vunpack.c.l.b16 %v4373
      %v4430 = vunpack.c.l.b16 %v4374
      %v4431 = vpack.c.b16 %v4416, %v4415
      %v4432 = vpack.c.b16 %v4418, %v4417
      %v4433 = vpack.c.b16 %v4420, %v4419
      %v4434 = vpack.c.b16 %v4422, %v4421
      %v4435 = vpack.c.b16 %v4424, %v4423
      %v4436 = vpack.c.b16 %v4426, %v4425
      %v4437 = vpack.c.b16 %v4428, %v4427
      %v4438 = vpack.c.b16 %v4430, %v4429
      %4447 = vmatprep.subr.bf16.mxu0 0
      %4448 = vmatpush1.bf16.msra.mxu0 %v4438
      %4449 = vmatprep.subr.bf16.mxu0 0
      %4450 = vmatpush1.bf16.msra.mxu0 %v4437
      %4451 = vmatprep.subr.bf16.mxu0 0
      %4452 = vmatpush1.bf16.msra.mxu0 %v4436
      %4453 = vmatprep.subr.bf16.mxu0 0
      %4454 = vmatpush1.bf16.msra.mxu0 %v4435
      %4455 = vmatprep.subr.bf16.mxu0 0
      %4456 = vmatpush1.bf16.msra.mxu0 %v4434
      %4457 = vmatprep.subr.bf16.mxu0 0
      %4458 = vmatpush1.bf16.msra.mxu0 %v4433
      %4459 = vmatprep.subr.bf16.mxu0 0
      %4460 = vmatpush1.bf16.msra.mxu0 %v4432
      %4461 = vmatprep.subr.bf16.mxu0 0
      %4462 = vmatpush1.bf16.msra.mxu0 %v4431
      %4463 = vmatprep.subr.bf16.mxu0 0
      %4464 = vmatpush2.bf16.msra.mxu0 0
      %4465 = vmatprep.subr.bf16.mxu0 0
      %4466 = vmatpush2.bf16.msra.mxu0 0
      %4467 = vmatprep.subr.bf16.mxu0 0
      %4468 = vmatpush2.bf16.msra.mxu0 0
      %4469 = vmatprep.subr.bf16.mxu0 0
      %4470 = vmatpush2.bf16.msra.mxu0 0
      %4471 = vmatprep.subr.bf16.mxu0 0
      %4472 = vmatpush2.bf16.msra.mxu0 0
      %4473 = vmatprep.subr.bf16.mxu0 0
      %4474 = vmatpush2.bf16.msra.mxu0 0
      %4475 = vmatprep.subr.bf16.mxu0 0
      %4476 = vmatpush2.bf16.msra.mxu0 0
      %4477 = vmatprep.subr.bf16.mxu0 0
      %4478 = vmatpush2.bf16.msra.mxu0 0
      %4479 = vmatprep.mubr.bf16.mxu0 0
      %4480 = vmatmul.mubr.bf16.gmra.mxu0 %v4391
      %v4481 = vpop.f32.mrf.mxu0
      %v4482 = vadd.f32 0.0, %v4481
      %v4483 = vpop.f32.mrf.mxu0
      %v4484 = vpop.f32.mrf.mxu0
      %v4485 = vadd.f32 0.0, %v4484
      %v4486 = vpop.f32.mrf.mxu0
      %4487 = vmatprep.mubr.bf16.mxu0 0
      %4488 = vmatmul.mubr.bf16.gmra.mxu0 %v4392
      %v4489 = vpop.f32.mrf.mxu0
      %v4490 = vadd.f32 0.0, %v4489
      %v4491 = vpop.f32.mrf.mxu0
      %v4492 = vpop.f32.mrf.mxu0
      %v4493 = vadd.f32 0.0, %v4492
      %v4494 = vpop.f32.mrf.mxu0
      %4495 = vmatprep.mubr.bf16.mxu0 0
      %4496 = vmatmul.mubr.bf16.gmra.mxu0 %v4393
      %v4497 = vpop.f32.mrf.mxu0
      %v4498 = vadd.f32 0.0, %v4497
      %v4499 = vpop.f32.mrf.mxu0
      %v4500 = vpop.f32.mrf.mxu0
      %v4501 = vadd.f32 0.0, %v4500
      %v4502 = vpop.f32.mrf.mxu0
      %4503 = vmatprep.mubr.bf16.mxu0 0
      %4504 = vmatmul.mubr.bf16.gmra.mxu0 %v4394
      %v4505 = vpop.f32.mrf.mxu0
      %v4506 = vadd.f32 0.0, %v4505
      %v4507 = vpop.f32.mrf.mxu0
      %v4508 = vpop.f32.mrf.mxu0
      %v4509 = vadd.f32 0.0, %v4508
      %v4510 = vpop.f32.mrf.mxu0
      %4511 = vdwg.mxu0
      %v4512 = vadd.f32 %v4342, %v4482
      %v4513 = vadd.f32 %v4343, %v4485
      %v4514 = vadd.f32 %v4344, %v4490
      %v4515 = vadd.f32 %v4345, %v4493
      %v4516 = vadd.f32 %v4346, %v4498
      %v4517 = vadd.f32 %v4347, %v4501
      %v4518 = vadd.f32 %v4348, %v4506
      %v4519 = vadd.f32 %v4349, %v4509
      %v4520 = vld [vmem:[%s381] sm:$0xf]
      %v4521 = vld [vmem:[%s381 + $0x4] sm:$0x1]
      %v4522 = vld [vmem:[%s381 + $0x8] sm:$0xf]
      %v4523 = vld [vmem:[%s381 + $0xc] sm:$0x1]
      %v4524 = vld [vmem:[%s381 + $0x10] sm:$0xf]
      %v4525 = vld [vmem:[%s381 + $0x14] sm:$0x1]
      %v4526 = vld [vmem:[%s381 + $0x18] sm:$0xf]
      %v4527 = vld [vmem:[%s381 + $0x1c] sm:$0x1]
      %v4528 = vld [vmem:[%s381 + $0x20] sm:$0xf]
      %v4529 = vld [vmem:[%s381 + $0x24] sm:$0x1]
      %v4530 = vld [vmem:[%s381 + $0x28] sm:$0xf]
      %v4531 = vld [vmem:[%s381 + $0x2c] sm:$0x1]
      %v4532 = vld [vmem:[%s381 + $0x30] sm:$0xf]
      %v4533 = vld [vmem:[%s381 + $0x34] sm:$0x1]
      %v4534 = vld [vmem:[%s381 + $0x38] sm:$0xf]
      %v4535 = vld [vmem:[%s381 + $0x3c] sm:$0x1]
      %v4537 = vshrl.u32 %v4520, 16
      %v4539 = vrot.slane %v4537, 4
      %v4540 = vshll.u32 %v4520, 16
      %v4542 = vrot.slane %v4540, 5
      %v4543 = vor.u32 %v4539, %v4542
      %v4544 = vrot.slane %v4543, 4
      %v4546 = vshll.u32 %v4521, 16
      %v4548 = vrot.slane %v4546, 5
      %v4549 = vsel %vm427, %v4544, %v4548
      %v4551 = vshrl.u32 %v4522, 16
      %v4553 = vrot.slane %v4551, 4
      %v4554 = vshll.u32 %v4522, 16
      %v4556 = vrot.slane %v4554, 5
      %v4557 = vor.u32 %v4553, %v4556
      %v4558 = vrot.slane %v4557, 4
      %v4560 = vshll.u32 %v4523, 16
      %v4562 = vrot.slane %v4560, 5
      %v4563 = vsel %vm427, %v4558, %v4562
      %v4565 = vshrl.u32 %v4524, 16
      %v4567 = vrot.slane %v4565, 4
      %v4568 = vshll.u32 %v4524, 16
      %v4570 = vrot.slane %v4568, 5
      %v4571 = vor.u32 %v4567, %v4570
      %v4572 = vrot.slane %v4571, 4
      %v4574 = vshll.u32 %v4525, 16
      %v4576 = vrot.slane %v4574, 5
      %v4577 = vsel %vm427, %v4572, %v4576
      %v4579 = vshrl.u32 %v4526, 16
      %v4581 = vrot.slane %v4579, 4
      %v4582 = vshll.u32 %v4526, 16
      %v4584 = vrot.slane %v4582, 5
      %v4585 = vor.u32 %v4581, %v4584
      %v4586 = vrot.slane %v4585, 4
      %v4588 = vshll.u32 %v4527, 16
      %v4590 = vrot.slane %v4588, 5
      %v4591 = vsel %vm427, %v4586, %v4590
      %v4593 = vshrl.u32 %v4528, 16
      %v4595 = vrot.slane %v4593, 4
      %v4596 = vshll.u32 %v4528, 16
      %v4598 = vrot.slane %v4596, 5
      %v4599 = vor.u32 %v4595, %v4598
      %v4600 = vrot.slane %v4599, 4
      %v4602 = vshll.u32 %v4529, 16
      %v4604 = vrot.slane %v4602, 5
      %v4605 = vsel %vm427, %v4600, %v4604
      %v4607 = vshrl.u32 %v4530, 16
      %v4609 = vrot.slane %v4607, 4
      %v4610 = vshll.u32 %v4530, 16
      %v4612 = vrot.slane %v4610, 5
      %v4613 = vor.u32 %v4609, %v4612
      %v4614 = vrot.slane %v4613, 4
      %v4616 = vshll.u32 %v4531, 16
      %v4618 = vrot.slane %v4616, 5
      %v4619 = vsel %vm427, %v4614, %v4618
      %v4621 = vshrl.u32 %v4532, 16
      %v4623 = vrot.slane %v4621, 4
      %v4624 = vshll.u32 %v4532, 16
      %v4626 = vrot.slane %v4624, 5
      %v4627 = vor.u32 %v4623, %v4626
      %v4628 = vrot.slane %v4627, 4
      %v4630 = vshll.u32 %v4533, 16
      %v4632 = vrot.slane %v4630, 5
      %v4633 = vsel %vm427, %v4628, %v4632
      %v4635 = vshrl.u32 %v4534, 16
      %v4637 = vrot.slane %v4635, 4
      %v4638 = vshll.u32 %v4534, 16
      %v4640 = vrot.slane %v4638, 5
      %v4641 = vor.u32 %v4637, %v4640
      %v4642 = vrot.slane %v4641, 4
      %v4644 = vshll.u32 %v4535, 16
      %v4646 = vrot.slane %v4644, 5
      %v4647 = vsel %vm427, %v4642, %v4646
      %s4648 = scalar_lea.vmem %s3, 1216
      %v4649 = vld [vmem:[%s4648] sm:$0xf]
      %v4650 = vld [vmem:[%s4648 + $0x4] sm:$0xf]
      %v4651 = vld [vmem:[%s4648 + $0x8] sm:$0xf]
      %v4652 = vld [vmem:[%s4648 + $0xc] sm:$0xf]
      %v4653 = vld [vmem:[%s4648 + $0x10] sm:$0xf]
      %v4654 = vld [vmem:[%s4648 + $0x14] sm:$0xf]
      %v4655 = vld [vmem:[%s4648 + $0x18] sm:$0xf]
      %v4656 = vld [vmem:[%s4648 + $0x1c] sm:$0xf]
      %v4657 = vld [vmem:[%s4648 + $0x20] sm:$0xf]
      %v4658 = vld [vmem:[%s4648 + $0x24] sm:$0xf]
      %v4659 = vld [vmem:[%s4648 + $0x28] sm:$0xf]
      %v4660 = vld [vmem:[%s4648 + $0x2c] sm:$0xf]
      %v4661 = vld [vmem:[%s4648 + $0x30] sm:$0xf]
      %v4662 = vld [vmem:[%s4648 + $0x34] sm:$0xf]
      %v4663 = vld [vmem:[%s4648 + $0x38] sm:$0xf]
      %v4664 = vld [vmem:[%s4648 + $0x3c] sm:$0xf]
      %v4665 = vunpack.c.l.b16 %v4549
      %v4666 = vunpack.c.l.b16 %v4563
      %v4667 = vunpack.c.l.b16 %v4577
      %v4668 = vunpack.c.l.b16 %v4591
      %v4669 = vunpack.c.l.b16 %v4605
      %v4670 = vunpack.c.l.b16 %v4619
      %v4671 = vunpack.c.l.b16 %v4633
      %v4672 = vunpack.c.l.b16 %v4647
      %v4673 = vpack.c.b16 %v4666, %v4665
      %v4674 = vpack.c.b16 %v4668, %v4667
      %v4675 = vpack.c.b16 %v4670, %v4669
      %v4676 = vpack.c.b16 %v4672, %v4671
      %v4697 = vunpack.c.l.b16 %v4649
      %v4698 = vunpack.c.l.b16 %v4650
      %v4699 = vunpack.c.l.b16 %v4651
      %v4700 = vunpack.c.l.b16 %v4652
      %v4701 = vunpack.c.l.b16 %v4653
      %v4702 = vunpack.c.l.b16 %v4654
      %v4703 = vunpack.c.l.b16 %v4655
      %v4704 = vunpack.c.l.b16 %v4656
      %v4705 = vunpack.c.l.b16 %v4657
      %v4706 = vunpack.c.l.b16 %v4658
      %v4707 = vunpack.c.l.b16 %v4659
      %v4708 = vunpack.c.l.b16 %v4660
      %v4709 = vunpack.c.l.b16 %v4661
      %v4710 = vunpack.c.l.b16 %v4662
      %v4711 = vunpack.c.l.b16 %v4663
      %v4712 = vunpack.c.l.b16 %v4664
      %v4713 = vpack.c.b16 %v4698, %v4697
      %v4714 = vpack.c.b16 %v4700, %v4699
      %v4715 = vpack.c.b16 %v4702, %v4701
      %v4716 = vpack.c.b16 %v4704, %v4703
      %v4717 = vpack.c.b16 %v4706, %v4705
      %v4718 = vpack.c.b16 %v4708, %v4707
      %v4719 = vpack.c.b16 %v4710, %v4709
      %v4720 = vpack.c.b16 %v4712, %v4711
      %4729 = vmatprep.subr.bf16.mxu0 0
      %4730 = vmatpush1.bf16.msra.mxu0 %v4720
      %4731 = vmatprep.subr.bf16.mxu0 0
      %4732 = vmatpush1.bf16.msra.mxu0 %v4719
      %4733 = vmatprep.subr.bf16.mxu0 0
      %4734 = vmatpush1.bf16.msra.mxu0 %v4718
      %4735 = vmatprep.subr.bf16.mxu0 0
      %4736 = vmatpush1.bf16.msra.mxu0 %v4717
      %4737 = vmatprep.subr.bf16.mxu0 0
      %4738 = vmatpush1.bf16.msra.mxu0 %v4716
      %4739 = vmatprep.subr.bf16.mxu0 0
      %4740 = vmatpush1.bf16.msra.mxu0 %v4715
      %4741 = vmatprep.subr.bf16.mxu0 0
      %4742 = vmatpush1.bf16.msra.mxu0 %v4714
      %4743 = vmatprep.subr.bf16.mxu0 0
      %4744 = vmatpush1.bf16.msra.mxu0 %v4713
      %4745 = vmatprep.subr.bf16.mxu0 0
      %4746 = vmatpush2.bf16.msra.mxu0 0
      %4747 = vmatprep.subr.bf16.mxu0 0
      %4748 = vmatpush2.bf16.msra.mxu0 0
      %4749 = vmatprep.subr.bf16.mxu0 0
      %4750 = vmatpush2.bf16.msra.mxu0 0
      %4751 = vmatprep.subr.bf16.mxu0 0
      %4752 = vmatpush2.bf16.msra.mxu0 0
      %4753 = vmatprep.subr.bf16.mxu0 0
      %4754 = vmatpush2.bf16.msra.mxu0 0
      %4755 = vmatprep.subr.bf16.mxu0 0
      %4756 = vmatpush2.bf16.msra.mxu0 0
      %4757 = vmatprep.subr.bf16.mxu0 0
      %4758 = vmatpush2.bf16.msra.mxu0 0
      %4759 = vmatprep.subr.bf16.mxu0 0
      %4760 = vmatpush2.bf16.msra.mxu0 0
      %4761 = vmatprep.mubr.bf16.mxu0 0
      %4762 = vmatmul.mubr.bf16.gmra.mxu0 %v4673
      %v4763 = vpop.f32.mrf.mxu0
      %v4764 = vadd.f32 0.0, %v4763
      %v4765 = vpop.f32.mrf.mxu0
      %v4766 = vpop.f32.mrf.mxu0
      %v4767 = vadd.f32 0.0, %v4766
      %v4768 = vpop.f32.mrf.mxu0
      %4769 = vmatprep.mubr.bf16.mxu0 0
      %4770 = vmatmul.mubr.bf16.gmra.mxu0 %v4674
      %v4771 = vpop.f32.mrf.mxu0
      %v4772 = vadd.f32 0.0, %v4771
      %v4773 = vpop.f32.mrf.mxu0
      %v4774 = vpop.f32.mrf.mxu0
      %v4775 = vadd.f32 0.0, %v4774
      %v4776 = vpop.f32.mrf.mxu0
      %4777 = vmatprep.mubr.bf16.mxu0 0
      %4778 = vmatmul.mubr.bf16.gmra.mxu0 %v4675
      %v4779 = vpop.f32.mrf.mxu0
      %v4780 = vadd.f32 0.0, %v4779
      %v4781 = vpop.f32.mrf.mxu0
      %v4782 = vpop.f32.mrf.mxu0
      %v4783 = vadd.f32 0.0, %v4782
      %v4784 = vpop.f32.mrf.mxu0
      %4785 = vmatprep.mubr.bf16.mxu0 0
      %4786 = vmatmul.mubr.bf16.gmra.mxu0 %v4676
      %v4787 = vpop.f32.mrf.mxu0
      %v4788 = vadd.f32 0.0, %v4787
      %v4789 = vpop.f32.mrf.mxu0
      %v4790 = vpop.f32.mrf.mxu0
      %v4791 = vadd.f32 0.0, %v4790
      %v4792 = vpop.f32.mrf.mxu0
      %4793 = vdwg.mxu0
      %v4794 = vadd.f32 %v4512, %v4764
      %v4795 = vadd.f32 %v4513, %v4767
      %v4796 = vadd.f32 %v4514, %v4772
      %v4797 = vadd.f32 %v4515, %v4775
      %v4798 = vadd.f32 %v4516, %v4780
      %v4799 = vadd.f32 %v4517, %v4783
      %v4800 = vadd.f32 %v4518, %v4788
      %v4801 = vadd.f32 %v4519, %v4791
      %v4802 = vld [vmem:[%s381] sm:$0xe]
      %v4803 = vld [vmem:[%s381 + $0x8] sm:$0xe]
      %v4804 = vld [vmem:[%s381 + $0x10] sm:$0xe]
      %v4805 = vld [vmem:[%s381 + $0x18] sm:$0xe]
      %v4806 = vld [vmem:[%s381 + $0x20] sm:$0xe]
      %v4807 = vld [vmem:[%s381 + $0x28] sm:$0xe]
      %v4808 = vld [vmem:[%s381 + $0x30] sm:$0xe]
      %v4809 = vld [vmem:[%s381 + $0x38] sm:$0xe]
      %v4826 = vrot.slane %v4802, 5
      %v4827 = vrot.slane %v4826, 4
      %v4828 = vrot.slane %v4521, 5
      %v4829 = vsel %vm849, %v4827, %v4828
      %v4830 = vrot.slane %v4803, 5
      %v4831 = vrot.slane %v4830, 4
      %v4832 = vrot.slane %v4523, 5
      %v4833 = vsel %vm849, %v4831, %v4832
      %v4834 = vrot.slane %v4804, 5
      %v4835 = vrot.slane %v4834, 4
      %v4836 = vrot.slane %v4525, 5
      %v4837 = vsel %vm849, %v4835, %v4836
      %v4838 = vrot.slane %v4805, 5
      %v4839 = vrot.slane %v4838, 4
      %v4840 = vrot.slane %v4527, 5
      %v4841 = vsel %vm849, %v4839, %v4840
      %v4842 = vrot.slane %v4806, 5
      %v4843 = vrot.slane %v4842, 4
      %v4844 = vrot.slane %v4529, 5
      %v4845 = vsel %vm849, %v4843, %v4844
      %v4846 = vrot.slane %v4807, 5
      %v4847 = vrot.slane %v4846, 4
      %v4848 = vrot.slane %v4531, 5
      %v4849 = vsel %vm849, %v4847, %v4848
      %v4850 = vrot.slane %v4808, 5
      %v4851 = vrot.slane %v4850, 4
      %v4852 = vrot.slane %v4533, 5
      %v4853 = vsel %vm849, %v4851, %v4852
      %v4854 = vrot.slane %v4809, 5
      %v4855 = vrot.slane %v4854, 4
      %v4856 = vrot.slane %v4535, 5
      %v4857 = vsel %vm849, %v4855, %v4856
      %s4858 = scalar_lea.vmem %s3, 1280
      %v4859 = vld [vmem:[%s4858] sm:$0xf]
      %v4860 = vld [vmem:[%s4858 + $0x4] sm:$0xf]
      %v4861 = vld [vmem:[%s4858 + $0x8] sm:$0xf]
      %v4862 = vld [vmem:[%s4858 + $0xc] sm:$0xf]
      %v4863 = vld [vmem:[%s4858 + $0x10] sm:$0xf]
      %v4864 = vld [vmem:[%s4858 + $0x14] sm:$0xf]
      %v4865 = vld [vmem:[%s4858 + $0x18] sm:$0xf]
      %v4866 = vld [vmem:[%s4858 + $0x1c] sm:$0xf]
      %v4867 = vld [vmem:[%s4858 + $0x20] sm:$0xf]
      %v4868 = vld [vmem:[%s4858 + $0x24] sm:$0xf]
      %v4869 = vld [vmem:[%s4858 + $0x28] sm:$0xf]
      %v4870 = vld [vmem:[%s4858 + $0x2c] sm:$0xf]
      %v4871 = vld [vmem:[%s4858 + $0x30] sm:$0xf]
      %v4872 = vld [vmem:[%s4858 + $0x34] sm:$0xf]
      %v4873 = vld [vmem:[%s4858 + $0x38] sm:$0xf]
      %v4874 = vld [vmem:[%s4858 + $0x3c] sm:$0xf]
      %v4875 = vunpack.c.l.b16 %v4829
      %v4876 = vunpack.c.l.b16 %v4833
      %v4877 = vunpack.c.l.b16 %v4837
      %v4878 = vunpack.c.l.b16 %v4841
      %v4879 = vunpack.c.l.b16 %v4845
      %v4880 = vunpack.c.l.b16 %v4849
      %v4881 = vunpack.c.l.b16 %v4853
      %v4882 = vunpack.c.l.b16 %v4857
      %v4883 = vpack.c.b16 %v4876, %v4875
      %v4884 = vpack.c.b16 %v4878, %v4877
      %v4885 = vpack.c.b16 %v4880, %v4879
      %v4886 = vpack.c.b16 %v4882, %v4881
      %v4907 = vunpack.c.l.b16 %v4859
      %v4908 = vunpack.c.l.b16 %v4860
      %v4909 = vunpack.c.l.b16 %v4861
      %v4910 = vunpack.c.l.b16 %v4862
      %v4911 = vunpack.c.l.b16 %v4863
      %v4912 = vunpack.c.l.b16 %v4864
      %v4913 = vunpack.c.l.b16 %v4865
      %v4914 = vunpack.c.l.b16 %v4866
      %v4915 = vunpack.c.l.b16 %v4867
      %v4916 = vunpack.c.l.b16 %v4868
      %v4917 = vunpack.c.l.b16 %v4869
      %v4918 = vunpack.c.l.b16 %v4870
      %v4919 = vunpack.c.l.b16 %v4871
      %v4920 = vunpack.c.l.b16 %v4872
      %v4921 = vunpack.c.l.b16 %v4873
      %v4922 = vunpack.c.l.b16 %v4874
      %v4923 = vpack.c.b16 %v4908, %v4907
      %v4924 = vpack.c.b16 %v4910, %v4909
      %v4925 = vpack.c.b16 %v4912, %v4911
      %v4926 = vpack.c.b16 %v4914, %v4913
      %v4927 = vpack.c.b16 %v4916, %v4915
      %v4928 = vpack.c.b16 %v4918, %v4917
      %v4929 = vpack.c.b16 %v4920, %v4919
      %v4930 = vpack.c.b16 %v4922, %v4921
      %4939 = vmatprep.subr.bf16.mxu0 0
      %4940 = vmatpush1.bf16.msra.mxu0 %v4930
      %4941 = vmatprep.subr.bf16.mxu0 0
      %4942 = vmatpush1.bf16.msra.mxu0 %v4929
      %4943 = vmatprep.subr.bf16.mxu0 0
      %4944 = vmatpush1.bf16.msra.mxu0 %v4928
      %4945 = vmatprep.subr.bf16.mxu0 0
      %4946 = vmatpush1.bf16.msra.mxu0 %v4927
      %4947 = vmatprep.subr.bf16.mxu0 0
      %4948 = vmatpush1.bf16.msra.mxu0 %v4926
      %4949 = vmatprep.subr.bf16.mxu0 0
      %4950 = vmatpush1.bf16.msra.mxu0 %v4925
      %4951 = vmatprep.subr.bf16.mxu0 0
      %4952 = vmatpush1.bf16.msra.mxu0 %v4924
      %4953 = vmatprep.subr.bf16.mxu0 0
      %4954 = vmatpush1.bf16.msra.mxu0 %v4923
      %4955 = vmatprep.subr.bf16.mxu0 0
      %4956 = vmatpush2.bf16.msra.mxu0 0
      %4957 = vmatprep.subr.bf16.mxu0 0
      %4958 = vmatpush2.bf16.msra.mxu0 0
      %4959 = vmatprep.subr.bf16.mxu0 0
      %4960 = vmatpush2.bf16.msra.mxu0 0
      %4961 = vmatprep.subr.bf16.mxu0 0
      %4962 = vmatpush2.bf16.msra.mxu0 0
      %4963 = vmatprep.subr.bf16.mxu0 0
      %4964 = vmatpush2.bf16.msra.mxu0 0
      %4965 = vmatprep.subr.bf16.mxu0 0
      %4966 = vmatpush2.bf16.msra.mxu0 0
      %4967 = vmatprep.subr.bf16.mxu0 0
      %4968 = vmatpush2.bf16.msra.mxu0 0
      %4969 = vmatprep.subr.bf16.mxu0 0
      %4970 = vmatpush2.bf16.msra.mxu0 0
      %4971 = vmatprep.mubr.bf16.mxu0 0
      %4972 = vmatmul.mubr.bf16.gmra.mxu0 %v4883
      %v4973 = vpop.f32.mrf.mxu0
      %v4974 = vadd.f32 0.0, %v4973
      %v4975 = vpop.f32.mrf.mxu0
      %v4976 = vpop.f32.mrf.mxu0
      %v4977 = vadd.f32 0.0, %v4976
      %v4978 = vpop.f32.mrf.mxu0
      %4979 = vmatprep.mubr.bf16.mxu0 0
      %4980 = vmatmul.mubr.bf16.gmra.mxu0 %v4884
      %v4981 = vpop.f32.mrf.mxu0
      %v4982 = vadd.f32 0.0, %v4981
      %v4983 = vpop.f32.mrf.mxu0
      %v4984 = vpop.f32.mrf.mxu0
      %v4985 = vadd.f32 0.0, %v4984
      %v4986 = vpop.f32.mrf.mxu0
      %4987 = vmatprep.mubr.bf16.mxu0 0
      %4988 = vmatmul.mubr.bf16.gmra.mxu0 %v4885
      %v4989 = vpop.f32.mrf.mxu0
      %v4990 = vadd.f32 0.0, %v4989
      %v4991 = vpop.f32.mrf.mxu0
      %v4992 = vpop.f32.mrf.mxu0
      %v4993 = vadd.f32 0.0, %v4992
      %v4994 = vpop.f32.mrf.mxu0
      %4995 = vmatprep.mubr.bf16.mxu0 0
      %4996 = vmatmul.mubr.bf16.gmra.mxu0 %v4886
      %v4997 = vpop.f32.mrf.mxu0
      %v4998 = vadd.f32 0.0, %v4997
      %v4999 = vpop.f32.mrf.mxu0
      %v5000 = vpop.f32.mrf.mxu0
      %v5001 = vadd.f32 0.0, %v5000
      %v5002 = vpop.f32.mrf.mxu0
      %5003 = vdwg.mxu0
      %v5004 = vadd.f32 %v4794, %v4974
      %v5005 = vadd.f32 %v4795, %v4977
      %v5006 = vadd.f32 %v4796, %v4982
      %v5007 = vadd.f32 %v4797, %v4985
      %v5008 = vadd.f32 %v4798, %v4990
      %v5009 = vadd.f32 %v4799, %v4993
      %v5010 = vadd.f32 %v4800, %v4998
      %v5011 = vadd.f32 %v4801, %v5001
      %s5012 = scalar_lea.vmem %s381, 8
      %v5013 = vld [vmem:[%s5012] sm:$0xf]
      %v5014 = vld [vmem:[%s5012 + $0x8] sm:$0xf]
      %v5015 = vld [vmem:[%s5012 + $0x10] sm:$0xf]
      %v5016 = vld [vmem:[%s5012 + $0x18] sm:$0xf]
      %v5017 = vld [vmem:[%s5012 + $0x20] sm:$0xf]
      %v5018 = vld [vmem:[%s5012 + $0x28] sm:$0xf]
      %v5019 = vld [vmem:[%s5012 + $0x30] sm:$0xf]
      %v5020 = vld [vmem:[%s5012 + $0x38] sm:$0xf]
      %s5021 = scalar_lea.vmem %s3, 1344
      %v5022 = vld [vmem:[%s5021] sm:$0xf]
      %v5023 = vld [vmem:[%s5021 + $0x4] sm:$0xf]
      %v5024 = vld [vmem:[%s5021 + $0x8] sm:$0xf]
      %v5025 = vld [vmem:[%s5021 + $0xc] sm:$0xf]
      %v5026 = vld [vmem:[%s5021 + $0x10] sm:$0xf]
      %v5027 = vld [vmem:[%s5021 + $0x14] sm:$0xf]
      %v5028 = vld [vmem:[%s5021 + $0x18] sm:$0xf]
      %v5029 = vld [vmem:[%s5021 + $0x1c] sm:$0xf]
      %v5030 = vld [vmem:[%s5021 + $0x20] sm:$0xf]
      %v5031 = vld [vmem:[%s5021 + $0x24] sm:$0xf]
      %v5032 = vld [vmem:[%s5021 + $0x28] sm:$0xf]
      %v5033 = vld [vmem:[%s5021 + $0x2c] sm:$0xf]
      %v5034 = vld [vmem:[%s5021 + $0x30] sm:$0xf]
      %v5035 = vld [vmem:[%s5021 + $0x34] sm:$0xf]
      %v5036 = vld [vmem:[%s5021 + $0x38] sm:$0xf]
      %v5037 = vld [vmem:[%s5021 + $0x3c] sm:$0xf]
      %v5046 = vunpack.c.l.b16 %v5013
      %v5047 = vunpack.c.l.b16 %v5014
      %v5048 = vunpack.c.l.b16 %v5015
      %v5049 = vunpack.c.l.b16 %v5016
      %v5050 = vunpack.c.l.b16 %v5017
      %v5051 = vunpack.c.l.b16 %v5018
      %v5052 = vunpack.c.l.b16 %v5019
      %v5053 = vunpack.c.l.b16 %v5020
      %v5054 = vpack.c.b16 %v5047, %v5046
      %v5055 = vpack.c.b16 %v5049, %v5048
      %v5056 = vpack.c.b16 %v5051, %v5050
      %v5057 = vpack.c.b16 %v5053, %v5052
      %v5078 = vunpack.c.l.b16 %v5022
      %v5079 = vunpack.c.l.b16 %v5023
      %v5080 = vunpack.c.l.b16 %v5024
      %v5081 = vunpack.c.l.b16 %v5025
      %v5082 = vunpack.c.l.b16 %v5026
      %v5083 = vunpack.c.l.b16 %v5027
      %v5084 = vunpack.c.l.b16 %v5028
      %v5085 = vunpack.c.l.b16 %v5029
      %v5086 = vunpack.c.l.b16 %v5030
      %v5087 = vunpack.c.l.b16 %v5031
      %v5088 = vunpack.c.l.b16 %v5032
      %v5089 = vunpack.c.l.b16 %v5033
      %v5090 = vunpack.c.l.b16 %v5034
      %v5091 = vunpack.c.l.b16 %v5035
      %v5092 = vunpack.c.l.b16 %v5036
      %v5093 = vunpack.c.l.b16 %v5037
      %v5094 = vpack.c.b16 %v5079, %v5078
      %v5095 = vpack.c.b16 %v5081, %v5080
      %v5096 = vpack.c.b16 %v5083, %v5082
      %v5097 = vpack.c.b16 %v5085, %v5084
      %v5098 = vpack.c.b16 %v5087, %v5086
      %v5099 = vpack.c.b16 %v5089, %v5088
      %v5100 = vpack.c.b16 %v5091, %v5090
      %v5101 = vpack.c.b16 %v5093, %v5092
      %5110 = vmatprep.subr.bf16.mxu0 0
      %5111 = vmatpush1.bf16.msra.mxu0 %v5101
      %5112 = vmatprep.subr.bf16.mxu0 0
      %5113 = vmatpush1.bf16.msra.mxu0 %v5100
      %5114 = vmatprep.subr.bf16.mxu0 0
      %5115 = vmatpush1.bf16.msra.mxu0 %v5099
      %5116 = vmatprep.subr.bf16.mxu0 0
      %5117 = vmatpush1.bf16.msra.mxu0 %v5098
      %5118 = vmatprep.subr.bf16.mxu0 0
      %5119 = vmatpush1.bf16.msra.mxu0 %v5097
      %5120 = vmatprep.subr.bf16.mxu0 0
      %5121 = vmatpush1.bf16.msra.mxu0 %v5096
      %5122 = vmatprep.subr.bf16.mxu0 0
      %5123 = vmatpush1.bf16.msra.mxu0 %v5095
      %5124 = vmatprep.subr.bf16.mxu0 0
      %5125 = vmatpush1.bf16.msra.mxu0 %v5094
      %5126 = vmatprep.subr.bf16.mxu0 0
      %5127 = vmatpush2.bf16.msra.mxu0 0
      %5128 = vmatprep.subr.bf16.mxu0 0
      %5129 = vmatpush2.bf16.msra.mxu0 0
      %5130 = vmatprep.subr.bf16.mxu0 0
      %5131 = vmatpush2.bf16.msra.mxu0 0
      %5132 = vmatprep.subr.bf16.mxu0 0
      %5133 = vmatpush2.bf16.msra.mxu0 0
      %5134 = vmatprep.subr.bf16.mxu0 0
      %5135 = vmatpush2.bf16.msra.mxu0 0
      %5136 = vmatprep.subr.bf16.mxu0 0
      %5137 = vmatpush2.bf16.msra.mxu0 0
      %5138 = vmatprep.subr.bf16.mxu0 0
      %5139 = vmatpush2.bf16.msra.mxu0 0
      %5140 = vmatprep.subr.bf16.mxu0 0
      %5141 = vmatpush2.bf16.msra.mxu0 0
      %5142 = vmatprep.mubr.bf16.mxu0 0
      %5143 = vmatmul.mubr.bf16.gmra.mxu0 %v5054
      %v5144 = vpop.f32.mrf.mxu0
      %v5145 = vadd.f32 0.0, %v5144
      %v5146 = vpop.f32.mrf.mxu0
      %v5147 = vpop.f32.mrf.mxu0
      %v5148 = vadd.f32 0.0, %v5147
      %v5149 = vpop.f32.mrf.mxu0
      %5150 = vmatprep.mubr.bf16.mxu0 0
      %5151 = vmatmul.mubr.bf16.gmra.mxu0 %v5055
      %v5152 = vpop.f32.mrf.mxu0
      %v5153 = vadd.f32 0.0, %v5152
      %v5154 = vpop.f32.mrf.mxu0
      %v5155 = vpop.f32.mrf.mxu0
      %v5156 = vadd.f32 0.0, %v5155
      %v5157 = vpop.f32.mrf.mxu0
      %5158 = vmatprep.mubr.bf16.mxu0 0
      %5159 = vmatmul.mubr.bf16.gmra.mxu0 %v5056
      %v5160 = vpop.f32.mrf.mxu0
      %v5161 = vadd.f32 0.0, %v5160
      %v5162 = vpop.f32.mrf.mxu0
      %v5163 = vpop.f32.mrf.mxu0
      %v5164 = vadd.f32 0.0, %v5163
      %v5165 = vpop.f32.mrf.mxu0
      %5166 = vmatprep.mubr.bf16.mxu0 0
      %5167 = vmatmul.mubr.bf16.gmra.mxu0 %v5057
      %v5168 = vpop.f32.mrf.mxu0
      %v5169 = vadd.f32 0.0, %v5168
      %v5170 = vpop.f32.mrf.mxu0
      %v5171 = vpop.f32.mrf.mxu0
      %v5172 = vadd.f32 0.0, %v5171
      %v5173 = vpop.f32.mrf.mxu0
      %5174 = vdwg.mxu0
      %v5175 = vadd.f32 %v5004, %v5145
      %v5176 = vadd.f32 %v5005, %v5148
      %v5177 = vadd.f32 %v5006, %v5153
      %v5178 = vadd.f32 %v5007, %v5156
      %v5179 = vadd.f32 %v5008, %v5161
      %v5180 = vadd.f32 %v5009, %v5164
      %v5181 = vadd.f32 %v5010, %v5169
      %v5182 = vadd.f32 %v5011, %v5172
      %v5183 = vld [vmem:[%s5012] sm:$0xf]
      %v5184 = vld [vmem:[%s5012 + $0x4] sm:$0x1]
      %v5185 = vld [vmem:[%s5012 + $0x8] sm:$0xf]
      %v5186 = vld [vmem:[%s5012 + $0xc] sm:$0x1]
      %v5187 = vld [vmem:[%s5012 + $0x10] sm:$0xf]
      %v5188 = vld [vmem:[%s5012 + $0x14] sm:$0x1]
      %v5189 = vld [vmem:[%s5012 + $0x18] sm:$0xf]
      %v5190 = vld [vmem:[%s5012 + $0x1c] sm:$0x1]
      %v5191 = vld [vmem:[%s5012 + $0x20] sm:$0xf]
      %v5192 = vld [vmem:[%s5012 + $0x24] sm:$0x1]
      %v5193 = vld [vmem:[%s5012 + $0x28] sm:$0xf]
      %v5194 = vld [vmem:[%s5012 + $0x2c] sm:$0x1]
      %v5195 = vld [vmem:[%s5012 + $0x30] sm:$0xf]
      %v5196 = vld [vmem:[%s5012 + $0x34] sm:$0x1]
      %v5197 = vld [vmem:[%s5012 + $0x38] sm:$0xf]
      %v5198 = vld [vmem:[%s5012 + $0x3c] sm:$0x1]
      %v5200 = vshrl.u32 %v5183, 16
      %v5202 = vrot.slane %v5200, 4
      %v5203 = vshll.u32 %v5183, 16
      %v5205 = vrot.slane %v5203, 5
      %v5206 = vor.u32 %v5202, %v5205
      %v5207 = vrot.slane %v5206, 4
      %v5209 = vshll.u32 %v5184, 16
      %v5211 = vrot.slane %v5209, 5
      %v5212 = vsel %vm427, %v5207, %v5211
      %v5214 = vshrl.u32 %v5185, 16
      %v5216 = vrot.slane %v5214, 4
      %v5217 = vshll.u32 %v5185, 16
      %v5219 = vrot.slane %v5217, 5
      %v5220 = vor.u32 %v5216, %v5219
      %v5221 = vrot.slane %v5220, 4
      %v5223 = vshll.u32 %v5186, 16
      %v5225 = vrot.slane %v5223, 5
      %v5226 = vsel %vm427, %v5221, %v5225
      %v5228 = vshrl.u32 %v5187, 16
      %v5230 = vrot.slane %v5228, 4
      %v5231 = vshll.u32 %v5187, 16
      %v5233 = vrot.slane %v5231, 5
      %v5234 = vor.u32 %v5230, %v5233
      %v5235 = vrot.slane %v5234, 4
      %v5237 = vshll.u32 %v5188, 16
      %v5239 = vrot.slane %v5237, 5
      %v5240 = vsel %vm427, %v5235, %v5239
      %v5242 = vshrl.u32 %v5189, 16
      %v5244 = vrot.slane %v5242, 4
      %v5245 = vshll.u32 %v5189, 16
      %v5247 = vrot.slane %v5245, 5
      %v5248 = vor.u32 %v5244, %v5247
      %v5249 = vrot.slane %v5248, 4
      %v5251 = vshll.u32 %v5190, 16
      %v5253 = vrot.slane %v5251, 5
      %v5254 = vsel %vm427, %v5249, %v5253
      %v5256 = vshrl.u32 %v5191, 16
      %v5258 = vrot.slane %v5256, 4
      %v5259 = vshll.u32 %v5191, 16
      %v5261 = vrot.slane %v5259, 5
      %v5262 = vor.u32 %v5258, %v5261
      %v5263 = vrot.slane %v5262, 4
      %v5265 = vshll.u32 %v5192, 16
      %v5267 = vrot.slane %v5265, 5
      %v5268 = vsel %vm427, %v5263, %v5267
      %v5270 = vshrl.u32 %v5193, 16
      %v5272 = vrot.slane %v5270, 4
      %v5273 = vshll.u32 %v5193, 16
      %v5275 = vrot.slane %v5273, 5
      %v5276 = vor.u32 %v5272, %v5275
      %v5277 = vrot.slane %v5276, 4
      %v5279 = vshll.u32 %v5194, 16
      %v5281 = vrot.slane %v5279, 5
      %v5282 = vsel %vm427, %v5277, %v5281
      %v5284 = vshrl.u32 %v5195, 16
      %v5286 = vrot.slane %v5284, 4
      %v5287 = vshll.u32 %v5195, 16
      %v5289 = vrot.slane %v5287, 5
      %v5290 = vor.u32 %v5286, %v5289
      %v5291 = vrot.slane %v5290, 4
      %v5293 = vshll.u32 %v5196, 16
      %v5295 = vrot.slane %v5293, 5
      %v5296 = vsel %vm427, %v5291, %v5295
      %v5298 = vshrl.u32 %v5197, 16
      %v5300 = vrot.slane %v5298, 4
      %v5301 = vshll.u32 %v5197, 16
      %v5303 = vrot.slane %v5301, 5
      %v5304 = vor.u32 %v5300, %v5303
      %v5305 = vrot.slane %v5304, 4
      %v5307 = vshll.u32 %v5198, 16
      %v5309 = vrot.slane %v5307, 5
      %v5310 = vsel %vm427, %v5305, %v5309
      %s5311 = scalar_lea.vmem %s3, 1408
      %v5312 = vld [vmem:[%s5311] sm:$0xf]
      %v5313 = vld [vmem:[%s5311 + $0x4] sm:$0xf]
      %v5314 = vld [vmem:[%s5311 + $0x8] sm:$0xf]
      %v5315 = vld [vmem:[%s5311 + $0xc] sm:$0xf]
      %v5316 = vld [vmem:[%s5311 + $0x10] sm:$0xf]
      %v5317 = vld [vmem:[%s5311 + $0x14] sm:$0xf]
      %v5318 = vld [vmem:[%s5311 + $0x18] sm:$0xf]
      %v5319 = vld [vmem:[%s5311 + $0x1c] sm:$0xf]
      %v5320 = vld [vmem:[%s5311 + $0x20] sm:$0xf]
      %v5321 = vld [vmem:[%s5311 + $0x24] sm:$0xf]
      %v5322 = vld [vmem:[%s5311 + $0x28] sm:$0xf]
      %v5323 = vld [vmem:[%s5311 + $0x2c] sm:$0xf]
      %v5324 = vld [vmem:[%s5311 + $0x30] sm:$0xf]
      %v5325 = vld [vmem:[%s5311 + $0x34] sm:$0xf]
      %v5326 = vld [vmem:[%s5311 + $0x38] sm:$0xf]
      %v5327 = vld [vmem:[%s5311 + $0x3c] sm:$0xf]
      %v5328 = vunpack.c.l.b16 %v5212
      %v5329 = vunpack.c.l.b16 %v5226
      %v5330 = vunpack.c.l.b16 %v5240
      %v5331 = vunpack.c.l.b16 %v5254
      %v5332 = vunpack.c.l.b16 %v5268
      %v5333 = vunpack.c.l.b16 %v5282
      %v5334 = vunpack.c.l.b16 %v5296
      %v5335 = vunpack.c.l.b16 %v5310
      %v5336 = vpack.c.b16 %v5329, %v5328
      %v5337 = vpack.c.b16 %v5331, %v5330
      %v5338 = vpack.c.b16 %v5333, %v5332
      %v5339 = vpack.c.b16 %v5335, %v5334
      %v5360 = vunpack.c.l.b16 %v5312
      %v5361 = vunpack.c.l.b16 %v5313
      %v5362 = vunpack.c.l.b16 %v5314
      %v5363 = vunpack.c.l.b16 %v5315
      %v5364 = vunpack.c.l.b16 %v5316
      %v5365 = vunpack.c.l.b16 %v5317
      %v5366 = vunpack.c.l.b16 %v5318
      %v5367 = vunpack.c.l.b16 %v5319
      %v5368 = vunpack.c.l.b16 %v5320
      %v5369 = vunpack.c.l.b16 %v5321
      %v5370 = vunpack.c.l.b16 %v5322
      %v5371 = vunpack.c.l.b16 %v5323
      %v5372 = vunpack.c.l.b16 %v5324
      %v5373 = vunpack.c.l.b16 %v5325
      %v5374 = vunpack.c.l.b16 %v5326
      %v5375 = vunpack.c.l.b16 %v5327
      %v5376 = vpack.c.b16 %v5361, %v5360
      %v5377 = vpack.c.b16 %v5363, %v5362
      %v5378 = vpack.c.b16 %v5365, %v5364
      %v5379 = vpack.c.b16 %v5367, %v5366
      %v5380 = vpack.c.b16 %v5369, %v5368
      %v5381 = vpack.c.b16 %v5371, %v5370
      %v5382 = vpack.c.b16 %v5373, %v5372
      %v5383 = vpack.c.b16 %v5375, %v5374
      %5392 = vmatprep.subr.bf16.mxu0 0
      %5393 = vmatpush1.bf16.msra.mxu0 %v5383
      %5394 = vmatprep.subr.bf16.mxu0 0
      %5395 = vmatpush1.bf16.msra.mxu0 %v5382
      %5396 = vmatprep.subr.bf16.mxu0 0
      %5397 = vmatpush1.bf16.msra.mxu0 %v5381
      %5398 = vmatprep.subr.bf16.mxu0 0
      %5399 = vmatpush1.bf16.msra.mxu0 %v5380
      %5400 = vmatprep.subr.bf16.mxu0 0
      %5401 = vmatpush1.bf16.msra.mxu0 %v5379
      %5402 = vmatprep.subr.bf16.mxu0 0
      %5403 = vmatpush1.bf16.msra.mxu0 %v5378
      %5404 = vmatprep.subr.bf16.mxu0 0
      %5405 = vmatpush1.bf16.msra.mxu0 %v5377
      %5406 = vmatprep.subr.bf16.mxu0 0
      %5407 = vmatpush1.bf16.msra.mxu0 %v5376
      %5408 = vmatprep.subr.bf16.mxu0 0
      %5409 = vmatpush2.bf16.msra.mxu0 0
      %5410 = vmatprep.subr.bf16.mxu0 0
      %5411 = vmatpush2.bf16.msra.mxu0 0
      %5412 = vmatprep.subr.bf16.mxu0 0
      %5413 = vmatpush2.bf16.msra.mxu0 0
      %5414 = vmatprep.subr.bf16.mxu0 0
      %5415 = vmatpush2.bf16.msra.mxu0 0
      %5416 = vmatprep.subr.bf16.mxu0 0
      %5417 = vmatpush2.bf16.msra.mxu0 0
      %5418 = vmatprep.subr.bf16.mxu0 0
      %5419 = vmatpush2.bf16.msra.mxu0 0
      %5420 = vmatprep.subr.bf16.mxu0 0
      %5421 = vmatpush2.bf16.msra.mxu0 0
      %5422 = vmatprep.subr.bf16.mxu0 0
      %5423 = vmatpush2.bf16.msra.mxu0 0
      %5424 = vmatprep.mubr.bf16.mxu0 0
      %5425 = vmatmul.mubr.bf16.gmra.mxu0 %v5336
      %v5426 = vpop.f32.mrf.mxu0
      %v5427 = vadd.f32 0.0, %v5426
      %v5428 = vpop.f32.mrf.mxu0
      %v5429 = vpop.f32.mrf.mxu0
      %v5430 = vadd.f32 0.0, %v5429
      %v5431 = vpop.f32.mrf.mxu0
      %5432 = vmatprep.mubr.bf16.mxu0 0
      %5433 = vmatmul.mubr.bf16.gmra.mxu0 %v5337
      %v5434 = vpop.f32.mrf.mxu0
      %v5435 = vadd.f32 0.0, %v5434
      %v5436 = vpop.f32.mrf.mxu0
      %v5437 = vpop.f32.mrf.mxu0
      %v5438 = vadd.f32 0.0, %v5437
      %v5439 = vpop.f32.mrf.mxu0
      %5440 = vmatprep.mubr.bf16.mxu0 0
      %5441 = vmatmul.mubr.bf16.gmra.mxu0 %v5338
      %v5442 = vpop.f32.mrf.mxu0
      %v5443 = vadd.f32 0.0, %v5442
      %v5444 = vpop.f32.mrf.mxu0
      %v5445 = vpop.f32.mrf.mxu0
      %v5446 = vadd.f32 0.0, %v5445
      %v5447 = vpop.f32.mrf.mxu0
      %5448 = vmatprep.mubr.bf16.mxu0 0
      %5449 = vmatmul.mubr.bf16.gmra.mxu0 %v5339
      %v5450 = vpop.f32.mrf.mxu0
      %v5451 = vadd.f32 0.0, %v5450
      %v5452 = vpop.f32.mrf.mxu0
      %v5453 = vpop.f32.mrf.mxu0
      %v5454 = vadd.f32 0.0, %v5453
      %v5455 = vpop.f32.mrf.mxu0
      %5456 = vdwg.mxu0
      %v5457 = vadd.f32 %v5175, %v5427
      %v5458 = vadd.f32 %v5176, %v5430
      %v5459 = vadd.f32 %v5177, %v5435
      %v5460 = vadd.f32 %v5178, %v5438
      %v5461 = vadd.f32 %v5179, %v5443
      %v5462 = vadd.f32 %v5180, %v5446
      %v5463 = vadd.f32 %v5181, %v5451
      %v5464 = vadd.f32 %v5182, %v5454
      %v5465 = vld [vmem:[%s5012] sm:$0xe]
      %v5466 = vld [vmem:[%s5012 + $0x8] sm:$0xe]
      %v5467 = vld [vmem:[%s5012 + $0x10] sm:$0xe]
      %v5468 = vld [vmem:[%s5012 + $0x18] sm:$0xe]
      %v5469 = vld [vmem:[%s5012 + $0x20] sm:$0xe]
      %v5470 = vld [vmem:[%s5012 + $0x28] sm:$0xe]
      %v5471 = vld [vmem:[%s5012 + $0x30] sm:$0xe]
      %v5472 = vld [vmem:[%s5012 + $0x38] sm:$0xe]
      %v5489 = vrot.slane %v5465, 5
      %v5490 = vrot.slane %v5489, 4
      %v5491 = vrot.slane %v5184, 5
      %v5492 = vsel %vm849, %v5490, %v5491
      %v5493 = vrot.slane %v5466, 5
      %v5494 = vrot.slane %v5493, 4
      %v5495 = vrot.slane %v5186, 5
      %v5496 = vsel %vm849, %v5494, %v5495
      %v5497 = vrot.slane %v5467, 5
      %v5498 = vrot.slane %v5497, 4
      %v5499 = vrot.slane %v5188, 5
      %v5500 = vsel %vm849, %v5498, %v5499
      %v5501 = vrot.slane %v5468, 5
      %v5502 = vrot.slane %v5501, 4
      %v5503 = vrot.slane %v5190, 5
      %v5504 = vsel %vm849, %v5502, %v5503
      %v5505 = vrot.slane %v5469, 5
      %v5506 = vrot.slane %v5505, 4
      %v5507 = vrot.slane %v5192, 5
      %v5508 = vsel %vm849, %v5506, %v5507
      %v5509 = vrot.slane %v5470, 5
      %v5510 = vrot.slane %v5509, 4
      %v5511 = vrot.slane %v5194, 5
      %v5512 = vsel %vm849, %v5510, %v5511
      %v5513 = vrot.slane %v5471, 5
      %v5514 = vrot.slane %v5513, 4
      %v5515 = vrot.slane %v5196, 5
      %v5516 = vsel %vm849, %v5514, %v5515
      %v5517 = vrot.slane %v5472, 5
      %v5518 = vrot.slane %v5517, 4
      %v5519 = vrot.slane %v5198, 5
      %v5520 = vsel %vm849, %v5518, %v5519
      %s5521 = scalar_lea.vmem %s3, 1472
      %v5522 = vld [vmem:[%s5521] sm:$0xf]
      %v5523 = vld [vmem:[%s5521 + $0x4] sm:$0xf]
      %v5524 = vld [vmem:[%s5521 + $0x8] sm:$0xf]
      %v5525 = vld [vmem:[%s5521 + $0xc] sm:$0xf]
      %v5526 = vld [vmem:[%s5521 + $0x10] sm:$0xf]
      %v5527 = vld [vmem:[%s5521 + $0x14] sm:$0xf]
      %v5528 = vld [vmem:[%s5521 + $0x18] sm:$0xf]
      %v5529 = vld [vmem:[%s5521 + $0x1c] sm:$0xf]
      %v5530 = vld [vmem:[%s5521 + $0x20] sm:$0xf]
      %v5531 = vld [vmem:[%s5521 + $0x24] sm:$0xf]
      %v5532 = vld [vmem:[%s5521 + $0x28] sm:$0xf]
      %v5533 = vld [vmem:[%s5521 + $0x2c] sm:$0xf]
      %v5534 = vld [vmem:[%s5521 + $0x30] sm:$0xf]
      %v5535 = vld [vmem:[%s5521 + $0x34] sm:$0xf]
      %v5536 = vld [vmem:[%s5521 + $0x38] sm:$0xf]
      %v5537 = vld [vmem:[%s5521 + $0x3c] sm:$0xf]
      %v5538 = vunpack.c.l.b16 %v5492
      %v5539 = vunpack.c.l.b16 %v5496
      %v5540 = vunpack.c.l.b16 %v5500
      %v5541 = vunpack.c.l.b16 %v5504
      %v5542 = vunpack.c.l.b16 %v5508
      %v5543 = vunpack.c.l.b16 %v5512
      %v5544 = vunpack.c.l.b16 %v5516
      %v5545 = vunpack.c.l.b16 %v5520
      %v5546 = vpack.c.b16 %v5539, %v5538
      %v5547 = vpack.c.b16 %v5541, %v5540
      %v5548 = vpack.c.b16 %v5543, %v5542
      %v5549 = vpack.c.b16 %v5545, %v5544
      %v5570 = vunpack.c.l.b16 %v5522
      %v5571 = vunpack.c.l.b16 %v5523
      %v5572 = vunpack.c.l.b16 %v5524
      %v5573 = vunpack.c.l.b16 %v5525
      %v5574 = vunpack.c.l.b16 %v5526
      %v5575 = vunpack.c.l.b16 %v5527
      %v5576 = vunpack.c.l.b16 %v5528
      %v5577 = vunpack.c.l.b16 %v5529
      %v5578 = vunpack.c.l.b16 %v5530
      %v5579 = vunpack.c.l.b16 %v5531
      %v5580 = vunpack.c.l.b16 %v5532
      %v5581 = vunpack.c.l.b16 %v5533
      %v5582 = vunpack.c.l.b16 %v5534
      %v5583 = vunpack.c.l.b16 %v5535
      %v5584 = vunpack.c.l.b16 %v5536
      %v5585 = vunpack.c.l.b16 %v5537
      %v5586 = vpack.c.b16 %v5571, %v5570
      %v5587 = vpack.c.b16 %v5573, %v5572
      %v5588 = vpack.c.b16 %v5575, %v5574
      %v5589 = vpack.c.b16 %v5577, %v5576
      %v5590 = vpack.c.b16 %v5579, %v5578
      %v5591 = vpack.c.b16 %v5581, %v5580
      %v5592 = vpack.c.b16 %v5583, %v5582
      %v5593 = vpack.c.b16 %v5585, %v5584
      %5602 = vmatprep.subr.bf16.mxu0 0
      %5603 = vmatpush1.bf16.msra.mxu0 %v5593
      %5604 = vmatprep.subr.bf16.mxu0 0
      %5605 = vmatpush1.bf16.msra.mxu0 %v5592
      %5606 = vmatprep.subr.bf16.mxu0 0
      %5607 = vmatpush1.bf16.msra.mxu0 %v5591
      %5608 = vmatprep.subr.bf16.mxu0 0
      %5609 = vmatpush1.bf16.msra.mxu0 %v5590
      %5610 = vmatprep.subr.bf16.mxu0 0
      %5611 = vmatpush1.bf16.msra.mxu0 %v5589
      %5612 = vmatprep.subr.bf16.mxu0 0
      %5613 = vmatpush1.bf16.msra.mxu0 %v5588
      %5614 = vmatprep.subr.bf16.mxu0 0
      %5615 = vmatpush1.bf16.msra.mxu0 %v5587
      %5616 = vmatprep.subr.bf16.mxu0 0
      %5617 = vmatpush1.bf16.msra.mxu0 %v5586
      %5618 = vmatprep.subr.bf16.mxu0 0
      %5619 = vmatpush2.bf16.msra.mxu0 0
      %5620 = vmatprep.subr.bf16.mxu0 0
      %5621 = vmatpush2.bf16.msra.mxu0 0
      %5622 = vmatprep.subr.bf16.mxu0 0
      %5623 = vmatpush2.bf16.msra.mxu0 0
      %5624 = vmatprep.subr.bf16.mxu0 0
      %5625 = vmatpush2.bf16.msra.mxu0 0
      %5626 = vmatprep.subr.bf16.mxu0 0
      %5627 = vmatpush2.bf16.msra.mxu0 0
      %5628 = vmatprep.subr.bf16.mxu0 0
      %5629 = vmatpush2.bf16.msra.mxu0 0
      %5630 = vmatprep.subr.bf16.mxu0 0
      %5631 = vmatpush2.bf16.msra.mxu0 0
      %5632 = vmatprep.subr.bf16.mxu0 0
      %5633 = vmatpush2.bf16.msra.mxu0 0
      %5634 = vmatprep.mubr.bf16.mxu0 0
      %5635 = vmatmul.mubr.bf16.gmra.mxu0 %v5546
      %v5636 = vpop.f32.mrf.mxu0
      %v5637 = vadd.f32 0.0, %v5636
      %v5638 = vpop.f32.mrf.mxu0
      %v5639 = vpop.f32.mrf.mxu0
      %v5640 = vadd.f32 0.0, %v5639
      %v5641 = vpop.f32.mrf.mxu0
      %5642 = vmatprep.mubr.bf16.mxu0 0
      %5643 = vmatmul.mubr.bf16.gmra.mxu0 %v5547
      %v5644 = vpop.f32.mrf.mxu0
      %v5645 = vadd.f32 0.0, %v5644
      %v5646 = vpop.f32.mrf.mxu0
      %v5647 = vpop.f32.mrf.mxu0
      %v5648 = vadd.f32 0.0, %v5647
      %v5649 = vpop.f32.mrf.mxu0
      %5650 = vmatprep.mubr.bf16.mxu0 0
      %5651 = vmatmul.mubr.bf16.gmra.mxu0 %v5548
      %v5652 = vpop.f32.mrf.mxu0
      %v5653 = vadd.f32 0.0, %v5652
      %v5654 = vpop.f32.mrf.mxu0
      %v5655 = vpop.f32.mrf.mxu0
      %v5656 = vadd.f32 0.0, %v5655
      %v5657 = vpop.f32.mrf.mxu0
      %5658 = vmatprep.mubr.bf16.mxu0 0
      %5659 = vmatmul.mubr.bf16.gmra.mxu0 %v5549
      %v5660 = vpop.f32.mrf.mxu0
      %v5661 = vadd.f32 0.0, %v5660
      %v5662 = vpop.f32.mrf.mxu0
      %v5663 = vpop.f32.mrf.mxu0
      %v5664 = vadd.f32 0.0, %v5663
      %v5665 = vpop.f32.mrf.mxu0
      %5666 = vdwg.mxu0
      %v5667 = vadd.f32 %v5457, %v5637
      %v5668 = vadd.f32 %v5458, %v5640
      %v5669 = vadd.f32 %v5459, %v5645
      %v5670 = vadd.f32 %v5460, %v5648
      %v5671 = vadd.f32 %v5461, %v5653
      %v5672 = vadd.f32 %v5462, %v5656
      %v5673 = vadd.f32 %v5463, %v5661
      %v5674 = vadd.f32 %v5464, %v5664
      %s5675 = scalar_lea.vmem %s381, 16
      %v5676 = vld [vmem:[%s5675] sm:$0xf]
      %v5677 = vld [vmem:[%s5675 + $0x8] sm:$0xf]
      %v5678 = vld [vmem:[%s5675 + $0x10] sm:$0xf]
      %v5679 = vld [vmem:[%s5675 + $0x18] sm:$0xf]
      %v5680 = vld [vmem:[%s5675 + $0x20] sm:$0xf]
      %v5681 = vld [vmem:[%s5675 + $0x28] sm:$0xf]
      %v5682 = vld [vmem:[%s5675 + $0x30] sm:$0xf]
      %v5683 = vld [vmem:[%s5675 + $0x38] sm:$0xf]
      %s5684 = scalar_lea.vmem %s3, 1536
      %v5685 = vld [vmem:[%s5684] sm:$0xf]
      %v5686 = vld [vmem:[%s5684 + $0x4] sm:$0xf]
      %v5687 = vld [vmem:[%s5684 + $0x8] sm:$0xf]
      %v5688 = vld [vmem:[%s5684 + $0xc] sm:$0xf]
      %v5689 = vld [vmem:[%s5684 + $0x10] sm:$0xf]
      %v5690 = vld [vmem:[%s5684 + $0x14] sm:$0xf]
      %v5691 = vld [vmem:[%s5684 + $0x18] sm:$0xf]
      %v5692 = vld [vmem:[%s5684 + $0x1c] sm:$0xf]
      %v5693 = vld [vmem:[%s5684 + $0x20] sm:$0xf]
      %v5694 = vld [vmem:[%s5684 + $0x24] sm:$0xf]
      %v5695 = vld [vmem:[%s5684 + $0x28] sm:$0xf]
      %v5696 = vld [vmem:[%s5684 + $0x2c] sm:$0xf]
      %v5697 = vld [vmem:[%s5684 + $0x30] sm:$0xf]
      %v5698 = vld [vmem:[%s5684 + $0x34] sm:$0xf]
      %v5699 = vld [vmem:[%s5684 + $0x38] sm:$0xf]
      %v5700 = vld [vmem:[%s5684 + $0x3c] sm:$0xf]
      %v5709 = vunpack.c.l.b16 %v5676
      %v5710 = vunpack.c.l.b16 %v5677
      %v5711 = vunpack.c.l.b16 %v5678
      %v5712 = vunpack.c.l.b16 %v5679
      %v5713 = vunpack.c.l.b16 %v5680
      %v5714 = vunpack.c.l.b16 %v5681
      %v5715 = vunpack.c.l.b16 %v5682
      %v5716 = vunpack.c.l.b16 %v5683
      %v5717 = vpack.c.b16 %v5710, %v5709
      %v5718 = vpack.c.b16 %v5712, %v5711
      %v5719 = vpack.c.b16 %v5714, %v5713
      %v5720 = vpack.c.b16 %v5716, %v5715
      %v5741 = vunpack.c.l.b16 %v5685
      %v5742 = vunpack.c.l.b16 %v5686
      %v5743 = vunpack.c.l.b16 %v5687
      %v5744 = vunpack.c.l.b16 %v5688
      %v5745 = vunpack.c.l.b16 %v5689
      %v5746 = vunpack.c.l.b16 %v5690
      %v5747 = vunpack.c.l.b16 %v5691
      %v5748 = vunpack.c.l.b16 %v5692
      %v5749 = vunpack.c.l.b16 %v5693
      %v5750 = vunpack.c.l.b16 %v5694
      %v5751 = vunpack.c.l.b16 %v5695
      %v5752 = vunpack.c.l.b16 %v5696
      %v5753 = vunpack.c.l.b16 %v5697
      %v5754 = vunpack.c.l.b16 %v5698
      %v5755 = vunpack.c.l.b16 %v5699
      %v5756 = vunpack.c.l.b16 %v5700
      %v5757 = vpack.c.b16 %v5742, %v5741
      %v5758 = vpack.c.b16 %v5744, %v5743
      %v5759 = vpack.c.b16 %v5746, %v5745
      %v5760 = vpack.c.b16 %v5748, %v5747
      %v5761 = vpack.c.b16 %v5750, %v5749
      %v5762 = vpack.c.b16 %v5752, %v5751
      %v5763 = vpack.c.b16 %v5754, %v5753
      %v5764 = vpack.c.b16 %v5756, %v5755
      %5773 = vmatprep.subr.bf16.mxu0 0
      %5774 = vmatpush1.bf16.msra.mxu0 %v5764
      %5775 = vmatprep.subr.bf16.mxu0 0
      %5776 = vmatpush1.bf16.msra.mxu0 %v5763
      %5777 = vmatprep.subr.bf16.mxu0 0
      %5778 = vmatpush1.bf16.msra.mxu0 %v5762
      %5779 = vmatprep.subr.bf16.mxu0 0
      %5780 = vmatpush1.bf16.msra.mxu0 %v5761
      %5781 = vmatprep.subr.bf16.mxu0 0
      %5782 = vmatpush1.bf16.msra.mxu0 %v5760
      %5783 = vmatprep.subr.bf16.mxu0 0
      %5784 = vmatpush1.bf16.msra.mxu0 %v5759
      %5785 = vmatprep.subr.bf16.mxu0 0
      %5786 = vmatpush1.bf16.msra.mxu0 %v5758
      %5787 = vmatprep.subr.bf16.mxu0 0
      %5788 = vmatpush1.bf16.msra.mxu0 %v5757
      %5789 = vmatprep.subr.bf16.mxu0 0
      %5790 = vmatpush2.bf16.msra.mxu0 0
      %5791 = vmatprep.subr.bf16.mxu0 0
      %5792 = vmatpush2.bf16.msra.mxu0 0
      %5793 = vmatprep.subr.bf16.mxu0 0
      %5794 = vmatpush2.bf16.msra.mxu0 0
      %5795 = vmatprep.subr.bf16.mxu0 0
      %5796 = vmatpush2.bf16.msra.mxu0 0
      %5797 = vmatprep.subr.bf16.mxu0 0
      %5798 = vmatpush2.bf16.msra.mxu0 0
      %5799 = vmatprep.subr.bf16.mxu0 0
      %5800 = vmatpush2.bf16.msra.mxu0 0
      %5801 = vmatprep.subr.bf16.mxu0 0
      %5802 = vmatpush2.bf16.msra.mxu0 0
      %5803 = vmatprep.subr.bf16.mxu0 0
      %5804 = vmatpush2.bf16.msra.mxu0 0
      %5805 = vmatprep.mubr.bf16.mxu0 0
      %5806 = vmatmul.mubr.bf16.gmra.mxu0 %v5717
      %v5807 = vpop.f32.mrf.mxu0
      %v5808 = vadd.f32 0.0, %v5807
      %v5809 = vpop.f32.mrf.mxu0
      %v5810 = vpop.f32.mrf.mxu0
      %v5811 = vadd.f32 0.0, %v5810
      %v5812 = vpop.f32.mrf.mxu0
      %5813 = vmatprep.mubr.bf16.mxu0 0
      %5814 = vmatmul.mubr.bf16.gmra.mxu0 %v5718
      %v5815 = vpop.f32.mrf.mxu0
      %v5816 = vadd.f32 0.0, %v5815
      %v5817 = vpop.f32.mrf.mxu0
      %v5818 = vpop.f32.mrf.mxu0
      %v5819 = vadd.f32 0.0, %v5818
      %v5820 = vpop.f32.mrf.mxu0
      %5821 = vmatprep.mubr.bf16.mxu0 0
      %5822 = vmatmul.mubr.bf16.gmra.mxu0 %v5719
      %v5823 = vpop.f32.mrf.mxu0
      %v5824 = vadd.f32 0.0, %v5823
      %v5825 = vpop.f32.mrf.mxu0
      %v5826 = vpop.f32.mrf.mxu0
      %v5827 = vadd.f32 0.0, %v5826
      %v5828 = vpop.f32.mrf.mxu0
      %5829 = vmatprep.mubr.bf16.mxu0 0
      %5830 = vmatmul.mubr.bf16.gmra.mxu0 %v5720
      %v5831 = vpop.f32.mrf.mxu0
      %v5832 = vadd.f32 0.0, %v5831
      %v5833 = vpop.f32.mrf.mxu0
      %v5834 = vpop.f32.mrf.mxu0
      %v5835 = vadd.f32 0.0, %v5834
      %v5836 = vpop.f32.mrf.mxu0
      %5837 = vdwg.mxu0
      %v5838 = vadd.f32 %v5667, %v5808
      %v5839 = vadd.f32 %v5668, %v5811
      %v5840 = vadd.f32 %v5669, %v5816
      %v5841 = vadd.f32 %v5670, %v5819
      %v5842 = vadd.f32 %v5671, %v5824
      %v5843 = vadd.f32 %v5672, %v5827
      %v5844 = vadd.f32 %v5673, %v5832
      %v5845 = vadd.f32 %v5674, %v5835
      %v5846 = vld [vmem:[%s5675] sm:$0xf]
      %v5847 = vld [vmem:[%s5675 + $0x4] sm:$0x1]
      %v5848 = vld [vmem:[%s5675 + $0x8] sm:$0xf]
      %v5849 = vld [vmem:[%s5675 + $0xc] sm:$0x1]
      %v5850 = vld [vmem:[%s5675 + $0x10] sm:$0xf]
      %v5851 = vld [vmem:[%s5675 + $0x14] sm:$0x1]
      %v5852 = vld [vmem:[%s5675 + $0x18] sm:$0xf]
      %v5853 = vld [vmem:[%s5675 + $0x1c] sm:$0x1]
      %v5854 = vld [vmem:[%s5675 + $0x20] sm:$0xf]
      %v5855 = vld [vmem:[%s5675 + $0x24] sm:$0x1]
      %v5856 = vld [vmem:[%s5675 + $0x28] sm:$0xf]
      %v5857 = vld [vmem:[%s5675 + $0x2c] sm:$0x1]
      %v5858 = vld [vmem:[%s5675 + $0x30] sm:$0xf]
      %v5859 = vld [vmem:[%s5675 + $0x34] sm:$0x1]
      %v5860 = vld [vmem:[%s5675 + $0x38] sm:$0xf]
      %v5861 = vld [vmem:[%s5675 + $0x3c] sm:$0x1]
      %v5863 = vshrl.u32 %v5846, 16
      %v5865 = vrot.slane %v5863, 4
      %v5866 = vshll.u32 %v5846, 16
      %v5868 = vrot.slane %v5866, 5
      %v5869 = vor.u32 %v5865, %v5868
      %v5870 = vrot.slane %v5869, 4
      %v5872 = vshll.u32 %v5847, 16
      %v5874 = vrot.slane %v5872, 5
      %v5875 = vsel %vm427, %v5870, %v5874
      %v5877 = vshrl.u32 %v5848, 16
      %v5879 = vrot.slane %v5877, 4
      %v5880 = vshll.u32 %v5848, 16
      %v5882 = vrot.slane %v5880, 5
      %v5883 = vor.u32 %v5879, %v5882
      %v5884 = vrot.slane %v5883, 4
      %v5886 = vshll.u32 %v5849, 16
      %v5888 = vrot.slane %v5886, 5
      %v5889 = vsel %vm427, %v5884, %v5888
      %v5891 = vshrl.u32 %v5850, 16
      %v5893 = vrot.slane %v5891, 4
      %v5894 = vshll.u32 %v5850, 16
      %v5896 = vrot.slane %v5894, 5
      %v5897 = vor.u32 %v5893, %v5896
      %v5898 = vrot.slane %v5897, 4
      %v5900 = vshll.u32 %v5851, 16
      %v5902 = vrot.slane %v5900, 5
      %v5903 = vsel %vm427, %v5898, %v5902
      %v5905 = vshrl.u32 %v5852, 16
      %v5907 = vrot.slane %v5905, 4
      %v5908 = vshll.u32 %v5852, 16
      %v5910 = vrot.slane %v5908, 5
      %v5911 = vor.u32 %v5907, %v5910
      %v5912 = vrot.slane %v5911, 4
      %v5914 = vshll.u32 %v5853, 16
      %v5916 = vrot.slane %v5914, 5
      %v5917 = vsel %vm427, %v5912, %v5916
      %v5919 = vshrl.u32 %v5854, 16
      %v5921 = vrot.slane %v5919, 4
      %v5922 = vshll.u32 %v5854, 16
      %v5924 = vrot.slane %v5922, 5
      %v5925 = vor.u32 %v5921, %v5924
      %v5926 = vrot.slane %v5925, 4
      %v5928 = vshll.u32 %v5855, 16
      %v5930 = vrot.slane %v5928, 5
      %v5931 = vsel %vm427, %v5926, %v5930
      %v5933 = vshrl.u32 %v5856, 16
      %v5935 = vrot.slane %v5933, 4
      %v5936 = vshll.u32 %v5856, 16
      %v5938 = vrot.slane %v5936, 5
      %v5939 = vor.u32 %v5935, %v5938
      %v5940 = vrot.slane %v5939, 4
      %v5942 = vshll.u32 %v5857, 16
      %v5944 = vrot.slane %v5942, 5
      %v5945 = vsel %vm427, %v5940, %v5944
      %v5947 = vshrl.u32 %v5858, 16
      %v5949 = vrot.slane %v5947, 4
      %v5950 = vshll.u32 %v5858, 16
      %v5952 = vrot.slane %v5950, 5
      %v5953 = vor.u32 %v5949, %v5952
      %v5954 = vrot.slane %v5953, 4
      %v5956 = vshll.u32 %v5859, 16
      %v5958 = vrot.slane %v5956, 5
      %v5959 = vsel %vm427, %v5954, %v5958
      %v5961 = vshrl.u32 %v5860, 16
      %v5963 = vrot.slane %v5961, 4
      %v5964 = vshll.u32 %v5860, 16
      %v5966 = vrot.slane %v5964, 5
      %v5967 = vor.u32 %v5963, %v5966
      %v5968 = vrot.slane %v5967, 4
      %v5970 = vshll.u32 %v5861, 16
      %v5972 = vrot.slane %v5970, 5
      %v5973 = vsel %vm427, %v5968, %v5972
      %s5974 = scalar_lea.vmem %s3, 1600
      %v5975 = vld [vmem:[%s5974] sm:$0xf]
      %v5976 = vld [vmem:[%s5974 + $0x4] sm:$0xf]
      %v5977 = vld [vmem:[%s5974 + $0x8] sm:$0xf]
      %v5978 = vld [vmem:[%s5974 + $0xc] sm:$0xf]
      %v5979 = vld [vmem:[%s5974 + $0x10] sm:$0xf]
      %v5980 = vld [vmem:[%s5974 + $0x14] sm:$0xf]
      %v5981 = vld [vmem:[%s5974 + $0x18] sm:$0xf]
      %v5982 = vld [vmem:[%s5974 + $0x1c] sm:$0xf]
      %v5983 = vld [vmem:[%s5974 + $0x20] sm:$0xf]
      %v5984 = vld [vmem:[%s5974 + $0x24] sm:$0xf]
      %v5985 = vld [vmem:[%s5974 + $0x28] sm:$0xf]
      %v5986 = vld [vmem:[%s5974 + $0x2c] sm:$0xf]
      %v5987 = vld [vmem:[%s5974 + $0x30] sm:$0xf]
      %v5988 = vld [vmem:[%s5974 + $0x34] sm:$0xf]
      %v5989 = vld [vmem:[%s5974 + $0x38] sm:$0xf]
      %v5990 = vld [vmem:[%s5974 + $0x3c] sm:$0xf]
      %v5991 = vunpack.c.l.b16 %v5875
      %v5992 = vunpack.c.l.b16 %v5889
      %v5993 = vunpack.c.l.b16 %v5903
      %v5994 = vunpack.c.l.b16 %v5917
      %v5995 = vunpack.c.l.b16 %v5931
      %v5996 = vunpack.c.l.b16 %v5945
      %v5997 = vunpack.c.l.b16 %v5959
      %v5998 = vunpack.c.l.b16 %v5973
      %v5999 = vpack.c.b16 %v5992, %v5991
      %v6000 = vpack.c.b16 %v5994, %v5993
      %v6001 = vpack.c.b16 %v5996, %v5995
      %v6002 = vpack.c.b16 %v5998, %v5997
      %v6023 = vunpack.c.l.b16 %v5975
      %v6024 = vunpack.c.l.b16 %v5976
      %v6025 = vunpack.c.l.b16 %v5977
      %v6026 = vunpack.c.l.b16 %v5978
      %v6027 = vunpack.c.l.b16 %v5979
      %v6028 = vunpack.c.l.b16 %v5980
      %v6029 = vunpack.c.l.b16 %v5981
      %v6030 = vunpack.c.l.b16 %v5982
      %v6031 = vunpack.c.l.b16 %v5983
      %v6032 = vunpack.c.l.b16 %v5984
      %v6033 = vunpack.c.l.b16 %v5985
      %v6034 = vunpack.c.l.b16 %v5986
      %v6035 = vunpack.c.l.b16 %v5987
      %v6036 = vunpack.c.l.b16 %v5988
      %v6037 = vunpack.c.l.b16 %v5989
      %v6038 = vunpack.c.l.b16 %v5990
      %v6039 = vpack.c.b16 %v6024, %v6023
      %v6040 = vpack.c.b16 %v6026, %v6025
      %v6041 = vpack.c.b16 %v6028, %v6027
      %v6042 = vpack.c.b16 %v6030, %v6029
      %v6043 = vpack.c.b16 %v6032, %v6031
      %v6044 = vpack.c.b16 %v6034, %v6033
      %v6045 = vpack.c.b16 %v6036, %v6035
      %v6046 = vpack.c.b16 %v6038, %v6037
      %6055 = vmatprep.subr.bf16.mxu0 0
      %6056 = vmatpush1.bf16.msra.mxu0 %v6046
      %6057 = vmatprep.subr.bf16.mxu0 0
      %6058 = vmatpush1.bf16.msra.mxu0 %v6045
      %6059 = vmatprep.subr.bf16.mxu0 0
      %6060 = vmatpush1.bf16.msra.mxu0 %v6044
      %6061 = vmatprep.subr.bf16.mxu0 0
      %6062 = vmatpush1.bf16.msra.mxu0 %v6043
      %6063 = vmatprep.subr.bf16.mxu0 0
      %6064 = vmatpush1.bf16.msra.mxu0 %v6042
      %6065 = vmatprep.subr.bf16.mxu0 0
      %6066 = vmatpush1.bf16.msra.mxu0 %v6041
      %6067 = vmatprep.subr.bf16.mxu0 0
      %6068 = vmatpush1.bf16.msra.mxu0 %v6040
      %6069 = vmatprep.subr.bf16.mxu0 0
      %6070 = vmatpush1.bf16.msra.mxu0 %v6039
      %6071 = vmatprep.subr.bf16.mxu0 0
      %6072 = vmatpush2.bf16.msra.mxu0 0
      %6073 = vmatprep.subr.bf16.mxu0 0
      %6074 = vmatpush2.bf16.msra.mxu0 0
      %6075 = vmatprep.subr.bf16.mxu0 0
      %6076 = vmatpush2.bf16.msra.mxu0 0
      %6077 = vmatprep.subr.bf16.mxu0 0
      %6078 = vmatpush2.bf16.msra.mxu0 0
      %6079 = vmatprep.subr.bf16.mxu0 0
      %6080 = vmatpush2.bf16.msra.mxu0 0
      %6081 = vmatprep.subr.bf16.mxu0 0
      %6082 = vmatpush2.bf16.msra.mxu0 0
      %6083 = vmatprep.subr.bf16.mxu0 0
      %6084 = vmatpush2.bf16.msra.mxu0 0
      %6085 = vmatprep.subr.bf16.mxu0 0
      %6086 = vmatpush2.bf16.msra.mxu0 0
      %6087 = vmatprep.mubr.bf16.mxu0 0
      %6088 = vmatmul.mubr.bf16.gmra.mxu0 %v5999
      %v6089 = vpop.f32.mrf.mxu0
      %v6090 = vadd.f32 0.0, %v6089
      %v6091 = vpop.f32.mrf.mxu0
      %v6092 = vpop.f32.mrf.mxu0
      %v6093 = vadd.f32 0.0, %v6092
      %v6094 = vpop.f32.mrf.mxu0
      %6095 = vmatprep.mubr.bf16.mxu0 0
      %6096 = vmatmul.mubr.bf16.gmra.mxu0 %v6000
      %v6097 = vpop.f32.mrf.mxu0
      %v6098 = vadd.f32 0.0, %v6097
      %v6099 = vpop.f32.mrf.mxu0
      %v6100 = vpop.f32.mrf.mxu0
      %v6101 = vadd.f32 0.0, %v6100
      %v6102 = vpop.f32.mrf.mxu0
      %6103 = vmatprep.mubr.bf16.mxu0 0
      %6104 = vmatmul.mubr.bf16.gmra.mxu0 %v6001
      %v6105 = vpop.f32.mrf.mxu0
      %v6106 = vadd.f32 0.0, %v6105
      %v6107 = vpop.f32.mrf.mxu0
      %v6108 = vpop.f32.mrf.mxu0
      %v6109 = vadd.f32 0.0, %v6108
      %v6110 = vpop.f32.mrf.mxu0
      %6111 = vmatprep.mubr.bf16.mxu0 0
      %6112 = vmatmul.mubr.bf16.gmra.mxu0 %v6002
      %v6113 = vpop.f32.mrf.mxu0
      %v6114 = vadd.f32 0.0, %v6113
      %v6115 = vpop.f32.mrf.mxu0
      %v6116 = vpop.f32.mrf.mxu0
      %v6117 = vadd.f32 0.0, %v6116
      %v6118 = vpop.f32.mrf.mxu0
      %6119 = vdwg.mxu0
      %v6120 = vadd.f32 %v5838, %v6090
      %v6121 = vadd.f32 %v5839, %v6093
      %v6122 = vadd.f32 %v5840, %v6098
      %v6123 = vadd.f32 %v5841, %v6101
      %v6124 = vadd.f32 %v5842, %v6106
      %v6125 = vadd.f32 %v5843, %v6109
      %v6126 = vadd.f32 %v5844, %v6114
      %v6127 = vadd.f32 %v5845, %v6117
      %v6128 = vld [vmem:[%s5675] sm:$0xe]
      %v6129 = vld [vmem:[%s5675 + $0x8] sm:$0xe]
      %v6130 = vld [vmem:[%s5675 + $0x10] sm:$0xe]
      %v6131 = vld [vmem:[%s5675 + $0x18] sm:$0xe]
      %v6132 = vld [vmem:[%s5675 + $0x20] sm:$0xe]
      %v6133 = vld [vmem:[%s5675 + $0x28] sm:$0xe]
      %v6134 = vld [vmem:[%s5675 + $0x30] sm:$0xe]
      %v6135 = vld [vmem:[%s5675 + $0x38] sm:$0xe]
      %v6152 = vrot.slane %v6128, 5
      %v6153 = vrot.slane %v6152, 4
      %v6154 = vrot.slane %v5847, 5
      %v6155 = vsel %vm849, %v6153, %v6154
      %v6156 = vrot.slane %v6129, 5
      %v6157 = vrot.slane %v6156, 4
      %v6158 = vrot.slane %v5849, 5
      %v6159 = vsel %vm849, %v6157, %v6158
      %v6160 = vrot.slane %v6130, 5
      %v6161 = vrot.slane %v6160, 4
      %v6162 = vrot.slane %v5851, 5
      %v6163 = vsel %vm849, %v6161, %v6162
      %v6164 = vrot.slane %v6131, 5
      %v6165 = vrot.slane %v6164, 4
      %v6166 = vrot.slane %v5853, 5
      %v6167 = vsel %vm849, %v6165, %v6166
      %v6168 = vrot.slane %v6132, 5
      %v6169 = vrot.slane %v6168, 4
      %v6170 = vrot.slane %v5855, 5
      %v6171 = vsel %vm849, %v6169, %v6170
      %v6172 = vrot.slane %v6133, 5
      %v6173 = vrot.slane %v6172, 4
      %v6174 = vrot.slane %v5857, 5
      %v6175 = vsel %vm849, %v6173, %v6174
      %v6176 = vrot.slane %v6134, 5
      %v6177 = vrot.slane %v6176, 4
      %v6178 = vrot.slane %v5859, 5
      %v6179 = vsel %vm849, %v6177, %v6178
      %v6180 = vrot.slane %v6135, 5
      %v6181 = vrot.slane %v6180, 4
      %v6182 = vrot.slane %v5861, 5
      %v6183 = vsel %vm849, %v6181, %v6182
      %s6184 = scalar_lea.vmem %s3, 1664
      %v6185 = vld [vmem:[%s6184] sm:$0xf]
      %v6186 = vld [vmem:[%s6184 + $0x4] sm:$0xf]
      %v6187 = vld [vmem:[%s6184 + $0x8] sm:$0xf]
      %v6188 = vld [vmem:[%s6184 + $0xc] sm:$0xf]
      %v6189 = vld [vmem:[%s6184 + $0x10] sm:$0xf]
      %v6190 = vld [vmem:[%s6184 + $0x14] sm:$0xf]
      %v6191 = vld [vmem:[%s6184 + $0x18] sm:$0xf]
      %v6192 = vld [vmem:[%s6184 + $0x1c] sm:$0xf]
      %v6193 = vld [vmem:[%s6184 + $0x20] sm:$0xf]
      %v6194 = vld [vmem:[%s6184 + $0x24] sm:$0xf]
      %v6195 = vld [vmem:[%s6184 + $0x28] sm:$0xf]
      %v6196 = vld [vmem:[%s6184 + $0x2c] sm:$0xf]
      %v6197 = vld [vmem:[%s6184 + $0x30] sm:$0xf]
      %v6198 = vld [vmem:[%s6184 + $0x34] sm:$0xf]
      %v6199 = vld [vmem:[%s6184 + $0x38] sm:$0xf]
      %v6200 = vld [vmem:[%s6184 + $0x3c] sm:$0xf]
      %v6201 = vunpack.c.l.b16 %v6155
      %v6202 = vunpack.c.l.b16 %v6159
      %v6203 = vunpack.c.l.b16 %v6163
      %v6204 = vunpack.c.l.b16 %v6167
      %v6205 = vunpack.c.l.b16 %v6171
      %v6206 = vunpack.c.l.b16 %v6175
      %v6207 = vunpack.c.l.b16 %v6179
      %v6208 = vunpack.c.l.b16 %v6183
      %v6209 = vpack.c.b16 %v6202, %v6201
      %v6210 = vpack.c.b16 %v6204, %v6203
      %v6211 = vpack.c.b16 %v6206, %v6205
      %v6212 = vpack.c.b16 %v6208, %v6207
      %v6233 = vunpack.c.l.b16 %v6185
      %v6234 = vunpack.c.l.b16 %v6186
      %v6235 = vunpack.c.l.b16 %v6187
      %v6236 = vunpack.c.l.b16 %v6188
      %v6237 = vunpack.c.l.b16 %v6189
      %v6238 = vunpack.c.l.b16 %v6190
      %v6239 = vunpack.c.l.b16 %v6191
      %v6240 = vunpack.c.l.b16 %v6192
      %v6241 = vunpack.c.l.b16 %v6193
      %v6242 = vunpack.c.l.b16 %v6194
      %v6243 = vunpack.c.l.b16 %v6195
      %v6244 = vunpack.c.l.b16 %v6196
      %v6245 = vunpack.c.l.b16 %v6197
      %v6246 = vunpack.c.l.b16 %v6198
      %v6247 = vunpack.c.l.b16 %v6199
      %v6248 = vunpack.c.l.b16 %v6200
      %v6249 = vpack.c.b16 %v6234, %v6233
      %v6250 = vpack.c.b16 %v6236, %v6235
      %v6251 = vpack.c.b16 %v6238, %v6237
      %v6252 = vpack.c.b16 %v6240, %v6239
      %v6253 = vpack.c.b16 %v6242, %v6241
      %v6254 = vpack.c.b16 %v6244, %v6243
      %v6255 = vpack.c.b16 %v6246, %v6245
      %v6256 = vpack.c.b16 %v6248, %v6247
      %6265 = vmatprep.subr.bf16.mxu0 0
      %6266 = vmatpush1.bf16.msra.mxu0 %v6256
      %6267 = vmatprep.subr.bf16.mxu0 0
      %6268 = vmatpush1.bf16.msra.mxu0 %v6255
      %6269 = vmatprep.subr.bf16.mxu0 0
      %6270 = vmatpush1.bf16.msra.mxu0 %v6254
      %6271 = vmatprep.subr.bf16.mxu0 0
      %6272 = vmatpush1.bf16.msra.mxu0 %v6253
      %6273 = vmatprep.subr.bf16.mxu0 0
      %6274 = vmatpush1.bf16.msra.mxu0 %v6252
      %6275 = vmatprep.subr.bf16.mxu0 0
      %6276 = vmatpush1.bf16.msra.mxu0 %v6251
      %6277 = vmatprep.subr.bf16.mxu0 0
      %6278 = vmatpush1.bf16.msra.mxu0 %v6250
      %6279 = vmatprep.subr.bf16.mxu0 0
      %6280 = vmatpush1.bf16.msra.mxu0 %v6249
      %6281 = vmatprep.subr.bf16.mxu0 0
      %6282 = vmatpush2.bf16.msra.mxu0 0
      %6283 = vmatprep.subr.bf16.mxu0 0
      %6284 = vmatpush2.bf16.msra.mxu0 0
      %6285 = vmatprep.subr.bf16.mxu0 0
      %6286 = vmatpush2.bf16.msra.mxu0 0
      %6287 = vmatprep.subr.bf16.mxu0 0
      %6288 = vmatpush2.bf16.msra.mxu0 0
      %6289 = vmatprep.subr.bf16.mxu0 0
      %6290 = vmatpush2.bf16.msra.mxu0 0
      %6291 = vmatprep.subr.bf16.mxu0 0
      %6292 = vmatpush2.bf16.msra.mxu0 0
      %6293 = vmatprep.subr.bf16.mxu0 0
      %6294 = vmatpush2.bf16.msra.mxu0 0
      %6295 = vmatprep.subr.bf16.mxu0 0
      %6296 = vmatpush2.bf16.msra.mxu0 0
      %6297 = vmatprep.mubr.bf16.mxu0 0
      %6298 = vmatmul.mubr.bf16.gmra.mxu0 %v6209
      %v6299 = vpop.f32.mrf.mxu0
      %v6300 = vadd.f32 0.0, %v6299
      %v6301 = vpop.f32.mrf.mxu0
      %v6302 = vpop.f32.mrf.mxu0
      %v6303 = vadd.f32 0.0, %v6302
      %v6304 = vpop.f32.mrf.mxu0
      %6305 = vmatprep.mubr.bf16.mxu0 0
      %6306 = vmatmul.mubr.bf16.gmra.mxu0 %v6210
      %v6307 = vpop.f32.mrf.mxu0
      %v6308 = vadd.f32 0.0, %v6307
      %v6309 = vpop.f32.mrf.mxu0
      %v6310 = vpop.f32.mrf.mxu0
      %v6311 = vadd.f32 0.0, %v6310
      %v6312 = vpop.f32.mrf.mxu0
      %6313 = vmatprep.mubr.bf16.mxu0 0
      %6314 = vmatmul.mubr.bf16.gmra.mxu0 %v6211
      %v6315 = vpop.f32.mrf.mxu0
      %v6316 = vadd.f32 0.0, %v6315
      %v6317 = vpop.f32.mrf.mxu0
      %v6318 = vpop.f32.mrf.mxu0
      %v6319 = vadd.f32 0.0, %v6318
      %v6320 = vpop.f32.mrf.mxu0
      %6321 = vmatprep.mubr.bf16.mxu0 0
      %6322 = vmatmul.mubr.bf16.gmra.mxu0 %v6212
      %v6323 = vpop.f32.mrf.mxu0
      %v6324 = vadd.f32 0.0, %v6323
      %v6325 = vpop.f32.mrf.mxu0
      %v6326 = vpop.f32.mrf.mxu0
      %v6327 = vadd.f32 0.0, %v6326
      %v6328 = vpop.f32.mrf.mxu0
      %6329 = vdwg.mxu0
      %v6330 = vadd.f32 %v6120, %v6300
      %v6331 = vadd.f32 %v6121, %v6303
      %v6332 = vadd.f32 %v6122, %v6308
      %v6333 = vadd.f32 %v6123, %v6311
      %v6334 = vadd.f32 %v6124, %v6316
      %v6335 = vadd.f32 %v6125, %v6319
      %v6336 = vadd.f32 %v6126, %v6324
      %v6337 = vadd.f32 %v6127, %v6327
      %v6338 = vld [vmem:[%s4] sm:$0x1]
      %v6340 = vlaneseq
      %v6341 = vshrl.u32 %v6340, 7
      %v6342 = vsub.s32 0, %v6341
      %v6343 = vrot.slane %v6338, %v6342
      %v6345 = vadd.f32 %v6330, %v6343
      %v6346 = vadd.f32 %v6331, %v6343
      %v6347 = vadd.f32 %v6332, %v6343
      %v6348 = vadd.f32 %v6333, %v6343
      %v6349 = vadd.f32 %v6334, %v6343
      %v6350 = vadd.f32 %v6335, %v6343
      %v6351 = vadd.f32 %v6336, %v6343
      %v6352 = vadd.f32 %v6337, %v6343
      %6353 = vst [vmem:[%s391] sm:$0xff] %v6345
      %6354 = vst [vmem:[%s391 + $0x8] sm:$0xff] %v6346
      %6355 = vst [vmem:[%s391 + $0x10] sm:$0xff] %v6347
      %6356 = vst [vmem:[%s391 + $0x18] sm:$0xff] %v6348
      %6357 = vst [vmem:[%s391 + $0x20] sm:$0xff] %v6349
      %6358 = vst [vmem:[%s391 + $0x28] sm:$0xff] %v6350
      %6359 = vst [vmem:[%s391 + $0x30] sm:$0xff] %v6351
      %6360 = vst [vmem:[%s391 + $0x38] sm:$0xff] %v6352
      %p6361 = scmp.eq.s32.totalorder %s23, 0
      %p6362 = scmp.eq.s32.totalorder %s24, 0
      %p6363 = pnand %p6361, %p6362
      %p6364 = pneg %p6363
      // Predicated region
      $region41: #{residual_block.4} parent=39 // pred_check
        _
      $region42: #{residual_block.4} parent=39 // pred_check_branch
        %6366 = sbr.rel (%p6363) target = $region44
      $region43: #{residual_block.4} parent=39 // pred_region
        %6367 = vst [vmem:[%s6] sm:$0x1] 0.0
        %6368 = vst [vmem:[%s7] sm:$0x1] 0.0
      $region44: #{residual_block.4} parent=39 // pred_fallthru
        _
      %v6369 = vld [vmem:[%s6] sm:$0x1]
      %v6370 = vadd.f32 %v6345, %v6346
      %v6371 = vadd.f32 %v6370, %v6347
      %v6372 = vadd.f32 %v6371, %v6348
      %v6373 = vadd.f32 %v6372, %v6349
      %v6374 = vadd.f32 %v6373, %v6350
      %v6375 = vadd.f32 %v6374, %v6351
      %v6376 = vadd.f32 %v6375, %v6352
      %v6377 = vrot.slane %v6376, 4
      %v6378 = vadd.f32 %v6376, %v6377
      %v6379 = vrot.slane %v6378, 2
      %v6380 = vadd.f32 %v6378, %v6379
      %v6381 = vrot.slane %v6380, 1
      %v6382 = vadd.f32 %v6380, %v6381
      %v6383 = vadd.f32 %v6369, %v6382
      %6384 = vst [vmem:[%s6] sm:$0x1] %v6383
      %v6385 = vld [vmem:[%s7] sm:$0x1]
      %v6386 = vmul.f32 %v6345, %v6345
      %v6387 = vmul.f32 %v6346, %v6346
      %v6388 = vmul.f32 %v6347, %v6347
      %v6389 = vmul.f32 %v6348, %v6348
      %v6390 = vmul.f32 %v6349, %v6349
      %v6391 = vmul.f32 %v6350, %v6350
      %v6392 = vmul.f32 %v6351, %v6351
      %v6393 = vmul.f32 %v6352, %v6352
      %v6394 = vadd.f32 %v6386, %v6387
      %v6395 = vadd.f32 %v6394, %v6388
      %v6396 = vadd.f32 %v6395, %v6389
      %v6397 = vadd.f32 %v6396, %v6390
      %v6398 = vadd.f32 %v6397, %v6391
      %v6399 = vadd.f32 %v6398, %v6392
      %v6400 = vadd.f32 %v6399, %v6393
      %v6401 = vrot.slane %v6400, 4
      %v6402 = vadd.f32 %v6400, %v6401
      %v6403 = vrot.slane %v6402, 2
      %v6404 = vadd.f32 %v6402, %v6403
      %v6405 = vrot.slane %v6404, 1
      %v6406 = vadd.f32 %v6404, %v6405
      %v6407 = vadd.f32 %v6385, %v6406
      %6408 = vst [vmem:[%s7] sm:$0x1] %v6407
      %p6409 = scmp.lt.s32.totalorder %s23, 1
      %s6410 = scalar_select %p6409, %s23, 1
      %p6411 = scmp.lt.s32.totalorder %s24, 7
      %s6412 = scalar_select %p6411, %s24, 7
      %s6413 = smul.addr %s6412, 8
      %s6414 = smul.addr %s6410, 64
      %s6415 = sadd.s32 %s6413, %s6414
      %s6416 = smul.addr %s6415, 8
      %s6417 = scalar_lea.vmem %s5, %s6416
      // Predicated region
      $region45: #{residual_block.4} parent=39 // pred_check
        %p6418 = pneg %p181
      $region46: #{residual_block.4} parent=39 // pred_check_branch
        %6420 = sbr.rel (%p6418) target = $region48
      $region47: #{residual_block.4} parent=39 // pred_region
        _
      $region48: #{residual_block.4} parent=39 // pred_fallthru
        _
      // Predicated region
      $region49: #{residual_block.4} parent=39 // pred_check
        %p6421 = pneg %p202
      $region50: #{residual_block.4} parent=39 // pred_check_branch
        %6423 = sbr.rel (%p6421) target = $region52
      $region51: #{residual_block.4} parent=39 // pred_region
        _
      $region52: #{residual_block.4} parent=39 // pred_fallthru
        _
      // Predicated region
      $region53: #{residual_block.4} parent=39 // pred_check
        %p6424 = pneg %p223
      $region54: #{residual_block.4} parent=39 // pred_check_branch
        %6426 = sbr.rel (%p6424) target = $region56
      $region55: #{residual_block.4} parent=39 // pred_region
        _
      $region56: #{residual_block.4} parent=39 // pred_fallthru
        _
      // Predicated region
      $region57: #{residual_block.4} parent=39 // pred_check
        %p6427 = pneg %p202
      $region58: #{residual_block.4} parent=39 // pred_check_branch
        %6429 = sbr.rel (%p6427) target = $region60
      $region59: #{residual_block.4} parent=39 // pred_region
        _
      $region60: #{residual_block.4} parent=39 // pred_fallthru
        _
      // Predicated region
      $region61: #{residual_block.4} parent=39 // pred_check
        %p6430 = pneg %p223
      $region62: #{residual_block.4} parent=39 // pred_check_branch
        %6432 = sbr.rel (%p6430) target = $region64
      $region63: #{residual_block.4} parent=39 // pred_region
        _
      $region64: #{residual_block.4} parent=39 // pred_fallthru
        _
    $region40: #{residual_block.4} parent=5 // pred_fallthru
      _
    %p6433 = scmp.le.s32.totalorder 2, %s14
    // Predicated region
    $region65: #{residual_block.4} parent=5 // pred_check
      %p6434 = pneg %p6433
    $region66: #{residual_block.4} parent=5 // pred_check_branch
      %6436 = sbr.rel (%p6434) target = $region68
    $region67: #{residual_block.4} parent=5 // pred_region
      %s6437 = ssub.s32 %s14, 2
      // Predicated region
      $region69: #{residual_block.4} parent=67 // pred_check
        %p6438 = pneg %p187
      $region70: #{residual_block.4} parent=67 // pred_check_branch
        %6440 = sbr.rel (%p6438) target = $region72
      $region71: #{residual_block.4} parent=67 // pred_region
        %p6441 = scmp.lt.s32.totalorder %s25, 1
        %s6442 = scalar_select %p6441, %s25, 1
        %p6443 = scmp.lt.s32.totalorder %s26, 7
        %s6444 = scalar_select %p6443, %s26, 7
        %s6445 = smul.addr %s6444, 8
        %s6446 = smul.addr %s6442, 64
        %s6447 = sadd.s32 %s6445, %s6446
        %s6448 = smul.addr %s6447, 8
        %s6449 = scalar_lea.vmem %s5, %s6448
      $region72: #{residual_block.4} parent=67 // pred_fallthru
        _
    $region68: #{residual_block.4} parent=5 // pred_fallthru
      _
  $region6: #{residual_block.4} parent=0 // loop_footer
    %s18 = sadd.s32 1, %s14
  $region7: #{residual_block.4} parent=0 // loop_footer_branch
    %13 = sbr.rel target = $region3
  $region8: #{residual_block.4} parent=0 // loop_exit
    _

</llo_original>
